<compile_context>
chip_gen: v7x
topology: tpu7x:2x2x1
jax: 0.10.0
libtpu: 0.0.40
codegen_flags: <defaults>
</compile_context>

<pallas_src>
import functools
import math

import jax
import jax.numpy as jnp
import numpy as np
from jax.experimental import pallas as pl
from jax.experimental.pallas import tpu as pltpu

# ----------------------------- config (small, synthetic) -----------------------------
HIDDEN = 32            # config.hidden_size
NUM_HEADS = 4          # config.num_attention_heads
HEAD_DIM = HIDDEN // NUM_HEADS
INTERMEDIATE = HIDDEN  # config.intermediate_size (must equal hidden_size, see TODO above)
ENC_HIDDEN = 48        # config.encoder_hidden_size
NUM_LAYERS = 2         # config.num_hidden_layers
CROSS_FREQ = 2         # config.cross_attention_frequency -> layer 0 has cross-attn, layer 1 does not
LN_EPS = 1e-12         # config.layer_norm_eps

B = 2                  # batch
S = 8                  # number of query tokens (query_length == seq length)
S_ENC = 16             # encoder (image) sequence length

_ATTN_KEYS = ('wq', 'bq', 'wk', 'bk', 'wv', 'bv', 'wo', 'bo', 'ln_g', 'ln_b')
_FFN_KEYS = ('w1', 'b1', 'g1', 'be1', 'w2', 'b2', 'g2', 'be2')


# ----------------------------- in-kernel building blocks (operate on VMEM values) -----------------------------
def _layernorm(x, gamma, beta, eps):
    mu = jnp.mean(x, axis=-1, keepdims=True)
    var = jnp.mean(jnp.square(x - mu), axis=-1, keepdims=True)
    return (x - mu) * jax.lax.rsqrt(var + eps) * gamma + beta


def _mha_block(x, kv, wq, bq, wk, bk, wv, bv, wo, bo, gamma, beta,
               *, num_heads, head_dim, eps):
    """Multi-head attention (self or cross) + output projection + residual + LayerNorm."""
    scale = 1.0 / math.sqrt(head_dim)
    # Pre-scale Q once instead of scaling every per-head score matrix.
    q = (jnp.dot(x, wq, preferred_element_type=jnp.float32) + bq) * scale   # (S, D)
    k = jnp.dot(kv, wk, preferred_element_type=jnp.float32) + bk            # (Skv, D)
    v = jnp.dot(kv, wv, preferred_element_type=jnp.float32) + bv            # (Skv, D)

    # Accumulate the output projection head-by-head; no lane-axis concatenation.
    proj = x + bo                                                           # residual + output bias
    for h in range(num_heads):                                              # static unroll over heads
        lo = h * head_dim
        qh = q[:, lo:lo + head_dim]                                         # (S, Dh)
        kh = k[:, lo:lo + head_dim]                                         # (Skv, Dh)
        vh = v[:, lo:lo + head_dim]                                         # (Skv, Dh)
        s = jax.lax.dot_general(qh, kh, (((1,), (1,)), ((), ())),
                                preferred_element_type=jnp.float32)          # (S, Skv)
        s = s - jnp.max(s, axis=-1, keepdims=True)
        p = jnp.exp(s)
        p = p * pl.reciprocal(jnp.sum(p, axis=-1, keepdims=True), approx=True)
        ctx_h = jnp.dot(p, vh, preferred_element_type=jnp.float32)          # (S, Dh)
        # Wo rows for this head are sublane-aligned (offsets 0/8/16/24) -> cheap slice.
        proj = proj + jnp.dot(ctx_h, wo[lo:lo + head_dim, :],
                              preferred_element_type=jnp.float32)
    return _layernorm(proj, gamma, beta, eps)


def _ffn_block(x, w1, b1, g1, be1, w2, b2, g2, be2, *, eps):
    """Q-Former query FFN: h1 = LN1(x@W1+b1+x); out = LN2(h1@W2+b2+x)."""
    h1 = jnp.dot(x, w1, preferred_element_type=jnp.float32) + b1
    h1 = _layernorm(h1 + x, g1, be1, eps)
    h2 = jnp.dot(h1, w2, preferred_element_type=jnp.float32) + b2
    return _layernorm(h2 + x, g2, be2, eps)


# ----------------------------- fused encoder kernel -----------------------------
def _encoder_kernel(*refs, plan, num_heads, head_dim, eps):
    """Whole Q-Former encoder for one batch element: all layers, all sub-blocks, in VMEM.

    refs = (x_ref, enc_ref, *weight_refs, o_ref); `plan` is a static tuple of has_cross flags.
    """
    x_ref, enc_ref = refs[0], refs[1]
    o_ref = refs[-1]
    w_refs = refs[2:-1]

    x = x_ref[0].astype(jnp.float32)       # (S, D)
    enc = enc_ref[0].astype(jnp.float32)   # (S_enc, D_enc)

    idx = 0

    def take(n):
        nonlocal idx
        vals = tuple(w_refs[i][...].astype(jnp.float32) for i in range(idx, idx + n))
        idx += n
        return vals

    for has_cross in plan:                 # static unroll over layers
        x = _mha_block(x, x, *take(len(_ATTN_KEYS)),
                       num_heads=num_heads, head_dim=head_dim, eps=eps)
        if has_cross:
            x = _mha_block(x, enc, *take(len(_ATTN_KEYS)),
                           num_heads=num_heads, head_dim=head_dim, eps=eps)
        x = _ffn_block(x, *take(len(_FFN_KEYS)), eps=eps)

    o_ref[0] = x.astype(o_ref.dtype)


def _resident_spec(a):
    """Full-array block with a constant index_map -> stays VMEM-resident across grid steps."""
    ndim = a.ndim
    return pl.BlockSpec(a.shape, lambda b: (0,) * ndim)


def qformer_encoder(hidden_states, encoder_hidden_states, layers):
    """Blip2QFormerEncoder.forward (last_hidden_state only), query_length == seq_len.

    One pallas_call for the entire encoder; grid=(B,), batch axis marked "parallel".
    """
    Bb, Sq, D = hidden_states.shape
    _, Senc, Denc = encoder_hidden_states.shape

    plan = []
    flat_w = []
    for lp in layers:
        plan.append(lp['cross_attn'] is not None)
        flat_w += [lp['self_attn'][k] for k in _ATTN_KEYS]
        if lp['cross_attn'] is not None:
            flat_w += [lp['cross_attn'][k] for k in _ATTN_KEYS]
        flat_w += [lp['ffn'][k] for k in _FFN_KEYS]

    kern = functools.partial(_encoder_kernel, plan=tuple(plan),
                             num_heads=NUM_HEADS, head_dim=HEAD_DIM, eps=LN_EPS)

    in_specs = ([pl.BlockSpec((1, Sq, D), lambda b: (b, 0, 0)),
                 pl.BlockSpec((1, Senc, Denc), lambda b: (b, 0, 0))]
                + [_resident_spec(w) for w in flat_w])

    return pl.pallas_call(
        kern,
        out_shape=jax.ShapeDtypeStruct((Bb, Sq, D), hidden_states.dtype),
        grid=(Bb,),
        in_specs=in_specs,
        out_specs=pl.BlockSpec((1, Sq, D), lambda b: (b, 0, 0)),
        compiler_params=pltpu.CompilerParams(
            dimension_semantics=("parallel",),
            vmem_limit_bytes=64 << 20),
    )(hidden_states, encoder_hidden_states, *flat_w)


# ----------------------------- pure-JAX reference (for sanity check) -----------------------------
def _ln_ref(x, g, b, eps=LN_EPS):
    mu = jnp.mean(x, axis=-1, keepdims=True)
    var = jnp.mean(jnp.square(x - mu), axis=-1, keepdims=True)
    return (x - mu) * jax.lax.rsqrt(var + eps) * g + b


def _attn_ref(x, kv, p):
    q = x @ p['wq'] + p['bq']
    k = kv @ p['wk'] + p['bk']
    v = kv @ p['wv'] + p['bv']
    B_, Sq, D = q.shape
    Skv = k.shape[1]
    qh = q.reshape(B_, Sq, NUM_HEADS, HEAD_DIM).transpose(0, 2, 1, 3)
    kh = k.reshape(B_, Skv, NUM_HEADS, HEAD_DIM).transpose(0, 2, 1, 3)
    vh = v.reshape(B_, Skv, NUM_HEADS, HEAD_DIM).transpose(0, 2, 1, 3)
    s = jnp.einsum('bhqd,bhkd->bhqk', qh, kh) / math.sqrt(HEAD_DIM)
    pr = jax.nn.softmax(s, axis=-1)
    ctx = jnp.einsum('bhqk,bhkd->bhqd', pr, vh).transpose(0, 2, 1, 3).reshape(B_, Sq, D)
    return _ln_ref(ctx @ p['wo'] + p['bo'] + x, p['ln_g'], p['ln_b'])


def _ffn_ref(x, p):
    h1 = _ln_ref(x @ p['w1'] + p['b1'] + x, p['g1'], p['be1'])
    return _ln_ref(h1 @ p['w2'] + p['b2'] + x, p['g2'], p['be2'])


def qformer_encoder_ref(hidden_states, encoder_hidden_states, layers):
    x = hidden_states
    for lp in layers:
        x = _attn_ref(x, x, lp['self_attn'])
        if lp['cross_attn'] is not None:
            x = _attn_ref(x, encoder_hidden_states, lp['cross_attn'])
        x = _ffn_ref(x, lp['ffn'])
    return x


# ----------------------------- deterministic parameter init -----------------------------
def _init_linear(key, din, dout):
    k1, k2 = jax.random.split(key)
    w = 0.02 * jax.random.normal(k1, (din, dout), jnp.float32)   # stored (in, out) == torch weight.T
    b = 0.02 * jax.random.normal(k2, (1, dout), jnp.float32)
    return w, b


def _init_ln(key, d):
    k1, k2 = jax.random.split(key)
    g = 1.0 + 0.1 * jax.random.normal(k1, (1, d), jnp.float32)
    be = 0.1 * jax.random.normal(k2, (1, d), jnp.float32)
    return g, be


def init_params(key):
    layers = []
    lkeys = jax.random.split(key, NUM_LAYERS)
    for i in range(NUM_LAYERS):
        ks = jax.random.split(lkeys[i], 6)

        def attn_params(kk, kv_dim):
            kq, kk_, kv_, ko, kl = jax.random.split(kk, 5)
            wq, bq = _init_linear(kq, HIDDEN, HIDDEN)
            wk, bk = _init_linear(kk_, kv_dim, HIDDEN)
            wv, bv = _init_linear(kv_, kv_dim, HIDDEN)
            wo, bo = _init_linear(ko, HIDDEN, HIDDEN)
            g, be = _init_ln(kl, HIDDEN)
            return dict(wq=wq, bq=bq, wk=wk, bk=bk, wv=wv, bv=bv,
                        wo=wo, bo=bo, ln_g=g, ln_b=be)

        self_attn = attn_params(ks[0], HIDDEN)
        cross_attn = attn_params(ks[1], ENC_HIDDEN) if (i % CROSS_FREQ == 0) else None
        w1, b1 = _init_linear(ks[2], INTERMEDIATE, HIDDEN)   # intermediate_query.dense
        g1, be1 = _init_ln(ks[3], HIDDEN)
        w2, b2 = _init_linear(ks[4], INTERMEDIATE, HIDDEN)   # output_query.dense
        g2, be2 = _init_ln(ks[5], HIDDEN)
        ffn = dict(w1=w1, b1=b1, g1=g1, be1=be1, w2=w2, b2=b2, g2=g2, be2=be2)
        layers.append(dict(self_attn=self_attn, cross_attn=cross_attn, ffn=ffn))
    return layers


# ----------------------------- main -----------------------------
if __name__ == "__main__":
    key = jax.random.PRNGKey(0)
    k_hs, k_enc, k_params = jax.random.split(key, 3)
    hidden_states = jax.random.normal(k_hs, (B, S, HIDDEN), jnp.float32)
    encoder_hidden_states = jax.random.normal(k_enc, (B, S_ENC, ENC_HIDDEN), jnp.float32)
    layers = init_params(k_params)

    out = qformer_encoder(hidden_states, encoder_hidden_states, layers)
    out = jax.block_until_ready(out)
    assert out.shape == (B, S, HIDDEN)

    ref = jax.block_until_ready(qformer_encoder_ref(hidden_states, encoder_hidden_states, layers))
    np.testing.assert_allclose(np.asarray(out), np.asarray(ref), rtol=5e-2, atol=5e-2)

    print("KERNEL_OK")
</pallas_src>

<mosaic_0001>
module attributes {stable_mosaic.version = 11 : i64} {
  func.func @_encoder_kernel(%arg0: i32, %arg1: memref<1x8x32xf32, #tpu.memory_space<vmem>>, %arg2: memref<1x16x48xf32, #tpu.memory_space<vmem>>, %arg3: memref<32x32xf32, #tpu.memory_space<vmem>>, %arg4: memref<1x32xf32, #tpu.memory_space<vmem>>, %arg5: memref<32x32xf32, #tpu.memory_space<vmem>>, %arg6: memref<1x32xf32, #tpu.memory_space<vmem>>, %arg7: memref<32x32xf32, #tpu.memory_space<vmem>>, %arg8: memref<1x32xf32, #tpu.memory_space<vmem>>, %arg9: memref<32x32xf32, #tpu.memory_space<vmem>>, %arg10: memref<1x32xf32, #tpu.memory_space<vmem>>, %arg11: memref<1x32xf32, #tpu.memory_space<vmem>>, %arg12: memref<1x32xf32, #tpu.memory_space<vmem>>, %arg13: memref<32x32xf32, #tpu.memory_space<vmem>>, %arg14: memref<1x32xf32, #tpu.memory_space<vmem>>, %arg15: memref<48x32xf32, #tpu.memory_space<vmem>>, %arg16: memref<1x32xf32, #tpu.memory_space<vmem>>, %arg17: memref<48x32xf32, #tpu.memory_space<vmem>>, %arg18: memref<1x32xf32, #tpu.memory_space<vmem>>, %arg19: memref<32x32xf32, #tpu.memory_space<vmem>>, %arg20: memref<1x32xf32, #tpu.memory_space<vmem>>, %arg21: memref<1x32xf32, #tpu.memory_space<vmem>>, %arg22: memref<1x32xf32, #tpu.memory_space<vmem>>, %arg23: memref<32x32xf32, #tpu.memory_space<vmem>>, %arg24: memref<1x32xf32, #tpu.memory_space<vmem>>, %arg25: memref<1x32xf32, #tpu.memory_space<vmem>>, %arg26: memref<1x32xf32, #tpu.memory_space<vmem>>, %arg27: memref<32x32xf32, #tpu.memory_space<vmem>>, %arg28: memref<1x32xf32, #tpu.memory_space<vmem>>, %arg29: memref<1x32xf32, #tpu.memory_space<vmem>>, %arg30: memref<1x32xf32, #tpu.memory_space<vmem>>, %arg31: memref<32x32xf32, #tpu.memory_space<vmem>>, %arg32: memref<1x32xf32, #tpu.memory_space<vmem>>, %arg33: memref<32x32xf32, #tpu.memory_space<vmem>>, %arg34: memref<1x32xf32, #tpu.memory_space<vmem>>, %arg35: memref<32x32xf32, #tpu.memory_space<vmem>>, %arg36: memref<1x32xf32, #tpu.memory_space<vmem>>, %arg37: memref<32x32xf32, #tpu.memory_space<vmem>>, %arg38: memref<1x32xf32, #tpu.memory_space<vmem>>, %arg39: memref<1x32xf32, #tpu.memory_space<vmem>>, %arg40: memref<1x32xf32, #tpu.memory_space<vmem>>, %arg41: memref<32x32xf32, #tpu.memory_space<vmem>>, %arg42: memref<1x32xf32, #tpu.memory_space<vmem>>, %arg43: memref<1x32xf32, #tpu.memory_space<vmem>>, %arg44: memref<1x32xf32, #tpu.memory_space<vmem>>, %arg45: memref<32x32xf32, #tpu.memory_space<vmem>>, %arg46: memref<1x32xf32, #tpu.memory_space<vmem>>, %arg47: memref<1x32xf32, #tpu.memory_space<vmem>>, %arg48: memref<1x32xf32, #tpu.memory_space<vmem>>, %arg49: memref<1x8x32xf32, #tpu.memory_space<vmem>>) attributes {dimension_semantics = [#tpu.dimension_semantics<parallel>], iteration_bounds = array<i64: 2>, scalar_prefetch = 0 : i64, scratch_operands = 0 : i64, tpu.core_type = #tpu.core_type<tc>, window_params = [{transform_indices = @transform_0, window_bounds = array<i64: 1, 8, 32>}, {transform_indices = @transform_1, window_bounds = array<i64: 1, 16, 48>}, {pipeline_mode = #tpu.pipeline_mode<synchronous>, transform_indices = @transform_2, window_bounds = array<i64: 32, 32>}, {pipeline_mode = #tpu.pipeline_mode<synchronous>, transform_indices = @transform_3, window_bounds = array<i64: 1, 32>}, {pipeline_mode = #tpu.pipeline_mode<synchronous>, transform_indices = @transform_4, window_bounds = array<i64: 32, 32>}, {pipeline_mode = #tpu.pipeline_mode<synchronous>, transform_indices = @transform_5, window_bounds = array<i64: 1, 32>}, {pipeline_mode = #tpu.pipeline_mode<synchronous>, transform_indices = @transform_6, window_bounds = array<i64: 32, 32>}, {pipeline_mode = #tpu.pipeline_mode<synchronous>, transform_indices = @transform_7, window_bounds = array<i64: 1, 32>}, {pipeline_mode = #tpu.pipeline_mode<synchronous>, transform_indices = @transform_8, window_bounds = array<i64: 32, 32>}, {pipeline_mode = #tpu.pipeline_mode<synchronous>, transform_indices = @transform_9, window_bounds = array<i64: 1, 32>}, {pipeline_mode = #tpu.pipeline_mode<synchronous>, transform_indices = @transform_10, window_bounds = array<i64: 1, 32>}, {pipeline_mode = #tpu.pipeline_mode<synchronous>, transform_indices = @transform_11, window_bounds = array<i64: 1, 32>}, {pipeline_mode = #tpu.pipeline_mode<synchronous>, transform_indices = @transform_12, window_bounds = array<i64: 32, 32>}, {pipeline_mode = #tpu.pipeline_mode<synchronous>, transform_indices = @transform_13, window_bounds = array<i64: 1, 32>}, {pipeline_mode = #tpu.pipeline_mode<synchronous>, transform_indices = @transform_14, window_bounds = array<i64: 48, 32>}, {pipeline_mode = #tpu.pipeline_mode<synchronous>, transform_indices = @transform_15, window_bounds = array<i64: 1, 32>}, {pipeline_mode = #tpu.pipeline_mode<synchronous>, transform_indices = @transform_16, window_bounds = array<i64: 48, 32>}, {pipeline_mode = #tpu.pipeline_mode<synchronous>, transform_indices = @transform_17, window_bounds = array<i64: 1, 32>}, {pipeline_mode = #tpu.pipeline_mode<synchronous>, transform_indices = @transform_18, window_bounds = array<i64: 32, 32>}, {pipeline_mode = #tpu.pipeline_mode<synchronous>, transform_indices = @transform_19, window_bounds = array<i64: 1, 32>}, {pipeline_mode = #tpu.pipeline_mode<synchronous>, transform_indices = @transform_20, window_bounds = array<i64: 1, 32>}, {pipeline_mode = #tpu.pipeline_mode<synchronous>, transform_indices = @transform_21, window_bounds = array<i64: 1, 32>}, {pipeline_mode = #tpu.pipeline_mode<synchronous>, transform_indices = @transform_22, window_bounds = array<i64: 32, 32>}, {pipeline_mode = #tpu.pipeline_mode<synchronous>, transform_indices = @transform_23, window_bounds = array<i64: 1, 32>}, {pipeline_mode = #tpu.pipeline_mode<synchronous>, transform_indices = @transform_24, window_bounds = array<i64: 1, 32>}, {pipeline_mode = #tpu.pipeline_mode<synchronous>, transform_indices = @transform_25, window_bounds = array<i64: 1, 32>}, {pipeline_mode = #tpu.pipeline_mode<synchronous>, transform_indices = @transform_26, window_bounds = array<i64: 32, 32>}, {pipeline_mode = #tpu.pipeline_mode<synchronous>, transform_indices = @transform_27, window_bounds = array<i64: 1, 32>}, {pipeline_mode = #tpu.pipeline_mode<synchronous>, transform_indices = @transform_28, window_bounds = array<i64: 1, 32>}, {pipeline_mode = #tpu.pipeline_mode<synchronous>, transform_indices = @transform_29, window_bounds = array<i64: 1, 32>}, {pipeline_mode = #tpu.pipeline_mode<synchronous>, transform_indices = @transform_30, window_bounds = array<i64: 32, 32>}, {pipeline_mode = #tpu.pipeline_mode<synchronous>, transform_indices = @transform_31, window_bounds = array<i64: 1, 32>}, {pipeline_mode = #tpu.pipeline_mode<synchronous>, transform_indices = @transform_32, window_bounds = array<i64: 32, 32>}, {pipeline_mode = #tpu.pipeline_mode<synchronous>, transform_indices = @transform_33, window_bounds = array<i64: 1, 32>}, {pipeline_mode = #tpu.pipeline_mode<synchronous>, transform_indices = @transform_34, window_bounds = array<i64: 32, 32>}, {pipeline_mode = #tpu.pipeline_mode<synchronous>, transform_indices = @transform_35, window_bounds = array<i64: 1, 32>}, {pipeline_mode = #tpu.pipeline_mode<synchronous>, transform_indices = @transform_36, window_bounds = array<i64: 32, 32>}, {pipeline_mode = #tpu.pipeline_mode<synchronous>, transform_indices = @transform_37, window_bounds = array<i64: 1, 32>}, {pipeline_mode = #tpu.pipeline_mode<synchronous>, transform_indices = @transform_38, window_bounds = array<i64: 1, 32>}, {pipeline_mode = #tpu.pipeline_mode<synchronous>, transform_indices = @transform_39, window_bounds = array<i64: 1, 32>}, {pipeline_mode = #tpu.pipeline_mode<synchronous>, transform_indices = @transform_40, window_bounds = array<i64: 32, 32>}, {pipeline_mode = #tpu.pipeline_mode<synchronous>, transform_indices = @transform_41, window_bounds = array<i64: 1, 32>}, {pipeline_mode = #tpu.pipeline_mode<synchronous>, transform_indices = @transform_42, window_bounds = array<i64: 1, 32>}, {pipeline_mode = #tpu.pipeline_mode<synchronous>, transform_indices = @transform_43, window_bounds = array<i64: 1, 32>}, {pipeline_mode = #tpu.pipeline_mode<synchronous>, transform_indices = @transform_44, window_bounds = array<i64: 32, 32>}, {pipeline_mode = #tpu.pipeline_mode<synchronous>, transform_indices = @transform_45, window_bounds = array<i64: 1, 32>}, {pipeline_mode = #tpu.pipeline_mode<synchronous>, transform_indices = @transform_46, window_bounds = array<i64: 1, 32>}, {pipeline_mode = #tpu.pipeline_mode<synchronous>, transform_indices = @transform_47, window_bounds = array<i64: 1, 32>}, {transform_indices = @transform_48, window_bounds = array<i64: 1, 8, 32>}]} {
    %c0 = arith.constant 0 : index
    %c0_0 = arith.constant 0 : index
    %c0_1 = arith.constant 0 : index
    %0 = vector.load %arg1[%c0, %c0_0, %c0_1] : memref<1x8x32xf32, #tpu.memory_space<vmem>>, vector<1x8x32xf32>
    %1 = vector.shape_cast %0 : vector<1x8x32xf32> to vector<8x32xf32>
    %c0_2 = arith.constant 0 : index
    %c0_3 = arith.constant 0 : index
    %c0_4 = arith.constant 0 : index
    %2 = vector.load %arg2[%c0_2, %c0_3, %c0_4] : memref<1x16x48xf32, #tpu.memory_space<vmem>>, vector<1x16x48xf32>
    %3 = vector.shape_cast %2 : vector<1x16x48xf32> to vector<16x48xf32>
    %c0_5 = arith.constant 0 : index
    %c0_6 = arith.constant 0 : index
    %4 = vector.load %arg3[%c0_5, %c0_6] : memref<32x32xf32, #tpu.memory_space<vmem>>, vector<32x32xf32>
    %c0_7 = arith.constant 0 : index
    %c0_8 = arith.constant 0 : index
    %5 = vector.load %arg4[%c0_7, %c0_8] : memref<1x32xf32, #tpu.memory_space<vmem>>, vector<1x32xf32>
    %c0_9 = arith.constant 0 : index
    %c0_10 = arith.constant 0 : index
    %6 = vector.load %arg5[%c0_9, %c0_10] : memref<32x32xf32, #tpu.memory_space<vmem>>, vector<32x32xf32>
    %c0_11 = arith.constant 0 : index
    %c0_12 = arith.constant 0 : index
    %7 = vector.load %arg6[%c0_11, %c0_12] : memref<1x32xf32, #tpu.memory_space<vmem>>, vector<1x32xf32>
    %c0_13 = arith.constant 0 : index
    %c0_14 = arith.constant 0 : index
    %8 = vector.load %arg7[%c0_13, %c0_14] : memref<32x32xf32, #tpu.memory_space<vmem>>, vector<32x32xf32>
    %c0_15 = arith.constant 0 : index
    %c0_16 = arith.constant 0 : index
    %9 = vector.load %arg8[%c0_15, %c0_16] : memref<1x32xf32, #tpu.memory_space<vmem>>, vector<1x32xf32>
    %c0_17 = arith.constant 0 : index
    %c0_18 = arith.constant 0 : index
    %10 = vector.load %arg9[%c0_17, %c0_18] : memref<32x32xf32, #tpu.memory_space<vmem>>, vector<32x32xf32>
    %c0_19 = arith.constant 0 : index
    %c0_20 = arith.constant 0 : index
    %11 = vector.load %arg10[%c0_19, %c0_20] : memref<1x32xf32, #tpu.memory_space<vmem>>, vector<1x32xf32>
    %c0_21 = arith.constant 0 : index
    %c0_22 = arith.constant 0 : index
    %12 = vector.load %arg11[%c0_21, %c0_22] : memref<1x32xf32, #tpu.memory_space<vmem>>, vector<1x32xf32>
    %c0_23 = arith.constant 0 : index
    %c0_24 = arith.constant 0 : index
    %13 = vector.load %arg12[%c0_23, %c0_24] : memref<1x32xf32, #tpu.memory_space<vmem>>, vector<1x32xf32>
    %cst = arith.constant dense<0.000000e+00> : vector<8x32xf32>
    %14 = tpu.matmul %1, %4, %cst {dimension_numbers = #tpu.dot_dimension_numbers<[1], [0], [0], [1], [0, 0, 1, 1], [], []>} : vector<8x32xf32>, vector<32x32xf32>, vector<8x32xf32> -> vector<8x32xf32>
    %15 = vector.broadcast %5 : vector<1x32xf32> to vector<8x32xf32>
    %16 = arith.addf %14, %15 : vector<8x32xf32>
    %cst_25 = arith.constant 0.353553385 : f32
    %17 = vector.broadcast %cst_25 : f32 to vector<8x32xf32>
    %18 = arith.mulf %16, %17 : vector<8x32xf32>
    %cst_26 = arith.constant dense<0.000000e+00> : vector<8x32xf32>
    %19 = tpu.matmul %1, %6, %cst_26 {dimension_numbers = #tpu.dot_dimension_numbers<[1], [0], [0], [1], [0, 0, 1, 1], [], []>} : vector<8x32xf32>, vector<32x32xf32>, vector<8x32xf32> -> vector<8x32xf32>
    %20 = vector.broadcast %7 : vector<1x32xf32> to vector<8x32xf32>
    %21 = arith.addf %19, %20 : vector<8x32xf32>
    %cst_27 = arith.constant dense<0.000000e+00> : vector<8x32xf32>
    %22 = tpu.matmul %1, %8, %cst_27 {dimension_numbers = #tpu.dot_dimension_numbers<[1], [0], [0], [1], [0, 0, 1, 1], [], []>} : vector<8x32xf32>, vector<32x32xf32>, vector<8x32xf32> -> vector<8x32xf32>
    %23 = vector.broadcast %9 : vector<1x32xf32> to vector<8x32xf32>
    %24 = arith.addf %22, %23 : vector<8x32xf32>
    %25 = vector.broadcast %11 : vector<1x32xf32> to vector<8x32xf32>
    %26 = arith.addf %1, %25 : vector<8x32xf32>
    %27 = vector.extract_strided_slice %18 {offsets = [0, 0], sizes = [8, 8], strides = [1, 1]} : vector<8x32xf32> to vector<8x8xf32>
    %28 = vector.extract_strided_slice %21 {offsets = [0, 0], sizes = [8, 8], strides = [1, 1]} : vector<8x32xf32> to vector<8x8xf32>
    %29 = vector.extract_strided_slice %24 {offsets = [0, 0], sizes = [8, 8], strides = [1, 1]} : vector<8x32xf32> to vector<8x8xf32>
    %cst_28 = arith.constant dense<0.000000e+00> : vector<8x8xf32>
    %30 = tpu.matmul %27, %28, %cst_28 {dimension_numbers = #tpu.dot_dimension_numbers<[1], [1], [0], [0], [0, 0, 1, 0], [], []>} : vector<8x8xf32>, vector<8x8xf32>, vector<8x8xf32> -> vector<8x8xf32>
    %cst_29 = arith.constant dense<0xFF800000> : vector<8xf32>
    %31 = vector.multi_reduction <maximumf>, %30, %cst_29 [1] : vector<8x8xf32> to vector<8xf32>
    %32 = vector.shape_cast %31 : vector<8xf32> to vector<8x1xf32>
    %33 = vector.broadcast %32 : vector<8x1xf32> to vector<8x8xf32>
    %34 = arith.subf %30, %33 : vector<8x8xf32>
    %35 = math.exp %34 : vector<8x8xf32>
    %cst_30 = arith.constant dense<0.000000e+00> : vector<8xf32>
    %36 = vector.multi_reduction <add>, %35, %cst_30 [1] : vector<8x8xf32> to vector<8xf32>
    %37 = vector.shape_cast %36 : vector<8xf32> to vector<8x1xf32>
    %38 = tpu.reciprocal %37 {approx = true} : vector<8x1xf32> -> vector<8x1xf32>
    %39 = vector.broadcast %38 : vector<8x1xf32> to vector<8x8xf32>
    %40 = arith.mulf %35, %39 : vector<8x8xf32>
    %cst_31 = arith.constant dense<0.000000e+00> : vector<8x8xf32>
    %41 = tpu.matmul %40, %29, %cst_31 {dimension_numbers = #tpu.dot_dimension_numbers<[1], [0], [0], [1], [0, 0, 1, 1], [], []>} : vector<8x8xf32>, vector<8x8xf32>, vector<8x8xf32> -> vector<8x8xf32>
    %42 = vector.extract_strided_slice %10 {offsets = [0, 0], sizes = [8, 32], strides = [1, 1]} : vector<32x32xf32> to vector<8x32xf32>
    %cst_32 = arith.constant dense<0.000000e+00> : vector<8x32xf32>
    %43 = tpu.matmul %41, %42, %cst_32 {dimension_numbers = #tpu.dot_dimension_numbers<[1], [0], [0], [1], [0, 0, 1, 1], [], []>} : vector<8x8xf32>, vector<8x32xf32>, vector<8x32xf32> -> vector<8x32xf32>
    %44 = arith.addf %26, %43 : vector<8x32xf32>
    %45 = vector.extract_strided_slice %18 {offsets = [0, 8], sizes = [8, 8], strides = [1, 1]} : vector<8x32xf32> to vector<8x8xf32>
    %46 = vector.extract_strided_slice %21 {offsets = [0, 8], sizes = [8, 8], strides = [1, 1]} : vector<8x32xf32> to vector<8x8xf32>
    %47 = vector.extract_strided_slice %24 {offsets = [0, 8], sizes = [8, 8], strides = [1, 1]} : vector<8x32xf32> to vector<8x8xf32>
    %cst_33 = arith.constant dense<0.000000e+00> : vector<8x8xf32>
    %48 = tpu.matmul %45, %46, %cst_33 {dimension_numbers = #tpu.dot_dimension_numbers<[1], [1], [0], [0], [0, 0, 1, 0], [], []>} : vector<8x8xf32>, vector<8x8xf32>, vector<8x8xf32> -> vector<8x8xf32>
    %cst_34 = arith.constant dense<0xFF800000> : vector<8xf32>
    %49 = vector.multi_reduction <maximumf>, %48, %cst_34 [1] : vector<8x8xf32> to vector<8xf32>
    %50 = vector.shape_cast %49 : vector<8xf32> to vector<8x1xf32>
    %51 = vector.broadcast %50 : vector<8x1xf32> to vector<8x8xf32>
    %52 = arith.subf %48, %51 : vector<8x8xf32>
    %53 = math.exp %52 : vector<8x8xf32>
    %cst_35 = arith.constant dense<0.000000e+00> : vector<8xf32>
    %54 = vector.multi_reduction <add>, %53, %cst_35 [1] : vector<8x8xf32> to vector<8xf32>
    %55 = vector.shape_cast %54 : vector<8xf32> to vector<8x1xf32>
    %56 = tpu.reciprocal %55 {approx = true} : vector<8x1xf32> -> vector<8x1xf32>
    %57 = vector.broadcast %56 : vector<8x1xf32> to vector<8x8xf32>
    %58 = arith.mulf %53, %57 : vector<8x8xf32>
    %cst_36 = arith.constant dense<0.000000e+00> : vector<8x8xf32>
    %59 = tpu.matmul %58, %47, %cst_36 {dimension_numbers = #tpu.dot_dimension_numbers<[1], [0], [0], [1], [0, 0, 1, 1], [], []>} : vector<8x8xf32>, vector<8x8xf32>, vector<8x8xf32> -> vector<8x8xf32>
    %60 = vector.extract_strided_slice %10 {offsets = [8, 0], sizes = [8, 32], strides = [1, 1]} : vector<32x32xf32> to vector<8x32xf32>
    %cst_37 = arith.constant dense<0.000000e+00> : vector<8x32xf32>
    %61 = tpu.matmul %59, %60, %cst_37 {dimension_numbers = #tpu.dot_dimension_numbers<[1], [0], [0], [1], [0, 0, 1, 1], [], []>} : vector<8x8xf32>, vector<8x32xf32>, vector<8x32xf32> -> vector<8x32xf32>
    %62 = arith.addf %44, %61 : vector<8x32xf32>
    %63 = vector.extract_strided_slice %18 {offsets = [0, 16], sizes = [8, 8], strides = [1, 1]} : vector<8x32xf32> to vector<8x8xf32>
    %64 = vector.extract_strided_slice %21 {offsets = [0, 16], sizes = [8, 8], strides = [1, 1]} : vector<8x32xf32> to vector<8x8xf32>
    %65 = vector.extract_strided_slice %24 {offsets = [0, 16], sizes = [8, 8], strides = [1, 1]} : vector<8x32xf32> to vector<8x8xf32>
    %cst_38 = arith.constant dense<0.000000e+00> : vector<8x8xf32>
    %66 = tpu.matmul %63, %64, %cst_38 {dimension_numbers = #tpu.dot_dimension_numbers<[1], [1], [0], [0], [0, 0, 1, 0], [], []>} : vector<8x8xf32>, vector<8x8xf32>, vector<8x8xf32> -> vector<8x8xf32>
    %cst_39 = arith.constant dense<0xFF800000> : vector<8xf32>
    %67 = vector.multi_reduction <maximumf>, %66, %cst_39 [1] : vector<8x8xf32> to vector<8xf32>
    %68 = vector.shape_cast %67 : vector<8xf32> to vector<8x1xf32>
    %69 = vector.broadcast %68 : vector<8x1xf32> to vector<8x8xf32>
    %70 = arith.subf %66, %69 : vector<8x8xf32>
    %71 = math.exp %70 : vector<8x8xf32>
    %cst_40 = arith.constant dense<0.000000e+00> : vector<8xf32>
    %72 = vector.multi_reduction <add>, %71, %cst_40 [1] : vector<8x8xf32> to vector<8xf32>
    %73 = vector.shape_cast %72 : vector<8xf32> to vector<8x1xf32>
    %74 = tpu.reciprocal %73 {approx = true} : vector<8x1xf32> -> vector<8x1xf32>
    %75 = vector.broadcast %74 : vector<8x1xf32> to vector<8x8xf32>
    %76 = arith.mulf %71, %75 : vector<8x8xf32>
    %cst_41 = arith.constant dense<0.000000e+00> : vector<8x8xf32>
    %77 = tpu.matmul %76, %65, %cst_41 {dimension_numbers = #tpu.dot_dimension_numbers<[1], [0], [0], [1], [0, 0, 1, 1], [], []>} : vector<8x8xf32>, vector<8x8xf32>, vector<8x8xf32> -> vector<8x8xf32>
    %78 = vector.extract_strided_slice %10 {offsets = [16, 0], sizes = [8, 32], strides = [1, 1]} : vector<32x32xf32> to vector<8x32xf32>
    %cst_42 = arith.constant dense<0.000000e+00> : vector<8x32xf32>
    %79 = tpu.matmul %77, %78, %cst_42 {dimension_numbers = #tpu.dot_dimension_numbers<[1], [0], [0], [1], [0, 0, 1, 1], [], []>} : vector<8x8xf32>, vector<8x32xf32>, vector<8x32xf32> -> vector<8x32xf32>
    %80 = arith.addf %62, %79 : vector<8x32xf32>
    %81 = vector.extract_strided_slice %18 {offsets = [0, 24], sizes = [8, 8], strides = [1, 1]} : vector<8x32xf32> to vector<8x8xf32>
    %82 = vector.extract_strided_slice %21 {offsets = [0, 24], sizes = [8, 8], strides = [1, 1]} : vector<8x32xf32> to vector<8x8xf32>
    %83 = vector.extract_strided_slice %24 {offsets = [0, 24], sizes = [8, 8], strides = [1, 1]} : vector<8x32xf32> to vector<8x8xf32>
    %cst_43 = arith.constant dense<0.000000e+00> : vector<8x8xf32>
    %84 = tpu.matmul %81, %82, %cst_43 {dimension_numbers = #tpu.dot_dimension_numbers<[1], [1], [0], [0], [0, 0, 1, 0], [], []>} : vector<8x8xf32>, vector<8x8xf32>, vector<8x8xf32> -> vector<8x8xf32>
    %cst_44 = arith.constant dense<0xFF800000> : vector<8xf32>
    %85 = vector.multi_reduction <maximumf>, %84, %cst_44 [1] : vector<8x8xf32> to vector<8xf32>
    %86 = vector.shape_cast %85 : vector<8xf32> to vector<8x1xf32>
    %87 = vector.broadcast %86 : vector<8x1xf32> to vector<8x8xf32>
    %88 = arith.subf %84, %87 : vector<8x8xf32>
    %89 = math.exp %88 : vector<8x8xf32>
    %cst_45 = arith.constant dense<0.000000e+00> : vector<8xf32>
    %90 = vector.multi_reduction <add>, %89, %cst_45 [1] : vector<8x8xf32> to vector<8xf32>
    %91 = vector.shape_cast %90 : vector<8xf32> to vector<8x1xf32>
    %92 = tpu.reciprocal %91 {approx = true} : vector<8x1xf32> -> vector<8x1xf32>
    %93 = vector.broadcast %92 : vector<8x1xf32> to vector<8x8xf32>
    %94 = arith.mulf %89, %93 : vector<8x8xf32>
    %cst_46 = arith.constant dense<0.000000e+00> : vector<8x8xf32>
    %95 = tpu.matmul %94, %83, %cst_46 {dimension_numbers = #tpu.dot_dimension_numbers<[1], [0], [0], [1], [0, 0, 1, 1], [], []>} : vector<8x8xf32>, vector<8x8xf32>, vector<8x8xf32> -> vector<8x8xf32>
    %96 = vector.extract_strided_slice %10 {offsets = [24, 0], sizes = [8, 32], strides = [1, 1]} : vector<32x32xf32> to vector<8x32xf32>
    %cst_47 = arith.constant dense<0.000000e+00> : vector<8x32xf32>
    %97 = tpu.matmul %95, %96, %cst_47 {dimension_numbers = #tpu.dot_dimension_numbers<[1], [0], [0], [1], [0, 0, 1, 1], [], []>} : vector<8x8xf32>, vector<8x32xf32>, vector<8x32xf32> -> vector<8x32xf32>
    %98 = arith.addf %80, %97 : vector<8x32xf32>
    %cst_48 = arith.constant dense<0.000000e+00> : vector<8xf32>
    %99 = vector.multi_reduction <add>, %98, %cst_48 [1] : vector<8x32xf32> to vector<8xf32>
    %100 = vector.shape_cast %99 : vector<8xf32> to vector<8x1xf32>
    %cst_49 = arith.constant 3.200000e+01 : f32
    %101 = vector.broadcast %cst_49 : f32 to vector<8x1xf32>
    %102 = arith.divf %100, %101 : vector<8x1xf32>
    %103 = vector.broadcast %102 : vector<8x1xf32> to vector<8x32xf32>
    %104 = arith.subf %98, %103 : vector<8x32xf32>
    %105 = arith.mulf %104, %104 : vector<8x32xf32>
    %cst_50 = arith.constant dense<0.000000e+00> : vector<8xf32>
    %106 = vector.multi_reduction <add>, %105, %cst_50 [1] : vector<8x32xf32> to vector<8xf32>
    %107 = vector.shape_cast %106 : vector<8xf32> to vector<8x1xf32>
    %cst_51 = arith.constant 3.200000e+01 : f32
    %108 = vector.broadcast %cst_51 : f32 to vector<8x1xf32>
    %109 = arith.divf %107, %108 : vector<8x1xf32>
    %110 = vector.broadcast %102 : vector<8x1xf32> to vector<8x32xf32>
    %111 = arith.subf %98, %110 : vector<8x32xf32>
    %cst_52 = arith.constant 9.99999996E-13 : f32
    %112 = vector.broadcast %cst_52 : f32 to vector<8x1xf32>
    %113 = arith.addf %109, %112 : vector<8x1xf32>
    %114 = math.rsqrt %113 : vector<8x1xf32>
    %115 = vector.broadcast %114 : vector<8x1xf32> to vector<8x32xf32>
    %116 = arith.mulf %111, %115 : vector<8x32xf32>
    %117 = vector.broadcast %12 : vector<1x32xf32> to vector<8x32xf32>
    %118 = arith.mulf %116, %117 : vector<8x32xf32>
    %119 = vector.broadcast %13 : vector<1x32xf32> to vector<8x32xf32>
    %120 = arith.addf %118, %119 : vector<8x32xf32>
    %c0_53 = arith.constant 0 : index
    %c0_54 = arith.constant 0 : index
    %121 = vector.load %arg13[%c0_53, %c0_54] : memref<32x32xf32, #tpu.memory_space<vmem>>, vector<32x32xf32>
    %c0_55 = arith.constant 0 : index
    %c0_56 = arith.constant 0 : index
    %122 = vector.load %arg14[%c0_55, %c0_56] : memref<1x32xf32, #tpu.memory_space<vmem>>, vector<1x32xf32>
    %c0_57 = arith.constant 0 : index
    %c0_58 = arith.constant 0 : index
    %123 = vector.load %arg15[%c0_57, %c0_58] : memref<48x32xf32, #tpu.memory_space<vmem>>, vector<48x32xf32>
    %c0_59 = arith.constant 0 : index
    %c0_60 = arith.constant 0 : index
    %124 = vector.load %arg16[%c0_59, %c0_60] : memref<1x32xf32, #tpu.memory_space<vmem>>, vector<1x32xf32>
    %c0_61 = arith.constant 0 : index
    %c0_62 = arith.constant 0 : index
    %125 = vector.load %arg17[%c0_61, %c0_62] : memref<48x32xf32, #tpu.memory_space<vmem>>, vector<48x32xf32>
    %c0_63 = arith.constant 0 : index
    %c0_64 = arith.constant 0 : index
    %126 = vector.load %arg18[%c0_63, %c0_64] : memref<1x32xf32, #tpu.memory_space<vmem>>, vector<1x32xf32>
    %c0_65 = arith.constant 0 : index
    %c0_66 = arith.constant 0 : index
    %127 = vector.load %arg19[%c0_65, %c0_66] : memref<32x32xf32, #tpu.memory_space<vmem>>, vector<32x32xf32>
    %c0_67 = arith.constant 0 : index
    %c0_68 = arith.constant 0 : index
    %128 = vector.load %arg20[%c0_67, %c0_68] : memref<1x32xf32, #tpu.memory_space<vmem>>, vector<1x32xf32>
    %c0_69 = arith.constant 0 : index
    %c0_70 = arith.constant 0 : index
    %129 = vector.load %arg21[%c0_69, %c0_70] : memref<1x32xf32, #tpu.memory_space<vmem>>, vector<1x32xf32>
    %c0_71 = arith.constant 0 : index
    %c0_72 = arith.constant 0 : index
    %130 = vector.load %arg22[%c0_71, %c0_72] : memref<1x32xf32, #tpu.memory_space<vmem>>, vector<1x32xf32>
    %cst_73 = arith.constant dense<0.000000e+00> : vector<8x32xf32>
    %131 = tpu.matmul %120, %121, %cst_73 {dimension_numbers = #tpu.dot_dimension_numbers<[1], [0], [0], [1], [0, 0, 1, 1], [], []>} : vector<8x32xf32>, vector<32x32xf32>, vector<8x32xf32> -> vector<8x32xf32>
    %132 = vector.broadcast %122 : vector<1x32xf32> to vector<8x32xf32>
    %133 = arith.addf %131, %132 : vector<8x32xf32>
    %cst_74 = arith.constant 0.353553385 : f32
    %134 = vector.broadcast %cst_74 : f32 to vector<8x32xf32>
    %135 = arith.mulf %133, %134 : vector<8x32xf32>
    %cst_75 = arith.constant dense<0.000000e+00> : vector<16x32xf32>
    %136 = tpu.matmul %3, %123, %cst_75 {dimension_numbers = #tpu.dot_dimension_numbers<[1], [0], [0], [1], [0, 0, 1, 1], [], []>} : vector<16x48xf32>, vector<48x32xf32>, vector<16x32xf32> -> vector<16x32xf32>
    %137 = vector.broadcast %124 : vector<1x32xf32> to vector<16x32xf32>
    %138 = arith.addf %136, %137 : vector<16x32xf32>
    %cst_76 = arith.constant dense<0.000000e+00> : vector<16x32xf32>
    %139 = tpu.matmul %3, %125, %cst_76 {dimension_numbers = #tpu.dot_dimension_numbers<[1], [0], [0], [1], [0, 0, 1, 1], [], []>} : vector<16x48xf32>, vector<48x32xf32>, vector<16x32xf32> -> vector<16x32xf32>
    %140 = vector.broadcast %126 : vector<1x32xf32> to vector<16x32xf32>
    %141 = arith.addf %139, %140 : vector<16x32xf32>
    %142 = vector.broadcast %128 : vector<1x32xf32> to vector<8x32xf32>
    %143 = arith.addf %120, %142 : vector<8x32xf32>
    %144 = vector.extract_strided_slice %135 {offsets = [0, 0], sizes = [8, 8], strides = [1, 1]} : vector<8x32xf32> to vector<8x8xf32>
    %145 = vector.extract_strided_slice %138 {offsets = [0, 0], sizes = [16, 8], strides = [1, 1]} : vector<16x32xf32> to vector<16x8xf32>
    %146 = vector.extract_strided_slice %141 {offsets = [0, 0], sizes = [16, 8], strides = [1, 1]} : vector<16x32xf32> to vector<16x8xf32>
    %cst_77 = arith.constant dense<0.000000e+00> : vector<8x16xf32>
    %147 = tpu.matmul %144, %145, %cst_77 {dimension_numbers = #tpu.dot_dimension_numbers<[1], [1], [0], [0], [0, 0, 1, 0], [], []>} : vector<8x8xf32>, vector<16x8xf32>, vector<8x16xf32> -> vector<8x16xf32>
    %cst_78 = arith.constant dense<0xFF800000> : vector<8xf32>
    %148 = vector.multi_reduction <maximumf>, %147, %cst_78 [1] : vector<8x16xf32> to vector<8xf32>
    %149 = vector.shape_cast %148 : vector<8xf32> to vector<8x1xf32>
    %150 = vector.broadcast %149 : vector<8x1xf32> to vector<8x16xf32>
    %151 = arith.subf %147, %150 : vector<8x16xf32>
    %152 = math.exp %151 : vector<8x16xf32>
    %cst_79 = arith.constant dense<0.000000e+00> : vector<8xf32>
    %153 = vector.multi_reduction <add>, %152, %cst_79 [1] : vector<8x16xf32> to vector<8xf32>
    %154 = vector.shape_cast %153 : vector<8xf32> to vector<8x1xf32>
    %155 = tpu.reciprocal %154 {approx = true} : vector<8x1xf32> -> vector<8x1xf32>
    %156 = vector.broadcast %155 : vector<8x1xf32> to vector<8x16xf32>
    %157 = arith.mulf %152, %156 : vector<8x16xf32>
    %cst_80 = arith.constant dense<0.000000e+00> : vector<8x8xf32>
    %158 = tpu.matmul %157, %146, %cst_80 {dimension_numbers = #tpu.dot_dimension_numbers<[1], [0], [0], [1], [0, 0, 1, 1], [], []>} : vector<8x16xf32>, vector<16x8xf32>, vector<8x8xf32> -> vector<8x8xf32>
    %159 = vector.extract_strided_slice %127 {offsets = [0, 0], sizes = [8, 32], strides = [1, 1]} : vector<32x32xf32> to vector<8x32xf32>
    %cst_81 = arith.constant dense<0.000000e+00> : vector<8x32xf32>
    %160 = tpu.matmul %158, %159, %cst_81 {dimension_numbers = #tpu.dot_dimension_numbers<[1], [0], [0], [1], [0, 0, 1, 1], [], []>} : vector<8x8xf32>, vector<8x32xf32>, vector<8x32xf32> -> vector<8x32xf32>
    %161 = arith.addf %143, %160 : vector<8x32xf32>
    %162 = vector.extract_strided_slice %135 {offsets = [0, 8], sizes = [8, 8], strides = [1, 1]} : vector<8x32xf32> to vector<8x8xf32>
    %163 = vector.extract_strided_slice %138 {offsets = [0, 8], sizes = [16, 8], strides = [1, 1]} : vector<16x32xf32> to vector<16x8xf32>
    %164 = vector.extract_strided_slice %141 {offsets = [0, 8], sizes = [16, 8], strides = [1, 1]} : vector<16x32xf32> to vector<16x8xf32>
    %cst_82 = arith.constant dense<0.000000e+00> : vector<8x16xf32>
    %165 = tpu.matmul %162, %163, %cst_82 {dimension_numbers = #tpu.dot_dimension_numbers<[1], [1], [0], [0], [0, 0, 1, 0], [], []>} : vector<8x8xf32>, vector<16x8xf32>, vector<8x16xf32> -> vector<8x16xf32>
    %cst_83 = arith.constant dense<0xFF800000> : vector<8xf32>
    %166 = vector.multi_reduction <maximumf>, %165, %cst_83 [1] : vector<8x16xf32> to vector<8xf32>
    %167 = vector.shape_cast %166 : vector<8xf32> to vector<8x1xf32>
    %168 = vector.broadcast %167 : vector<8x1xf32> to vector<8x16xf32>
    %169 = arith.subf %165, %168 : vector<8x16xf32>
    %170 = math.exp %169 : vector<8x16xf32>
    %cst_84 = arith.constant dense<0.000000e+00> : vector<8xf32>
    %171 = vector.multi_reduction <add>, %170, %cst_84 [1] : vector<8x16xf32> to vector<8xf32>
    %172 = vector.shape_cast %171 : vector<8xf32> to vector<8x1xf32>
    %173 = tpu.reciprocal %172 {approx = true} : vector<8x1xf32> -> vector<8x1xf32>
    %174 = vector.broadcast %173 : vector<8x1xf32> to vector<8x16xf32>
    %175 = arith.mulf %170, %174 : vector<8x16xf32>
    %cst_85 = arith.constant dense<0.000000e+00> : vector<8x8xf32>
    %176 = tpu.matmul %175, %164, %cst_85 {dimension_numbers = #tpu.dot_dimension_numbers<[1], [0], [0], [1], [0, 0, 1, 1], [], []>} : vector<8x16xf32>, vector<16x8xf32>, vector<8x8xf32> -> vector<8x8xf32>
    %177 = vector.extract_strided_slice %127 {offsets = [8, 0], sizes = [8, 32], strides = [1, 1]} : vector<32x32xf32> to vector<8x32xf32>
    %cst_86 = arith.constant dense<0.000000e+00> : vector<8x32xf32>
    %178 = tpu.matmul %176, %177, %cst_86 {dimension_numbers = #tpu.dot_dimension_numbers<[1], [0], [0], [1], [0, 0, 1, 1], [], []>} : vector<8x8xf32>, vector<8x32xf32>, vector<8x32xf32> -> vector<8x32xf32>
    %179 = arith.addf %161, %178 : vector<8x32xf32>
    %180 = vector.extract_strided_slice %135 {offsets = [0, 16], sizes = [8, 8], strides = [1, 1]} : vector<8x32xf32> to vector<8x8xf32>
    %181 = vector.extract_strided_slice %138 {offsets = [0, 16], sizes = [16, 8], strides = [1, 1]} : vector<16x32xf32> to vector<16x8xf32>
    %182 = vector.extract_strided_slice %141 {offsets = [0, 16], sizes = [16, 8], strides = [1, 1]} : vector<16x32xf32> to vector<16x8xf32>
    %cst_87 = arith.constant dense<0.000000e+00> : vector<8x16xf32>
    %183 = tpu.matmul %180, %181, %cst_87 {dimension_numbers = #tpu.dot_dimension_numbers<[1], [1], [0], [0], [0, 0, 1, 0], [], []>} : vector<8x8xf32>, vector<16x8xf32>, vector<8x16xf32> -> vector<8x16xf32>
    %cst_88 = arith.constant dense<0xFF800000> : vector<8xf32>
    %184 = vector.multi_reduction <maximumf>, %183, %cst_88 [1] : vector<8x16xf32> to vector<8xf32>
    %185 = vector.shape_cast %184 : vector<8xf32> to vector<8x1xf32>
    %186 = vector.broadcast %185 : vector<8x1xf32> to vector<8x16xf32>
    %187 = arith.subf %183, %186 : vector<8x16xf32>
    %188 = math.exp %187 : vector<8x16xf32>
    %cst_89 = arith.constant dense<0.000000e+00> : vector<8xf32>
    %189 = vector.multi_reduction <add>, %188, %cst_89 [1] : vector<8x16xf32> to vector<8xf32>
    %190 = vector.shape_cast %189 : vector<8xf32> to vector<8x1xf32>
    %191 = tpu.reciprocal %190 {approx = true} : vector<8x1xf32> -> vector<8x1xf32>
    %192 = vector.broadcast %191 : vector<8x1xf32> to vector<8x16xf32>
    %193 = arith.mulf %188, %192 : vector<8x16xf32>
    %cst_90 = arith.constant dense<0.000000e+00> : vector<8x8xf32>
    %194 = tpu.matmul %193, %182, %cst_90 {dimension_numbers = #tpu.dot_dimension_numbers<[1], [0], [0], [1], [0, 0, 1, 1], [], []>} : vector<8x16xf32>, vector<16x8xf32>, vector<8x8xf32> -> vector<8x8xf32>
    %195 = vector.extract_strided_slice %127 {offsets = [16, 0], sizes = [8, 32], strides = [1, 1]} : vector<32x32xf32> to vector<8x32xf32>
    %cst_91 = arith.constant dense<0.000000e+00> : vector<8x32xf32>
    %196 = tpu.matmul %194, %195, %cst_91 {dimension_numbers = #tpu.dot_dimension_numbers<[1], [0], [0], [1], [0, 0, 1, 1], [], []>} : vector<8x8xf32>, vector<8x32xf32>, vector<8x32xf32> -> vector<8x32xf32>
    %197 = arith.addf %179, %196 : vector<8x32xf32>
    %198 = vector.extract_strided_slice %135 {offsets = [0, 24], sizes = [8, 8], strides = [1, 1]} : vector<8x32xf32> to vector<8x8xf32>
    %199 = vector.extract_strided_slice %138 {offsets = [0, 24], sizes = [16, 8], strides = [1, 1]} : vector<16x32xf32> to vector<16x8xf32>
    %200 = vector.extract_strided_slice %141 {offsets = [0, 24], sizes = [16, 8], strides = [1, 1]} : vector<16x32xf32> to vector<16x8xf32>
    %cst_92 = arith.constant dense<0.000000e+00> : vector<8x16xf32>
    %201 = tpu.matmul %198, %199, %cst_92 {dimension_numbers = #tpu.dot_dimension_numbers<[1], [1], [0], [0], [0, 0, 1, 0], [], []>} : vector<8x8xf32>, vector<16x8xf32>, vector<8x16xf32> -> vector<8x16xf32>
    %cst_93 = arith.constant dense<0xFF800000> : vector<8xf32>
    %202 = vector.multi_reduction <maximumf>, %201, %cst_93 [1] : vector<8x16xf32> to vector<8xf32>
    %203 = vector.shape_cast %202 : vector<8xf32> to vector<8x1xf32>
    %204 = vector.broadcast %203 : vector<8x1xf32> to vector<8x16xf32>
    %205 = arith.subf %201, %204 : vector<8x16xf32>
    %206 = math.exp %205 : vector<8x16xf32>
    %cst_94 = arith.constant dense<0.000000e+00> : vector<8xf32>
    %207 = vector.multi_reduction <add>, %206, %cst_94 [1] : vector<8x16xf32> to vector<8xf32>
    %208 = vector.shape_cast %207 : vector<8xf32> to vector<8x1xf32>
    %209 = tpu.reciprocal %208 {approx = true} : vector<8x1xf32> -> vector<8x1xf32>
    %210 = vector.broadcast %209 : vector<8x1xf32> to vector<8x16xf32>
    %211 = arith.mulf %206, %210 : vector<8x16xf32>
    %cst_95 = arith.constant dense<0.000000e+00> : vector<8x8xf32>
    %212 = tpu.matmul %211, %200, %cst_95 {dimension_numbers = #tpu.dot_dimension_numbers<[1], [0], [0], [1], [0, 0, 1, 1], [], []>} : vector<8x16xf32>, vector<16x8xf32>, vector<8x8xf32> -> vector<8x8xf32>
    %213 = vector.extract_strided_slice %127 {offsets = [24, 0], sizes = [8, 32], strides = [1, 1]} : vector<32x32xf32> to vector<8x32xf32>
    %cst_96 = arith.constant dense<0.000000e+00> : vector<8x32xf32>
    %214 = tpu.matmul %212, %213, %cst_96 {dimension_numbers = #tpu.dot_dimension_numbers<[1], [0], [0], [1], [0, 0, 1, 1], [], []>} : vector<8x8xf32>, vector<8x32xf32>, vector<8x32xf32> -> vector<8x32xf32>
    %215 = arith.addf %197, %214 : vector<8x32xf32>
    %cst_97 = arith.constant dense<0.000000e+00> : vector<8xf32>
    %216 = vector.multi_reduction <add>, %215, %cst_97 [1] : vector<8x32xf32> to vector<8xf32>
    %217 = vector.shape_cast %216 : vector<8xf32> to vector<8x1xf32>
    %cst_98 = arith.constant 3.200000e+01 : f32
    %218 = vector.broadcast %cst_98 : f32 to vector<8x1xf32>
    %219 = arith.divf %217, %218 : vector<8x1xf32>
    %220 = vector.broadcast %219 : vector<8x1xf32> to vector<8x32xf32>
    %221 = arith.subf %215, %220 : vector<8x32xf32>
    %222 = arith.mulf %221, %221 : vector<8x32xf32>
    %cst_99 = arith.constant dense<0.000000e+00> : vector<8xf32>
    %223 = vector.multi_reduction <add>, %222, %cst_99 [1] : vector<8x32xf32> to vector<8xf32>
    %224 = vector.shape_cast %223 : vector<8xf32> to vector<8x1xf32>
    %cst_100 = arith.constant 3.200000e+01 : f32
    %225 = vector.broadcast %cst_100 : f32 to vector<8x1xf32>
    %226 = arith.divf %224, %225 : vector<8x1xf32>
    %227 = vector.broadcast %219 : vector<8x1xf32> to vector<8x32xf32>
    %228 = arith.subf %215, %227 : vector<8x32xf32>
    %cst_101 = arith.constant 9.99999996E-13 : f32
    %229 = vector.broadcast %cst_101 : f32 to vector<8x1xf32>
    %230 = arith.addf %226, %229 : vector<8x1xf32>
    %231 = math.rsqrt %230 : vector<8x1xf32>
    %232 = vector.broadcast %231 : vector<8x1xf32> to vector<8x32xf32>
    %233 = arith.mulf %228, %232 : vector<8x32xf32>
    %234 = vector.broadcast %129 : vector<1x32xf32> to vector<8x32xf32>
    %235 = arith.mulf %233, %234 : vector<8x32xf32>
    %236 = vector.broadcast %130 : vector<1x32xf32> to vector<8x32xf32>
    %237 = arith.addf %235, %236 : vector<8x32xf32>
    %c0_102 = arith.constant 0 : index
    %c0_103 = arith.constant 0 : index
    %238 = vector.load %arg23[%c0_102, %c0_103] : memref<32x32xf32, #tpu.memory_space<vmem>>, vector<32x32xf32>
    %c0_104 = arith.constant 0 : index
    %c0_105 = arith.constant 0 : index
    %239 = vector.load %arg24[%c0_104, %c0_105] : memref<1x32xf32, #tpu.memory_space<vmem>>, vector<1x32xf32>
    %c0_106 = arith.constant 0 : index
    %c0_107 = arith.constant 0 : index
    %240 = vector.load %arg25[%c0_106, %c0_107] : memref<1x32xf32, #tpu.memory_space<vmem>>, vector<1x32xf32>
    %c0_108 = arith.constant 0 : index
    %c0_109 = arith.constant 0 : index
    %241 = vector.load %arg26[%c0_108, %c0_109] : memref<1x32xf32, #tpu.memory_space<vmem>>, vector<1x32xf32>
    %c0_110 = arith.constant 0 : index
    %c0_111 = arith.constant 0 : index
    %242 = vector.load %arg27[%c0_110, %c0_111] : memref<32x32xf32, #tpu.memory_space<vmem>>, vector<32x32xf32>
    %c0_112 = arith.constant 0 : index
    %c0_113 = arith.constant 0 : index
    %243 = vector.load %arg28[%c0_112, %c0_113] : memref<1x32xf32, #tpu.memory_space<vmem>>, vector<1x32xf32>
    %c0_114 = arith.constant 0 : index
    %c0_115 = arith.constant 0 : index
    %244 = vector.load %arg29[%c0_114, %c0_115] : memref<1x32xf32, #tpu.memory_space<vmem>>, vector<1x32xf32>
    %c0_116 = arith.constant 0 : index
    %c0_117 = arith.constant 0 : index
    %245 = vector.load %arg30[%c0_116, %c0_117] : memref<1x32xf32, #tpu.memory_space<vmem>>, vector<1x32xf32>
    %cst_118 = arith.constant dense<0.000000e+00> : vector<8x32xf32>
    %246 = tpu.matmul %237, %238, %cst_118 {dimension_numbers = #tpu.dot_dimension_numbers<[1], [0], [0], [1], [0, 0, 1, 1], [], []>} : vector<8x32xf32>, vector<32x32xf32>, vector<8x32xf32> -> vector<8x32xf32>
    %247 = vector.broadcast %239 : vector<1x32xf32> to vector<8x32xf32>
    %248 = arith.addf %246, %247 : vector<8x32xf32>
    %249 = arith.addf %248, %237 : vector<8x32xf32>
    %cst_119 = arith.constant dense<0.000000e+00> : vector<8xf32>
    %250 = vector.multi_reduction <add>, %249, %cst_119 [1] : vector<8x32xf32> to vector<8xf32>
    %251 = vector.shape_cast %250 : vector<8xf32> to vector<8x1xf32>
    %cst_120 = arith.constant 3.200000e+01 : f32
    %252 = vector.broadcast %cst_120 : f32 to vector<8x1xf32>
    %253 = arith.divf %251, %252 : vector<8x1xf32>
    %254 = vector.broadcast %253 : vector<8x1xf32> to vector<8x32xf32>
    %255 = arith.subf %249, %254 : vector<8x32xf32>
    %256 = arith.mulf %255, %255 : vector<8x32xf32>
    %cst_121 = arith.constant dense<0.000000e+00> : vector<8xf32>
    %257 = vector.multi_reduction <add>, %256, %cst_121 [1] : vector<8x32xf32> to vector<8xf32>
    %258 = vector.shape_cast %257 : vector<8xf32> to vector<8x1xf32>
    %cst_122 = arith.constant 3.200000e+01 : f32
    %259 = vector.broadcast %cst_122 : f32 to vector<8x1xf32>
    %260 = arith.divf %258, %259 : vector<8x1xf32>
    %261 = vector.broadcast %253 : vector<8x1xf32> to vector<8x32xf32>
    %262 = arith.subf %249, %261 : vector<8x32xf32>
    %cst_123 = arith.constant 9.99999996E-13 : f32
    %263 = vector.broadcast %cst_123 : f32 to vector<8x1xf32>
    %264 = arith.addf %260, %263 : vector<8x1xf32>
    %265 = math.rsqrt %264 : vector<8x1xf32>
    %266 = vector.broadcast %265 : vector<8x1xf32> to vector<8x32xf32>
    %267 = arith.mulf %262, %266 : vector<8x32xf32>
    %268 = vector.broadcast %240 : vector<1x32xf32> to vector<8x32xf32>
    %269 = arith.mulf %267, %268 : vector<8x32xf32>
    %270 = vector.broadcast %241 : vector<1x32xf32> to vector<8x32xf32>
    %271 = arith.addf %269, %270 : vector<8x32xf32>
    %cst_124 = arith.constant dense<0.000000e+00> : vector<8x32xf32>
    %272 = tpu.matmul %271, %242, %cst_124 {dimension_numbers = #tpu.dot_dimension_numbers<[1], [0], [0], [1], [0, 0, 1, 1], [], []>} : vector<8x32xf32>, vector<32x32xf32>, vector<8x32xf32> -> vector<8x32xf32>
    %273 = vector.broadcast %243 : vector<1x32xf32> to vector<8x32xf32>
    %274 = arith.addf %272, %273 : vector<8x32xf32>
    %275 = arith.addf %274, %237 : vector<8x32xf32>
    %cst_125 = arith.constant dense<0.000000e+00> : vector<8xf32>
    %276 = vector.multi_reduction <add>, %275, %cst_125 [1] : vector<8x32xf32> to vector<8xf32>
    %277 = vector.shape_cast %276 : vector<8xf32> to vector<8x1xf32>
    %cst_126 = arith.constant 3.200000e+01 : f32
    %278 = vector.broadcast %cst_126 : f32 to vector<8x1xf32>
    %279 = arith.divf %277, %278 : vector<8x1xf32>
    %280 = vector.broadcast %279 : vector<8x1xf32> to vector<8x32xf32>
    %281 = arith.subf %275, %280 : vector<8x32xf32>
    %282 = arith.mulf %281, %281 : vector<8x32xf32>
    %cst_127 = arith.constant dense<0.000000e+00> : vector<8xf32>
    %283 = vector.multi_reduction <add>, %282, %cst_127 [1] : vector<8x32xf32> to vector<8xf32>
    %284 = vector.shape_cast %283 : vector<8xf32> to vector<8x1xf32>
    %cst_128 = arith.constant 3.200000e+01 : f32
    %285 = vector.broadcast %cst_128 : f32 to vector<8x1xf32>
    %286 = arith.divf %284, %285 : vector<8x1xf32>
    %287 = vector.broadcast %279 : vector<8x1xf32> to vector<8x32xf32>
    %288 = arith.subf %275, %287 : vector<8x32xf32>
    %cst_129 = arith.constant 9.99999996E-13 : f32
    %289 = vector.broadcast %cst_129 : f32 to vector<8x1xf32>
    %290 = arith.addf %286, %289 : vector<8x1xf32>
    %291 = math.rsqrt %290 : vector<8x1xf32>
    %292 = vector.broadcast %291 : vector<8x1xf32> to vector<8x32xf32>
    %293 = arith.mulf %288, %292 : vector<8x32xf32>
    %294 = vector.broadcast %244 : vector<1x32xf32> to vector<8x32xf32>
    %295 = arith.mulf %293, %294 : vector<8x32xf32>
    %296 = vector.broadcast %245 : vector<1x32xf32> to vector<8x32xf32>
    %297 = arith.addf %295, %296 : vector<8x32xf32>
    %c0_130 = arith.constant 0 : index
    %c0_131 = arith.constant 0 : index
    %298 = vector.load %arg31[%c0_130, %c0_131] : memref<32x32xf32, #tpu.memory_space<vmem>>, vector<32x32xf32>
    %c0_132 = arith.constant 0 : index
    %c0_133 = arith.constant 0 : index
    %299 = vector.load %arg32[%c0_132, %c0_133] : memref<1x32xf32, #tpu.memory_space<vmem>>, vector<1x32xf32>
    %c0_134 = arith.constant 0 : index
    %c0_135 = arith.constant 0 : index
    %300 = vector.load %arg33[%c0_134, %c0_135] : memref<32x32xf32, #tpu.memory_space<vmem>>, vector<32x32xf32>
    %c0_136 = arith.constant 0 : index
    %c0_137 = arith.constant 0 : index
    %301 = vector.load %arg34[%c0_136, %c0_137] : memref<1x32xf32, #tpu.memory_space<vmem>>, vector<1x32xf32>
    %c0_138 = arith.constant 0 : index
    %c0_139 = arith.constant 0 : index
    %302 = vector.load %arg35[%c0_138, %c0_139] : memref<32x32xf32, #tpu.memory_space<vmem>>, vector<32x32xf32>
    %c0_140 = arith.constant 0 : index
    %c0_141 = arith.constant 0 : index
    %303 = vector.load %arg36[%c0_140, %c0_141] : memref<1x32xf32, #tpu.memory_space<vmem>>, vector<1x32xf32>
    %c0_142 = arith.constant 0 : index
    %c0_143 = arith.constant 0 : index
    %304 = vector.load %arg37[%c0_142, %c0_143] : memref<32x32xf32, #tpu.memory_space<vmem>>, vector<32x32xf32>
    %c0_144 = arith.constant 0 : index
    %c0_145 = arith.constant 0 : index
    %305 = vector.load %arg38[%c0_144, %c0_145] : memref<1x32xf32, #tpu.memory_space<vmem>>, vector<1x32xf32>
    %c0_146 = arith.constant 0 : index
    %c0_147 = arith.constant 0 : index
    %306 = vector.load %arg39[%c0_146, %c0_147] : memref<1x32xf32, #tpu.memory_space<vmem>>, vector<1x32xf32>
    %c0_148 = arith.constant 0 : index
    %c0_149 = arith.constant 0 : index
    %307 = vector.load %arg40[%c0_148, %c0_149] : memref<1x32xf32, #tpu.memory_space<vmem>>, vector<1x32xf32>
    %cst_150 = arith.constant dense<0.000000e+00> : vector<8x32xf32>
    %308 = tpu.matmul %297, %298, %cst_150 {dimension_numbers = #tpu.dot_dimension_numbers<[1], [0], [0], [1], [0, 0, 1, 1], [], []>} : vector<8x32xf32>, vector<32x32xf32>, vector<8x32xf32> -> vector<8x32xf32>
    %309 = vector.broadcast %299 : vector<1x32xf32> to vector<8x32xf32>
    %310 = arith.addf %308, %309 : vector<8x32xf32>
    %cst_151 = arith.constant 0.353553385 : f32
    %311 = vector.broadcast %cst_151 : f32 to vector<8x32xf32>
    %312 = arith.mulf %310, %311 : vector<8x32xf32>
    %cst_152 = arith.constant dense<0.000000e+00> : vector<8x32xf32>
    %313 = tpu.matmul %297, %300, %cst_152 {dimension_numbers = #tpu.dot_dimension_numbers<[1], [0], [0], [1], [0, 0, 1, 1], [], []>} : vector<8x32xf32>, vector<32x32xf32>, vector<8x32xf32> -> vector<8x32xf32>
    %314 = vector.broadcast %301 : vector<1x32xf32> to vector<8x32xf32>
    %315 = arith.addf %313, %314 : vector<8x32xf32>
    %cst_153 = arith.constant dense<0.000000e+00> : vector<8x32xf32>
    %316 = tpu.matmul %297, %302, %cst_153 {dimension_numbers = #tpu.dot_dimension_numbers<[1], [0], [0], [1], [0, 0, 1, 1], [], []>} : vector<8x32xf32>, vector<32x32xf32>, vector<8x32xf32> -> vector<8x32xf32>
    %317 = vector.broadcast %303 : vector<1x32xf32> to vector<8x32xf32>
    %318 = arith.addf %316, %317 : vector<8x32xf32>
    %319 = vector.broadcast %305 : vector<1x32xf32> to vector<8x32xf32>
    %320 = arith.addf %297, %319 : vector<8x32xf32>
    %321 = vector.extract_strided_slice %312 {offsets = [0, 0], sizes = [8, 8], strides = [1, 1]} : vector<8x32xf32> to vector<8x8xf32>
    %322 = vector.extract_strided_slice %315 {offsets = [0, 0], sizes = [8, 8], strides = [1, 1]} : vector<8x32xf32> to vector<8x8xf32>
    %323 = vector.extract_strided_slice %318 {offsets = [0, 0], sizes = [8, 8], strides = [1, 1]} : vector<8x32xf32> to vector<8x8xf32>
    %cst_154 = arith.constant dense<0.000000e+00> : vector<8x8xf32>
    %324 = tpu.matmul %321, %322, %cst_154 {dimension_numbers = #tpu.dot_dimension_numbers<[1], [1], [0], [0], [0, 0, 1, 0], [], []>} : vector<8x8xf32>, vector<8x8xf32>, vector<8x8xf32> -> vector<8x8xf32>
    %cst_155 = arith.constant dense<0xFF800000> : vector<8xf32>
    %325 = vector.multi_reduction <maximumf>, %324, %cst_155 [1] : vector<8x8xf32> to vector<8xf32>
    %326 = vector.shape_cast %325 : vector<8xf32> to vector<8x1xf32>
    %327 = vector.broadcast %326 : vector<8x1xf32> to vector<8x8xf32>
    %328 = arith.subf %324, %327 : vector<8x8xf32>
    %329 = math.exp %328 : vector<8x8xf32>
    %cst_156 = arith.constant dense<0.000000e+00> : vector<8xf32>
    %330 = vector.multi_reduction <add>, %329, %cst_156 [1] : vector<8x8xf32> to vector<8xf32>
    %331 = vector.shape_cast %330 : vector<8xf32> to vector<8x1xf32>
    %332 = tpu.reciprocal %331 {approx = true} : vector<8x1xf32> -> vector<8x1xf32>
    %333 = vector.broadcast %332 : vector<8x1xf32> to vector<8x8xf32>
    %334 = arith.mulf %329, %333 : vector<8x8xf32>
    %cst_157 = arith.constant dense<0.000000e+00> : vector<8x8xf32>
    %335 = tpu.matmul %334, %323, %cst_157 {dimension_numbers = #tpu.dot_dimension_numbers<[1], [0], [0], [1], [0, 0, 1, 1], [], []>} : vector<8x8xf32>, vector<8x8xf32>, vector<8x8xf32> -> vector<8x8xf32>
    %336 = vector.extract_strided_slice %304 {offsets = [0, 0], sizes = [8, 32], strides = [1, 1]} : vector<32x32xf32> to vector<8x32xf32>
    %cst_158 = arith.constant dense<0.000000e+00> : vector<8x32xf32>
    %337 = tpu.matmul %335, %336, %cst_158 {dimension_numbers = #tpu.dot_dimension_numbers<[1], [0], [0], [1], [0, 0, 1, 1], [], []>} : vector<8x8xf32>, vector<8x32xf32>, vector<8x32xf32> -> vector<8x32xf32>
    %338 = arith.addf %320, %337 : vector<8x32xf32>
    %339 = vector.extract_strided_slice %312 {offsets = [0, 8], sizes = [8, 8], strides = [1, 1]} : vector<8x32xf32> to vector<8x8xf32>
    %340 = vector.extract_strided_slice %315 {offsets = [0, 8], sizes = [8, 8], strides = [1, 1]} : vector<8x32xf32> to vector<8x8xf32>
    %341 = vector.extract_strided_slice %318 {offsets = [0, 8], sizes = [8, 8], strides = [1, 1]} : vector<8x32xf32> to vector<8x8xf32>
    %cst_159 = arith.constant dense<0.000000e+00> : vector<8x8xf32>
    %342 = tpu.matmul %339, %340, %cst_159 {dimension_numbers = #tpu.dot_dimension_numbers<[1], [1], [0], [0], [0, 0, 1, 0], [], []>} : vector<8x8xf32>, vector<8x8xf32>, vector<8x8xf32> -> vector<8x8xf32>
    %cst_160 = arith.constant dense<0xFF800000> : vector<8xf32>
    %343 = vector.multi_reduction <maximumf>, %342, %cst_160 [1] : vector<8x8xf32> to vector<8xf32>
    %344 = vector.shape_cast %343 : vector<8xf32> to vector<8x1xf32>
    %345 = vector.broadcast %344 : vector<8x1xf32> to vector<8x8xf32>
    %346 = arith.subf %342, %345 : vector<8x8xf32>
    %347 = math.exp %346 : vector<8x8xf32>
    %cst_161 = arith.constant dense<0.000000e+00> : vector<8xf32>
    %348 = vector.multi_reduction <add>, %347, %cst_161 [1] : vector<8x8xf32> to vector<8xf32>
    %349 = vector.shape_cast %348 : vector<8xf32> to vector<8x1xf32>
    %350 = tpu.reciprocal %349 {approx = true} : vector<8x1xf32> -> vector<8x1xf32>
    %351 = vector.broadcast %350 : vector<8x1xf32> to vector<8x8xf32>
    %352 = arith.mulf %347, %351 : vector<8x8xf32>
    %cst_162 = arith.constant dense<0.000000e+00> : vector<8x8xf32>
    %353 = tpu.matmul %352, %341, %cst_162 {dimension_numbers = #tpu.dot_dimension_numbers<[1], [0], [0], [1], [0, 0, 1, 1], [], []>} : vector<8x8xf32>, vector<8x8xf32>, vector<8x8xf32> -> vector<8x8xf32>
    %354 = vector.extract_strided_slice %304 {offsets = [8, 0], sizes = [8, 32], strides = [1, 1]} : vector<32x32xf32> to vector<8x32xf32>
    %cst_163 = arith.constant dense<0.000000e+00> : vector<8x32xf32>
    %355 = tpu.matmul %353, %354, %cst_163 {dimension_numbers = #tpu.dot_dimension_numbers<[1], [0], [0], [1], [0, 0, 1, 1], [], []>} : vector<8x8xf32>, vector<8x32xf32>, vector<8x32xf32> -> vector<8x32xf32>
    %356 = arith.addf %338, %355 : vector<8x32xf32>
    %357 = vector.extract_strided_slice %312 {offsets = [0, 16], sizes = [8, 8], strides = [1, 1]} : vector<8x32xf32> to vector<8x8xf32>
    %358 = vector.extract_strided_slice %315 {offsets = [0, 16], sizes = [8, 8], strides = [1, 1]} : vector<8x32xf32> to vector<8x8xf32>
    %359 = vector.extract_strided_slice %318 {offsets = [0, 16], sizes = [8, 8], strides = [1, 1]} : vector<8x32xf32> to vector<8x8xf32>
    %cst_164 = arith.constant dense<0.000000e+00> : vector<8x8xf32>
    %360 = tpu.matmul %357, %358, %cst_164 {dimension_numbers = #tpu.dot_dimension_numbers<[1], [1], [0], [0], [0, 0, 1, 0], [], []>} : vector<8x8xf32>, vector<8x8xf32>, vector<8x8xf32> -> vector<8x8xf32>
    %cst_165 = arith.constant dense<0xFF800000> : vector<8xf32>
    %361 = vector.multi_reduction <maximumf>, %360, %cst_165 [1] : vector<8x8xf32> to vector<8xf32>
    %362 = vector.shape_cast %361 : vector<8xf32> to vector<8x1xf32>
    %363 = vector.broadcast %362 : vector<8x1xf32> to vector<8x8xf32>
    %364 = arith.subf %360, %363 : vector<8x8xf32>
    %365 = math.exp %364 : vector<8x8xf32>
    %cst_166 = arith.constant dense<0.000000e+00> : vector<8xf32>
    %366 = vector.multi_reduction <add>, %365, %cst_166 [1] : vector<8x8xf32> to vector<8xf32>
    %367 = vector.shape_cast %366 : vector<8xf32> to vector<8x1xf32>
    %368 = tpu.reciprocal %367 {approx = true} : vector<8x1xf32> -> vector<8x1xf32>
    %369 = vector.broadcast %368 : vector<8x1xf32> to vector<8x8xf32>
    %370 = arith.mulf %365, %369 : vector<8x8xf32>
    %cst_167 = arith.constant dense<0.000000e+00> : vector<8x8xf32>
    %371 = tpu.matmul %370, %359, %cst_167 {dimension_numbers = #tpu.dot_dimension_numbers<[1], [0], [0], [1], [0, 0, 1, 1], [], []>} : vector<8x8xf32>, vector<8x8xf32>, vector<8x8xf32> -> vector<8x8xf32>
    %372 = vector.extract_strided_slice %304 {offsets = [16, 0], sizes = [8, 32], strides = [1, 1]} : vector<32x32xf32> to vector<8x32xf32>
    %cst_168 = arith.constant dense<0.000000e+00> : vector<8x32xf32>
    %373 = tpu.matmul %371, %372, %cst_168 {dimension_numbers = #tpu.dot_dimension_numbers<[1], [0], [0], [1], [0, 0, 1, 1], [], []>} : vector<8x8xf32>, vector<8x32xf32>, vector<8x32xf32> -> vector<8x32xf32>
    %374 = arith.addf %356, %373 : vector<8x32xf32>
    %375 = vector.extract_strided_slice %312 {offsets = [0, 24], sizes = [8, 8], strides = [1, 1]} : vector<8x32xf32> to vector<8x8xf32>
    %376 = vector.extract_strided_slice %315 {offsets = [0, 24], sizes = [8, 8], strides = [1, 1]} : vector<8x32xf32> to vector<8x8xf32>
    %377 = vector.extract_strided_slice %318 {offsets = [0, 24], sizes = [8, 8], strides = [1, 1]} : vector<8x32xf32> to vector<8x8xf32>
    %cst_169 = arith.constant dense<0.000000e+00> : vector<8x8xf32>
    %378 = tpu.matmul %375, %376, %cst_169 {dimension_numbers = #tpu.dot_dimension_numbers<[1], [1], [0], [0], [0, 0, 1, 0], [], []>} : vector<8x8xf32>, vector<8x8xf32>, vector<8x8xf32> -> vector<8x8xf32>
    %cst_170 = arith.constant dense<0xFF800000> : vector<8xf32>
    %379 = vector.multi_reduction <maximumf>, %378, %cst_170 [1] : vector<8x8xf32> to vector<8xf32>
    %380 = vector.shape_cast %379 : vector<8xf32> to vector<8x1xf32>
    %381 = vector.broadcast %380 : vector<8x1xf32> to vector<8x8xf32>
    %382 = arith.subf %378, %381 : vector<8x8xf32>
    %383 = math.exp %382 : vector<8x8xf32>
    %cst_171 = arith.constant dense<0.000000e+00> : vector<8xf32>
    %384 = vector.multi_reduction <add>, %383, %cst_171 [1] : vector<8x8xf32> to vector<8xf32>
    %385 = vector.shape_cast %384 : vector<8xf32> to vector<8x1xf32>
    %386 = tpu.reciprocal %385 {approx = true} : vector<8x1xf32> -> vector<8x1xf32>
    %387 = vector.broadcast %386 : vector<8x1xf32> to vector<8x8xf32>
    %388 = arith.mulf %383, %387 : vector<8x8xf32>
    %cst_172 = arith.constant dense<0.000000e+00> : vector<8x8xf32>
    %389 = tpu.matmul %388, %377, %cst_172 {dimension_numbers = #tpu.dot_dimension_numbers<[1], [0], [0], [1], [0, 0, 1, 1], [], []>} : vector<8x8xf32>, vector<8x8xf32>, vector<8x8xf32> -> vector<8x8xf32>
    %390 = vector.extract_strided_slice %304 {offsets = [24, 0], sizes = [8, 32], strides = [1, 1]} : vector<32x32xf32> to vector<8x32xf32>
    %cst_173 = arith.constant dense<0.000000e+00> : vector<8x32xf32>
    %391 = tpu.matmul %389, %390, %cst_173 {dimension_numbers = #tpu.dot_dimension_numbers<[1], [0], [0], [1], [0, 0, 1, 1], [], []>} : vector<8x8xf32>, vector<8x32xf32>, vector<8x32xf32> -> vector<8x32xf32>
    %392 = arith.addf %374, %391 : vector<8x32xf32>
    %cst_174 = arith.constant dense<0.000000e+00> : vector<8xf32>
    %393 = vector.multi_reduction <add>, %392, %cst_174 [1] : vector<8x32xf32> to vector<8xf32>
    %394 = vector.shape_cast %393 : vector<8xf32> to vector<8x1xf32>
    %cst_175 = arith.constant 3.200000e+01 : f32
    %395 = vector.broadcast %cst_175 : f32 to vector<8x1xf32>
    %396 = arith.divf %394, %395 : vector<8x1xf32>
    %397 = vector.broadcast %396 : vector<8x1xf32> to vector<8x32xf32>
    %398 = arith.subf %392, %397 : vector<8x32xf32>
    %399 = arith.mulf %398, %398 : vector<8x32xf32>
    %cst_176 = arith.constant dense<0.000000e+00> : vector<8xf32>
    %400 = vector.multi_reduction <add>, %399, %cst_176 [1] : vector<8x32xf32> to vector<8xf32>
    %401 = vector.shape_cast %400 : vector<8xf32> to vector<8x1xf32>
    %cst_177 = arith.constant 3.200000e+01 : f32
    %402 = vector.broadcast %cst_177 : f32 to vector<8x1xf32>
    %403 = arith.divf %401, %402 : vector<8x1xf32>
    %404 = vector.broadcast %396 : vector<8x1xf32> to vector<8x32xf32>
    %405 = arith.subf %392, %404 : vector<8x32xf32>
    %cst_178 = arith.constant 9.99999996E-13 : f32
    %406 = vector.broadcast %cst_178 : f32 to vector<8x1xf32>
    %407 = arith.addf %403, %406 : vector<8x1xf32>
    %408 = math.rsqrt %407 : vector<8x1xf32>
    %409 = vector.broadcast %408 : vector<8x1xf32> to vector<8x32xf32>
    %410 = arith.mulf %405, %409 : vector<8x32xf32>
    %411 = vector.broadcast %306 : vector<1x32xf32> to vector<8x32xf32>
    %412 = arith.mulf %410, %411 : vector<8x32xf32>
    %413 = vector.broadcast %307 : vector<1x32xf32> to vector<8x32xf32>
    %414 = arith.addf %412, %413 : vector<8x32xf32>
    %c0_179 = arith.constant 0 : index
    %c0_180 = arith.constant 0 : index
    %415 = vector.load %arg41[%c0_179, %c0_180] : memref<32x32xf32, #tpu.memory_space<vmem>>, vector<32x32xf32>
    %c0_181 = arith.constant 0 : index
    %c0_182 = arith.constant 0 : index
    %416 = vector.load %arg42[%c0_181, %c0_182] : memref<1x32xf32, #tpu.memory_space<vmem>>, vector<1x32xf32>
    %c0_183 = arith.constant 0 : index
    %c0_184 = arith.constant 0 : index
    %417 = vector.load %arg43[%c0_183, %c0_184] : memref<1x32xf32, #tpu.memory_space<vmem>>, vector<1x32xf32>
    %c0_185 = arith.constant 0 : index
    %c0_186 = arith.constant 0 : index
    %418 = vector.load %arg44[%c0_185, %c0_186] : memref<1x32xf32, #tpu.memory_space<vmem>>, vector<1x32xf32>
    %c0_187 = arith.constant 0 : index
    %c0_188 = arith.constant 0 : index
    %419 = vector.load %arg45[%c0_187, %c0_188] : memref<32x32xf32, #tpu.memory_space<vmem>>, vector<32x32xf32>
    %c0_189 = arith.constant 0 : index
    %c0_190 = arith.constant 0 : index
    %420 = vector.load %arg46[%c0_189, %c0_190] : memref<1x32xf32, #tpu.memory_space<vmem>>, vector<1x32xf32>
    %c0_191 = arith.constant 0 : index
    %c0_192 = arith.constant 0 : index
    %421 = vector.load %arg47[%c0_191, %c0_192] : memref<1x32xf32, #tpu.memory_space<vmem>>, vector<1x32xf32>
    %c0_193 = arith.constant 0 : index
    %c0_194 = arith.constant 0 : index
    %422 = vector.load %arg48[%c0_193, %c0_194] : memref<1x32xf32, #tpu.memory_space<vmem>>, vector<1x32xf32>
    %cst_195 = arith.constant dense<0.000000e+00> : vector<8x32xf32>
    %423 = tpu.matmul %414, %415, %cst_195 {dimension_numbers = #tpu.dot_dimension_numbers<[1], [0], [0], [1], [0, 0, 1, 1], [], []>} : vector<8x32xf32>, vector<32x32xf32>, vector<8x32xf32> -> vector<8x32xf32>
    %424 = vector.broadcast %416 : vector<1x32xf32> to vector<8x32xf32>
    %425 = arith.addf %423, %424 : vector<8x32xf32>
    %426 = arith.addf %425, %414 : vector<8x32xf32>
    %cst_196 = arith.constant dense<0.000000e+00> : vector<8xf32>
    %427 = vector.multi_reduction <add>, %426, %cst_196 [1] : vector<8x32xf32> to vector<8xf32>
    %428 = vector.shape_cast %427 : vector<8xf32> to vector<8x1xf32>
    %cst_197 = arith.constant 3.200000e+01 : f32
    %429 = vector.broadcast %cst_197 : f32 to vector<8x1xf32>
    %430 = arith.divf %428, %429 : vector<8x1xf32>
    %431 = vector.broadcast %430 : vector<8x1xf32> to vector<8x32xf32>
    %432 = arith.subf %426, %431 : vector<8x32xf32>
    %433 = arith.mulf %432, %432 : vector<8x32xf32>
    %cst_198 = arith.constant dense<0.000000e+00> : vector<8xf32>
    %434 = vector.multi_reduction <add>, %433, %cst_198 [1] : vector<8x32xf32> to vector<8xf32>
    %435 = vector.shape_cast %434 : vector<8xf32> to vector<8x1xf32>
    %cst_199 = arith.constant 3.200000e+01 : f32
    %436 = vector.broadcast %cst_199 : f32 to vector<8x1xf32>
    %437 = arith.divf %435, %436 : vector<8x1xf32>
    %438 = vector.broadcast %430 : vector<8x1xf32> to vector<8x32xf32>
    %439 = arith.subf %426, %438 : vector<8x32xf32>
    %cst_200 = arith.constant 9.99999996E-13 : f32
    %440 = vector.broadcast %cst_200 : f32 to vector<8x1xf32>
    %441 = arith.addf %437, %440 : vector<8x1xf32>
    %442 = math.rsqrt %441 : vector<8x1xf32>
    %443 = vector.broadcast %442 : vector<8x1xf32> to vector<8x32xf32>
    %444 = arith.mulf %439, %443 : vector<8x32xf32>
    %445 = vector.broadcast %417 : vector<1x32xf32> to vector<8x32xf32>
    %446 = arith.mulf %444, %445 : vector<8x32xf32>
    %447 = vector.broadcast %418 : vector<1x32xf32> to vector<8x32xf32>
    %448 = arith.addf %446, %447 : vector<8x32xf32>
    %cst_201 = arith.constant dense<0.000000e+00> : vector<8x32xf32>
    %449 = tpu.matmul %448, %419, %cst_201 {dimension_numbers = #tpu.dot_dimension_numbers<[1], [0], [0], [1], [0, 0, 1, 1], [], []>} : vector<8x32xf32>, vector<32x32xf32>, vector<8x32xf32> -> vector<8x32xf32>
    %450 = vector.broadcast %420 : vector<1x32xf32> to vector<8x32xf32>
    %451 = arith.addf %449, %450 : vector<8x32xf32>
    %452 = arith.addf %451, %414 : vector<8x32xf32>
    %cst_202 = arith.constant dense<0.000000e+00> : vector<8xf32>
    %453 = vector.multi_reduction <add>, %452, %cst_202 [1] : vector<8x32xf32> to vector<8xf32>
    %454 = vector.shape_cast %453 : vector<8xf32> to vector<8x1xf32>
    %cst_203 = arith.constant 3.200000e+01 : f32
    %455 = vector.broadcast %cst_203 : f32 to vector<8x1xf32>
    %456 = arith.divf %454, %455 : vector<8x1xf32>
    %457 = vector.broadcast %456 : vector<8x1xf32> to vector<8x32xf32>
    %458 = arith.subf %452, %457 : vector<8x32xf32>
    %459 = arith.mulf %458, %458 : vector<8x32xf32>
    %cst_204 = arith.constant dense<0.000000e+00> : vector<8xf32>
    %460 = vector.multi_reduction <add>, %459, %cst_204 [1] : vector<8x32xf32> to vector<8xf32>
    %461 = vector.shape_cast %460 : vector<8xf32> to vector<8x1xf32>
    %cst_205 = arith.constant 3.200000e+01 : f32
    %462 = vector.broadcast %cst_205 : f32 to vector<8x1xf32>
    %463 = arith.divf %461, %462 : vector<8x1xf32>
    %464 = vector.broadcast %456 : vector<8x1xf32> to vector<8x32xf32>
    %465 = arith.subf %452, %464 : vector<8x32xf32>
    %cst_206 = arith.constant 9.99999996E-13 : f32
    %466 = vector.broadcast %cst_206 : f32 to vector<8x1xf32>
    %467 = arith.addf %463, %466 : vector<8x1xf32>
    %468 = math.rsqrt %467 : vector<8x1xf32>
    %469 = vector.broadcast %468 : vector<8x1xf32> to vector<8x32xf32>
    %470 = arith.mulf %465, %469 : vector<8x32xf32>
    %471 = vector.broadcast %421 : vector<1x32xf32> to vector<8x32xf32>
    %472 = arith.mulf %470, %471 : vector<8x32xf32>
    %473 = vector.broadcast %422 : vector<1x32xf32> to vector<8x32xf32>
    %474 = arith.addf %472, %473 : vector<8x32xf32>
    %c0_207 = arith.constant 0 : index
    %c0_208 = arith.constant 0 : index
    %c0_209 = arith.constant 0 : index
    %475 = vector.load %arg49[%c0_207, %c0_208, %c0_209] : memref<1x8x32xf32, #tpu.memory_space<vmem>>, vector<1x8x32xf32>
    %476 = vector.shape_cast %475 : vector<1x8x32xf32> to vector<8x32xf32>
    %477 = vector.shape_cast %474 : vector<8x32xf32> to vector<1x8x32xf32>
    tpu.vector_store %arg49[%c0_207, %c0_208, %c0_209], %477 {strides = array<i32>} : memref<1x8x32xf32, #tpu.memory_space<vmem>>, vector<1x8x32xf32>,
    return
  }
  func.func @transform_0(%arg0: i32) -> (i32, i32, i32) {
    %c0_i32 = arith.constant 0 : i32
    %c0_i32_0 = arith.constant 0 : i32
    %c0_i32_1 = arith.constant 0 : i32
    return %arg0, %c0_i32, %c0_i32_0 : i32, i32, i32
  }
  func.func @transform_1(%arg0: i32) -> (i32, i32, i32) {
    %c0_i32 = arith.constant 0 : i32
    %c0_i32_0 = arith.constant 0 : i32
    %c0_i32_1 = arith.constant 0 : i32
    return %arg0, %c0_i32, %c0_i32_0 : i32, i32, i32
  }
  func.func @transform_2(%arg0: i32) -> (i32, i32) {
    %c0_i32 = arith.constant 0 : i32
    %c0_i32_0 = arith.constant 0 : i32
    %c0_i32_1 = arith.constant 0 : i32
    return %c0_i32, %c0_i32_0 : i32, i32
  }
  func.func @transform_3(%arg0: i32) -> (i32, i32) {
    %c0_i32 = arith.constant 0 : i32
    %c0_i32_0 = arith.constant 0 : i32
    %c0_i32_1 = arith.constant 0 : i32
    return %c0_i32, %c0_i32_0 : i32, i32
  }
  func.func @transform_4(%arg0: i32) -> (i32, i32) {
    %c0_i32 = arith.constant 0 : i32
    %c0_i32_0 = arith.constant 0 : i32
    %c0_i32_1 = arith.constant 0 : i32
    return %c0_i32, %c0_i32_0 : i32, i32
  }
  func.func @transform_5(%arg0: i32) -> (i32, i32) {
    %c0_i32 = arith.constant 0 : i32
    %c0_i32_0 = arith.constant 0 : i32
    %c0_i32_1 = arith.constant 0 : i32
    return %c0_i32, %c0_i32_0 : i32, i32
  }
  func.func @transform_6(%arg0: i32) -> (i32, i32) {
    %c0_i32 = arith.constant 0 : i32
    %c0_i32_0 = arith.constant 0 : i32
    %c0_i32_1 = arith.constant 0 : i32
    return %c0_i32, %c0_i32_0 : i32, i32
  }
  func.func @transform_7(%arg0: i32) -> (i32, i32) {
    %c0_i32 = arith.constant 0 : i32
    %c0_i32_0 = arith.constant 0 : i32
    %c0_i32_1 = arith.constant 0 : i32
    return %c0_i32, %c0_i32_0 : i32, i32
  }
  func.func @transform_8(%arg0: i32) -> (i32, i32) {
    %c0_i32 = arith.constant 0 : i32
    %c0_i32_0 = arith.constant 0 : i32
    %c0_i32_1 = arith.constant 0 : i32
    return %c0_i32, %c0_i32_0 : i32, i32
  }
  func.func @transform_9(%arg0: i32) -> (i32, i32) {
    %c0_i32 = arith.constant 0 : i32
    %c0_i32_0 = arith.constant 0 : i32
    %c0_i32_1 = arith.constant 0 : i32
    return %c0_i32, %c0_i32_0 : i32, i32
  }
  func.func @transform_10(%arg0: i32) -> (i32, i32) {
    %c0_i32 = arith.constant 0 : i32
    %c0_i32_0 = arith.constant 0 : i32
    %c0_i32_1 = arith.constant 0 : i32
    return %c0_i32, %c0_i32_0 : i32, i32
  }
  func.func @transform_11(%arg0: i32) -> (i32, i32) {
    %c0_i32 = arith.constant 0 : i32
    %c0_i32_0 = arith.constant 0 : i32
    %c0_i32_1 = arith.constant 0 : i32
    return %c0_i32, %c0_i32_0 : i32, i32
  }
  func.func @transform_12(%arg0: i32) -> (i32, i32) {
    %c0_i32 = arith.constant 0 : i32
    %c0_i32_0 = arith.constant 0 : i32
    %c0_i32_1 = arith.constant 0 : i32
    return %c0_i32, %c0_i32_0 : i32, i32
  }
  func.func @transform_13(%arg0: i32) -> (i32, i32) {
    %c0_i32 = arith.constant 0 : i32
    %c0_i32_0 = arith.constant 0 : i32
    %c0_i32_1 = arith.constant 0 : i32
    return %c0_i32, %c0_i32_0 : i32, i32
  }
  func.func @transform_14(%arg0: i32) -> (i32, i32) {
    %c0_i32 = arith.constant 0 : i32
    %c0_i32_0 = arith.constant 0 : i32
    %c0_i32_1 = arith.constant 0 : i32
    return %c0_i32, %c0_i32_0 : i32, i32
  }
  func.func @transform_15(%arg0: i32) -> (i32, i32) {
    %c0_i32 = arith.constant 0 : i32
    %c0_i32_0 = arith.constant 0 : i32
    %c0_i32_1 = arith.constant 0 : i32
    return %c0_i32, %c0_i32_0 : i32, i32
  }
  func.func @transform_16(%arg0: i32) -> (i32, i32) {
    %c0_i32 = arith.constant 0 : i32
    %c0_i32_0 = arith.constant 0 : i32
    %c0_i32_1 = arith.constant 0 : i32
    return %c0_i32, %c0_i32_0 : i32, i32
  }
  func.func @transform_17(%arg0: i32) -> (i32, i32) {
    %c0_i32 = arith.constant 0 : i32
    %c0_i32_0 = arith.constant 0 : i32
    %c0_i32_1 = arith.constant 0 : i32
    return %c0_i32, %c0_i32_0 : i32, i32
  }
  func.func @transform_18(%arg0: i32) -> (i32, i32) {
    %c0_i32 = arith.constant 0 : i32
    %c0_i32_0 = arith.constant 0 : i32
    %c0_i32_1 = arith.constant 0 : i32
    return %c0_i32, %c0_i32_0 : i32, i32
  }
  func.func @transform_19(%arg0: i32) -> (i32, i32) {
    %c0_i32 = arith.constant 0 : i32
    %c0_i32_0 = arith.constant 0 : i32
    %c0_i32_1 = arith.constant 0 : i32
    return %c0_i32, %c0_i32_0 : i32, i32
  }
  func.func @transform_20(%arg0: i32) -> (i32, i32) {
    %c0_i32 = arith.constant 0 : i32
    %c0_i32_0 = arith.constant 0 : i32
    %c0_i32_1 = arith.constant 0 : i32
    return %c0_i32, %c0_i32_0 : i32, i32
  }
  func.func @transform_21(%arg0: i32) -> (i32, i32) {
    %c0_i32 = arith.constant 0 : i32
    %c0_i32_0 = arith.constant 0 : i32
    %c0_i32_1 = arith.constant 0 : i32
    return %c0_i32, %c0_i32_0 : i32, i32
  }
  func.func @transform_22(%arg0: i32) -> (i32, i32) {
    %c0_i32 = arith.constant 0 : i32
    %c0_i32_0 = arith.constant 0 : i32
    %c0_i32_1 = arith.constant 0 : i32
    return %c0_i32, %c0_i32_0 : i32, i32
  }
  func.func @transform_23(%arg0: i32) -> (i32, i32) {
    %c0_i32 = arith.constant 0 : i32
    %c0_i32_0 = arith.constant 0 : i32
    %c0_i32_1 = arith.constant 0 : i32
    return %c0_i32, %c0_i32_0 : i32, i32
  }
  func.func @transform_24(%arg0: i32) -> (i32, i32) {
    %c0_i32 = arith.constant 0 : i32
    %c0_i32_0 = arith.constant 0 : i32
    %c0_i32_1 = arith.constant 0 : i32
    return %c0_i32, %c0_i32_0 : i32, i32
  }
  func.func @transform_25(%arg0: i32) -> (i32, i32) {
    %c0_i32 = arith.constant 0 : i32
    %c0_i32_0 = arith.constant 0 : i32
    %c0_i32_1 = arith.constant 0 : i32
    return %c0_i32, %c0_i32_0 : i32, i32
  }
  func.func @transform_26(%arg0: i32) -> (i32, i32) {
    %c0_i32 = arith.constant 0 : i32
    %c0_i32_0 = arith.constant 0 : i32
    %c0_i32_1 = arith.constant 0 : i32
    return %c0_i32, %c0_i32_0 : i32, i32
  }
  func.func @transform_27(%arg0: i32) -> (i32, i32) {
    %c0_i32 = arith.constant 0 : i32
    %c0_i32_0 = arith.constant 0 : i32
    %c0_i32_1 = arith.constant 0 : i32
    return %c0_i32, %c0_i32_0 : i32, i32
  }
  func.func @transform_28(%arg0: i32) -> (i32, i32) {
    %c0_i32 = arith.constant 0 : i32
    %c0_i32_0 = arith.constant 0 : i32
    %c0_i32_1 = arith.constant 0 : i32
    return %c0_i32, %c0_i32_0 : i32, i32
  }
  func.func @transform_29(%arg0: i32) -> (i32, i32) {
    %c0_i32 = arith.constant 0 : i32
    %c0_i32_0 = arith.constant 0 : i32
    %c0_i32_1 = arith.constant 0 : i32
    return %c0_i32, %c0_i32_0 : i32, i32
  }
  func.func @transform_30(%arg0: i32) -> (i32, i32) {
    %c0_i32 = arith.constant 0 : i32
    %c0_i32_0 = arith.constant 0 : i32
    %c0_i32_1 = arith.constant 0 : i32
    return %c0_i32, %c0_i32_0 : i32, i32
  }
  func.func @transform_31(%arg0: i32) -> (i32, i32) {
    %c0_i32 = arith.constant 0 : i32
    %c0_i32_0 = arith.constant 0 : i32
    %c0_i32_1 = arith.constant 0 : i32
    return %c0_i32, %c0_i32_0 : i32, i32
  }
  func.func @transform_32(%arg0: i32) -> (i32, i32) {
    %c0_i32 = arith.constant 0 : i32
    %c0_i32_0 = arith.constant 0 : i32
    %c0_i32_1 = arith.constant 0 : i32
    return %c0_i32, %c0_i32_0 : i32, i32
  }
  func.func @transform_33(%arg0: i32) -> (i32, i32) {
    %c0_i32 = arith.constant 0 : i32
    %c0_i32_0 = arith.constant 0 : i32
    %c0_i32_1 = arith.constant 0 : i32
    return %c0_i32, %c0_i32_0 : i32, i32
  }
  func.func @transform_34(%arg0: i32) -> (i32, i32) {
    %c0_i32 = arith.constant 0 : i32
    %c0_i32_0 = arith.constant 0 : i32
    %c0_i32_1 = arith.constant 0 : i32
    return %c0_i32, %c0_i32_0 : i32, i32
  }
  func.func @transform_35(%arg0: i32) -> (i32, i32) {
    %c0_i32 = arith.constant 0 : i32
    %c0_i32_0 = arith.constant 0 : i32
    %c0_i32_1 = arith.constant 0 : i32
    return %c0_i32, %c0_i32_0 : i32, i32
  }
  func.func @transform_36(%arg0: i32) -> (i32, i32) {
    %c0_i32 = arith.constant 0 : i32
    %c0_i32_0 = arith.constant 0 : i32
    %c0_i32_1 = arith.constant 0 : i32
    return %c0_i32, %c0_i32_0 : i32, i32
  }
  func.func @transform_37(%arg0: i32) -> (i32, i32) {
    %c0_i32 = arith.constant 0 : i32
    %c0_i32_0 = arith.constant 0 : i32
    %c0_i32_1 = arith.constant 0 : i32
    return %c0_i32, %c0_i32_0 : i32, i32
  }
  func.func @transform_38(%arg0: i32) -> (i32, i32) {
    %c0_i32 = arith.constant 0 : i32
    %c0_i32_0 = arith.constant 0 : i32
    %c0_i32_1 = arith.constant 0 : i32
    return %c0_i32, %c0_i32_0 : i32, i32
  }
  func.func @transform_39(%arg0: i32) -> (i32, i32) {
    %c0_i32 = arith.constant 0 : i32
    %c0_i32_0 = arith.constant 0 : i32
    %c0_i32_1 = arith.constant 0 : i32
    return %c0_i32, %c0_i32_0 : i32, i32
  }
  func.func @transform_40(%arg0: i32) -> (i32, i32) {
    %c0_i32 = arith.constant 0 : i32
    %c0_i32_0 = arith.constant 0 : i32
    %c0_i32_1 = arith.constant 0 : i32
    return %c0_i32, %c0_i32_0 : i32, i32
  }
  func.func @transform_41(%arg0: i32) -> (i32, i32) {
    %c0_i32 = arith.constant 0 : i32
    %c0_i32_0 = arith.constant 0 : i32
    %c0_i32_1 = arith.constant 0 : i32
    return %c0_i32, %c0_i32_0 : i32, i32
  }
  func.func @transform_42(%arg0: i32) -> (i32, i32) {
    %c0_i32 = arith.constant 0 : i32
    %c0_i32_0 = arith.constant 0 : i32
    %c0_i32_1 = arith.constant 0 : i32
    return %c0_i32, %c0_i32_0 : i32, i32
  }
  func.func @transform_43(%arg0: i32) -> (i32, i32) {
    %c0_i32 = arith.constant 0 : i32
    %c0_i32_0 = arith.constant 0 : i32
    %c0_i32_1 = arith.constant 0 : i32
    return %c0_i32, %c0_i32_0 : i32, i32
  }
  func.func @transform_44(%arg0: i32) -> (i32, i32) {
    %c0_i32 = arith.constant 0 : i32
    %c0_i32_0 = arith.constant 0 : i32
    %c0_i32_1 = arith.constant 0 : i32
    return %c0_i32, %c0_i32_0 : i32, i32
  }
  func.func @transform_45(%arg0: i32) -> (i32, i32) {
    %c0_i32 = arith.constant 0 : i32
    %c0_i32_0 = arith.constant 0 : i32
    %c0_i32_1 = arith.constant 0 : i32
    return %c0_i32, %c0_i32_0 : i32, i32
  }
  func.func @transform_46(%arg0: i32) -> (i32, i32) {
    %c0_i32 = arith.constant 0 : i32
    %c0_i32_0 = arith.constant 0 : i32
    %c0_i32_1 = arith.constant 0 : i32
    return %c0_i32, %c0_i32_0 : i32, i32
  }
  func.func @transform_47(%arg0: i32) -> (i32, i32) {
    %c0_i32 = arith.constant 0 : i32
    %c0_i32_0 = arith.constant 0 : i32
    %c0_i32_1 = arith.constant 0 : i32
    return %c0_i32, %c0_i32_0 : i32, i32
  }
  func.func @transform_48(%arg0: i32) -> (i32, i32, i32) {
    %c0_i32 = arith.constant 0 : i32
    %c0_i32_0 = arith.constant 0 : i32
    %c0_i32_1 = arith.constant 0 : i32
    return %arg0, %c0_i32, %c0_i32_0 : i32, i32, i32
  }
}

</mosaic_0001>

<llo_original>
// kernel: tpu_custom_call.1
$region0: #{tpu_custom_call.1}
  #allocation0 [shape = 'u32[]', space=smem, size = 0x4, offset = 0x4, fixed_abs, tag = 'smem constant byte address 0x4 - core index']
  #allocation1 [shape = 'u32[144,128]{1,0:T(1,128)}', space=vmem, size = 0x12000, scoped, tag = 'internal scratch']
  %s0 = inlined_call_operand.smem [shape: u32[49], index: -1, kind: input, shape index: {}]
  %s1 = sld [smem:[%s0]]
  %s2 = scalar_lea.smem %s0, 1
  %s3 = sld [smem:[%s2]]
  %s4 = scalar_lea.smem %s0, 2
  %s5 = sld [smem:[%s4]]
  %s6 = scalar_lea.smem %s0, 3
  %s7 = sld [smem:[%s6]]
  %s8 = scalar_lea.smem %s0, 4
  %s9 = sld [smem:[%s8]]
  %s10 = scalar_lea.smem %s0, 5
  %s11 = sld [smem:[%s10]]
  %s12 = scalar_lea.smem %s0, 6
  %s13 = sld [smem:[%s12]]
  %s14 = scalar_lea.smem %s0, 7
  %s15 = sld [smem:[%s14]]
  %s16 = scalar_lea.smem %s0, 8
  %s17 = sld [smem:[%s16]]
  %s18 = scalar_lea.smem %s0, 9
  %s19 = sld [smem:[%s18]]
  %s20 = scalar_lea.smem %s0, 10
  %s21 = sld [smem:[%s20]]
  %s22 = scalar_lea.smem %s0, 11
  %s23 = sld [smem:[%s22]]
  %s24 = scalar_lea.smem %s0, 12
  %s25 = sld [smem:[%s24]]
  %s26 = scalar_lea.smem %s0, 13
  %s27 = sld [smem:[%s26]]
  %s28 = scalar_lea.smem %s0, 14
  %s29 = sld [smem:[%s28]]
  %s30 = scalar_lea.smem %s0, 15
  %s31 = sld [smem:[%s30]]
  %s32 = scalar_lea.smem %s0, 16
  %s33 = sld [smem:[%s32]]
  %s34 = scalar_lea.smem %s0, 17
  %s35 = sld [smem:[%s34]]
  %s36 = scalar_lea.smem %s0, 18
  %s37 = sld [smem:[%s36]]
  %s38 = scalar_lea.smem %s0, 19
  %s39 = sld [smem:[%s38]]
  %s40 = scalar_lea.smem %s0, 20
  %s41 = sld [smem:[%s40]]
  %s42 = scalar_lea.smem %s0, 21
  %s43 = sld [smem:[%s42]]
  %s44 = scalar_lea.smem %s0, 22
  %s45 = sld [smem:[%s44]]
  %s46 = scalar_lea.smem %s0, 23
  %s47 = sld [smem:[%s46]]
  %s48 = scalar_lea.smem %s0, 24
  %s49 = sld [smem:[%s48]]
  %s50 = scalar_lea.smem %s0, 25
  %s51 = sld [smem:[%s50]]
  %s52 = scalar_lea.smem %s0, 26
  %s53 = sld [smem:[%s52]]
  %s54 = scalar_lea.smem %s0, 27
  %s55 = sld [smem:[%s54]]
  %s56 = scalar_lea.smem %s0, 28
  %s57 = sld [smem:[%s56]]
  %s58 = scalar_lea.smem %s0, 29
  %s59 = sld [smem:[%s58]]
  %s60 = scalar_lea.smem %s0, 30
  %s61 = sld [smem:[%s60]]
  %s62 = scalar_lea.smem %s0, 31
  %s63 = sld [smem:[%s62]]
  %s64 = scalar_lea.smem %s0, 32
  %s65 = sld [smem:[%s64]]
  %s66 = scalar_lea.smem %s0, 33
  %s67 = sld [smem:[%s66]]
  %s68 = scalar_lea.smem %s0, 34
  %s69 = sld [smem:[%s68]]
  %s70 = scalar_lea.smem %s0, 35
  %s71 = sld [smem:[%s70]]
  %s72 = scalar_lea.smem %s0, 36
  %s73 = sld [smem:[%s72]]
  %s74 = scalar_lea.smem %s0, 37
  %s75 = sld [smem:[%s74]]
  %s76 = scalar_lea.smem %s0, 38
  %s77 = sld [smem:[%s76]]
  %s78 = scalar_lea.smem %s0, 39
  %s79 = sld [smem:[%s78]]
  %s80 = scalar_lea.smem %s0, 40
  %s81 = sld [smem:[%s80]]
  %s82 = scalar_lea.smem %s0, 41
  %s83 = sld [smem:[%s82]]
  %s84 = scalar_lea.smem %s0, 42
  %s85 = sld [smem:[%s84]]
  %s86 = scalar_lea.smem %s0, 43
  %s87 = sld [smem:[%s86]]
  %s88 = scalar_lea.smem %s0, 44
  %s89 = sld [smem:[%s88]]
  %s90 = scalar_lea.smem %s0, 45
  %s91 = sld [smem:[%s90]]
  %s92 = scalar_lea.smem %s0, 46
  %s93 = sld [smem:[%s92]]
  %s94 = scalar_lea.smem %s0, 47
  %s95 = sld [smem:[%s94]]
  %s96 = scalar_lea.smem %s0, 48
  %s97 = sld [smem:[%s96]]
  %s98 = sld [smem:[#allocation0]]
  $region417: #{tpu_custom_call.1} parent=0
    _
  %s100 = ssub.s32 1, %s98
  %s101 = scalar_select 0, %s100, %s98
  $region1: #{tpu_custom_call.1} parent=0
    #allocation2 [shape = 'u8[8192]{0}', space=vmem, size = 0x2000, scoped, tag = 'input window, operand 0']
    #allocation3 [shape = 's32[2]{0}', space=sflag, size = 0x8, scoped, tag = 'scoped memory for tpu_custom_call.1']
    #allocation4 [shape = 's32[2]{0}', space=sflag, size = 0x8, scoped, tag = 'scoped memory for tpu_custom_call.1']
    #allocation5 [shape = 'u8[16384]{0}', space=vmem, size = 0x4000, scoped, tag = 'input window, operand 1']
    #allocation6 [shape = 's32[2]{0}', space=sflag, size = 0x8, scoped, tag = 'scoped memory for tpu_custom_call.1']
    #allocation7 [shape = 'u8[16384]{0}', space=vmem, size = 0x4000, scoped, tag = 'input window, operand 2, single buffered']
    #allocation8 [shape = 'u8[512]{0}', space=vmem, size = 0x400, scoped, tag = 'input window, operand 3, single buffered']
    #allocation9 [shape = 's32[1]{0}', space=sflag, size = 0x4, scoped, tag = 'scoped memory for tpu_custom_call.1']
    #allocation10 [shape = 'u8[16384]{0}', space=vmem, size = 0x4000, scoped, tag = 'input window, operand 4, single buffered']
    #allocation11 [shape = 'u8[512]{0}', space=vmem, size = 0x400, scoped, tag = 'input window, operand 5, single buffered']
    #allocation12 [shape = 's32[1]{0}', space=sflag, size = 0x4, scoped, tag = 'scoped memory for tpu_custom_call.1']
    #allocation13 [shape = 'u8[16384]{0}', space=vmem, size = 0x4000, scoped, tag = 'input window, operand 6, single buffered']
    #allocation14 [shape = 'u8[512]{0}', space=vmem, size = 0x400, scoped, tag = 'input window, operand 7, single buffered']
    #allocation15 [shape = 's32[1]{0}', space=sflag, size = 0x4, scoped, tag = 'scoped memory for tpu_custom_call.1']
    #allocation16 [shape = 'u8[16384]{0}', space=vmem, size = 0x4000, scoped, tag = 'input window, operand 8, single buffered']
    #allocation17 [shape = 'u8[512]{0}', space=vmem, size = 0x400, scoped, tag = 'input window, operand 9, single buffered']
    #allocation18 [shape = 's32[1]{0}', space=sflag, size = 0x4, scoped, tag = 'scoped memory for tpu_custom_call.1']
    #allocation19 [shape = 'u8[512]{0}', space=vmem, size = 0x400, scoped, tag = 'input window, operand 10, single buffered']
    #allocation20 [shape = 'u8[512]{0}', space=vmem, size = 0x400, scoped, tag = 'input window, operand 11, single buffered']
    #allocation21 [shape = 's32[1]{0}', space=sflag, size = 0x4, scoped, tag = 'scoped memory for tpu_custom_call.1']
    #allocation22 [shape = 'u8[16384]{0}', space=vmem, size = 0x4000, scoped, tag = 'input window, operand 12, single buffered']
    #allocation23 [shape = 'u8[512]{0}', space=vmem, size = 0x400, scoped, tag = 'input window, operand 13, single buffered']
    #allocation24 [shape = 's32[1]{0}', space=sflag, size = 0x4, scoped, tag = 'scoped memory for tpu_custom_call.1']
    #allocation25 [shape = 'u8[24576]{0}', space=vmem, size = 0x6000, scoped, tag = 'input window, operand 14, single buffered']
    #allocation26 [shape = 'u8[512]{0}', space=vmem, size = 0x400, scoped, tag = 'input window, operand 15, single buffered']
    #allocation27 [shape = 's32[1]{0}', space=sflag, size = 0x4, scoped, tag = 'scoped memory for tpu_custom_call.1']
    #allocation28 [shape = 'u8[24576]{0}', space=vmem, size = 0x6000, scoped, tag = 'input window, operand 16, single buffered']
    #allocation29 [shape = 'u8[512]{0}', space=vmem, size = 0x400, scoped, tag = 'input window, operand 17, single buffered']
    #allocation30 [shape = 's32[1]{0}', space=sflag, size = 0x4, scoped, tag = 'scoped memory for tpu_custom_call.1']
    #allocation31 [shape = 'u8[16384]{0}', space=vmem, size = 0x4000, scoped, tag = 'input window, operand 18, single buffered']
    #allocation32 [shape = 'u8[512]{0}', space=vmem, size = 0x400, scoped, tag = 'input window, operand 19, single buffered']
    #allocation33 [shape = 's32[1]{0}', space=sflag, size = 0x4, scoped, tag = 'scoped memory for tpu_custom_call.1']
    #allocation34 [shape = 'u8[512]{0}', space=vmem, size = 0x400, scoped, tag = 'input window, operand 20, single buffered']
    #allocation35 [shape = 'u8[512]{0}', space=vmem, size = 0x400, scoped, tag = 'input window, operand 21, single buffered']
    #allocation36 [shape = 's32[1]{0}', space=sflag, size = 0x4, scoped, tag = 'scoped memory for tpu_custom_call.1']
    #allocation37 [shape = 'u8[16384]{0}', space=vmem, size = 0x4000, scoped, tag = 'input window, operand 22, single buffered']
    #allocation38 [shape = 'u8[512]{0}', space=vmem, size = 0x400, scoped, tag = 'input window, operand 23, single buffered']
    #allocation39 [shape = 's32[1]{0}', space=sflag, size = 0x4, scoped, tag = 'scoped memory for tpu_custom_call.1']
    #allocation40 [shape = 'u8[512]{0}', space=vmem, size = 0x400, scoped, tag = 'input window, operand 24, single buffered']
    #allocation41 [shape = 'u8[512]{0}', space=vmem, size = 0x400, scoped, tag = 'input window, operand 25, single buffered']
    #allocation42 [shape = 's32[1]{0}', space=sflag, size = 0x4, scoped, tag = 'scoped memory for tpu_custom_call.1']
    #allocation43 [shape = 'u8[16384]{0}', space=vmem, size = 0x4000, scoped, tag = 'input window, operand 26, single buffered']
    #allocation44 [shape = 'u8[512]{0}', space=vmem, size = 0x400, scoped, tag = 'input window, operand 27, single buffered']
    #allocation45 [shape = 's32[1]{0}', space=sflag, size = 0x4, scoped, tag = 'scoped memory for tpu_custom_call.1']
    #allocation46 [shape = 'u8[512]{0}', space=vmem, size = 0x400, scoped, tag = 'input window, operand 28, single buffered']
    #allocation47 [shape = 'u8[512]{0}', space=vmem, size = 0x400, scoped, tag = 'input window, operand 29, single buffered']
    #allocation48 [shape = 's32[1]{0}', space=sflag, size = 0x4, scoped, tag = 'scoped memory for tpu_custom_call.1']
    #allocation49 [shape = 'u8[16384]{0}', space=vmem, size = 0x4000, scoped, tag = 'input window, operand 30, single buffered']
    #allocation50 [shape = 'u8[512]{0}', space=vmem, size = 0x400, scoped, tag = 'input window, operand 31, single buffered']
    #allocation51 [shape = 's32[1]{0}', space=sflag, size = 0x4, scoped, tag = 'scoped memory for tpu_custom_call.1']
    #allocation52 [shape = 'u8[16384]{0}', space=vmem, size = 0x4000, scoped, tag = 'input window, operand 32, single buffered']
    #allocation53 [shape = 'u8[512]{0}', space=vmem, size = 0x400, scoped, tag = 'input window, operand 33, single buffered']
    #allocation54 [shape = 's32[1]{0}', space=sflag, size = 0x4, scoped, tag = 'scoped memory for tpu_custom_call.1']
    #allocation55 [shape = 'u8[16384]{0}', space=vmem, size = 0x4000, scoped, tag = 'input window, operand 34, single buffered']
    #allocation56 [shape = 'u8[512]{0}', space=vmem, size = 0x400, scoped, tag = 'input window, operand 35, single buffered']
    #allocation57 [shape = 's32[1]{0}', space=sflag, size = 0x4, scoped, tag = 'scoped memory for tpu_custom_call.1']
    #allocation58 [shape = 'u8[16384]{0}', space=vmem, size = 0x4000, scoped, tag = 'input window, operand 36, single buffered']
    #allocation59 [shape = 'u8[512]{0}', space=vmem, size = 0x400, scoped, tag = 'input window, operand 37, single buffered']
    #allocation60 [shape = 's32[1]{0}', space=sflag, size = 0x4, scoped, tag = 'scoped memory for tpu_custom_call.1']
    #allocation61 [shape = 'u8[512]{0}', space=vmem, size = 0x400, scoped, tag = 'input window, operand 38, single buffered']
    #allocation62 [shape = 'u8[512]{0}', space=vmem, size = 0x400, scoped, tag = 'input window, operand 39, single buffered']
    #allocation63 [shape = 's32[1]{0}', space=sflag, size = 0x4, scoped, tag = 'scoped memory for tpu_custom_call.1']
    #allocation64 [shape = 'u8[16384]{0}', space=vmem, size = 0x4000, scoped, tag = 'input window, operand 40, single buffered']
    #allocation65 [shape = 'u8[512]{0}', space=vmem, size = 0x400, scoped, tag = 'input window, operand 41, single buffered']
    #allocation66 [shape = 's32[1]{0}', space=sflag, size = 0x4, scoped, tag = 'scoped memory for tpu_custom_call.1']
    #allocation67 [shape = 'u8[512]{0}', space=vmem, size = 0x400, scoped, tag = 'input window, operand 42, single buffered']
    #allocation68 [shape = 'u8[512]{0}', space=vmem, size = 0x400, scoped, tag = 'input window, operand 43, single buffered']
    #allocation69 [shape = 's32[1]{0}', space=sflag, size = 0x4, scoped, tag = 'scoped memory for tpu_custom_call.1']
    #allocation70 [shape = 'u8[16384]{0}', space=vmem, size = 0x4000, scoped, tag = 'input window, operand 44, single buffered']
    #allocation71 [shape = 'u8[512]{0}', space=vmem, size = 0x400, scoped, tag = 'input window, operand 45, single buffered']
    #allocation72 [shape = 's32[1]{0}', space=sflag, size = 0x4, scoped, tag = 'scoped memory for tpu_custom_call.1']
    #allocation73 [shape = 'u8[512]{0}', space=vmem, size = 0x400, scoped, tag = 'input window, operand 46, single buffered']
    #allocation74 [shape = 'u8[512]{0}', space=vmem, size = 0x400, scoped, tag = 'input window, operand 47, single buffered']
    #allocation75 [shape = 's32[1]{0}', space=sflag, size = 0x4, scoped, tag = 'scoped memory for tpu_custom_call.1']
    #allocation76 [shape = 'u8[8192]{0}', space=vmem, size = 0x2000, scoped, tag = 'output window, operand 0']
    %102 = vsyncpa [#allocation3], 0
    %s103 = scalar_lea.sflag [#allocation3], 1
    %104 = vsyncpa %s103, 0
    %105 = vsyncpa [#allocation6], 0
    %s106 = scalar_lea.sflag [#allocation6], 1
    %107 = vsyncpa %s106, 0
    %108 = vsyncpa [#allocation9], 0
    %109 = vsyncpa [#allocation12], 0
    %110 = vsyncpa [#allocation15], 0
    %111 = vsyncpa [#allocation18], 0
    %112 = vsyncpa [#allocation21], 0
    %113 = vsyncpa [#allocation24], 0
    %114 = vsyncpa [#allocation27], 0
    %115 = vsyncpa [#allocation30], 0
    %116 = vsyncpa [#allocation33], 0
    %117 = vsyncpa [#allocation36], 0
    %118 = vsyncpa [#allocation39], 0
    %119 = vsyncpa [#allocation42], 0
    %120 = vsyncpa [#allocation45], 0
    %121 = vsyncpa [#allocation48], 0
    %122 = vsyncpa [#allocation51], 0
    %123 = vsyncpa [#allocation54], 0
    %124 = vsyncpa [#allocation57], 0
    %125 = vsyncpa [#allocation60], 0
    %126 = vsyncpa [#allocation63], 0
    %127 = vsyncpa [#allocation66], 0
    %128 = vsyncpa [#allocation69], 0
    %129 = vsyncpa [#allocation72], 0
    %130 = vsyncpa [#allocation75], 0
    %131 = vsyncpa [#allocation4], 0
    %s132 = scalar_lea.sflag [#allocation4], 1
    %133 = vsyncpa %s132, 0
    loop: start=0, step=1, limit=4
    $region2: #{tpu_custom_call.1} parent=1 // loop_pre_header
      _
    $region3: #{tpu_custom_call.1} parent=1 // loop_header
      %s135 = sphi 0, %s139
      %p136 = scmp.ge.s32.totalorder %s135, 4
      %s145 = sphi 0, %s147
      %s148 = sphi 0, %s145
      %s149 = sphi 0, %s148
      %s165 = sphi 0, %s149
      %s171 = sphi 0, %s173
      %s174 = sphi 0, %s171
      %s175 = sphi 0, %s174
      %s191 = sphi 0, %s175
      %s195 = sphi 0, %s195
      %s197 = sphi 0, %s195
      %s198 = sphi 0, %s197
      %s212 = sphi 0, %s198
      %s216 = sphi 0, %s216
      %s218 = sphi 0, %s216
      %s219 = sphi 0, %s218
      %s233 = sphi 0, %s219
      %s237 = sphi 0, %s237
      %s239 = sphi 0, %s237
      %s240 = sphi 0, %s239
      %s254 = sphi 0, %s240
      %s258 = sphi 0, %s258
      %s260 = sphi 0, %s258
      %s261 = sphi 0, %s260
      %s275 = sphi 0, %s261
      %s279 = sphi 0, %s279
      %s281 = sphi 0, %s279
      %s282 = sphi 0, %s281
      %s296 = sphi 0, %s282
      %s300 = sphi 0, %s300
      %s302 = sphi 0, %s300
      %s303 = sphi 0, %s302
      %s317 = sphi 0, %s303
      %s321 = sphi 0, %s321
      %s323 = sphi 0, %s321
      %s324 = sphi 0, %s323
      %s338 = sphi 0, %s324
      %s342 = sphi 0, %s342
      %s344 = sphi 0, %s342
      %s345 = sphi 0, %s344
      %s359 = sphi 0, %s345
      %s363 = sphi 0, %s363
      %s365 = sphi 0, %s363
      %s366 = sphi 0, %s365
      %s380 = sphi 0, %s366
      %s384 = sphi 0, %s384
      %s386 = sphi 0, %s384
      %s387 = sphi 0, %s386
      %s401 = sphi 0, %s387
      %s405 = sphi 0, %s405
      %s407 = sphi 0, %s405
      %s408 = sphi 0, %s407
      %s422 = sphi 0, %s408
      %s426 = sphi 0, %s426
      %s428 = sphi 0, %s426
      %s429 = sphi 0, %s428
      %s443 = sphi 0, %s429
      %s447 = sphi 0, %s447
      %s449 = sphi 0, %s447
      %s450 = sphi 0, %s449
      %s464 = sphi 0, %s450
      %s468 = sphi 0, %s468
      %s470 = sphi 0, %s468
      %s471 = sphi 0, %s470
      %s485 = sphi 0, %s471
      %s489 = sphi 0, %s489
      %s491 = sphi 0, %s489
      %s492 = sphi 0, %s491
      %s506 = sphi 0, %s492
      %s510 = sphi 0, %s510
      %s512 = sphi 0, %s510
      %s513 = sphi 0, %s512
      %s527 = sphi 0, %s513
      %s531 = sphi 0, %s531
      %s533 = sphi 0, %s531
      %s534 = sphi 0, %s533
      %s548 = sphi 0, %s534
      %s552 = sphi 0, %s552
      %s554 = sphi 0, %s552
      %s555 = sphi 0, %s554
      %s569 = sphi 0, %s555
      %s573 = sphi 0, %s573
      %s575 = sphi 0, %s573
      %s576 = sphi 0, %s575
      %s590 = sphi 0, %s576
      %s594 = sphi 0, %s594
      %s596 = sphi 0, %s594
      %s597 = sphi 0, %s596
      %s611 = sphi 0, %s597
      %s615 = sphi 0, %s615
      %s617 = sphi 0, %s615
      %s618 = sphi 0, %s617
      %s632 = sphi 0, %s618
      %s636 = sphi 0, %s636
      %s638 = sphi 0, %s636
      %s639 = sphi 0, %s638
      %s653 = sphi 0, %s639
      %s657 = sphi 0, %s657
      %s659 = sphi 0, %s657
      %s660 = sphi 0, %s659
      %s674 = sphi 0, %s660
      %s678 = sphi 0, %s678
      %s680 = sphi 0, %s678
      %s681 = sphi 0, %s680
      %s695 = sphi 0, %s681
      %s699 = sphi 0, %s699
      %s701 = sphi 0, %s699
      %s702 = sphi 0, %s701
      %s716 = sphi 0, %s702
      %s720 = sphi 0, %s720
      %s722 = sphi 0, %s720
      %s723 = sphi 0, %s722
      %s737 = sphi 0, %s723
      %s741 = sphi 0, %s741
      %s743 = sphi 0, %s741
      %s744 = sphi 0, %s743
      %s758 = sphi 0, %s744
      %s762 = sphi 0, %s762
      %s764 = sphi 0, %s762
      %s765 = sphi 0, %s764
      %s779 = sphi 0, %s765
      %s783 = sphi 0, %s783
      %s785 = sphi 0, %s783
      %s786 = sphi 0, %s785
      %s800 = sphi 0, %s786
      %s804 = sphi 0, %s804
      %s806 = sphi 0, %s804
      %s807 = sphi 0, %s806
      %s821 = sphi 0, %s807
      %s825 = sphi 0, %s825
      %s827 = sphi 0, %s825
      %s828 = sphi 0, %s827
      %s842 = sphi 0, %s828
      %s846 = sphi 0, %s846
      %s848 = sphi 0, %s846
      %s849 = sphi 0, %s848
      %s863 = sphi 0, %s849
      %s867 = sphi 0, %s867
      %s869 = sphi 0, %s867
      %s870 = sphi 0, %s869
      %s884 = sphi 0, %s870
      %s888 = sphi 0, %s888
      %s890 = sphi 0, %s888
      %s891 = sphi 0, %s890
      %s905 = sphi 0, %s891
      %s909 = sphi 0, %s909
      %s911 = sphi 0, %s909
      %s912 = sphi 0, %s911
      %s926 = sphi 0, %s912
      %s930 = sphi 0, %s930
      %s932 = sphi 0, %s930
      %s933 = sphi 0, %s932
      %s947 = sphi 0, %s933
      %s951 = sphi 0, %s951
      %s953 = sphi 0, %s951
      %s954 = sphi 0, %s953
      %s968 = sphi 0, %s954
      %s972 = sphi 0, %s972
      %s974 = sphi 0, %s972
      %s975 = sphi 0, %s974
      %s989 = sphi 0, %s975
      %s993 = sphi 0, %s993
      %s995 = sphi 0, %s993
      %s996 = sphi 0, %s995
      %s1010 = sphi 0, %s996
      %s1014 = sphi 0, %s1014
      %s1016 = sphi 0, %s1014
      %s1017 = sphi 0, %s1016
      %s1031 = sphi 0, %s1017
      %s1035 = sphi 0, %s1035
      %s1037 = sphi 0, %s1035
      %s1038 = sphi 0, %s1037
      %s1052 = sphi 0, %s1038
      %s1056 = sphi 0, %s1056
      %s1058 = sphi 0, %s1056
      %s1059 = sphi 0, %s1058
      %s1073 = sphi 0, %s1059
      %s1077 = sphi 0, %s1077
      %s1079 = sphi 0, %s1077
      %s1080 = sphi 0, %s1079
      %s1094 = sphi 0, %s1080
      %s1098 = sphi 0, %s1098
      %s1100 = sphi 0, %s1098
      %s1101 = sphi 0, %s1100
      %s1115 = sphi 0, %s1101
      %s1119 = sphi 0, %s1119
      %s1121 = sphi 0, %s1119
      %s1122 = sphi 0, %s1121
      %s1136 = sphi 0, %s1122
      %s1140 = sphi 0, %s1140
      %s1142 = sphi 0, %s1140
      %s1143 = sphi 0, %s1142
      %s1157 = sphi 0, %s1143
      %s1163 = sphi 0, %s1165
      %s1166 = sphi 0, %s1163
      %s1167 = sphi 0, %s1166
      %s1183 = sphi 0, %s1167
    $region4: #{tpu_custom_call.1} parent=1 // loop_header_branch
      %138 = sbr.rel (%p136) target = $region8
    $region5: #{tpu_custom_call.1} parent=1 // loop_body
      %s140 = ssub.s32 %s135, 1
      %s141 = ssub.s32 %s135, 2
      %s142 = sadd.s32 %s135, 1
      %s143 = ssub.s32 %s135, %s142
      %p144 = scmp.eq.s32.totalorder %s143, 0
      %s146 = sadd.s32 %s145, 1
      %s147 = scalar_select %p144, %s145, %s146
      %p150 = pneg %p144
      %p151 = scmp.eq.s32.totalorder %s135, 1
      %p152 = por %p150, %p151
      %p153 = scmp.ne.s32.totalorder %s145, %s148
      %p154 = scmp.eq.s32.totalorder %s135, 0
      %p155 = por %p153, %p154
      %p156 = scmp.ne.s32.totalorder %s145, %s148
      %p157 = scmp.eq.s32.totalorder %s140, 1
      %p158 = por %p156, %p157
      %p159 = scmp.ne.s32.totalorder %s148, %s149
      %p160 = scmp.eq.s32.totalorder %s140, 0
      %p161 = por %p159, %p160
      %p162 = scmp.ne.s32.totalorder %s148, %s149
      %p163 = scmp.eq.s32.totalorder %s141, 1
      %p164 = por %p162, %p163
      %p166 = scmp.ne.s32.totalorder %s149, %s165
      %p167 = scmp.eq.s32.totalorder %s141, 0
      %p168 = por %p166, %p167
      %s169 = ssub.s32 %s135, %s142
      %p170 = scmp.eq.s32.totalorder %s169, 0
      %s172 = sadd.s32 %s171, 1
      %s173 = scalar_select %p170, %s171, %s172
      %p176 = pneg %p170
      %p177 = scmp.eq.s32.totalorder %s135, 1
      %p178 = por %p176, %p177
      %p179 = scmp.ne.s32.totalorder %s171, %s174
      %p180 = scmp.eq.s32.totalorder %s135, 0
      %p181 = por %p179, %p180
      %p182 = scmp.ne.s32.totalorder %s171, %s174
      %p183 = scmp.eq.s32.totalorder %s140, 1
      %p184 = por %p182, %p183
      %p185 = scmp.ne.s32.totalorder %s174, %s175
      %p186 = scmp.eq.s32.totalorder %s140, 0
      %p187 = por %p185, %p186
      %p188 = scmp.ne.s32.totalorder %s174, %s175
      %p189 = scmp.eq.s32.totalorder %s141, 1
      %p190 = por %p188, %p189
      %p192 = scmp.ne.s32.totalorder %s175, %s191
      %p193 = scmp.eq.s32.totalorder %s141, 0
      %p194 = por %p192, %p193
      %s196 = sadd.s32 %s195, 1
      %p199 = scmp.eq.s32.totalorder %s135, 1
      %p200 = scmp.ne.s32.totalorder %s195, %s197
      %p201 = scmp.eq.s32.totalorder %s135, 0
      %p202 = por %p200, %p201
      %p203 = scmp.ne.s32.totalorder %s195, %s197
      %p204 = scmp.eq.s32.totalorder %s140, 1
      %p205 = por %p203, %p204
      %p206 = scmp.ne.s32.totalorder %s197, %s198
      %p207 = scmp.eq.s32.totalorder %s140, 0
      %p208 = por %p206, %p207
      %p209 = scmp.ne.s32.totalorder %s197, %s198
      %p210 = scmp.eq.s32.totalorder %s141, 1
      %p211 = por %p209, %p210
      %p213 = scmp.ne.s32.totalorder %s198, %s212
      %p214 = scmp.eq.s32.totalorder %s141, 0
      %p215 = por %p213, %p214
      %s217 = sadd.s32 %s216, 1
      %p220 = scmp.eq.s32.totalorder %s135, 1
      %p221 = scmp.ne.s32.totalorder %s216, %s218
      %p222 = scmp.eq.s32.totalorder %s135, 0
      %p223 = por %p221, %p222
      %p224 = scmp.ne.s32.totalorder %s216, %s218
      %p225 = scmp.eq.s32.totalorder %s140, 1
      %p226 = por %p224, %p225
      %p227 = scmp.ne.s32.totalorder %s218, %s219
      %p228 = scmp.eq.s32.totalorder %s140, 0
      %p229 = por %p227, %p228
      %p230 = scmp.ne.s32.totalorder %s218, %s219
      %p231 = scmp.eq.s32.totalorder %s141, 1
      %p232 = por %p230, %p231
      %p234 = scmp.ne.s32.totalorder %s219, %s233
      %p235 = scmp.eq.s32.totalorder %s141, 0
      %p236 = por %p234, %p235
      %s238 = sadd.s32 %s237, 1
      %p241 = scmp.eq.s32.totalorder %s135, 1
      %p242 = scmp.ne.s32.totalorder %s237, %s239
      %p243 = scmp.eq.s32.totalorder %s135, 0
      %p244 = por %p242, %p243
      %p245 = scmp.ne.s32.totalorder %s237, %s239
      %p246 = scmp.eq.s32.totalorder %s140, 1
      %p247 = por %p245, %p246
      %p248 = scmp.ne.s32.totalorder %s239, %s240
      %p249 = scmp.eq.s32.totalorder %s140, 0
      %p250 = por %p248, %p249
      %p251 = scmp.ne.s32.totalorder %s239, %s240
      %p252 = scmp.eq.s32.totalorder %s141, 1
      %p253 = por %p251, %p252
      %p255 = scmp.ne.s32.totalorder %s240, %s254
      %p256 = scmp.eq.s32.totalorder %s141, 0
      %p257 = por %p255, %p256
      %s259 = sadd.s32 %s258, 1
      %p262 = scmp.eq.s32.totalorder %s135, 1
      %p263 = scmp.ne.s32.totalorder %s258, %s260
      %p264 = scmp.eq.s32.totalorder %s135, 0
      %p265 = por %p263, %p264
      %p266 = scmp.ne.s32.totalorder %s258, %s260
      %p267 = scmp.eq.s32.totalorder %s140, 1
      %p268 = por %p266, %p267
      %p269 = scmp.ne.s32.totalorder %s260, %s261
      %p270 = scmp.eq.s32.totalorder %s140, 0
      %p271 = por %p269, %p270
      %p272 = scmp.ne.s32.totalorder %s260, %s261
      %p273 = scmp.eq.s32.totalorder %s141, 1
      %p274 = por %p272, %p273
      %p276 = scmp.ne.s32.totalorder %s261, %s275
      %p277 = scmp.eq.s32.totalorder %s141, 0
      %p278 = por %p276, %p277
      %s280 = sadd.s32 %s279, 1
      %p283 = scmp.eq.s32.totalorder %s135, 1
      %p284 = scmp.ne.s32.totalorder %s279, %s281
      %p285 = scmp.eq.s32.totalorder %s135, 0
      %p286 = por %p284, %p285
      %p287 = scmp.ne.s32.totalorder %s279, %s281
      %p288 = scmp.eq.s32.totalorder %s140, 1
      %p289 = por %p287, %p288
      %p290 = scmp.ne.s32.totalorder %s281, %s282
      %p291 = scmp.eq.s32.totalorder %s140, 0
      %p292 = por %p290, %p291
      %p293 = scmp.ne.s32.totalorder %s281, %s282
      %p294 = scmp.eq.s32.totalorder %s141, 1
      %p295 = por %p293, %p294
      %p297 = scmp.ne.s32.totalorder %s282, %s296
      %p298 = scmp.eq.s32.totalorder %s141, 0
      %p299 = por %p297, %p298
      %s301 = sadd.s32 %s300, 1
      %p304 = scmp.eq.s32.totalorder %s135, 1
      %p305 = scmp.ne.s32.totalorder %s300, %s302
      %p306 = scmp.eq.s32.totalorder %s135, 0
      %p307 = por %p305, %p306
      %p308 = scmp.ne.s32.totalorder %s300, %s302
      %p309 = scmp.eq.s32.totalorder %s140, 1
      %p310 = por %p308, %p309
      %p311 = scmp.ne.s32.totalorder %s302, %s303
      %p312 = scmp.eq.s32.totalorder %s140, 0
      %p313 = por %p311, %p312
      %p314 = scmp.ne.s32.totalorder %s302, %s303
      %p315 = scmp.eq.s32.totalorder %s141, 1
      %p316 = por %p314, %p315
      %p318 = scmp.ne.s32.totalorder %s303, %s317
      %p319 = scmp.eq.s32.totalorder %s141, 0
      %p320 = por %p318, %p319
      %s322 = sadd.s32 %s321, 1
      %p325 = scmp.eq.s32.totalorder %s135, 1
      %p326 = scmp.ne.s32.totalorder %s321, %s323
      %p327 = scmp.eq.s32.totalorder %s135, 0
      %p328 = por %p326, %p327
      %p329 = scmp.ne.s32.totalorder %s321, %s323
      %p330 = scmp.eq.s32.totalorder %s140, 1
      %p331 = por %p329, %p330
      %p332 = scmp.ne.s32.totalorder %s323, %s324
      %p333 = scmp.eq.s32.totalorder %s140, 0
      %p334 = por %p332, %p333
      %p335 = scmp.ne.s32.totalorder %s323, %s324
      %p336 = scmp.eq.s32.totalorder %s141, 1
      %p337 = por %p335, %p336
      %p339 = scmp.ne.s32.totalorder %s324, %s338
      %p340 = scmp.eq.s32.totalorder %s141, 0
      %p341 = por %p339, %p340
      %s343 = sadd.s32 %s342, 1
      %p346 = scmp.eq.s32.totalorder %s135, 1
      %p347 = scmp.ne.s32.totalorder %s342, %s344
      %p348 = scmp.eq.s32.totalorder %s135, 0
      %p349 = por %p347, %p348
      %p350 = scmp.ne.s32.totalorder %s342, %s344
      %p351 = scmp.eq.s32.totalorder %s140, 1
      %p352 = por %p350, %p351
      %p353 = scmp.ne.s32.totalorder %s344, %s345
      %p354 = scmp.eq.s32.totalorder %s140, 0
      %p355 = por %p353, %p354
      %p356 = scmp.ne.s32.totalorder %s344, %s345
      %p357 = scmp.eq.s32.totalorder %s141, 1
      %p358 = por %p356, %p357
      %p360 = scmp.ne.s32.totalorder %s345, %s359
      %p361 = scmp.eq.s32.totalorder %s141, 0
      %p362 = por %p360, %p361
      %s364 = sadd.s32 %s363, 1
      %p367 = scmp.eq.s32.totalorder %s135, 1
      %p368 = scmp.ne.s32.totalorder %s363, %s365
      %p369 = scmp.eq.s32.totalorder %s135, 0
      %p370 = por %p368, %p369
      %p371 = scmp.ne.s32.totalorder %s363, %s365
      %p372 = scmp.eq.s32.totalorder %s140, 1
      %p373 = por %p371, %p372
      %p374 = scmp.ne.s32.totalorder %s365, %s366
      %p375 = scmp.eq.s32.totalorder %s140, 0
      %p376 = por %p374, %p375
      %p377 = scmp.ne.s32.totalorder %s365, %s366
      %p378 = scmp.eq.s32.totalorder %s141, 1
      %p379 = por %p377, %p378
      %p381 = scmp.ne.s32.totalorder %s366, %s380
      %p382 = scmp.eq.s32.totalorder %s141, 0
      %p383 = por %p381, %p382
      %s385 = sadd.s32 %s384, 1
      %p388 = scmp.eq.s32.totalorder %s135, 1
      %p389 = scmp.ne.s32.totalorder %s384, %s386
      %p390 = scmp.eq.s32.totalorder %s135, 0
      %p391 = por %p389, %p390
      %p392 = scmp.ne.s32.totalorder %s384, %s386
      %p393 = scmp.eq.s32.totalorder %s140, 1
      %p394 = por %p392, %p393
      %p395 = scmp.ne.s32.totalorder %s386, %s387
      %p396 = scmp.eq.s32.totalorder %s140, 0
      %p397 = por %p395, %p396
      %p398 = scmp.ne.s32.totalorder %s386, %s387
      %p399 = scmp.eq.s32.totalorder %s141, 1
      %p400 = por %p398, %p399
      %p402 = scmp.ne.s32.totalorder %s387, %s401
      %p403 = scmp.eq.s32.totalorder %s141, 0
      %p404 = por %p402, %p403
      %s406 = sadd.s32 %s405, 1
      %p409 = scmp.eq.s32.totalorder %s135, 1
      %p410 = scmp.ne.s32.totalorder %s405, %s407
      %p411 = scmp.eq.s32.totalorder %s135, 0
      %p412 = por %p410, %p411
      %p413 = scmp.ne.s32.totalorder %s405, %s407
      %p414 = scmp.eq.s32.totalorder %s140, 1
      %p415 = por %p413, %p414
      %p416 = scmp.ne.s32.totalorder %s407, %s408
      %p417 = scmp.eq.s32.totalorder %s140, 0
      %p418 = por %p416, %p417
      %p419 = scmp.ne.s32.totalorder %s407, %s408
      %p420 = scmp.eq.s32.totalorder %s141, 1
      %p421 = por %p419, %p420
      %p423 = scmp.ne.s32.totalorder %s408, %s422
      %p424 = scmp.eq.s32.totalorder %s141, 0
      %p425 = por %p423, %p424
      %s427 = sadd.s32 %s426, 1
      %p430 = scmp.eq.s32.totalorder %s135, 1
      %p431 = scmp.ne.s32.totalorder %s426, %s428
      %p432 = scmp.eq.s32.totalorder %s135, 0
      %p433 = por %p431, %p432
      %p434 = scmp.ne.s32.totalorder %s426, %s428
      %p435 = scmp.eq.s32.totalorder %s140, 1
      %p436 = por %p434, %p435
      %p437 = scmp.ne.s32.totalorder %s428, %s429
      %p438 = scmp.eq.s32.totalorder %s140, 0
      %p439 = por %p437, %p438
      %p440 = scmp.ne.s32.totalorder %s428, %s429
      %p441 = scmp.eq.s32.totalorder %s141, 1
      %p442 = por %p440, %p441
      %p444 = scmp.ne.s32.totalorder %s429, %s443
      %p445 = scmp.eq.s32.totalorder %s141, 0
      %p446 = por %p444, %p445
      %s448 = sadd.s32 %s447, 1
      %p451 = scmp.eq.s32.totalorder %s135, 1
      %p452 = scmp.ne.s32.totalorder %s447, %s449
      %p453 = scmp.eq.s32.totalorder %s135, 0
      %p454 = por %p452, %p453
      %p455 = scmp.ne.s32.totalorder %s447, %s449
      %p456 = scmp.eq.s32.totalorder %s140, 1
      %p457 = por %p455, %p456
      %p458 = scmp.ne.s32.totalorder %s449, %s450
      %p459 = scmp.eq.s32.totalorder %s140, 0
      %p460 = por %p458, %p459
      %p461 = scmp.ne.s32.totalorder %s449, %s450
      %p462 = scmp.eq.s32.totalorder %s141, 1
      %p463 = por %p461, %p462
      %p465 = scmp.ne.s32.totalorder %s450, %s464
      %p466 = scmp.eq.s32.totalorder %s141, 0
      %p467 = por %p465, %p466
      %s469 = sadd.s32 %s468, 1
      %p472 = scmp.eq.s32.totalorder %s135, 1
      %p473 = scmp.ne.s32.totalorder %s468, %s470
      %p474 = scmp.eq.s32.totalorder %s135, 0
      %p475 = por %p473, %p474
      %p476 = scmp.ne.s32.totalorder %s468, %s470
      %p477 = scmp.eq.s32.totalorder %s140, 1
      %p478 = por %p476, %p477
      %p479 = scmp.ne.s32.totalorder %s470, %s471
      %p480 = scmp.eq.s32.totalorder %s140, 0
      %p481 = por %p479, %p480
      %p482 = scmp.ne.s32.totalorder %s470, %s471
      %p483 = scmp.eq.s32.totalorder %s141, 1
      %p484 = por %p482, %p483
      %p486 = scmp.ne.s32.totalorder %s471, %s485
      %p487 = scmp.eq.s32.totalorder %s141, 0
      %p488 = por %p486, %p487
      %s490 = sadd.s32 %s489, 1
      %p493 = scmp.eq.s32.totalorder %s135, 1
      %p494 = scmp.ne.s32.totalorder %s489, %s491
      %p495 = scmp.eq.s32.totalorder %s135, 0
      %p496 = por %p494, %p495
      %p497 = scmp.ne.s32.totalorder %s489, %s491
      %p498 = scmp.eq.s32.totalorder %s140, 1
      %p499 = por %p497, %p498
      %p500 = scmp.ne.s32.totalorder %s491, %s492
      %p501 = scmp.eq.s32.totalorder %s140, 0
      %p502 = por %p500, %p501
      %p503 = scmp.ne.s32.totalorder %s491, %s492
      %p504 = scmp.eq.s32.totalorder %s141, 1
      %p505 = por %p503, %p504
      %p507 = scmp.ne.s32.totalorder %s492, %s506
      %p508 = scmp.eq.s32.totalorder %s141, 0
      %p509 = por %p507, %p508
      %s511 = sadd.s32 %s510, 1
      %p514 = scmp.eq.s32.totalorder %s135, 1
      %p515 = scmp.ne.s32.totalorder %s510, %s512
      %p516 = scmp.eq.s32.totalorder %s135, 0
      %p517 = por %p515, %p516
      %p518 = scmp.ne.s32.totalorder %s510, %s512
      %p519 = scmp.eq.s32.totalorder %s140, 1
      %p520 = por %p518, %p519
      %p521 = scmp.ne.s32.totalorder %s512, %s513
      %p522 = scmp.eq.s32.totalorder %s140, 0
      %p523 = por %p521, %p522
      %p524 = scmp.ne.s32.totalorder %s512, %s513
      %p525 = scmp.eq.s32.totalorder %s141, 1
      %p526 = por %p524, %p525
      %p528 = scmp.ne.s32.totalorder %s513, %s527
      %p529 = scmp.eq.s32.totalorder %s141, 0
      %p530 = por %p528, %p529
      %s532 = sadd.s32 %s531, 1
      %p535 = scmp.eq.s32.totalorder %s135, 1
      %p536 = scmp.ne.s32.totalorder %s531, %s533
      %p537 = scmp.eq.s32.totalorder %s135, 0
      %p538 = por %p536, %p537
      %p539 = scmp.ne.s32.totalorder %s531, %s533
      %p540 = scmp.eq.s32.totalorder %s140, 1
      %p541 = por %p539, %p540
      %p542 = scmp.ne.s32.totalorder %s533, %s534
      %p543 = scmp.eq.s32.totalorder %s140, 0
      %p544 = por %p542, %p543
      %p545 = scmp.ne.s32.totalorder %s533, %s534
      %p546 = scmp.eq.s32.totalorder %s141, 1
      %p547 = por %p545, %p546
      %p549 = scmp.ne.s32.totalorder %s534, %s548
      %p550 = scmp.eq.s32.totalorder %s141, 0
      %p551 = por %p549, %p550
      %s553 = sadd.s32 %s552, 1
      %p556 = scmp.eq.s32.totalorder %s135, 1
      %p557 = scmp.ne.s32.totalorder %s552, %s554
      %p558 = scmp.eq.s32.totalorder %s135, 0
      %p559 = por %p557, %p558
      %p560 = scmp.ne.s32.totalorder %s552, %s554
      %p561 = scmp.eq.s32.totalorder %s140, 1
      %p562 = por %p560, %p561
      %p563 = scmp.ne.s32.totalorder %s554, %s555
      %p564 = scmp.eq.s32.totalorder %s140, 0
      %p565 = por %p563, %p564
      %p566 = scmp.ne.s32.totalorder %s554, %s555
      %p567 = scmp.eq.s32.totalorder %s141, 1
      %p568 = por %p566, %p567
      %p570 = scmp.ne.s32.totalorder %s555, %s569
      %p571 = scmp.eq.s32.totalorder %s141, 0
      %p572 = por %p570, %p571
      %s574 = sadd.s32 %s573, 1
      %p577 = scmp.eq.s32.totalorder %s135, 1
      %p578 = scmp.ne.s32.totalorder %s573, %s575
      %p579 = scmp.eq.s32.totalorder %s135, 0
      %p580 = por %p578, %p579
      %p581 = scmp.ne.s32.totalorder %s573, %s575
      %p582 = scmp.eq.s32.totalorder %s140, 1
      %p583 = por %p581, %p582
      %p584 = scmp.ne.s32.totalorder %s575, %s576
      %p585 = scmp.eq.s32.totalorder %s140, 0
      %p586 = por %p584, %p585
      %p587 = scmp.ne.s32.totalorder %s575, %s576
      %p588 = scmp.eq.s32.totalorder %s141, 1
      %p589 = por %p587, %p588
      %p591 = scmp.ne.s32.totalorder %s576, %s590
      %p592 = scmp.eq.s32.totalorder %s141, 0
      %p593 = por %p591, %p592
      %s595 = sadd.s32 %s594, 1
      %p598 = scmp.eq.s32.totalorder %s135, 1
      %p599 = scmp.ne.s32.totalorder %s594, %s596
      %p600 = scmp.eq.s32.totalorder %s135, 0
      %p601 = por %p599, %p600
      %p602 = scmp.ne.s32.totalorder %s594, %s596
      %p603 = scmp.eq.s32.totalorder %s140, 1
      %p604 = por %p602, %p603
      %p605 = scmp.ne.s32.totalorder %s596, %s597
      %p606 = scmp.eq.s32.totalorder %s140, 0
      %p607 = por %p605, %p606
      %p608 = scmp.ne.s32.totalorder %s596, %s597
      %p609 = scmp.eq.s32.totalorder %s141, 1
      %p610 = por %p608, %p609
      %p612 = scmp.ne.s32.totalorder %s597, %s611
      %p613 = scmp.eq.s32.totalorder %s141, 0
      %p614 = por %p612, %p613
      %s616 = sadd.s32 %s615, 1
      %p619 = scmp.eq.s32.totalorder %s135, 1
      %p620 = scmp.ne.s32.totalorder %s615, %s617
      %p621 = scmp.eq.s32.totalorder %s135, 0
      %p622 = por %p620, %p621
      %p623 = scmp.ne.s32.totalorder %s615, %s617
      %p624 = scmp.eq.s32.totalorder %s140, 1
      %p625 = por %p623, %p624
      %p626 = scmp.ne.s32.totalorder %s617, %s618
      %p627 = scmp.eq.s32.totalorder %s140, 0
      %p628 = por %p626, %p627
      %p629 = scmp.ne.s32.totalorder %s617, %s618
      %p630 = scmp.eq.s32.totalorder %s141, 1
      %p631 = por %p629, %p630
      %p633 = scmp.ne.s32.totalorder %s618, %s632
      %p634 = scmp.eq.s32.totalorder %s141, 0
      %p635 = por %p633, %p634
      %s637 = sadd.s32 %s636, 1
      %p640 = scmp.eq.s32.totalorder %s135, 1
      %p641 = scmp.ne.s32.totalorder %s636, %s638
      %p642 = scmp.eq.s32.totalorder %s135, 0
      %p643 = por %p641, %p642
      %p644 = scmp.ne.s32.totalorder %s636, %s638
      %p645 = scmp.eq.s32.totalorder %s140, 1
      %p646 = por %p644, %p645
      %p647 = scmp.ne.s32.totalorder %s638, %s639
      %p648 = scmp.eq.s32.totalorder %s140, 0
      %p649 = por %p647, %p648
      %p650 = scmp.ne.s32.totalorder %s638, %s639
      %p651 = scmp.eq.s32.totalorder %s141, 1
      %p652 = por %p650, %p651
      %p654 = scmp.ne.s32.totalorder %s639, %s653
      %p655 = scmp.eq.s32.totalorder %s141, 0
      %p656 = por %p654, %p655
      %s658 = sadd.s32 %s657, 1
      %p661 = scmp.eq.s32.totalorder %s135, 1
      %p662 = scmp.ne.s32.totalorder %s657, %s659
      %p663 = scmp.eq.s32.totalorder %s135, 0
      %p664 = por %p662, %p663
      %p665 = scmp.ne.s32.totalorder %s657, %s659
      %p666 = scmp.eq.s32.totalorder %s140, 1
      %p667 = por %p665, %p666
      %p668 = scmp.ne.s32.totalorder %s659, %s660
      %p669 = scmp.eq.s32.totalorder %s140, 0
      %p670 = por %p668, %p669
      %p671 = scmp.ne.s32.totalorder %s659, %s660
      %p672 = scmp.eq.s32.totalorder %s141, 1
      %p673 = por %p671, %p672
      %p675 = scmp.ne.s32.totalorder %s660, %s674
      %p676 = scmp.eq.s32.totalorder %s141, 0
      %p677 = por %p675, %p676
      %s679 = sadd.s32 %s678, 1
      %p682 = scmp.eq.s32.totalorder %s135, 1
      %p683 = scmp.ne.s32.totalorder %s678, %s680
      %p684 = scmp.eq.s32.totalorder %s135, 0
      %p685 = por %p683, %p684
      %p686 = scmp.ne.s32.totalorder %s678, %s680
      %p687 = scmp.eq.s32.totalorder %s140, 1
      %p688 = por %p686, %p687
      %p689 = scmp.ne.s32.totalorder %s680, %s681
      %p690 = scmp.eq.s32.totalorder %s140, 0
      %p691 = por %p689, %p690
      %p692 = scmp.ne.s32.totalorder %s680, %s681
      %p693 = scmp.eq.s32.totalorder %s141, 1
      %p694 = por %p692, %p693
      %p696 = scmp.ne.s32.totalorder %s681, %s695
      %p697 = scmp.eq.s32.totalorder %s141, 0
      %p698 = por %p696, %p697
      %s700 = sadd.s32 %s699, 1
      %p703 = scmp.eq.s32.totalorder %s135, 1
      %p704 = scmp.ne.s32.totalorder %s699, %s701
      %p705 = scmp.eq.s32.totalorder %s135, 0
      %p706 = por %p704, %p705
      %p707 = scmp.ne.s32.totalorder %s699, %s701
      %p708 = scmp.eq.s32.totalorder %s140, 1
      %p709 = por %p707, %p708
      %p710 = scmp.ne.s32.totalorder %s701, %s702
      %p711 = scmp.eq.s32.totalorder %s140, 0
      %p712 = por %p710, %p711
      %p713 = scmp.ne.s32.totalorder %s701, %s702
      %p714 = scmp.eq.s32.totalorder %s141, 1
      %p715 = por %p713, %p714
      %p717 = scmp.ne.s32.totalorder %s702, %s716
      %p718 = scmp.eq.s32.totalorder %s141, 0
      %p719 = por %p717, %p718
      %s721 = sadd.s32 %s720, 1
      %p724 = scmp.eq.s32.totalorder %s135, 1
      %p725 = scmp.ne.s32.totalorder %s720, %s722
      %p726 = scmp.eq.s32.totalorder %s135, 0
      %p727 = por %p725, %p726
      %p728 = scmp.ne.s32.totalorder %s720, %s722
      %p729 = scmp.eq.s32.totalorder %s140, 1
      %p730 = por %p728, %p729
      %p731 = scmp.ne.s32.totalorder %s722, %s723
      %p732 = scmp.eq.s32.totalorder %s140, 0
      %p733 = por %p731, %p732
      %p734 = scmp.ne.s32.totalorder %s722, %s723
      %p735 = scmp.eq.s32.totalorder %s141, 1
      %p736 = por %p734, %p735
      %p738 = scmp.ne.s32.totalorder %s723, %s737
      %p739 = scmp.eq.s32.totalorder %s141, 0
      %p740 = por %p738, %p739
      %s742 = sadd.s32 %s741, 1
      %p745 = scmp.eq.s32.totalorder %s135, 1
      %p746 = scmp.ne.s32.totalorder %s741, %s743
      %p747 = scmp.eq.s32.totalorder %s135, 0
      %p748 = por %p746, %p747
      %p749 = scmp.ne.s32.totalorder %s741, %s743
      %p750 = scmp.eq.s32.totalorder %s140, 1
      %p751 = por %p749, %p750
      %p752 = scmp.ne.s32.totalorder %s743, %s744
      %p753 = scmp.eq.s32.totalorder %s140, 0
      %p754 = por %p752, %p753
      %p755 = scmp.ne.s32.totalorder %s743, %s744
      %p756 = scmp.eq.s32.totalorder %s141, 1
      %p757 = por %p755, %p756
      %p759 = scmp.ne.s32.totalorder %s744, %s758
      %p760 = scmp.eq.s32.totalorder %s141, 0
      %p761 = por %p759, %p760
      %s763 = sadd.s32 %s762, 1
      %p766 = scmp.eq.s32.totalorder %s135, 1
      %p767 = scmp.ne.s32.totalorder %s762, %s764
      %p768 = scmp.eq.s32.totalorder %s135, 0
      %p769 = por %p767, %p768
      %p770 = scmp.ne.s32.totalorder %s762, %s764
      %p771 = scmp.eq.s32.totalorder %s140, 1
      %p772 = por %p770, %p771
      %p773 = scmp.ne.s32.totalorder %s764, %s765
      %p774 = scmp.eq.s32.totalorder %s140, 0
      %p775 = por %p773, %p774
      %p776 = scmp.ne.s32.totalorder %s764, %s765
      %p777 = scmp.eq.s32.totalorder %s141, 1
      %p778 = por %p776, %p777
      %p780 = scmp.ne.s32.totalorder %s765, %s779
      %p781 = scmp.eq.s32.totalorder %s141, 0
      %p782 = por %p780, %p781
      %s784 = sadd.s32 %s783, 1
      %p787 = scmp.eq.s32.totalorder %s135, 1
      %p788 = scmp.ne.s32.totalorder %s783, %s785
      %p789 = scmp.eq.s32.totalorder %s135, 0
      %p790 = por %p788, %p789
      %p791 = scmp.ne.s32.totalorder %s783, %s785
      %p792 = scmp.eq.s32.totalorder %s140, 1
      %p793 = por %p791, %p792
      %p794 = scmp.ne.s32.totalorder %s785, %s786
      %p795 = scmp.eq.s32.totalorder %s140, 0
      %p796 = por %p794, %p795
      %p797 = scmp.ne.s32.totalorder %s785, %s786
      %p798 = scmp.eq.s32.totalorder %s141, 1
      %p799 = por %p797, %p798
      %p801 = scmp.ne.s32.totalorder %s786, %s800
      %p802 = scmp.eq.s32.totalorder %s141, 0
      %p803 = por %p801, %p802
      %s805 = sadd.s32 %s804, 1
      %p808 = scmp.eq.s32.totalorder %s135, 1
      %p809 = scmp.ne.s32.totalorder %s804, %s806
      %p810 = scmp.eq.s32.totalorder %s135, 0
      %p811 = por %p809, %p810
      %p812 = scmp.ne.s32.totalorder %s804, %s806
      %p813 = scmp.eq.s32.totalorder %s140, 1
      %p814 = por %p812, %p813
      %p815 = scmp.ne.s32.totalorder %s806, %s807
      %p816 = scmp.eq.s32.totalorder %s140, 0
      %p817 = por %p815, %p816
      %p818 = scmp.ne.s32.totalorder %s806, %s807
      %p819 = scmp.eq.s32.totalorder %s141, 1
      %p820 = por %p818, %p819
      %p822 = scmp.ne.s32.totalorder %s807, %s821
      %p823 = scmp.eq.s32.totalorder %s141, 0
      %p824 = por %p822, %p823
      %s826 = sadd.s32 %s825, 1
      %p829 = scmp.eq.s32.totalorder %s135, 1
      %p830 = scmp.ne.s32.totalorder %s825, %s827
      %p831 = scmp.eq.s32.totalorder %s135, 0
      %p832 = por %p830, %p831
      %p833 = scmp.ne.s32.totalorder %s825, %s827
      %p834 = scmp.eq.s32.totalorder %s140, 1
      %p835 = por %p833, %p834
      %p836 = scmp.ne.s32.totalorder %s827, %s828
      %p837 = scmp.eq.s32.totalorder %s140, 0
      %p838 = por %p836, %p837
      %p839 = scmp.ne.s32.totalorder %s827, %s828
      %p840 = scmp.eq.s32.totalorder %s141, 1
      %p841 = por %p839, %p840
      %p843 = scmp.ne.s32.totalorder %s828, %s842
      %p844 = scmp.eq.s32.totalorder %s141, 0
      %p845 = por %p843, %p844
      %s847 = sadd.s32 %s846, 1
      %p850 = scmp.eq.s32.totalorder %s135, 1
      %p851 = scmp.ne.s32.totalorder %s846, %s848
      %p852 = scmp.eq.s32.totalorder %s135, 0
      %p853 = por %p851, %p852
      %p854 = scmp.ne.s32.totalorder %s846, %s848
      %p855 = scmp.eq.s32.totalorder %s140, 1
      %p856 = por %p854, %p855
      %p857 = scmp.ne.s32.totalorder %s848, %s849
      %p858 = scmp.eq.s32.totalorder %s140, 0
      %p859 = por %p857, %p858
      %p860 = scmp.ne.s32.totalorder %s848, %s849
      %p861 = scmp.eq.s32.totalorder %s141, 1
      %p862 = por %p860, %p861
      %p864 = scmp.ne.s32.totalorder %s849, %s863
      %p865 = scmp.eq.s32.totalorder %s141, 0
      %p866 = por %p864, %p865
      %s868 = sadd.s32 %s867, 1
      %p871 = scmp.eq.s32.totalorder %s135, 1
      %p872 = scmp.ne.s32.totalorder %s867, %s869
      %p873 = scmp.eq.s32.totalorder %s135, 0
      %p874 = por %p872, %p873
      %p875 = scmp.ne.s32.totalorder %s867, %s869
      %p876 = scmp.eq.s32.totalorder %s140, 1
      %p877 = por %p875, %p876
      %p878 = scmp.ne.s32.totalorder %s869, %s870
      %p879 = scmp.eq.s32.totalorder %s140, 0
      %p880 = por %p878, %p879
      %p881 = scmp.ne.s32.totalorder %s869, %s870
      %p882 = scmp.eq.s32.totalorder %s141, 1
      %p883 = por %p881, %p882
      %p885 = scmp.ne.s32.totalorder %s870, %s884
      %p886 = scmp.eq.s32.totalorder %s141, 0
      %p887 = por %p885, %p886
      %s889 = sadd.s32 %s888, 1
      %p892 = scmp.eq.s32.totalorder %s135, 1
      %p893 = scmp.ne.s32.totalorder %s888, %s890
      %p894 = scmp.eq.s32.totalorder %s135, 0
      %p895 = por %p893, %p894
      %p896 = scmp.ne.s32.totalorder %s888, %s890
      %p897 = scmp.eq.s32.totalorder %s140, 1
      %p898 = por %p896, %p897
      %p899 = scmp.ne.s32.totalorder %s890, %s891
      %p900 = scmp.eq.s32.totalorder %s140, 0
      %p901 = por %p899, %p900
      %p902 = scmp.ne.s32.totalorder %s890, %s891
      %p903 = scmp.eq.s32.totalorder %s141, 1
      %p904 = por %p902, %p903
      %p906 = scmp.ne.s32.totalorder %s891, %s905
      %p907 = scmp.eq.s32.totalorder %s141, 0
      %p908 = por %p906, %p907
      %s910 = sadd.s32 %s909, 1
      %p913 = scmp.eq.s32.totalorder %s135, 1
      %p914 = scmp.ne.s32.totalorder %s909, %s911
      %p915 = scmp.eq.s32.totalorder %s135, 0
      %p916 = por %p914, %p915
      %p917 = scmp.ne.s32.totalorder %s909, %s911
      %p918 = scmp.eq.s32.totalorder %s140, 1
      %p919 = por %p917, %p918
      %p920 = scmp.ne.s32.totalorder %s911, %s912
      %p921 = scmp.eq.s32.totalorder %s140, 0
      %p922 = por %p920, %p921
      %p923 = scmp.ne.s32.totalorder %s911, %s912
      %p924 = scmp.eq.s32.totalorder %s141, 1
      %p925 = por %p923, %p924
      %p927 = scmp.ne.s32.totalorder %s912, %s926
      %p928 = scmp.eq.s32.totalorder %s141, 0
      %p929 = por %p927, %p928
      %s931 = sadd.s32 %s930, 1
      %p934 = scmp.eq.s32.totalorder %s135, 1
      %p935 = scmp.ne.s32.totalorder %s930, %s932
      %p936 = scmp.eq.s32.totalorder %s135, 0
      %p937 = por %p935, %p936
      %p938 = scmp.ne.s32.totalorder %s930, %s932
      %p939 = scmp.eq.s32.totalorder %s140, 1
      %p940 = por %p938, %p939
      %p941 = scmp.ne.s32.totalorder %s932, %s933
      %p942 = scmp.eq.s32.totalorder %s140, 0
      %p943 = por %p941, %p942
      %p944 = scmp.ne.s32.totalorder %s932, %s933
      %p945 = scmp.eq.s32.totalorder %s141, 1
      %p946 = por %p944, %p945
      %p948 = scmp.ne.s32.totalorder %s933, %s947
      %p949 = scmp.eq.s32.totalorder %s141, 0
      %p950 = por %p948, %p949
      %s952 = sadd.s32 %s951, 1
      %p955 = scmp.eq.s32.totalorder %s135, 1
      %p956 = scmp.ne.s32.totalorder %s951, %s953
      %p957 = scmp.eq.s32.totalorder %s135, 0
      %p958 = por %p956, %p957
      %p959 = scmp.ne.s32.totalorder %s951, %s953
      %p960 = scmp.eq.s32.totalorder %s140, 1
      %p961 = por %p959, %p960
      %p962 = scmp.ne.s32.totalorder %s953, %s954
      %p963 = scmp.eq.s32.totalorder %s140, 0
      %p964 = por %p962, %p963
      %p965 = scmp.ne.s32.totalorder %s953, %s954
      %p966 = scmp.eq.s32.totalorder %s141, 1
      %p967 = por %p965, %p966
      %p969 = scmp.ne.s32.totalorder %s954, %s968
      %p970 = scmp.eq.s32.totalorder %s141, 0
      %p971 = por %p969, %p970
      %s973 = sadd.s32 %s972, 1
      %p976 = scmp.eq.s32.totalorder %s135, 1
      %p977 = scmp.ne.s32.totalorder %s972, %s974
      %p978 = scmp.eq.s32.totalorder %s135, 0
      %p979 = por %p977, %p978
      %p980 = scmp.ne.s32.totalorder %s972, %s974
      %p981 = scmp.eq.s32.totalorder %s140, 1
      %p982 = por %p980, %p981
      %p983 = scmp.ne.s32.totalorder %s974, %s975
      %p984 = scmp.eq.s32.totalorder %s140, 0
      %p985 = por %p983, %p984
      %p986 = scmp.ne.s32.totalorder %s974, %s975
      %p987 = scmp.eq.s32.totalorder %s141, 1
      %p988 = por %p986, %p987
      %p990 = scmp.ne.s32.totalorder %s975, %s989
      %p991 = scmp.eq.s32.totalorder %s141, 0
      %p992 = por %p990, %p991
      %s994 = sadd.s32 %s993, 1
      %p997 = scmp.eq.s32.totalorder %s135, 1
      %p998 = scmp.ne.s32.totalorder %s993, %s995
      %p999 = scmp.eq.s32.totalorder %s135, 0
      %p1000 = por %p998, %p999
      %p1001 = scmp.ne.s32.totalorder %s993, %s995
      %p1002 = scmp.eq.s32.totalorder %s140, 1
      %p1003 = por %p1001, %p1002
      %p1004 = scmp.ne.s32.totalorder %s995, %s996
      %p1005 = scmp.eq.s32.totalorder %s140, 0
      %p1006 = por %p1004, %p1005
      %p1007 = scmp.ne.s32.totalorder %s995, %s996
      %p1008 = scmp.eq.s32.totalorder %s141, 1
      %p1009 = por %p1007, %p1008
      %p1011 = scmp.ne.s32.totalorder %s996, %s1010
      %p1012 = scmp.eq.s32.totalorder %s141, 0
      %p1013 = por %p1011, %p1012
      %s1015 = sadd.s32 %s1014, 1
      %p1018 = scmp.eq.s32.totalorder %s135, 1
      %p1019 = scmp.ne.s32.totalorder %s1014, %s1016
      %p1020 = scmp.eq.s32.totalorder %s135, 0
      %p1021 = por %p1019, %p1020
      %p1022 = scmp.ne.s32.totalorder %s1014, %s1016
      %p1023 = scmp.eq.s32.totalorder %s140, 1
      %p1024 = por %p1022, %p1023
      %p1025 = scmp.ne.s32.totalorder %s1016, %s1017
      %p1026 = scmp.eq.s32.totalorder %s140, 0
      %p1027 = por %p1025, %p1026
      %p1028 = scmp.ne.s32.totalorder %s1016, %s1017
      %p1029 = scmp.eq.s32.totalorder %s141, 1
      %p1030 = por %p1028, %p1029
      %p1032 = scmp.ne.s32.totalorder %s1017, %s1031
      %p1033 = scmp.eq.s32.totalorder %s141, 0
      %p1034 = por %p1032, %p1033
      %s1036 = sadd.s32 %s1035, 1
      %p1039 = scmp.eq.s32.totalorder %s135, 1
      %p1040 = scmp.ne.s32.totalorder %s1035, %s1037
      %p1041 = scmp.eq.s32.totalorder %s135, 0
      %p1042 = por %p1040, %p1041
      %p1043 = scmp.ne.s32.totalorder %s1035, %s1037
      %p1044 = scmp.eq.s32.totalorder %s140, 1
      %p1045 = por %p1043, %p1044
      %p1046 = scmp.ne.s32.totalorder %s1037, %s1038
      %p1047 = scmp.eq.s32.totalorder %s140, 0
      %p1048 = por %p1046, %p1047
      %p1049 = scmp.ne.s32.totalorder %s1037, %s1038
      %p1050 = scmp.eq.s32.totalorder %s141, 1
      %p1051 = por %p1049, %p1050
      %p1053 = scmp.ne.s32.totalorder %s1038, %s1052
      %p1054 = scmp.eq.s32.totalorder %s141, 0
      %p1055 = por %p1053, %p1054
      %s1057 = sadd.s32 %s1056, 1
      %p1060 = scmp.eq.s32.totalorder %s135, 1
      %p1061 = scmp.ne.s32.totalorder %s1056, %s1058
      %p1062 = scmp.eq.s32.totalorder %s135, 0
      %p1063 = por %p1061, %p1062
      %p1064 = scmp.ne.s32.totalorder %s1056, %s1058
      %p1065 = scmp.eq.s32.totalorder %s140, 1
      %p1066 = por %p1064, %p1065
      %p1067 = scmp.ne.s32.totalorder %s1058, %s1059
      %p1068 = scmp.eq.s32.totalorder %s140, 0
      %p1069 = por %p1067, %p1068
      %p1070 = scmp.ne.s32.totalorder %s1058, %s1059
      %p1071 = scmp.eq.s32.totalorder %s141, 1
      %p1072 = por %p1070, %p1071
      %p1074 = scmp.ne.s32.totalorder %s1059, %s1073
      %p1075 = scmp.eq.s32.totalorder %s141, 0
      %p1076 = por %p1074, %p1075
      %s1078 = sadd.s32 %s1077, 1
      %p1081 = scmp.eq.s32.totalorder %s135, 1
      %p1082 = scmp.ne.s32.totalorder %s1077, %s1079
      %p1083 = scmp.eq.s32.totalorder %s135, 0
      %p1084 = por %p1082, %p1083
      %p1085 = scmp.ne.s32.totalorder %s1077, %s1079
      %p1086 = scmp.eq.s32.totalorder %s140, 1
      %p1087 = por %p1085, %p1086
      %p1088 = scmp.ne.s32.totalorder %s1079, %s1080
      %p1089 = scmp.eq.s32.totalorder %s140, 0
      %p1090 = por %p1088, %p1089
      %p1091 = scmp.ne.s32.totalorder %s1079, %s1080
      %p1092 = scmp.eq.s32.totalorder %s141, 1
      %p1093 = por %p1091, %p1092
      %p1095 = scmp.ne.s32.totalorder %s1080, %s1094
      %p1096 = scmp.eq.s32.totalorder %s141, 0
      %p1097 = por %p1095, %p1096
      %s1099 = sadd.s32 %s1098, 1
      %p1102 = scmp.eq.s32.totalorder %s135, 1
      %p1103 = scmp.ne.s32.totalorder %s1098, %s1100
      %p1104 = scmp.eq.s32.totalorder %s135, 0
      %p1105 = por %p1103, %p1104
      %p1106 = scmp.ne.s32.totalorder %s1098, %s1100
      %p1107 = scmp.eq.s32.totalorder %s140, 1
      %p1108 = por %p1106, %p1107
      %p1109 = scmp.ne.s32.totalorder %s1100, %s1101
      %p1110 = scmp.eq.s32.totalorder %s140, 0
      %p1111 = por %p1109, %p1110
      %p1112 = scmp.ne.s32.totalorder %s1100, %s1101
      %p1113 = scmp.eq.s32.totalorder %s141, 1
      %p1114 = por %p1112, %p1113
      %p1116 = scmp.ne.s32.totalorder %s1101, %s1115
      %p1117 = scmp.eq.s32.totalorder %s141, 0
      %p1118 = por %p1116, %p1117
      %s1120 = sadd.s32 %s1119, 1
      %p1123 = scmp.eq.s32.totalorder %s135, 1
      %p1124 = scmp.ne.s32.totalorder %s1119, %s1121
      %p1125 = scmp.eq.s32.totalorder %s135, 0
      %p1126 = por %p1124, %p1125
      %p1127 = scmp.ne.s32.totalorder %s1119, %s1121
      %p1128 = scmp.eq.s32.totalorder %s140, 1
      %p1129 = por %p1127, %p1128
      %p1130 = scmp.ne.s32.totalorder %s1121, %s1122
      %p1131 = scmp.eq.s32.totalorder %s140, 0
      %p1132 = por %p1130, %p1131
      %p1133 = scmp.ne.s32.totalorder %s1121, %s1122
      %p1134 = scmp.eq.s32.totalorder %s141, 1
      %p1135 = por %p1133, %p1134
      %p1137 = scmp.ne.s32.totalorder %s1122, %s1136
      %p1138 = scmp.eq.s32.totalorder %s141, 0
      %p1139 = por %p1137, %p1138
      %s1141 = sadd.s32 %s1140, 1
      %p1144 = scmp.eq.s32.totalorder %s135, 1
      %p1145 = scmp.ne.s32.totalorder %s1140, %s1142
      %p1146 = scmp.eq.s32.totalorder %s135, 0
      %p1147 = por %p1145, %p1146
      %p1148 = scmp.ne.s32.totalorder %s1140, %s1142
      %p1149 = scmp.eq.s32.totalorder %s140, 1
      %p1150 = por %p1148, %p1149
      %p1151 = scmp.ne.s32.totalorder %s1142, %s1143
      %p1152 = scmp.eq.s32.totalorder %s140, 0
      %p1153 = por %p1151, %p1152
      %p1154 = scmp.ne.s32.totalorder %s1142, %s1143
      %p1155 = scmp.eq.s32.totalorder %s141, 1
      %p1156 = por %p1154, %p1155
      %p1158 = scmp.ne.s32.totalorder %s1143, %s1157
      %p1159 = scmp.eq.s32.totalorder %s141, 0
      %p1160 = por %p1158, %p1159
      %s1161 = ssub.s32 %s135, %s142
      %p1162 = scmp.eq.s32.totalorder %s1161, 0
      %s1164 = sadd.s32 %s1163, 1
      %s1165 = scalar_select %p1162, %s1163, %s1164
      %p1168 = pneg %p1162
      %p1169 = scmp.eq.s32.totalorder %s135, 1
      %p1170 = por %p1168, %p1169
      %p1171 = scmp.ne.s32.totalorder %s1163, %s1166
      %p1172 = scmp.eq.s32.totalorder %s135, 0
      %p1173 = por %p1171, %p1172
      %p1174 = scmp.ne.s32.totalorder %s1163, %s1166
      %p1175 = scmp.eq.s32.totalorder %s140, 1
      %p1176 = por %p1174, %p1175
      %p1177 = scmp.ne.s32.totalorder %s1166, %s1167
      %p1178 = scmp.eq.s32.totalorder %s140, 0
      %p1179 = por %p1177, %p1178
      %p1180 = scmp.ne.s32.totalorder %s1166, %s1167
      %p1181 = scmp.eq.s32.totalorder %s141, 1
      %p1182 = por %p1180, %p1181
      %p1184 = scmp.ne.s32.totalorder %s1167, %s1183
      %p1185 = scmp.eq.s32.totalorder %s141, 0
      %p1186 = por %p1184, %p1185
      %p1187 = scmp.le.s32.totalorder 1, %s135
      %p1188 = scmp.lt.s32.totalorder %s135, 3
      %p1189 = pnand %p1187, %p1188
      %p1190 = pneg %p1189
      // Predicated region
      $region9: #{tpu_custom_call.1} parent=5 // pred_check
        _
      $region10: #{tpu_custom_call.1} parent=5 // pred_check_branch
        %1192 = sbr.rel (%p1189) target = $region12
      $region11: #{tpu_custom_call.1} parent=5 // pred_region
        %s1193 = ssub.s32 %s135, 1
        // Predicated region
        $region13: #{tpu_custom_call.1} parent=11 // pred_check
          %p1194 = pneg %p208
        $region14: #{tpu_custom_call.1} parent=11 // pred_check_branch
          %1196 = sbr.rel (%p1194) target = $region16
        $region15: #{tpu_custom_call.1} parent=11 // pred_region
          %s1198 = ssub.s32 512, 512
          %1199 = vsyncadd [#allocation6], %s1198
          %s1200 = sshll.u32 [#allocation7], 4
          %s1201 = int_to_ptr.vmem [resolvable:$true] %s1200
          %1206 = dma.hbm_to_vmem [thread:$0]  %s5, 512, %s1201, [#allocation6], 128, 128, 8
        $region16: #{tpu_custom_call.1} parent=11 // pred_fallthru
          _
        // Predicated region
        $region17: #{tpu_custom_call.1} parent=11 // pred_check
          %p1207 = pneg %p229
        $region18: #{tpu_custom_call.1} parent=11 // pred_check_branch
          %1209 = sbr.rel (%p1207) target = $region20
        $region19: #{tpu_custom_call.1} parent=11 // pred_region
          %s1211 = ssub.s32 16, 16
          %1212 = vsyncadd [#allocation9], %s1211
          %s1214 = sshll.u32 [#allocation8], 4
          %s1215 = int_to_ptr.vmem [resolvable:$true] %s1214
          %1217 = dma.hbm_to_vmem [thread:$0]  %s7, 16, %s1215, [#allocation9]
        $region20: #{tpu_custom_call.1} parent=11 // pred_fallthru
          _
        // Predicated region
        $region21: #{tpu_custom_call.1} parent=11 // pred_check
          %p1218 = pneg %p250
        $region22: #{tpu_custom_call.1} parent=11 // pred_check_branch
          %1220 = sbr.rel (%p1218) target = $region24
        $region23: #{tpu_custom_call.1} parent=11 // pred_region
          %s1222 = ssub.s32 512, 512
          %1223 = vsyncadd [#allocation9], %s1222
          %s1224 = sshll.u32 [#allocation10], 4
          %s1225 = int_to_ptr.vmem [resolvable:$true] %s1224
          %1230 = dma.hbm_to_vmem [thread:$0]  %s9, 512, %s1225, [#allocation9], 128, 128, 8
        $region24: #{tpu_custom_call.1} parent=11 // pred_fallthru
          _
        // Predicated region
        $region25: #{tpu_custom_call.1} parent=11 // pred_check
          %p1231 = pneg %p271
        $region26: #{tpu_custom_call.1} parent=11 // pred_check_branch
          %1233 = sbr.rel (%p1231) target = $region28
        $region27: #{tpu_custom_call.1} parent=11 // pred_region
          %s1235 = ssub.s32 16, 16
          %1236 = vsyncadd [#allocation12], %s1235
          %s1238 = sshll.u32 [#allocation11], 4
          %s1239 = int_to_ptr.vmem [resolvable:$true] %s1238
          %1241 = dma.hbm_to_vmem [thread:$0]  %s11, 16, %s1239, [#allocation12]
        $region28: #{tpu_custom_call.1} parent=11 // pred_fallthru
          _
        // Predicated region
        $region29: #{tpu_custom_call.1} parent=11 // pred_check
          %p1242 = pneg %p292
        $region30: #{tpu_custom_call.1} parent=11 // pred_check_branch
          %1244 = sbr.rel (%p1242) target = $region32
        $region31: #{tpu_custom_call.1} parent=11 // pred_region
          %s1246 = ssub.s32 512, 512
          %1247 = vsyncadd [#allocation12], %s1246
          %s1248 = sshll.u32 [#allocation13], 4
          %s1249 = int_to_ptr.vmem [resolvable:$true] %s1248
          %1254 = dma.hbm_to_vmem [thread:$0]  %s13, 512, %s1249, [#allocation12], 128, 128, 8
        $region32: #{tpu_custom_call.1} parent=11 // pred_fallthru
          _
        // Predicated region
        $region33: #{tpu_custom_call.1} parent=11 // pred_check
          %p1255 = pneg %p313
        $region34: #{tpu_custom_call.1} parent=11 // pred_check_branch
          %1257 = sbr.rel (%p1255) target = $region36
        $region35: #{tpu_custom_call.1} parent=11 // pred_region
          %s1259 = ssub.s32 16, 16
          %1260 = vsyncadd [#allocation15], %s1259
          %s1262 = sshll.u32 [#allocation14], 4
          %s1263 = int_to_ptr.vmem [resolvable:$true] %s1262
          %1265 = dma.hbm_to_vmem [thread:$0]  %s15, 16, %s1263, [#allocation15]
        $region36: #{tpu_custom_call.1} parent=11 // pred_fallthru
          _
        // Predicated region
        $region37: #{tpu_custom_call.1} parent=11 // pred_check
          %p1266 = pneg %p334
        $region38: #{tpu_custom_call.1} parent=11 // pred_check_branch
          %1268 = sbr.rel (%p1266) target = $region40
        $region39: #{tpu_custom_call.1} parent=11 // pred_region
          %s1270 = ssub.s32 512, 512
          %1271 = vsyncadd [#allocation15], %s1270
          %s1272 = sshll.u32 [#allocation16], 4
          %s1273 = int_to_ptr.vmem [resolvable:$true] %s1272
          %1278 = dma.hbm_to_vmem [thread:$0]  %s17, 512, %s1273, [#allocation15], 128, 128, 8
        $region40: #{tpu_custom_call.1} parent=11 // pred_fallthru
          _
        // Predicated region
        $region41: #{tpu_custom_call.1} parent=11 // pred_check
          %p1279 = pneg %p355
        $region42: #{tpu_custom_call.1} parent=11 // pred_check_branch
          %1281 = sbr.rel (%p1279) target = $region44
        $region43: #{tpu_custom_call.1} parent=11 // pred_region
          %s1283 = ssub.s32 16, 16
          %1284 = vsyncadd [#allocation18], %s1283
          %s1286 = sshll.u32 [#allocation17], 4
          %s1287 = int_to_ptr.vmem [resolvable:$true] %s1286
          %1289 = dma.hbm_to_vmem [thread:$0]  %s19, 16, %s1287, [#allocation18]
        $region44: #{tpu_custom_call.1} parent=11 // pred_fallthru
          _
        // Predicated region
        $region45: #{tpu_custom_call.1} parent=11 // pred_check
          %p1290 = pneg %p376
        $region46: #{tpu_custom_call.1} parent=11 // pred_check_branch
          %1292 = sbr.rel (%p1290) target = $region48
        $region47: #{tpu_custom_call.1} parent=11 // pred_region
          %s1294 = ssub.s32 16, 16
          %1295 = vsyncadd [#allocation18], %s1294
          %s1297 = sshll.u32 [#allocation19], 4
          %s1298 = int_to_ptr.vmem [resolvable:$true] %s1297
          %1300 = dma.hbm_to_vmem [thread:$0]  %s21, 16, %s1298, [#allocation18]
        $region48: #{tpu_custom_call.1} parent=11 // pred_fallthru
          _
        // Predicated region
        $region49: #{tpu_custom_call.1} parent=11 // pred_check
          %p1301 = pneg %p397
        $region50: #{tpu_custom_call.1} parent=11 // pred_check_branch
          %1303 = sbr.rel (%p1301) target = $region52
        $region51: #{tpu_custom_call.1} parent=11 // pred_region
          %s1305 = ssub.s32 16, 16
          %1306 = vsyncadd [#allocation21], %s1305
          %s1308 = sshll.u32 [#allocation20], 4
          %s1309 = int_to_ptr.vmem [resolvable:$true] %s1308
          %1311 = dma.hbm_to_vmem [thread:$0]  %s23, 16, %s1309, [#allocation21]
        $region52: #{tpu_custom_call.1} parent=11 // pred_fallthru
          _
        // Predicated region
        $region53: #{tpu_custom_call.1} parent=11 // pred_check
          %p1312 = pneg %p418
        $region54: #{tpu_custom_call.1} parent=11 // pred_check_branch
          %1314 = sbr.rel (%p1312) target = $region56
        $region55: #{tpu_custom_call.1} parent=11 // pred_region
          %s1316 = ssub.s32 512, 512
          %1317 = vsyncadd [#allocation21], %s1316
          %s1318 = sshll.u32 [#allocation22], 4
          %s1319 = int_to_ptr.vmem [resolvable:$true] %s1318
          %1324 = dma.hbm_to_vmem [thread:$0]  %s25, 512, %s1319, [#allocation21], 128, 128, 8
        $region56: #{tpu_custom_call.1} parent=11 // pred_fallthru
          _
        // Predicated region
        $region57: #{tpu_custom_call.1} parent=11 // pred_check
          %p1325 = pneg %p439
        $region58: #{tpu_custom_call.1} parent=11 // pred_check_branch
          %1327 = sbr.rel (%p1325) target = $region60
        $region59: #{tpu_custom_call.1} parent=11 // pred_region
          %s1329 = ssub.s32 16, 16
          %1330 = vsyncadd [#allocation24], %s1329
          %s1332 = sshll.u32 [#allocation23], 4
          %s1333 = int_to_ptr.vmem [resolvable:$true] %s1332
          %1335 = dma.hbm_to_vmem [thread:$0]  %s27, 16, %s1333, [#allocation24]
        $region60: #{tpu_custom_call.1} parent=11 // pred_fallthru
          _
        // Predicated region
        $region61: #{tpu_custom_call.1} parent=11 // pred_check
          %p1336 = pneg %p460
        $region62: #{tpu_custom_call.1} parent=11 // pred_check_branch
          %1338 = sbr.rel (%p1336) target = $region64
        $region63: #{tpu_custom_call.1} parent=11 // pred_region
          %s1340 = ssub.s32 768, 768
          %1341 = vsyncadd [#allocation24], %s1340
          %s1342 = sshll.u32 [#allocation25], 4
          %s1343 = int_to_ptr.vmem [resolvable:$true] %s1342
          %1348 = dma.hbm_to_vmem [thread:$0]  %s29, 768, %s1343, [#allocation24], 128, 128, 8
        $region64: #{tpu_custom_call.1} parent=11 // pred_fallthru
          _
        // Predicated region
        $region65: #{tpu_custom_call.1} parent=11 // pred_check
          %p1349 = pneg %p481
        $region66: #{tpu_custom_call.1} parent=11 // pred_check_branch
          %1351 = sbr.rel (%p1349) target = $region68
        $region67: #{tpu_custom_call.1} parent=11 // pred_region
          %s1353 = ssub.s32 16, 16
          %1354 = vsyncadd [#allocation27], %s1353
          %s1356 = sshll.u32 [#allocation26], 4
          %s1357 = int_to_ptr.vmem [resolvable:$true] %s1356
          %1359 = dma.hbm_to_vmem [thread:$0]  %s31, 16, %s1357, [#allocation27]
        $region68: #{tpu_custom_call.1} parent=11 // pred_fallthru
          _
        // Predicated region
        $region69: #{tpu_custom_call.1} parent=11 // pred_check
          %p1360 = pneg %p502
        $region70: #{tpu_custom_call.1} parent=11 // pred_check_branch
          %1362 = sbr.rel (%p1360) target = $region72
        $region71: #{tpu_custom_call.1} parent=11 // pred_region
          %s1364 = ssub.s32 768, 768
          %1365 = vsyncadd [#allocation27], %s1364
          %s1366 = sshll.u32 [#allocation28], 4
          %s1367 = int_to_ptr.vmem [resolvable:$true] %s1366
          %1372 = dma.hbm_to_vmem [thread:$0]  %s33, 768, %s1367, [#allocation27], 128, 128, 8
        $region72: #{tpu_custom_call.1} parent=11 // pred_fallthru
          _
        // Predicated region
        $region73: #{tpu_custom_call.1} parent=11 // pred_check
          %p1373 = pneg %p523
        $region74: #{tpu_custom_call.1} parent=11 // pred_check_branch
          %1375 = sbr.rel (%p1373) target = $region76
        $region75: #{tpu_custom_call.1} parent=11 // pred_region
          %s1377 = ssub.s32 16, 16
          %1378 = vsyncadd [#allocation30], %s1377
          %s1380 = sshll.u32 [#allocation29], 4
          %s1381 = int_to_ptr.vmem [resolvable:$true] %s1380
          %1383 = dma.hbm_to_vmem [thread:$0]  %s35, 16, %s1381, [#allocation30]
        $region76: #{tpu_custom_call.1} parent=11 // pred_fallthru
          _
        // Predicated region
        $region77: #{tpu_custom_call.1} parent=11 // pred_check
          %p1384 = pneg %p544
        $region78: #{tpu_custom_call.1} parent=11 // pred_check_branch
          %1386 = sbr.rel (%p1384) target = $region80
        $region79: #{tpu_custom_call.1} parent=11 // pred_region
          %s1388 = ssub.s32 512, 512
          %1389 = vsyncadd [#allocation30], %s1388
          %s1390 = sshll.u32 [#allocation31], 4
          %s1391 = int_to_ptr.vmem [resolvable:$true] %s1390
          %1396 = dma.hbm_to_vmem [thread:$0]  %s37, 512, %s1391, [#allocation30], 128, 128, 8
        $region80: #{tpu_custom_call.1} parent=11 // pred_fallthru
          _
        // Predicated region
        $region81: #{tpu_custom_call.1} parent=11 // pred_check
          %p1397 = pneg %p565
        $region82: #{tpu_custom_call.1} parent=11 // pred_check_branch
          %1399 = sbr.rel (%p1397) target = $region84
        $region83: #{tpu_custom_call.1} parent=11 // pred_region
          %s1401 = ssub.s32 16, 16
          %1402 = vsyncadd [#allocation33], %s1401
          %s1404 = sshll.u32 [#allocation32], 4
          %s1405 = int_to_ptr.vmem [resolvable:$true] %s1404
          %1407 = dma.hbm_to_vmem [thread:$0]  %s39, 16, %s1405, [#allocation33]
        $region84: #{tpu_custom_call.1} parent=11 // pred_fallthru
          _
        // Predicated region
        $region85: #{tpu_custom_call.1} parent=11 // pred_check
          %p1408 = pneg %p586
        $region86: #{tpu_custom_call.1} parent=11 // pred_check_branch
          %1410 = sbr.rel (%p1408) target = $region88
        $region87: #{tpu_custom_call.1} parent=11 // pred_region
          %s1412 = ssub.s32 16, 16
          %1413 = vsyncadd [#allocation33], %s1412
          %s1415 = sshll.u32 [#allocation34], 4
          %s1416 = int_to_ptr.vmem [resolvable:$true] %s1415
          %1418 = dma.hbm_to_vmem [thread:$0]  %s41, 16, %s1416, [#allocation33]
        $region88: #{tpu_custom_call.1} parent=11 // pred_fallthru
          _
        // Predicated region
        $region89: #{tpu_custom_call.1} parent=11 // pred_check
          %p1419 = pneg %p607
        $region90: #{tpu_custom_call.1} parent=11 // pred_check_branch
          %1421 = sbr.rel (%p1419) target = $region92
        $region91: #{tpu_custom_call.1} parent=11 // pred_region
          %s1423 = ssub.s32 16, 16
          %1424 = vsyncadd [#allocation36], %s1423
          %s1426 = sshll.u32 [#allocation35], 4
          %s1427 = int_to_ptr.vmem [resolvable:$true] %s1426
          %1429 = dma.hbm_to_vmem [thread:$0]  %s43, 16, %s1427, [#allocation36]
        $region92: #{tpu_custom_call.1} parent=11 // pred_fallthru
          _
        // Predicated region
        $region93: #{tpu_custom_call.1} parent=11 // pred_check
          %p1430 = pneg %p628
        $region94: #{tpu_custom_call.1} parent=11 // pred_check_branch
          %1432 = sbr.rel (%p1430) target = $region96
        $region95: #{tpu_custom_call.1} parent=11 // pred_region
          %s1434 = ssub.s32 512, 512
          %1435 = vsyncadd [#allocation36], %s1434
          %s1436 = sshll.u32 [#allocation37], 4
          %s1437 = int_to_ptr.vmem [resolvable:$true] %s1436
          %1442 = dma.hbm_to_vmem [thread:$0]  %s45, 512, %s1437, [#allocation36], 128, 128, 8
        $region96: #{tpu_custom_call.1} parent=11 // pred_fallthru
          _
        // Predicated region
        $region97: #{tpu_custom_call.1} parent=11 // pred_check
          %p1443 = pneg %p649
        $region98: #{tpu_custom_call.1} parent=11 // pred_check_branch
          %1445 = sbr.rel (%p1443) target = $region100
        $region99: #{tpu_custom_call.1} parent=11 // pred_region
          %s1447 = ssub.s32 16, 16
          %1448 = vsyncadd [#allocation39], %s1447
          %s1450 = sshll.u32 [#allocation38], 4
          %s1451 = int_to_ptr.vmem [resolvable:$true] %s1450
          %1453 = dma.hbm_to_vmem [thread:$0]  %s47, 16, %s1451, [#allocation39]
        $region100: #{tpu_custom_call.1} parent=11 // pred_fallthru
          _
        // Predicated region
        $region101: #{tpu_custom_call.1} parent=11 // pred_check
          %p1454 = pneg %p670
        $region102: #{tpu_custom_call.1} parent=11 // pred_check_branch
          %1456 = sbr.rel (%p1454) target = $region104
        $region103: #{tpu_custom_call.1} parent=11 // pred_region
          %s1458 = ssub.s32 16, 16
          %1459 = vsyncadd [#allocation39], %s1458
          %s1461 = sshll.u32 [#allocation40], 4
          %s1462 = int_to_ptr.vmem [resolvable:$true] %s1461
          %1464 = dma.hbm_to_vmem [thread:$0]  %s49, 16, %s1462, [#allocation39]
        $region104: #{tpu_custom_call.1} parent=11 // pred_fallthru
          _
        // Predicated region
        $region105: #{tpu_custom_call.1} parent=11 // pred_check
          %p1465 = pneg %p691
        $region106: #{tpu_custom_call.1} parent=11 // pred_check_branch
          %1467 = sbr.rel (%p1465) target = $region108
        $region107: #{tpu_custom_call.1} parent=11 // pred_region
          %s1469 = ssub.s32 16, 16
          %1470 = vsyncadd [#allocation42], %s1469
          %s1472 = sshll.u32 [#allocation41], 4
          %s1473 = int_to_ptr.vmem [resolvable:$true] %s1472
          %1475 = dma.hbm_to_vmem [thread:$0]  %s51, 16, %s1473, [#allocation42]
        $region108: #{tpu_custom_call.1} parent=11 // pred_fallthru
          _
        // Predicated region
        $region109: #{tpu_custom_call.1} parent=11 // pred_check
          %p1476 = pneg %p712
        $region110: #{tpu_custom_call.1} parent=11 // pred_check_branch
          %1478 = sbr.rel (%p1476) target = $region112
        $region111: #{tpu_custom_call.1} parent=11 // pred_region
          %s1480 = ssub.s32 512, 512
          %1481 = vsyncadd [#allocation42], %s1480
          %s1482 = sshll.u32 [#allocation43], 4
          %s1483 = int_to_ptr.vmem [resolvable:$true] %s1482
          %1488 = dma.hbm_to_vmem [thread:$0]  %s53, 512, %s1483, [#allocation42], 128, 128, 8
        $region112: #{tpu_custom_call.1} parent=11 // pred_fallthru
          _
        // Predicated region
        $region113: #{tpu_custom_call.1} parent=11 // pred_check
          %p1489 = pneg %p733
        $region114: #{tpu_custom_call.1} parent=11 // pred_check_branch
          %1491 = sbr.rel (%p1489) target = $region116
        $region115: #{tpu_custom_call.1} parent=11 // pred_region
          %s1493 = ssub.s32 16, 16
          %1494 = vsyncadd [#allocation45], %s1493
          %s1496 = sshll.u32 [#allocation44], 4
          %s1497 = int_to_ptr.vmem [resolvable:$true] %s1496
          %1499 = dma.hbm_to_vmem [thread:$0]  %s55, 16, %s1497, [#allocation45]
        $region116: #{tpu_custom_call.1} parent=11 // pred_fallthru
          _
        // Predicated region
        $region117: #{tpu_custom_call.1} parent=11 // pred_check
          %p1500 = pneg %p754
        $region118: #{tpu_custom_call.1} parent=11 // pred_check_branch
          %1502 = sbr.rel (%p1500) target = $region120
        $region119: #{tpu_custom_call.1} parent=11 // pred_region
          %s1504 = ssub.s32 16, 16
          %1505 = vsyncadd [#allocation45], %s1504
          %s1507 = sshll.u32 [#allocation46], 4
          %s1508 = int_to_ptr.vmem [resolvable:$true] %s1507
          %1510 = dma.hbm_to_vmem [thread:$0]  %s57, 16, %s1508, [#allocation45]
        $region120: #{tpu_custom_call.1} parent=11 // pred_fallthru
          _
        // Predicated region
        $region121: #{tpu_custom_call.1} parent=11 // pred_check
          %p1511 = pneg %p775
        $region122: #{tpu_custom_call.1} parent=11 // pred_check_branch
          %1513 = sbr.rel (%p1511) target = $region124
        $region123: #{tpu_custom_call.1} parent=11 // pred_region
          %s1515 = ssub.s32 16, 16
          %1516 = vsyncadd [#allocation48], %s1515
          %s1518 = sshll.u32 [#allocation47], 4
          %s1519 = int_to_ptr.vmem [resolvable:$true] %s1518
          %1521 = dma.hbm_to_vmem [thread:$0]  %s59, 16, %s1519, [#allocation48]
        $region124: #{tpu_custom_call.1} parent=11 // pred_fallthru
          _
        // Predicated region
        $region125: #{tpu_custom_call.1} parent=11 // pred_check
          %p1522 = pneg %p796
        $region126: #{tpu_custom_call.1} parent=11 // pred_check_branch
          %1524 = sbr.rel (%p1522) target = $region128
        $region127: #{tpu_custom_call.1} parent=11 // pred_region
          %s1526 = ssub.s32 512, 512
          %1527 = vsyncadd [#allocation48], %s1526
          %s1528 = sshll.u32 [#allocation49], 4
          %s1529 = int_to_ptr.vmem [resolvable:$true] %s1528
          %1534 = dma.hbm_to_vmem [thread:$0]  %s61, 512, %s1529, [#allocation48], 128, 128, 8
        $region128: #{tpu_custom_call.1} parent=11 // pred_fallthru
          _
        // Predicated region
        $region129: #{tpu_custom_call.1} parent=11 // pred_check
          %p1535 = pneg %p817
        $region130: #{tpu_custom_call.1} parent=11 // pred_check_branch
          %1537 = sbr.rel (%p1535) target = $region132
        $region131: #{tpu_custom_call.1} parent=11 // pred_region
          %s1539 = ssub.s32 16, 16
          %1540 = vsyncadd [#allocation51], %s1539
          %s1542 = sshll.u32 [#allocation50], 4
          %s1543 = int_to_ptr.vmem [resolvable:$true] %s1542
          %1545 = dma.hbm_to_vmem [thread:$0]  %s63, 16, %s1543, [#allocation51]
        $region132: #{tpu_custom_call.1} parent=11 // pred_fallthru
          _
        // Predicated region
        $region133: #{tpu_custom_call.1} parent=11 // pred_check
          %p1546 = pneg %p838
        $region134: #{tpu_custom_call.1} parent=11 // pred_check_branch
          %1548 = sbr.rel (%p1546) target = $region136
        $region135: #{tpu_custom_call.1} parent=11 // pred_region
          %s1550 = ssub.s32 512, 512
          %1551 = vsyncadd [#allocation51], %s1550
          %s1552 = sshll.u32 [#allocation52], 4
          %s1553 = int_to_ptr.vmem [resolvable:$true] %s1552
          %1558 = dma.hbm_to_vmem [thread:$0]  %s65, 512, %s1553, [#allocation51], 128, 128, 8
        $region136: #{tpu_custom_call.1} parent=11 // pred_fallthru
          _
        // Predicated region
        $region137: #{tpu_custom_call.1} parent=11 // pred_check
          %p1559 = pneg %p859
        $region138: #{tpu_custom_call.1} parent=11 // pred_check_branch
          %1561 = sbr.rel (%p1559) target = $region140
        $region139: #{tpu_custom_call.1} parent=11 // pred_region
          %s1563 = ssub.s32 16, 16
          %1564 = vsyncadd [#allocation54], %s1563
          %s1566 = sshll.u32 [#allocation53], 4
          %s1567 = int_to_ptr.vmem [resolvable:$true] %s1566
          %1569 = dma.hbm_to_vmem [thread:$0]  %s67, 16, %s1567, [#allocation54]
        $region140: #{tpu_custom_call.1} parent=11 // pred_fallthru
          _
        // Predicated region
        $region141: #{tpu_custom_call.1} parent=11 // pred_check
          %p1570 = pneg %p880
        $region142: #{tpu_custom_call.1} parent=11 // pred_check_branch
          %1572 = sbr.rel (%p1570) target = $region144
        $region143: #{tpu_custom_call.1} parent=11 // pred_region
          %s1574 = ssub.s32 512, 512
          %1575 = vsyncadd [#allocation54], %s1574
          %s1576 = sshll.u32 [#allocation55], 4
          %s1577 = int_to_ptr.vmem [resolvable:$true] %s1576
          %1582 = dma.hbm_to_vmem [thread:$0]  %s69, 512, %s1577, [#allocation54], 128, 128, 8
        $region144: #{tpu_custom_call.1} parent=11 // pred_fallthru
          _
        // Predicated region
        $region145: #{tpu_custom_call.1} parent=11 // pred_check
          %p1583 = pneg %p901
        $region146: #{tpu_custom_call.1} parent=11 // pred_check_branch
          %1585 = sbr.rel (%p1583) target = $region148
        $region147: #{tpu_custom_call.1} parent=11 // pred_region
          %s1587 = ssub.s32 16, 16
          %1588 = vsyncadd [#allocation57], %s1587
          %s1590 = sshll.u32 [#allocation56], 4
          %s1591 = int_to_ptr.vmem [resolvable:$true] %s1590
          %1593 = dma.hbm_to_vmem [thread:$0]  %s71, 16, %s1591, [#allocation57]
        $region148: #{tpu_custom_call.1} parent=11 // pred_fallthru
          _
        // Predicated region
        $region149: #{tpu_custom_call.1} parent=11 // pred_check
          %p1594 = pneg %p922
        $region150: #{tpu_custom_call.1} parent=11 // pred_check_branch
          %1596 = sbr.rel (%p1594) target = $region152
        $region151: #{tpu_custom_call.1} parent=11 // pred_region
          %s1598 = ssub.s32 512, 512
          %1599 = vsyncadd [#allocation57], %s1598
          %s1600 = sshll.u32 [#allocation58], 4
          %s1601 = int_to_ptr.vmem [resolvable:$true] %s1600
          %1606 = dma.hbm_to_vmem [thread:$0]  %s73, 512, %s1601, [#allocation57], 128, 128, 8
        $region152: #{tpu_custom_call.1} parent=11 // pred_fallthru
          _
        // Predicated region
        $region153: #{tpu_custom_call.1} parent=11 // pred_check
          %p1607 = pneg %p943
        $region154: #{tpu_custom_call.1} parent=11 // pred_check_branch
          %1609 = sbr.rel (%p1607) target = $region156
        $region155: #{tpu_custom_call.1} parent=11 // pred_region
          %s1611 = ssub.s32 16, 16
          %1612 = vsyncadd [#allocation60], %s1611
          %s1614 = sshll.u32 [#allocation59], 4
          %s1615 = int_to_ptr.vmem [resolvable:$true] %s1614
          %1617 = dma.hbm_to_vmem [thread:$0]  %s75, 16, %s1615, [#allocation60]
        $region156: #{tpu_custom_call.1} parent=11 // pred_fallthru
          _
        // Predicated region
        $region157: #{tpu_custom_call.1} parent=11 // pred_check
          %p1618 = pneg %p964
        $region158: #{tpu_custom_call.1} parent=11 // pred_check_branch
          %1620 = sbr.rel (%p1618) target = $region160
        $region159: #{tpu_custom_call.1} parent=11 // pred_region
          %s1622 = ssub.s32 16, 16
          %1623 = vsyncadd [#allocation60], %s1622
          %s1625 = sshll.u32 [#allocation61], 4
          %s1626 = int_to_ptr.vmem [resolvable:$true] %s1625
          %1628 = dma.hbm_to_vmem [thread:$0]  %s77, 16, %s1626, [#allocation60]
        $region160: #{tpu_custom_call.1} parent=11 // pred_fallthru
          _
        // Predicated region
        $region161: #{tpu_custom_call.1} parent=11 // pred_check
          %p1629 = pneg %p985
        $region162: #{tpu_custom_call.1} parent=11 // pred_check_branch
          %1631 = sbr.rel (%p1629) target = $region164
        $region163: #{tpu_custom_call.1} parent=11 // pred_region
          %s1633 = ssub.s32 16, 16
          %1634 = vsyncadd [#allocation63], %s1633
          %s1636 = sshll.u32 [#allocation62], 4
          %s1637 = int_to_ptr.vmem [resolvable:$true] %s1636
          %1639 = dma.hbm_to_vmem [thread:$0]  %s79, 16, %s1637, [#allocation63]
        $region164: #{tpu_custom_call.1} parent=11 // pred_fallthru
          _
        // Predicated region
        $region165: #{tpu_custom_call.1} parent=11 // pred_check
          %p1640 = pneg %p1006
        $region166: #{tpu_custom_call.1} parent=11 // pred_check_branch
          %1642 = sbr.rel (%p1640) target = $region168
        $region167: #{tpu_custom_call.1} parent=11 // pred_region
          %s1644 = ssub.s32 512, 512
          %1645 = vsyncadd [#allocation63], %s1644
          %s1646 = sshll.u32 [#allocation64], 4
          %s1647 = int_to_ptr.vmem [resolvable:$true] %s1646
          %1652 = dma.hbm_to_vmem [thread:$0]  %s81, 512, %s1647, [#allocation63], 128, 128, 8
        $region168: #{tpu_custom_call.1} parent=11 // pred_fallthru
          _
        // Predicated region
        $region169: #{tpu_custom_call.1} parent=11 // pred_check
          %p1653 = pneg %p1027
        $region170: #{tpu_custom_call.1} parent=11 // pred_check_branch
          %1655 = sbr.rel (%p1653) target = $region172
        $region171: #{tpu_custom_call.1} parent=11 // pred_region
          %s1657 = ssub.s32 16, 16
          %1658 = vsyncadd [#allocation66], %s1657
          %s1660 = sshll.u32 [#allocation65], 4
          %s1661 = int_to_ptr.vmem [resolvable:$true] %s1660
          %1663 = dma.hbm_to_vmem [thread:$0]  %s83, 16, %s1661, [#allocation66]
        $region172: #{tpu_custom_call.1} parent=11 // pred_fallthru
          _
        // Predicated region
        $region173: #{tpu_custom_call.1} parent=11 // pred_check
          %p1664 = pneg %p1048
        $region174: #{tpu_custom_call.1} parent=11 // pred_check_branch
          %1666 = sbr.rel (%p1664) target = $region176
        $region175: #{tpu_custom_call.1} parent=11 // pred_region
          %s1668 = ssub.s32 16, 16
          %1669 = vsyncadd [#allocation66], %s1668
          %s1671 = sshll.u32 [#allocation67], 4
          %s1672 = int_to_ptr.vmem [resolvable:$true] %s1671
          %1674 = dma.hbm_to_vmem [thread:$0]  %s85, 16, %s1672, [#allocation66]
        $region176: #{tpu_custom_call.1} parent=11 // pred_fallthru
          _
        // Predicated region
        $region177: #{tpu_custom_call.1} parent=11 // pred_check
          %p1675 = pneg %p1069
        $region178: #{tpu_custom_call.1} parent=11 // pred_check_branch
          %1677 = sbr.rel (%p1675) target = $region180
        $region179: #{tpu_custom_call.1} parent=11 // pred_region
          %s1679 = ssub.s32 16, 16
          %1680 = vsyncadd [#allocation69], %s1679
          %s1682 = sshll.u32 [#allocation68], 4
          %s1683 = int_to_ptr.vmem [resolvable:$true] %s1682
          %1685 = dma.hbm_to_vmem [thread:$0]  %s87, 16, %s1683, [#allocation69]
        $region180: #{tpu_custom_call.1} parent=11 // pred_fallthru
          _
        // Predicated region
        $region181: #{tpu_custom_call.1} parent=11 // pred_check
          %p1686 = pneg %p1090
        $region182: #{tpu_custom_call.1} parent=11 // pred_check_branch
          %1688 = sbr.rel (%p1686) target = $region184
        $region183: #{tpu_custom_call.1} parent=11 // pred_region
          %s1690 = ssub.s32 512, 512
          %1691 = vsyncadd [#allocation69], %s1690
          %s1692 = sshll.u32 [#allocation70], 4
          %s1693 = int_to_ptr.vmem [resolvable:$true] %s1692
          %1698 = dma.hbm_to_vmem [thread:$0]  %s89, 512, %s1693, [#allocation69], 128, 128, 8
        $region184: #{tpu_custom_call.1} parent=11 // pred_fallthru
          _
        // Predicated region
        $region185: #{tpu_custom_call.1} parent=11 // pred_check
          %p1699 = pneg %p1111
        $region186: #{tpu_custom_call.1} parent=11 // pred_check_branch
          %1701 = sbr.rel (%p1699) target = $region188
        $region187: #{tpu_custom_call.1} parent=11 // pred_region
          %s1703 = ssub.s32 16, 16
          %1704 = vsyncadd [#allocation72], %s1703
          %s1706 = sshll.u32 [#allocation71], 4
          %s1707 = int_to_ptr.vmem [resolvable:$true] %s1706
          %1709 = dma.hbm_to_vmem [thread:$0]  %s91, 16, %s1707, [#allocation72]
        $region188: #{tpu_custom_call.1} parent=11 // pred_fallthru
          _
        // Predicated region
        $region189: #{tpu_custom_call.1} parent=11 // pred_check
          %p1710 = pneg %p1132
        $region190: #{tpu_custom_call.1} parent=11 // pred_check_branch
          %1712 = sbr.rel (%p1710) target = $region192
        $region191: #{tpu_custom_call.1} parent=11 // pred_region
          %s1714 = ssub.s32 16, 16
          %1715 = vsyncadd [#allocation72], %s1714
          %s1717 = sshll.u32 [#allocation73], 4
          %s1718 = int_to_ptr.vmem [resolvable:$true] %s1717
          %1720 = dma.hbm_to_vmem [thread:$0]  %s93, 16, %s1718, [#allocation72]
        $region192: #{tpu_custom_call.1} parent=11 // pred_fallthru
          _
        // Predicated region
        $region193: #{tpu_custom_call.1} parent=11 // pred_check
          %p1721 = pneg %p1153
        $region194: #{tpu_custom_call.1} parent=11 // pred_check_branch
          %1723 = sbr.rel (%p1721) target = $region196
        $region195: #{tpu_custom_call.1} parent=11 // pred_region
          %s1725 = ssub.s32 16, 16
          %1726 = vsyncadd [#allocation75], %s1725
          %s1728 = sshll.u32 [#allocation74], 4
          %s1729 = int_to_ptr.vmem [resolvable:$true] %s1728
          %1731 = dma.hbm_to_vmem [thread:$0]  %s95, 16, %s1729, [#allocation75]
        $region196: #{tpu_custom_call.1} parent=11 // pred_fallthru
          _
      $region12: #{tpu_custom_call.1} parent=5 // pred_fallthru
        _
      %p1732 = scmp.lt.s32.totalorder %s135, 2
      // Predicated region
      $region197: #{tpu_custom_call.1} parent=5 // pred_check
        %p1733 = pneg %p1732
      $region198: #{tpu_custom_call.1} parent=5 // pred_check_branch
        %1735 = sbr.rel (%p1733) target = $region200
      $region199: #{tpu_custom_call.1} parent=5 // pred_region
        // Predicated region
        $region201: #{tpu_custom_call.1} parent=199 // pred_check
          %p1736 = pneg %p155
        $region202: #{tpu_custom_call.1} parent=199 // pred_check_branch
          %1738 = sbr.rel (%p1736) target = $region204
        $region203: #{tpu_custom_call.1} parent=199 // pred_region
          %s1739 = sand.u32 %s145, 1
          %s1740 = scalar_lea.sflag [#allocation3], %s1739
          %s1741 = sand.u32 %s145, 1
          %s1742 = smul.addr %s1741, 8
          %s1743 = scalar_lea.vmem [#allocation2], %s1742
          %s1745 = ssub.s32 128, 128
          %1746 = vsyncadd %s1740, %s1745
          %s1747 = smul.addr %s135, 128
          %s1748 = scalar_lea.hbm %s1, %s1747
          %s1750 = sshll.u32 %s1743, 4
          %s1751 = int_to_ptr.vmem [resolvable:$true] %s1750
          %1753 = dma.hbm_to_vmem [thread:$0]  %s1748, 128, %s1751, %s1740
        $region204: #{tpu_custom_call.1} parent=199 // pred_fallthru
          _
        // Predicated region
        $region205: #{tpu_custom_call.1} parent=199 // pred_check
          %p1754 = pneg %p181
        $region206: #{tpu_custom_call.1} parent=199 // pred_check_branch
          %1756 = sbr.rel (%p1754) target = $region208
        $region207: #{tpu_custom_call.1} parent=199 // pred_region
          %s1757 = sand.u32 %s135, 1
          %s1758 = scalar_lea.sflag [#allocation6], %s1757
          %s1759 = sand.u32 %s171, 1
          %s1760 = smul.addr %s1759, 16
          %s1761 = scalar_lea.vmem [#allocation5], %s1760
          %s1763 = ssub.s32 256, 256
          %1764 = vsyncadd %s1758, %s1763
          %s1765 = smul.addr %s135, 2
          %s1766 = smul.addr %s1765, 128
          %s1767 = scalar_lea.hbm %s3, %s1766
          %s1768 = sshll.u32 %s1761, 4
          %s1769 = int_to_ptr.vmem [resolvable:$true] %s1768
          %1774 = dma.hbm_to_vmem [thread:$0]  %s1767, 256, %s1769, %s1758, 128, 128, 8
        $region208: #{tpu_custom_call.1} parent=199 // pred_fallthru
          _
      $region200: #{tpu_custom_call.1} parent=5 // pred_fallthru
        _
      %p1775 = scmp.le.s32.totalorder 1, %s135
      %p1776 = scmp.lt.s32.totalorder %s135, 3
      %p1777 = pnand %p1775, %p1776
      %p1778 = pneg %p1777
      // Predicated region
      $region209: #{tpu_custom_call.1} parent=5 // pred_check
        _
      $region210: #{tpu_custom_call.1} parent=5 // pred_check_branch
        %1780 = sbr.rel (%p1777) target = $region212
      $region211: #{tpu_custom_call.1} parent=5 // pred_region
        %s1781 = ssub.s32 %s135, 1
        %s1782 = sand.u32 %s148, 1
        %s1783 = scalar_lea.sflag [#allocation3], %s1782
        %s1784 = sand.u32 %s148, 1
        %s1785 = smul.addr %s1784, 8
        %s1786 = scalar_lea.vmem [#allocation2], %s1785
        // Predicated region
        $region213: #{tpu_custom_call.1} parent=211 // pred_check
          %p1787 = pneg %p161
        $region214: #{tpu_custom_call.1} parent=211 // pred_check_branch
          %1789 = sbr.rel (%p1787) target = $region216
        $region215: #{tpu_custom_call.1} parent=211 // pred_region
          %1790 = dma.done %s1783, 128
        $region216: #{tpu_custom_call.1} parent=211 // pred_fallthru
          _
        %s1791 = sand.u32 %s140, 1
        %s1792 = scalar_lea.sflag [#allocation6], %s1791
        %s1793 = sand.u32 %s174, 1
        %s1794 = smul.addr %s1793, 16
        %s1795 = scalar_lea.vmem [#allocation5], %s1794
        // Predicated region
        $region217: #{tpu_custom_call.1} parent=211 // pred_check
          %p1796 = pneg %p187
        $region218: #{tpu_custom_call.1} parent=211 // pred_check_branch
          %1798 = sbr.rel (%p1796) target = $region220
        $region219: #{tpu_custom_call.1} parent=211 // pred_region
          %1799 = dma.done %s1792, 256
        $region220: #{tpu_custom_call.1} parent=211 // pred_fallthru
          _
        // Predicated region
        $region221: #{tpu_custom_call.1} parent=211 // pred_check
          %p1800 = pneg %p208
        $region222: #{tpu_custom_call.1} parent=211 // pred_check_branch
          %1802 = sbr.rel (%p1800) target = $region224
        $region223: #{tpu_custom_call.1} parent=211 // pred_region
          %1803 = dma.done [#allocation6], 512
        $region224: #{tpu_custom_call.1} parent=211 // pred_fallthru
          _
        // Predicated region
        $region225: #{tpu_custom_call.1} parent=211 // pred_check
          %p1804 = pneg %p229
        $region226: #{tpu_custom_call.1} parent=211 // pred_check_branch
          %1806 = sbr.rel (%p1804) target = $region228
        $region227: #{tpu_custom_call.1} parent=211 // pred_region
          %1807 = dma.done [#allocation9], 16
        $region228: #{tpu_custom_call.1} parent=211 // pred_fallthru
          _
        // Predicated region
        $region229: #{tpu_custom_call.1} parent=211 // pred_check
          %p1808 = pneg %p250
        $region230: #{tpu_custom_call.1} parent=211 // pred_check_branch
          %1810 = sbr.rel (%p1808) target = $region232
        $region231: #{tpu_custom_call.1} parent=211 // pred_region
          %1811 = dma.done [#allocation9], 512
        $region232: #{tpu_custom_call.1} parent=211 // pred_fallthru
          _
        // Predicated region
        $region233: #{tpu_custom_call.1} parent=211 // pred_check
          %p1812 = pneg %p271
        $region234: #{tpu_custom_call.1} parent=211 // pred_check_branch
          %1814 = sbr.rel (%p1812) target = $region236
        $region235: #{tpu_custom_call.1} parent=211 // pred_region
          %1815 = dma.done [#allocation12], 16
        $region236: #{tpu_custom_call.1} parent=211 // pred_fallthru
          _
        // Predicated region
        $region237: #{tpu_custom_call.1} parent=211 // pred_check
          %p1816 = pneg %p292
        $region238: #{tpu_custom_call.1} parent=211 // pred_check_branch
          %1818 = sbr.rel (%p1816) target = $region240
        $region239: #{tpu_custom_call.1} parent=211 // pred_region
          %1819 = dma.done [#allocation12], 512
        $region240: #{tpu_custom_call.1} parent=211 // pred_fallthru
          _
        // Predicated region
        $region241: #{tpu_custom_call.1} parent=211 // pred_check
          %p1820 = pneg %p313
        $region242: #{tpu_custom_call.1} parent=211 // pred_check_branch
          %1822 = sbr.rel (%p1820) target = $region244
        $region243: #{tpu_custom_call.1} parent=211 // pred_region
          %1823 = dma.done [#allocation15], 16
        $region244: #{tpu_custom_call.1} parent=211 // pred_fallthru
          _
        // Predicated region
        $region245: #{tpu_custom_call.1} parent=211 // pred_check
          %p1824 = pneg %p334
        $region246: #{tpu_custom_call.1} parent=211 // pred_check_branch
          %1826 = sbr.rel (%p1824) target = $region248
        $region247: #{tpu_custom_call.1} parent=211 // pred_region
          %1827 = dma.done [#allocation15], 512
        $region248: #{tpu_custom_call.1} parent=211 // pred_fallthru
          _
        // Predicated region
        $region249: #{tpu_custom_call.1} parent=211 // pred_check
          %p1828 = pneg %p355
        $region250: #{tpu_custom_call.1} parent=211 // pred_check_branch
          %1830 = sbr.rel (%p1828) target = $region252
        $region251: #{tpu_custom_call.1} parent=211 // pred_region
          %1831 = dma.done [#allocation18], 16
        $region252: #{tpu_custom_call.1} parent=211 // pred_fallthru
          _
        // Predicated region
        $region253: #{tpu_custom_call.1} parent=211 // pred_check
          %p1832 = pneg %p376
        $region254: #{tpu_custom_call.1} parent=211 // pred_check_branch
          %1834 = sbr.rel (%p1832) target = $region256
        $region255: #{tpu_custom_call.1} parent=211 // pred_region
          %1835 = dma.done [#allocation18], 16
        $region256: #{tpu_custom_call.1} parent=211 // pred_fallthru
          _
        // Predicated region
        $region257: #{tpu_custom_call.1} parent=211 // pred_check
          %p1836 = pneg %p397
        $region258: #{tpu_custom_call.1} parent=211 // pred_check_branch
          %1838 = sbr.rel (%p1836) target = $region260
        $region259: #{tpu_custom_call.1} parent=211 // pred_region
          %1839 = dma.done [#allocation21], 16
        $region260: #{tpu_custom_call.1} parent=211 // pred_fallthru
          _
        // Predicated region
        $region261: #{tpu_custom_call.1} parent=211 // pred_check
          %p1840 = pneg %p418
        $region262: #{tpu_custom_call.1} parent=211 // pred_check_branch
          %1842 = sbr.rel (%p1840) target = $region264
        $region263: #{tpu_custom_call.1} parent=211 // pred_region
          %1843 = dma.done [#allocation21], 512
        $region264: #{tpu_custom_call.1} parent=211 // pred_fallthru
          _
        // Predicated region
        $region265: #{tpu_custom_call.1} parent=211 // pred_check
          %p1844 = pneg %p439
        $region266: #{tpu_custom_call.1} parent=211 // pred_check_branch
          %1846 = sbr.rel (%p1844) target = $region268
        $region267: #{tpu_custom_call.1} parent=211 // pred_region
          %1847 = dma.done [#allocation24], 16
        $region268: #{tpu_custom_call.1} parent=211 // pred_fallthru
          _
        // Predicated region
        $region269: #{tpu_custom_call.1} parent=211 // pred_check
          %p1848 = pneg %p460
        $region270: #{tpu_custom_call.1} parent=211 // pred_check_branch
          %1850 = sbr.rel (%p1848) target = $region272
        $region271: #{tpu_custom_call.1} parent=211 // pred_region
          %1851 = dma.done [#allocation24], 768
        $region272: #{tpu_custom_call.1} parent=211 // pred_fallthru
          _
        // Predicated region
        $region273: #{tpu_custom_call.1} parent=211 // pred_check
          %p1852 = pneg %p481
        $region274: #{tpu_custom_call.1} parent=211 // pred_check_branch
          %1854 = sbr.rel (%p1852) target = $region276
        $region275: #{tpu_custom_call.1} parent=211 // pred_region
          %1855 = dma.done [#allocation27], 16
        $region276: #{tpu_custom_call.1} parent=211 // pred_fallthru
          _
        // Predicated region
        $region277: #{tpu_custom_call.1} parent=211 // pred_check
          %p1856 = pneg %p502
        $region278: #{tpu_custom_call.1} parent=211 // pred_check_branch
          %1858 = sbr.rel (%p1856) target = $region280
        $region279: #{tpu_custom_call.1} parent=211 // pred_region
          %1859 = dma.done [#allocation27], 768
        $region280: #{tpu_custom_call.1} parent=211 // pred_fallthru
          _
        // Predicated region
        $region281: #{tpu_custom_call.1} parent=211 // pred_check
          %p1860 = pneg %p523
        $region282: #{tpu_custom_call.1} parent=211 // pred_check_branch
          %1862 = sbr.rel (%p1860) target = $region284
        $region283: #{tpu_custom_call.1} parent=211 // pred_region
          %1863 = dma.done [#allocation30], 16
        $region284: #{tpu_custom_call.1} parent=211 // pred_fallthru
          _
        // Predicated region
        $region285: #{tpu_custom_call.1} parent=211 // pred_check
          %p1864 = pneg %p544
        $region286: #{tpu_custom_call.1} parent=211 // pred_check_branch
          %1866 = sbr.rel (%p1864) target = $region288
        $region287: #{tpu_custom_call.1} parent=211 // pred_region
          %1867 = dma.done [#allocation30], 512
        $region288: #{tpu_custom_call.1} parent=211 // pred_fallthru
          _
        // Predicated region
        $region289: #{tpu_custom_call.1} parent=211 // pred_check
          %p1868 = pneg %p565
        $region290: #{tpu_custom_call.1} parent=211 // pred_check_branch
          %1870 = sbr.rel (%p1868) target = $region292
        $region291: #{tpu_custom_call.1} parent=211 // pred_region
          %1871 = dma.done [#allocation33], 16
        $region292: #{tpu_custom_call.1} parent=211 // pred_fallthru
          _
        // Predicated region
        $region293: #{tpu_custom_call.1} parent=211 // pred_check
          %p1872 = pneg %p586
        $region294: #{tpu_custom_call.1} parent=211 // pred_check_branch
          %1874 = sbr.rel (%p1872) target = $region296
        $region295: #{tpu_custom_call.1} parent=211 // pred_region
          %1875 = dma.done [#allocation33], 16
        $region296: #{tpu_custom_call.1} parent=211 // pred_fallthru
          _
        // Predicated region
        $region297: #{tpu_custom_call.1} parent=211 // pred_check
          %p1876 = pneg %p607
        $region298: #{tpu_custom_call.1} parent=211 // pred_check_branch
          %1878 = sbr.rel (%p1876) target = $region300
        $region299: #{tpu_custom_call.1} parent=211 // pred_region
          %1879 = dma.done [#allocation36], 16
        $region300: #{tpu_custom_call.1} parent=211 // pred_fallthru
          _
        // Predicated region
        $region301: #{tpu_custom_call.1} parent=211 // pred_check
          %p1880 = pneg %p628
        $region302: #{tpu_custom_call.1} parent=211 // pred_check_branch
          %1882 = sbr.rel (%p1880) target = $region304
        $region303: #{tpu_custom_call.1} parent=211 // pred_region
          %1883 = dma.done [#allocation36], 512
        $region304: #{tpu_custom_call.1} parent=211 // pred_fallthru
          _
        // Predicated region
        $region305: #{tpu_custom_call.1} parent=211 // pred_check
          %p1884 = pneg %p649
        $region306: #{tpu_custom_call.1} parent=211 // pred_check_branch
          %1886 = sbr.rel (%p1884) target = $region308
        $region307: #{tpu_custom_call.1} parent=211 // pred_region
          %1887 = dma.done [#allocation39], 16
        $region308: #{tpu_custom_call.1} parent=211 // pred_fallthru
          _
        // Predicated region
        $region309: #{tpu_custom_call.1} parent=211 // pred_check
          %p1888 = pneg %p670
        $region310: #{tpu_custom_call.1} parent=211 // pred_check_branch
          %1890 = sbr.rel (%p1888) target = $region312
        $region311: #{tpu_custom_call.1} parent=211 // pred_region
          %1891 = dma.done [#allocation39], 16
        $region312: #{tpu_custom_call.1} parent=211 // pred_fallthru
          _
        // Predicated region
        $region313: #{tpu_custom_call.1} parent=211 // pred_check
          %p1892 = pneg %p691
        $region314: #{tpu_custom_call.1} parent=211 // pred_check_branch
          %1894 = sbr.rel (%p1892) target = $region316
        $region315: #{tpu_custom_call.1} parent=211 // pred_region
          %1895 = dma.done [#allocation42], 16
        $region316: #{tpu_custom_call.1} parent=211 // pred_fallthru
          _
        // Predicated region
        $region317: #{tpu_custom_call.1} parent=211 // pred_check
          %p1896 = pneg %p712
        $region318: #{tpu_custom_call.1} parent=211 // pred_check_branch
          %1898 = sbr.rel (%p1896) target = $region320
        $region319: #{tpu_custom_call.1} parent=211 // pred_region
          %1899 = dma.done [#allocation42], 512
        $region320: #{tpu_custom_call.1} parent=211 // pred_fallthru
          _
        // Predicated region
        $region321: #{tpu_custom_call.1} parent=211 // pred_check
          %p1900 = pneg %p733
        $region322: #{tpu_custom_call.1} parent=211 // pred_check_branch
          %1902 = sbr.rel (%p1900) target = $region324
        $region323: #{tpu_custom_call.1} parent=211 // pred_region
          %1903 = dma.done [#allocation45], 16
        $region324: #{tpu_custom_call.1} parent=211 // pred_fallthru
          _
        // Predicated region
        $region325: #{tpu_custom_call.1} parent=211 // pred_check
          %p1904 = pneg %p754
        $region326: #{tpu_custom_call.1} parent=211 // pred_check_branch
          %1906 = sbr.rel (%p1904) target = $region328
        $region327: #{tpu_custom_call.1} parent=211 // pred_region
          %1907 = dma.done [#allocation45], 16
        $region328: #{tpu_custom_call.1} parent=211 // pred_fallthru
          _
        // Predicated region
        $region329: #{tpu_custom_call.1} parent=211 // pred_check
          %p1908 = pneg %p775
        $region330: #{tpu_custom_call.1} parent=211 // pred_check_branch
          %1910 = sbr.rel (%p1908) target = $region332
        $region331: #{tpu_custom_call.1} parent=211 // pred_region
          %1911 = dma.done [#allocation48], 16
        $region332: #{tpu_custom_call.1} parent=211 // pred_fallthru
          _
        // Predicated region
        $region333: #{tpu_custom_call.1} parent=211 // pred_check
          %p1912 = pneg %p796
        $region334: #{tpu_custom_call.1} parent=211 // pred_check_branch
          %1914 = sbr.rel (%p1912) target = $region336
        $region335: #{tpu_custom_call.1} parent=211 // pred_region
          %1915 = dma.done [#allocation48], 512
        $region336: #{tpu_custom_call.1} parent=211 // pred_fallthru
          _
        // Predicated region
        $region337: #{tpu_custom_call.1} parent=211 // pred_check
          %p1916 = pneg %p817
        $region338: #{tpu_custom_call.1} parent=211 // pred_check_branch
          %1918 = sbr.rel (%p1916) target = $region340
        $region339: #{tpu_custom_call.1} parent=211 // pred_region
          %1919 = dma.done [#allocation51], 16
        $region340: #{tpu_custom_call.1} parent=211 // pred_fallthru
          _
        // Predicated region
        $region341: #{tpu_custom_call.1} parent=211 // pred_check
          %p1920 = pneg %p838
        $region342: #{tpu_custom_call.1} parent=211 // pred_check_branch
          %1922 = sbr.rel (%p1920) target = $region344
        $region343: #{tpu_custom_call.1} parent=211 // pred_region
          %1923 = dma.done [#allocation51], 512
        $region344: #{tpu_custom_call.1} parent=211 // pred_fallthru
          _
        // Predicated region
        $region345: #{tpu_custom_call.1} parent=211 // pred_check
          %p1924 = pneg %p859
        $region346: #{tpu_custom_call.1} parent=211 // pred_check_branch
          %1926 = sbr.rel (%p1924) target = $region348
        $region347: #{tpu_custom_call.1} parent=211 // pred_region
          %1927 = dma.done [#allocation54], 16
        $region348: #{tpu_custom_call.1} parent=211 // pred_fallthru
          _
        // Predicated region
        $region349: #{tpu_custom_call.1} parent=211 // pred_check
          %p1928 = pneg %p880
        $region350: #{tpu_custom_call.1} parent=211 // pred_check_branch
          %1930 = sbr.rel (%p1928) target = $region352
        $region351: #{tpu_custom_call.1} parent=211 // pred_region
          %1931 = dma.done [#allocation54], 512
        $region352: #{tpu_custom_call.1} parent=211 // pred_fallthru
          _
        // Predicated region
        $region353: #{tpu_custom_call.1} parent=211 // pred_check
          %p1932 = pneg %p901
        $region354: #{tpu_custom_call.1} parent=211 // pred_check_branch
          %1934 = sbr.rel (%p1932) target = $region356
        $region355: #{tpu_custom_call.1} parent=211 // pred_region
          %1935 = dma.done [#allocation57], 16
        $region356: #{tpu_custom_call.1} parent=211 // pred_fallthru
          _
        // Predicated region
        $region357: #{tpu_custom_call.1} parent=211 // pred_check
          %p1936 = pneg %p922
        $region358: #{tpu_custom_call.1} parent=211 // pred_check_branch
          %1938 = sbr.rel (%p1936) target = $region360
        $region359: #{tpu_custom_call.1} parent=211 // pred_region
          %1939 = dma.done [#allocation57], 512
        $region360: #{tpu_custom_call.1} parent=211 // pred_fallthru
          _
        // Predicated region
        $region361: #{tpu_custom_call.1} parent=211 // pred_check
          %p1940 = pneg %p943
        $region362: #{tpu_custom_call.1} parent=211 // pred_check_branch
          %1942 = sbr.rel (%p1940) target = $region364
        $region363: #{tpu_custom_call.1} parent=211 // pred_region
          %1943 = dma.done [#allocation60], 16
        $region364: #{tpu_custom_call.1} parent=211 // pred_fallthru
          _
        // Predicated region
        $region365: #{tpu_custom_call.1} parent=211 // pred_check
          %p1944 = pneg %p964
        $region366: #{tpu_custom_call.1} parent=211 // pred_check_branch
          %1946 = sbr.rel (%p1944) target = $region368
        $region367: #{tpu_custom_call.1} parent=211 // pred_region
          %1947 = dma.done [#allocation60], 16
        $region368: #{tpu_custom_call.1} parent=211 // pred_fallthru
          _
        // Predicated region
        $region369: #{tpu_custom_call.1} parent=211 // pred_check
          %p1948 = pneg %p985
        $region370: #{tpu_custom_call.1} parent=211 // pred_check_branch
          %1950 = sbr.rel (%p1948) target = $region372
        $region371: #{tpu_custom_call.1} parent=211 // pred_region
          %1951 = dma.done [#allocation63], 16
        $region372: #{tpu_custom_call.1} parent=211 // pred_fallthru
          _
        // Predicated region
        $region373: #{tpu_custom_call.1} parent=211 // pred_check
          %p1952 = pneg %p1006
        $region374: #{tpu_custom_call.1} parent=211 // pred_check_branch
          %1954 = sbr.rel (%p1952) target = $region376
        $region375: #{tpu_custom_call.1} parent=211 // pred_region
          %1955 = dma.done [#allocation63], 512
        $region376: #{tpu_custom_call.1} parent=211 // pred_fallthru
          _
        // Predicated region
        $region377: #{tpu_custom_call.1} parent=211 // pred_check
          %p1956 = pneg %p1027
        $region378: #{tpu_custom_call.1} parent=211 // pred_check_branch
          %1958 = sbr.rel (%p1956) target = $region380
        $region379: #{tpu_custom_call.1} parent=211 // pred_region
          %1959 = dma.done [#allocation66], 16
        $region380: #{tpu_custom_call.1} parent=211 // pred_fallthru
          _
        // Predicated region
        $region381: #{tpu_custom_call.1} parent=211 // pred_check
          %p1960 = pneg %p1048
        $region382: #{tpu_custom_call.1} parent=211 // pred_check_branch
          %1962 = sbr.rel (%p1960) target = $region384
        $region383: #{tpu_custom_call.1} parent=211 // pred_region
          %1963 = dma.done [#allocation66], 16
        $region384: #{tpu_custom_call.1} parent=211 // pred_fallthru
          _
        // Predicated region
        $region385: #{tpu_custom_call.1} parent=211 // pred_check
          %p1964 = pneg %p1069
        $region386: #{tpu_custom_call.1} parent=211 // pred_check_branch
          %1966 = sbr.rel (%p1964) target = $region388
        $region387: #{tpu_custom_call.1} parent=211 // pred_region
          %1967 = dma.done [#allocation69], 16
        $region388: #{tpu_custom_call.1} parent=211 // pred_fallthru
          _
        // Predicated region
        $region389: #{tpu_custom_call.1} parent=211 // pred_check
          %p1968 = pneg %p1090
        $region390: #{tpu_custom_call.1} parent=211 // pred_check_branch
          %1970 = sbr.rel (%p1968) target = $region392
        $region391: #{tpu_custom_call.1} parent=211 // pred_region
          %1971 = dma.done [#allocation69], 512
        $region392: #{tpu_custom_call.1} parent=211 // pred_fallthru
          _
        // Predicated region
        $region393: #{tpu_custom_call.1} parent=211 // pred_check
          %p1972 = pneg %p1111
        $region394: #{tpu_custom_call.1} parent=211 // pred_check_branch
          %1974 = sbr.rel (%p1972) target = $region396
        $region395: #{tpu_custom_call.1} parent=211 // pred_region
          %1975 = dma.done [#allocation72], 16
        $region396: #{tpu_custom_call.1} parent=211 // pred_fallthru
          _
        // Predicated region
        $region397: #{tpu_custom_call.1} parent=211 // pred_check
          %p1976 = pneg %p1132
        $region398: #{tpu_custom_call.1} parent=211 // pred_check_branch
          %1978 = sbr.rel (%p1976) target = $region400
        $region399: #{tpu_custom_call.1} parent=211 // pred_region
          %1979 = dma.done [#allocation72], 16
        $region400: #{tpu_custom_call.1} parent=211 // pred_fallthru
          _
        // Predicated region
        $region401: #{tpu_custom_call.1} parent=211 // pred_check
          %p1980 = pneg %p1153
        $region402: #{tpu_custom_call.1} parent=211 // pred_check_branch
          %1982 = sbr.rel (%p1980) target = $region404
        $region403: #{tpu_custom_call.1} parent=211 // pred_region
          %1983 = dma.done [#allocation75], 16
        $region404: #{tpu_custom_call.1} parent=211 // pred_fallthru
          _
        %s1984 = sand.u32 %s148, 1
        %s1985 = scalar_lea.sflag [#allocation3], %s1984
        %s1986 = sand.u32 %s148, 1
        %s1987 = smul.addr %s1986, 8
        %s1988 = scalar_lea.vmem [#allocation2], %s1987
        %p1989 = pneg %p161
        %p1990 = pneg %p158
        %s1991 = sand.u32 %s140, 1
        %s1992 = scalar_lea.sflag [#allocation6], %s1991
        %s1993 = sand.u32 %s174, 1
        %s1994 = smul.addr %s1993, 16
        %s1995 = scalar_lea.vmem [#allocation5], %s1994
        %p1996 = pneg %p187
        %p1997 = pneg %p184
        %p1998 = pneg %p208
        %p1999 = pneg %p205
        %p2000 = pneg %p229
        %p2001 = pneg %p226
        %p2002 = pneg %p250
        %p2003 = pneg %p247
        %p2004 = pneg %p271
        %p2005 = pneg %p268
        %p2006 = pneg %p292
        %p2007 = pneg %p289
        %p2008 = pneg %p313
        %p2009 = pneg %p310
        %p2010 = pneg %p334
        %p2011 = pneg %p331
        %p2012 = pneg %p355
        %p2013 = pneg %p352
        %p2014 = pneg %p376
        %p2015 = pneg %p373
        %p2016 = pneg %p397
        %p2017 = pneg %p394
        %p2018 = pneg %p418
        %p2019 = pneg %p415
        %p2020 = pneg %p439
        %p2021 = pneg %p436
        %p2022 = pneg %p460
        %p2023 = pneg %p457
        %p2024 = pneg %p481
        %p2025 = pneg %p478
        %p2026 = pneg %p502
        %p2027 = pneg %p499
        %p2028 = pneg %p523
        %p2029 = pneg %p520
        %p2030 = pneg %p544
        %p2031 = pneg %p541
        %p2032 = pneg %p565
        %p2033 = pneg %p562
        %p2034 = pneg %p586
        %p2035 = pneg %p583
        %p2036 = pneg %p607
        %p2037 = pneg %p604
        %p2038 = pneg %p628
        %p2039 = pneg %p625
        %p2040 = pneg %p649
        %p2041 = pneg %p646
        %p2042 = pneg %p670
        %p2043 = pneg %p667
        %p2044 = pneg %p691
        %p2045 = pneg %p688
        %p2046 = pneg %p712
        %p2047 = pneg %p709
        %p2048 = pneg %p733
        %p2049 = pneg %p730
        %p2050 = pneg %p754
        %p2051 = pneg %p751
        %p2052 = pneg %p775
        %p2053 = pneg %p772
        %p2054 = pneg %p796
        %p2055 = pneg %p793
        %p2056 = pneg %p817
        %p2057 = pneg %p814
        %p2058 = pneg %p838
        %p2059 = pneg %p835
        %p2060 = pneg %p859
        %p2061 = pneg %p856
        %p2062 = pneg %p880
        %p2063 = pneg %p877
        %p2064 = pneg %p901
        %p2065 = pneg %p898
        %p2066 = pneg %p922
        %p2067 = pneg %p919
        %p2068 = pneg %p943
        %p2069 = pneg %p940
        %p2070 = pneg %p964
        %p2071 = pneg %p961
        %p2072 = pneg %p985
        %p2073 = pneg %p982
        %p2074 = pneg %p1006
        %p2075 = pneg %p1003
        %p2076 = pneg %p1027
        %p2077 = pneg %p1024
        %p2078 = pneg %p1048
        %p2079 = pneg %p1045
        %p2080 = pneg %p1069
        %p2081 = pneg %p1066
        %p2082 = pneg %p1090
        %p2083 = pneg %p1087
        %p2084 = pneg %p1111
        %p2085 = pneg %p1108
        %p2086 = pneg %p1132
        %p2087 = pneg %p1129
        %p2088 = pneg %p1153
        %p2089 = pneg %p1150
        %p2090 = pneg %p1179
        %p2091 = pneg %p1176
        %s2092 = sand.u32 %s1166, 1
        %s2093 = scalar_lea.sflag [#allocation4], %s2092
        %s2094 = sand.u32 %s1166, 1
        %s2095 = smul.addr %s2094, 8
        %s2096 = scalar_lea.vmem [#allocation76], %s2095
        %v2097 = vld [vmem:[%s1786] sm:$0xff]
        %v2098 = vld [vmem:[%s1795] sm:$0xff]
        %v2099 = vld [vmem:[%s1795 + $0x8] sm:$0xff]
        %v2100 = vld [vmem:[#allocation7] sm:$0xff]
        %v2101 = vld [vmem:[#allocation7 + $0x8] sm:$0xff]
        %v2102 = vld [vmem:[#allocation7 + $0x10] sm:$0xff]
        %v2103 = vld [vmem:[#allocation7 + $0x18] sm:$0xff]
        %v2104 = vld [vmem:[#allocation8] sm:$0x1]
        %v2105 = vld [vmem:[#allocation10] sm:$0xff]
        %v2106 = vld [vmem:[#allocation10 + $0x8] sm:$0xff]
        %v2107 = vld [vmem:[#allocation10 + $0x10] sm:$0xff]
        %v2108 = vld [vmem:[#allocation10 + $0x18] sm:$0xff]
        %v2109 = vld [vmem:[#allocation11] sm:$0x1]
        %v2110 = vld [vmem:[#allocation13] sm:$0xff]
        %v2111 = vld [vmem:[#allocation13 + $0x8] sm:$0xff]
        %v2112 = vld [vmem:[#allocation13 + $0x10] sm:$0xff]
        %v2113 = vld [vmem:[#allocation13 + $0x18] sm:$0xff]
        %v2114 = vld [vmem:[#allocation14] sm:$0x1]
        %v2115 = vld [vmem:[#allocation16] sm:$0xff]
        %v2116 = vld [vmem:[#allocation16 + $0x8] sm:$0xff]
        %v2117 = vld [vmem:[#allocation16 + $0x10] sm:$0xff]
        %v2118 = vld [vmem:[#allocation16 + $0x18] sm:$0xff]
        %v2119 = vld [vmem:[#allocation17] sm:$0x1]
        %v2120 = vld [vmem:[#allocation19] sm:$0x1]
        %v2121 = vld [vmem:[#allocation20] sm:$0x1]
        %v2123 = vlaneseq
        %v2124 = vshrl.u32 %v2123, 7
        %v2125 = vsub.s32 0, %v2124
        %v2126 = vrot.slane %v2104, %v2125
        %vm2128 = vcmask 261120
        %v2130 = vsel %vm2128, %v2097, 0
        %2132 = vmatprep.subr.mxu0 0.0
        %2133 = vmatpush1.msra.mxu0 %v2100
        %2134 = vmatprep.subr.mxu0 0.0
        %2135 = vmatpush1.msra.mxu0 %v2101
        %2136 = vmatprep.subr.mxu0 0.0
        %2137 = vmatpush1.msra.mxu0 %v2102
        %2138 = vmatprep.subr.mxu0 0.0
        %2139 = vmatpush1.msra.mxu0 %v2103
        %2140 = vmatprep.subr.mxu0 0.0
        %2141 = vmatpush1.msra.mxu0 0.0
        %2142 = vmatprep.subr.mxu0 0.0
        %2143 = vmatpush1.msra.mxu0 0.0
        %2144 = vmatprep.subr.mxu0 0.0
        %2145 = vmatpush1.msra.mxu0 0.0
        %2146 = vmatprep.subr.mxu0 0.0
        %2147 = vmatpush1.msra.mxu0 0.0
        %2148 = vmatprep.subr.mxu0 0.0
        %2149 = vmatpush1.msra.mxu0 0.0
        %2150 = vmatprep.subr.mxu0 0.0
        %2151 = vmatpush1.msra.mxu0 0.0
        %2152 = vmatprep.subr.mxu0 0.0
        %2153 = vmatpush1.msra.mxu0 0.0
        %2154 = vmatprep.subr.mxu0 0.0
        %2155 = vmatpush1.msra.mxu0 0.0
        %2156 = vmatprep.subr.mxu0 0.0
        %2157 = vmatpush1.msra.mxu0 0.0
        %2158 = vmatprep.subr.mxu0 0.0
        %2159 = vmatpush1.msra.mxu0 0.0
        %2160 = vmatprep.subr.mxu0 0.0
        %2161 = vmatpush1.msra.mxu0 0.0
        %2162 = vmatprep.subr.mxu0 0.0
        %2163 = vmatpush1.msra.mxu0 0.0
        %2164 = vmatprep.subr.mxu0 0.0
        %2165 = vmatpush1.msra.mxu0 0.0
        %2166 = vmatprep.subr.mxu0 0.0
        %2167 = vmatpush1.msra.mxu0 0.0
        %2168 = vmatprep.subr.mxu0 0.0
        %2169 = vmatpush1.msra.mxu0 0.0
        %2170 = vmatprep.subr.mxu0 0.0
        %2171 = vmatpush1.msra.mxu0 0.0
        %2172 = vmatprep.subr.mxu0 0.0
        %2173 = vmatpush1.msra.mxu0 0.0
        %2174 = vmatprep.subr.mxu0 0.0
        %2175 = vmatpush1.msra.mxu0 0.0
        %2176 = vmatprep.subr.mxu0 0.0
        %2177 = vmatpush1.msra.mxu0 0.0
        %2178 = vmatprep.subr.mxu0 0.0
        %2179 = vmatpush1.msra.mxu0 0.0
        %2180 = vmatprep.subr.mxu0 0.0
        %2181 = vmatpush1.msra.mxu0 0.0
        %2182 = vmatprep.subr.mxu0 0.0
        %2183 = vmatpush1.msra.mxu0 0.0
        %2184 = vmatprep.subr.mxu0 0.0
        %2185 = vmatpush1.msra.mxu0 0.0
        %2186 = vmatprep.subr.mxu0 0.0
        %2187 = vmatpush1.msra.mxu0 0.0
        %2188 = vmatprep.subr.mxu0 0.0
        %2189 = vmatpush1.msra.mxu0 0.0
        %2190 = vmatprep.subr.mxu0 0.0
        %2191 = vmatpush1.msra.mxu0 0.0
        %2192 = vmatprep.subr.mxu0 0.0
        %2193 = vmatpush1.msra.mxu0 0.0
        %2194 = vmatprep.subr.mxu0 0.0
        %2195 = vmatpush1.msra.mxu0 0.0
        %2196 = vmatprep.mubr.f32.mxu0 0.0
        %2197 = vmatmul.mubr.f32.gmra.mrb[0].mxu0 %v2130
        %v2198 = vpop.f32.mrb[0].mxu0
        %v2199 = vadd.f32 %v2126, %v2198
        %v2200 = vpop.f32.mrb[0].mxu0
        %2201 = vdwg.mxu0
        %v2202 = vmul.f32 %v2199, 0.35355338
        %v2204 = vlaneseq
        %v2205 = vshrl.u32 %v2204, 7
        %v2206 = vsub.s32 0, %v2205
        %v2207 = vrot.slane %v2109, %v2206
        %2209 = vmatprep.subr.mxu0 0.0
        %2210 = vmatpush1.msra.mxu0 %v2105
        %2211 = vmatprep.subr.mxu0 0.0
        %2212 = vmatpush1.msra.mxu0 %v2106
        %2213 = vmatprep.subr.mxu0 0.0
        %2214 = vmatpush1.msra.mxu0 %v2107
        %2215 = vmatprep.subr.mxu0 0.0
        %2216 = vmatpush1.msra.mxu0 %v2108
        %2217 = vmatprep.subr.mxu0 0.0
        %2218 = vmatpush1.msra.mxu0 0.0
        %2219 = vmatprep.subr.mxu0 0.0
        %2220 = vmatpush1.msra.mxu0 0.0
        %2221 = vmatprep.subr.mxu0 0.0
        %2222 = vmatpush1.msra.mxu0 0.0
        %2223 = vmatprep.subr.mxu0 0.0
        %2224 = vmatpush1.msra.mxu0 0.0
        %2225 = vmatprep.subr.mxu0 0.0
        %2226 = vmatpush1.msra.mxu0 0.0
        %2227 = vmatprep.subr.mxu0 0.0
        %2228 = vmatpush1.msra.mxu0 0.0
        %2229 = vmatprep.subr.mxu0 0.0
        %2230 = vmatpush1.msra.mxu0 0.0
        %2231 = vmatprep.subr.mxu0 0.0
        %2232 = vmatpush1.msra.mxu0 0.0
        %2233 = vmatprep.subr.mxu0 0.0
        %2234 = vmatpush1.msra.mxu0 0.0
        %2235 = vmatprep.subr.mxu0 0.0
        %2236 = vmatpush1.msra.mxu0 0.0
        %2237 = vmatprep.subr.mxu0 0.0
        %2238 = vmatpush1.msra.mxu0 0.0
        %2239 = vmatprep.subr.mxu0 0.0
        %2240 = vmatpush1.msra.mxu0 0.0
        %2241 = vmatprep.subr.mxu0 0.0
        %2242 = vmatpush1.msra.mxu0 0.0
        %2243 = vmatprep.subr.mxu0 0.0
        %2244 = vmatpush1.msra.mxu0 0.0
        %2245 = vmatprep.subr.mxu0 0.0
        %2246 = vmatpush1.msra.mxu0 0.0
        %2247 = vmatprep.subr.mxu0 0.0
        %2248 = vmatpush1.msra.mxu0 0.0
        %2249 = vmatprep.subr.mxu0 0.0
        %2250 = vmatpush1.msra.mxu0 0.0
        %2251 = vmatprep.subr.mxu0 0.0
        %2252 = vmatpush1.msra.mxu0 0.0
        %2253 = vmatprep.subr.mxu0 0.0
        %2254 = vmatpush1.msra.mxu0 0.0
        %2255 = vmatprep.subr.mxu0 0.0
        %2256 = vmatpush1.msra.mxu0 0.0
        %2257 = vmatprep.subr.mxu0 0.0
        %2258 = vmatpush1.msra.mxu0 0.0
        %2259 = vmatprep.subr.mxu0 0.0
        %2260 = vmatpush1.msra.mxu0 0.0
        %2261 = vmatprep.subr.mxu0 0.0
        %2262 = vmatpush1.msra.mxu0 0.0
        %2263 = vmatprep.subr.mxu0 0.0
        %2264 = vmatpush1.msra.mxu0 0.0
        %2265 = vmatprep.subr.mxu0 0.0
        %2266 = vmatpush1.msra.mxu0 0.0
        %2267 = vmatprep.subr.mxu0 0.0
        %2268 = vmatpush1.msra.mxu0 0.0
        %2269 = vmatprep.subr.mxu0 0.0
        %2270 = vmatpush1.msra.mxu0 0.0
        %2271 = vmatprep.subr.mxu0 0.0
        %2272 = vmatpush1.msra.mxu0 0.0
        %2273 = vmatprep.mubr.f32.mxu0 0.0
        %2274 = vmatmul.mubr.f32.gmra.mrb[0].mxu0 %v2130
        %v2275 = vpop.f32.mrb[0].mxu0
        %v2276 = vadd.f32 %v2207, %v2275
        %v2277 = vpop.f32.mrb[0].mxu0
        %2278 = vdwg.mxu0
        %v2280 = vlaneseq
        %v2281 = vshrl.u32 %v2280, 7
        %v2282 = vsub.s32 0, %v2281
        %v2283 = vrot.slane %v2114, %v2282
        %2285 = vmatprep.subr.mxu0 0.0
        %2286 = vmatpush1.msra.mxu0 %v2110
        %2287 = vmatprep.subr.mxu0 0.0
        %2288 = vmatpush1.msra.mxu0 %v2111
        %2289 = vmatprep.subr.mxu0 0.0
        %2290 = vmatpush1.msra.mxu0 %v2112
        %2291 = vmatprep.subr.mxu0 0.0
        %2292 = vmatpush1.msra.mxu0 %v2113
        %2293 = vmatprep.subr.mxu0 0.0
        %2294 = vmatpush1.msra.mxu0 0.0
        %2295 = vmatprep.subr.mxu0 0.0
        %2296 = vmatpush1.msra.mxu0 0.0
        %2297 = vmatprep.subr.mxu0 0.0
        %2298 = vmatpush1.msra.mxu0 0.0
        %2299 = vmatprep.subr.mxu0 0.0
        %2300 = vmatpush1.msra.mxu0 0.0
        %2301 = vmatprep.subr.mxu0 0.0
        %2302 = vmatpush1.msra.mxu0 0.0
        %2303 = vmatprep.subr.mxu0 0.0
        %2304 = vmatpush1.msra.mxu0 0.0
        %2305 = vmatprep.subr.mxu0 0.0
        %2306 = vmatpush1.msra.mxu0 0.0
        %2307 = vmatprep.subr.mxu0 0.0
        %2308 = vmatpush1.msra.mxu0 0.0
        %2309 = vmatprep.subr.mxu0 0.0
        %2310 = vmatpush1.msra.mxu0 0.0
        %2311 = vmatprep.subr.mxu0 0.0
        %2312 = vmatpush1.msra.mxu0 0.0
        %2313 = vmatprep.subr.mxu0 0.0
        %2314 = vmatpush1.msra.mxu0 0.0
        %2315 = vmatprep.subr.mxu0 0.0
        %2316 = vmatpush1.msra.mxu0 0.0
        %2317 = vmatprep.subr.mxu0 0.0
        %2318 = vmatpush1.msra.mxu0 0.0
        %2319 = vmatprep.subr.mxu0 0.0
        %2320 = vmatpush1.msra.mxu0 0.0
        %2321 = vmatprep.subr.mxu0 0.0
        %2322 = vmatpush1.msra.mxu0 0.0
        %2323 = vmatprep.subr.mxu0 0.0
        %2324 = vmatpush1.msra.mxu0 0.0
        %2325 = vmatprep.subr.mxu0 0.0
        %2326 = vmatpush1.msra.mxu0 0.0
        %2327 = vmatprep.subr.mxu0 0.0
        %2328 = vmatpush1.msra.mxu0 0.0
        %2329 = vmatprep.subr.mxu0 0.0
        %2330 = vmatpush1.msra.mxu0 0.0
        %2331 = vmatprep.subr.mxu0 0.0
        %2332 = vmatpush1.msra.mxu0 0.0
        %2333 = vmatprep.subr.mxu0 0.0
        %2334 = vmatpush1.msra.mxu0 0.0
        %2335 = vmatprep.subr.mxu0 0.0
        %2336 = vmatpush1.msra.mxu0 0.0
        %2337 = vmatprep.subr.mxu0 0.0
        %2338 = vmatpush1.msra.mxu0 0.0
        %2339 = vmatprep.subr.mxu0 0.0
        %2340 = vmatpush1.msra.mxu0 0.0
        %2341 = vmatprep.subr.mxu0 0.0
        %2342 = vmatpush1.msra.mxu0 0.0
        %2343 = vmatprep.subr.mxu0 0.0
        %2344 = vmatpush1.msra.mxu0 0.0
        %2345 = vmatprep.subr.mxu0 0.0
        %2346 = vmatpush1.msra.mxu0 0.0
        %2347 = vmatprep.subr.mxu0 0.0
        %2348 = vmatpush1.msra.mxu0 0.0
        %2349 = vmatprep.mubr.f32.mxu0 0.0
        %2350 = vmatmul.mubr.f32.gmra.mrb[0].mxu0 %v2130
        %v2351 = vpop.f32.mrb[0].mxu0
        %v2352 = vadd.f32 %v2283, %v2351
        %v2353 = vpop.f32.mrb[0].mxu0
        %2354 = vdwg.mxu0
        %v2356 = vlaneseq
        %v2357 = vshrl.u32 %v2356, 7
        %v2358 = vsub.s32 0, %v2357
        %v2359 = vrot.slane %v2119, %v2358
        %v2361 = vadd.f32 %v2097, %v2359
        %vm2362 = vcmask 64512
        %v2364 = vsel %vm2362, %v2202, 0
        %v2367 = vsel %vm2362, %v2276, 0
        %2369 = vmatprep.subr.mxu0 0.0
        %2370 = vmatpush1.xpose.msra.mxu0 %v2367
        %2371 = vmatprep.subr.mxu0 0.0
        %2372 = vmatpush1.xpose.msra.mxu0 0.0
        %2373 = vmatprep.subr.mxu0 0.0
        %2374 = vmatpush1.xpose.msra.mxu0 0.0
        %2375 = vmatprep.subr.mxu0 0.0
        %2376 = vmatpush1.xpose.msra.mxu0 0.0
        %2377 = vmatprep.subr.mxu0 0.0
        %2378 = vmatpush1.xpose.msra.mxu0 0.0
        %2379 = vmatprep.subr.mxu0 0.0
        %2380 = vmatpush1.xpose.msra.mxu0 0.0
        %2381 = vmatprep.subr.mxu0 0.0
        %2382 = vmatpush1.xpose.msra.mxu0 0.0
        %2383 = vmatprep.subr.mxu0 0.0
        %2384 = vmatpush1.xpose.msra.mxu0 0.0
        %2385 = vmatprep.subr.mxu0 0.0
        %2386 = vmatpush1.xpose.msra.mxu0 0.0
        %2387 = vmatprep.subr.mxu0 0.0
        %2388 = vmatpush1.xpose.msra.mxu0 0.0
        %2389 = vmatprep.subr.mxu0 0.0
        %2390 = vmatpush1.xpose.msra.mxu0 0.0
        %2391 = vmatprep.subr.mxu0 0.0
        %2392 = vmatpush1.xpose.msra.mxu0 0.0
        %2393 = vmatprep.subr.mxu0 0.0
        %2394 = vmatpush1.xpose.msra.mxu0 0.0
        %2395 = vmatprep.subr.mxu0 0.0
        %2396 = vmatpush1.xpose.msra.mxu0 0.0
        %2397 = vmatprep.subr.mxu0 0.0
        %2398 = vmatpush1.xpose.msra.mxu0 0.0
        %2399 = vmatprep.subr.mxu0 0.0
        %2400 = vmatpush1.xpose.msra.mxu0 0.0
        %2401 = vmatprep.subr.mxu0 0.0
        %2402 = vmatpush1.xpose.msra.mxu0 0.0
        %2403 = vmatprep.subr.mxu0 0.0
        %2404 = vmatpush1.xpose.msra.mxu0 0.0
        %2405 = vmatprep.subr.mxu0 0.0
        %2406 = vmatpush1.xpose.msra.mxu0 0.0
        %2407 = vmatprep.subr.mxu0 0.0
        %2408 = vmatpush1.xpose.msra.mxu0 0.0
        %2409 = vmatprep.subr.mxu0 0.0
        %2410 = vmatpush1.xpose.msra.mxu0 0.0
        %2411 = vmatprep.subr.mxu0 0.0
        %2412 = vmatpush1.xpose.msra.mxu0 0.0
        %2413 = vmatprep.subr.mxu0 0.0
        %2414 = vmatpush1.xpose.msra.mxu0 0.0
        %2415 = vmatprep.subr.mxu0 0.0
        %2416 = vmatpush1.xpose.msra.mxu0 0.0
        %2417 = vmatprep.subr.mxu0 0.0
        %2418 = vmatpush1.xpose.msra.mxu0 0.0
        %2419 = vmatprep.subr.mxu0 0.0
        %2420 = vmatpush1.xpose.msra.mxu0 0.0
        %2421 = vmatprep.subr.mxu0 0.0
        %2422 = vmatpush1.xpose.msra.mxu0 0.0
        %2423 = vmatprep.subr.mxu0 0.0
        %2424 = vmatpush1.xpose.msra.mxu0 0.0
        %2425 = vmatprep.subr.mxu0 0.0
        %2426 = vmatpush1.xpose.msra.mxu0 0.0
        %2427 = vmatprep.subr.mxu0 0.0
        %2428 = vmatpush1.xpose.msra.mxu0 0.0
        %2429 = vmatprep.subr.mxu0 0.0
        %2430 = vmatpush1.xpose.msra.mxu0 0.0
        %2431 = vmatprep.subr.mxu0 0.0
        %2432 = vmatpush1.xpose.msra.mxu0 0.0
        %2433 = vmatprep.mubr.f32.mxu0 0.0
        %2434 = vmatmul.mubr.f32.gmra.mrb[0].mxu0 %v2364
        %v2435 = vpop.f32.mrb[0].mxu0
        %v2436 = vadd.f32 0.0, %v2435
        %v2437 = vpop.f32.mrb[0].mxu0
        %2438 = vdwg.mxu0
        %v2439 = vsel %vm2362, %v2436, -inf
        %2440 = vmax.xlane.f32.xlu0 %v2439
        %v2441 = vpop.xlane.xlu0 %2440
        %v2442 = vsub.f32 %v2436, %v2441
        %v2443 = vmul.f32 %v2442, 1.442695
        %v2444 = vpow.pop %v2443
        %v2445 = vsel %vm2362, %v2444, 0.0
        %2446 = vadd.xlane.f32.xlu0 %v2445
        %v2447 = vpop.xlane.xlu0 %2446
        %v2448 = vrcp.pop %v2447
        %v2449 = vmul.f32 %v2444, %v2448
        %v2451 = vsel %vm2362, %v2449, 0
        %2453 = vmatprep.subr.mxu0 0.0
        %2454 = vmatpush1.msra.mxu0 %v2352
        %2455 = vmatprep.subr.mxu0 0.0
        %2456 = vmatpush1.msra.mxu0 0.0
        %2457 = vmatprep.subr.mxu0 0.0
        %2458 = vmatpush1.msra.mxu0 0.0
        %2459 = vmatprep.subr.mxu0 0.0
        %2460 = vmatpush1.msra.mxu0 0.0
        %2461 = vmatprep.subr.mxu0 0.0
        %2462 = vmatpush1.msra.mxu0 0.0
        %2463 = vmatprep.subr.mxu0 0.0
        %2464 = vmatpush1.msra.mxu0 0.0
        %2465 = vmatprep.subr.mxu0 0.0
        %2466 = vmatpush1.msra.mxu0 0.0
        %2467 = vmatprep.subr.mxu0 0.0
        %2468 = vmatpush1.msra.mxu0 0.0
        %2469 = vmatprep.subr.mxu0 0.0
        %2470 = vmatpush1.msra.mxu0 0.0
        %2471 = vmatprep.subr.mxu0 0.0
        %2472 = vmatpush1.msra.mxu0 0.0
        %2473 = vmatprep.subr.mxu0 0.0
        %2474 = vmatpush1.msra.mxu0 0.0
        %2475 = vmatprep.subr.mxu0 0.0
        %2476 = vmatpush1.msra.mxu0 0.0
        %2477 = vmatprep.subr.mxu0 0.0
        %2478 = vmatpush1.msra.mxu0 0.0
        %2479 = vmatprep.subr.mxu0 0.0
        %2480 = vmatpush1.msra.mxu0 0.0
        %2481 = vmatprep.subr.mxu0 0.0
        %2482 = vmatpush1.msra.mxu0 0.0
        %2483 = vmatprep.subr.mxu0 0.0
        %2484 = vmatpush1.msra.mxu0 0.0
        %2485 = vmatprep.subr.mxu0 0.0
        %2486 = vmatpush1.msra.mxu0 0.0
        %2487 = vmatprep.subr.mxu0 0.0
        %2488 = vmatpush1.msra.mxu0 0.0
        %2489 = vmatprep.subr.mxu0 0.0
        %2490 = vmatpush1.msra.mxu0 0.0
        %2491 = vmatprep.subr.mxu0 0.0
        %2492 = vmatpush1.msra.mxu0 0.0
        %2493 = vmatprep.subr.mxu0 0.0
        %2494 = vmatpush1.msra.mxu0 0.0
        %2495 = vmatprep.subr.mxu0 0.0
        %2496 = vmatpush1.msra.mxu0 0.0
        %2497 = vmatprep.subr.mxu0 0.0
        %2498 = vmatpush1.msra.mxu0 0.0
        %2499 = vmatprep.subr.mxu0 0.0
        %2500 = vmatpush1.msra.mxu0 0.0
        %2501 = vmatprep.subr.mxu0 0.0
        %2502 = vmatpush1.msra.mxu0 0.0
        %2503 = vmatprep.subr.mxu0 0.0
        %2504 = vmatpush1.msra.mxu0 0.0
        %2505 = vmatprep.subr.mxu0 0.0
        %2506 = vmatpush1.msra.mxu0 0.0
        %2507 = vmatprep.subr.mxu0 0.0
        %2508 = vmatpush1.msra.mxu0 0.0
        %2509 = vmatprep.subr.mxu0 0.0
        %2510 = vmatpush1.msra.mxu0 0.0
        %2511 = vmatprep.subr.mxu0 0.0
        %2512 = vmatpush1.msra.mxu0 0.0
        %2513 = vmatprep.subr.mxu0 0.0
        %2514 = vmatpush1.msra.mxu0 0.0
        %2515 = vmatprep.subr.mxu0 0.0
        %2516 = vmatpush1.msra.mxu0 0.0
        %2517 = vmatprep.mubr.f32.mxu0 0.0
        %2518 = vmatmul.mubr.f32.gmra.mrb[0].mxu0 %v2451
        %v2519 = vpop.f32.mrb[0].mxu0
        %v2520 = vadd.f32 0.0, %v2519
        %v2521 = vpop.f32.mrb[0].mxu0
        %2522 = vdwg.mxu0
        %v2524 = vsel %vm2362, %v2520, 0
        %2526 = vmatprep.subr.mxu0 0.0
        %2527 = vmatpush1.msra.mxu0 %v2115
        %2528 = vmatprep.subr.mxu0 0.0
        %2529 = vmatpush1.msra.mxu0 0.0
        %2530 = vmatprep.subr.mxu0 0.0
        %2531 = vmatpush1.msra.mxu0 0.0
        %2532 = vmatprep.subr.mxu0 0.0
        %2533 = vmatpush1.msra.mxu0 0.0
        %2534 = vmatprep.subr.mxu0 0.0
        %2535 = vmatpush1.msra.mxu0 0.0
        %2536 = vmatprep.subr.mxu0 0.0
        %2537 = vmatpush1.msra.mxu0 0.0
        %2538 = vmatprep.subr.mxu0 0.0
        %2539 = vmatpush1.msra.mxu0 0.0
        %2540 = vmatprep.subr.mxu0 0.0
        %2541 = vmatpush1.msra.mxu0 0.0
        %2542 = vmatprep.subr.mxu0 0.0
        %2543 = vmatpush1.msra.mxu0 0.0
        %2544 = vmatprep.subr.mxu0 0.0
        %2545 = vmatpush1.msra.mxu0 0.0
        %2546 = vmatprep.subr.mxu0 0.0
        %2547 = vmatpush1.msra.mxu0 0.0
        %2548 = vmatprep.subr.mxu0 0.0
        %2549 = vmatpush1.msra.mxu0 0.0
        %2550 = vmatprep.subr.mxu0 0.0
        %2551 = vmatpush1.msra.mxu0 0.0
        %2552 = vmatprep.subr.mxu0 0.0
        %2553 = vmatpush1.msra.mxu0 0.0
        %2554 = vmatprep.subr.mxu0 0.0
        %2555 = vmatpush1.msra.mxu0 0.0
        %2556 = vmatprep.subr.mxu0 0.0
        %2557 = vmatpush1.msra.mxu0 0.0
        %2558 = vmatprep.subr.mxu0 0.0
        %2559 = vmatpush1.msra.mxu0 0.0
        %2560 = vmatprep.subr.mxu0 0.0
        %2561 = vmatpush1.msra.mxu0 0.0
        %2562 = vmatprep.subr.mxu0 0.0
        %2563 = vmatpush1.msra.mxu0 0.0
        %2564 = vmatprep.subr.mxu0 0.0
        %2565 = vmatpush1.msra.mxu0 0.0
        %2566 = vmatprep.subr.mxu0 0.0
        %2567 = vmatpush1.msra.mxu0 0.0
        %2568 = vmatprep.subr.mxu0 0.0
        %2569 = vmatpush1.msra.mxu0 0.0
        %2570 = vmatprep.subr.mxu0 0.0
        %2571 = vmatpush1.msra.mxu0 0.0
        %2572 = vmatprep.subr.mxu0 0.0
        %2573 = vmatpush1.msra.mxu0 0.0
        %2574 = vmatprep.subr.mxu0 0.0
        %2575 = vmatpush1.msra.mxu0 0.0
        %2576 = vmatprep.subr.mxu0 0.0
        %2577 = vmatpush1.msra.mxu0 0.0
        %2578 = vmatprep.subr.mxu0 0.0
        %2579 = vmatpush1.msra.mxu0 0.0
        %2580 = vmatprep.subr.mxu0 0.0
        %2581 = vmatpush1.msra.mxu0 0.0
        %2582 = vmatprep.subr.mxu0 0.0
        %2583 = vmatpush1.msra.mxu0 0.0
        %2584 = vmatprep.subr.mxu0 0.0
        %2585 = vmatpush1.msra.mxu0 0.0
        %2586 = vmatprep.subr.mxu0 0.0
        %2587 = vmatpush1.msra.mxu0 0.0
        %2588 = vmatprep.subr.mxu0 0.0
        %2589 = vmatpush1.msra.mxu0 0.0
        %2590 = vmatprep.mubr.f32.mxu0 0.0
        %2591 = vmatmul.mubr.f32.gmra.mrb[0].mxu0 %v2524
        %v2592 = vpop.f32.mrb[0].mxu0
        %v2593 = vadd.f32 0.0, %v2592
        %v2594 = vpop.f32.mrb[0].mxu0
        %2595 = vdwg.mxu0
        %v2596 = vadd.f32 %v2361, %v2593
        %2597 = vrot.lane.b32.xlu0 %v2202, 120
        %v2598 = vpop.permute.xlu0 %2597
        %2599 = vrot.lane.b32.xlu0 %v2276, 120
        %v2600 = vpop.permute.xlu0 %2599
        %v2601 = vsel %vm2362, %v2598, 0
        %v2603 = vsel %vm2362, %v2600, 0
        %2605 = vmatprep.subr.mxu0 0.0
        %2606 = vmatpush1.xpose.msra.mxu0 %v2603
        %2607 = vmatprep.subr.mxu0 0.0
        %2608 = vmatpush1.xpose.msra.mxu0 0.0
        %2609 = vmatprep.subr.mxu0 0.0
        %2610 = vmatpush1.xpose.msra.mxu0 0.0
        %2611 = vmatprep.subr.mxu0 0.0
        %2612 = vmatpush1.xpose.msra.mxu0 0.0
        %2613 = vmatprep.subr.mxu0 0.0
        %2614 = vmatpush1.xpose.msra.mxu0 0.0
        %2615 = vmatprep.subr.mxu0 0.0
        %2616 = vmatpush1.xpose.msra.mxu0 0.0
        %2617 = vmatprep.subr.mxu0 0.0
        %2618 = vmatpush1.xpose.msra.mxu0 0.0
        %2619 = vmatprep.subr.mxu0 0.0
        %2620 = vmatpush1.xpose.msra.mxu0 0.0
        %2621 = vmatprep.subr.mxu0 0.0
        %2622 = vmatpush1.xpose.msra.mxu0 0.0
        %2623 = vmatprep.subr.mxu0 0.0
        %2624 = vmatpush1.xpose.msra.mxu0 0.0
        %2625 = vmatprep.subr.mxu0 0.0
        %2626 = vmatpush1.xpose.msra.mxu0 0.0
        %2627 = vmatprep.subr.mxu0 0.0
        %2628 = vmatpush1.xpose.msra.mxu0 0.0
        %2629 = vmatprep.subr.mxu0 0.0
        %2630 = vmatpush1.xpose.msra.mxu0 0.0
        %2631 = vmatprep.subr.mxu0 0.0
        %2632 = vmatpush1.xpose.msra.mxu0 0.0
        %2633 = vmatprep.subr.mxu0 0.0
        %2634 = vmatpush1.xpose.msra.mxu0 0.0
        %2635 = vmatprep.subr.mxu0 0.0
        %2636 = vmatpush1.xpose.msra.mxu0 0.0
        %2637 = vmatprep.subr.mxu0 0.0
        %2638 = vmatpush1.xpose.msra.mxu0 0.0
        %2639 = vmatprep.subr.mxu0 0.0
        %2640 = vmatpush1.xpose.msra.mxu0 0.0
        %2641 = vmatprep.subr.mxu0 0.0
        %2642 = vmatpush1.xpose.msra.mxu0 0.0
        %2643 = vmatprep.subr.mxu0 0.0
        %2644 = vmatpush1.xpose.msra.mxu0 0.0
        %2645 = vmatprep.subr.mxu0 0.0
        %2646 = vmatpush1.xpose.msra.mxu0 0.0
        %2647 = vmatprep.subr.mxu0 0.0
        %2648 = vmatpush1.xpose.msra.mxu0 0.0
        %2649 = vmatprep.subr.mxu0 0.0
        %2650 = vmatpush1.xpose.msra.mxu0 0.0
        %2651 = vmatprep.subr.mxu0 0.0
        %2652 = vmatpush1.xpose.msra.mxu0 0.0
        %2653 = vmatprep.subr.mxu0 0.0
        %2654 = vmatpush1.xpose.msra.mxu0 0.0
        %2655 = vmatprep.subr.mxu0 0.0
        %2656 = vmatpush1.xpose.msra.mxu0 0.0
        %2657 = vmatprep.subr.mxu0 0.0
        %2658 = vmatpush1.xpose.msra.mxu0 0.0
        %2659 = vmatprep.subr.mxu0 0.0
        %2660 = vmatpush1.xpose.msra.mxu0 0.0
        %2661 = vmatprep.subr.mxu0 0.0
        %2662 = vmatpush1.xpose.msra.mxu0 0.0
        %2663 = vmatprep.subr.mxu0 0.0
        %2664 = vmatpush1.xpose.msra.mxu0 0.0
        %2665 = vmatprep.subr.mxu0 0.0
        %2666 = vmatpush1.xpose.msra.mxu0 0.0
        %2667 = vmatprep.subr.mxu0 0.0
        %2668 = vmatpush1.xpose.msra.mxu0 0.0
        %2669 = vmatprep.mubr.f32.mxu0 0.0
        %2670 = vmatmul.mubr.f32.gmra.mrb[0].mxu0 %v2601
        %v2671 = vpop.f32.mrb[0].mxu0
        %v2672 = vadd.f32 0.0, %v2671
        %v2673 = vpop.f32.mrb[0].mxu0
        %2674 = vdwg.mxu0
        %v2675 = vsel %vm2362, %v2672, -inf
        %2676 = vmax.xlane.f32.xlu0 %v2675
        %v2677 = vpop.xlane.xlu0 %2676
        %v2678 = vsub.f32 %v2672, %v2677
        %v2679 = vmul.f32 %v2678, 1.442695
        %v2680 = vpow.pop %v2679
        %v2681 = vsel %vm2362, %v2680, 0.0
        %2682 = vadd.xlane.f32.xlu0 %v2681
        %v2683 = vpop.xlane.xlu0 %2682
        %v2684 = vrcp.pop %v2683
        %v2685 = vmul.f32 %v2680, %v2684
        %2687 = vrot.lane.b32.xlu0 %v2352, 120
        %v2688 = vpop.permute.xlu0 %2687
        %v2691 = vsel %vm2362, %v2685, 0
        %2693 = vmatprep.subr.mxu0 0.0
        %2694 = vmatpush1.msra.mxu0 %v2688
        %2695 = vmatprep.subr.mxu0 0.0
        %2696 = vmatpush1.msra.mxu0 0.0
        %2697 = vmatprep.subr.mxu0 0.0
        %2698 = vmatpush1.msra.mxu0 0.0
        %2699 = vmatprep.subr.mxu0 0.0
        %2700 = vmatpush1.msra.mxu0 0.0
        %2701 = vmatprep.subr.mxu0 0.0
        %2702 = vmatpush1.msra.mxu0 0.0
        %2703 = vmatprep.subr.mxu0 0.0
        %2704 = vmatpush1.msra.mxu0 0.0
        %2705 = vmatprep.subr.mxu0 0.0
        %2706 = vmatpush1.msra.mxu0 0.0
        %2707 = vmatprep.subr.mxu0 0.0
        %2708 = vmatpush1.msra.mxu0 0.0
        %2709 = vmatprep.subr.mxu0 0.0
        %2710 = vmatpush1.msra.mxu0 0.0
        %2711 = vmatprep.subr.mxu0 0.0
        %2712 = vmatpush1.msra.mxu0 0.0
        %2713 = vmatprep.subr.mxu0 0.0
        %2714 = vmatpush1.msra.mxu0 0.0
        %2715 = vmatprep.subr.mxu0 0.0
        %2716 = vmatpush1.msra.mxu0 0.0
        %2717 = vmatprep.subr.mxu0 0.0
        %2718 = vmatpush1.msra.mxu0 0.0
        %2719 = vmatprep.subr.mxu0 0.0
        %2720 = vmatpush1.msra.mxu0 0.0
        %2721 = vmatprep.subr.mxu0 0.0
        %2722 = vmatpush1.msra.mxu0 0.0
        %2723 = vmatprep.subr.mxu0 0.0
        %2724 = vmatpush1.msra.mxu0 0.0
        %2725 = vmatprep.subr.mxu0 0.0
        %2726 = vmatpush1.msra.mxu0 0.0
        %2727 = vmatprep.subr.mxu0 0.0
        %2728 = vmatpush1.msra.mxu0 0.0
        %2729 = vmatprep.subr.mxu0 0.0
        %2730 = vmatpush1.msra.mxu0 0.0
        %2731 = vmatprep.subr.mxu0 0.0
        %2732 = vmatpush1.msra.mxu0 0.0
        %2733 = vmatprep.subr.mxu0 0.0
        %2734 = vmatpush1.msra.mxu0 0.0
        %2735 = vmatprep.subr.mxu0 0.0
        %2736 = vmatpush1.msra.mxu0 0.0
        %2737 = vmatprep.subr.mxu0 0.0
        %2738 = vmatpush1.msra.mxu0 0.0
        %2739 = vmatprep.subr.mxu0 0.0
        %2740 = vmatpush1.msra.mxu0 0.0
        %2741 = vmatprep.subr.mxu0 0.0
        %2742 = vmatpush1.msra.mxu0 0.0
        %2743 = vmatprep.subr.mxu0 0.0
        %2744 = vmatpush1.msra.mxu0 0.0
        %2745 = vmatprep.subr.mxu0 0.0
        %2746 = vmatpush1.msra.mxu0 0.0
        %2747 = vmatprep.subr.mxu0 0.0
        %2748 = vmatpush1.msra.mxu0 0.0
        %2749 = vmatprep.subr.mxu0 0.0
        %2750 = vmatpush1.msra.mxu0 0.0
        %2751 = vmatprep.subr.mxu0 0.0
        %2752 = vmatpush1.msra.mxu0 0.0
        %2753 = vmatprep.subr.mxu0 0.0
        %2754 = vmatpush1.msra.mxu0 0.0
        %2755 = vmatprep.subr.mxu0 0.0
        %2756 = vmatpush1.msra.mxu0 0.0
        %2757 = vmatprep.mubr.f32.mxu0 0.0
        %2758 = vmatmul.mubr.f32.gmra.mrb[0].mxu0 %v2691
        %v2759 = vpop.f32.mrb[0].mxu0
        %v2760 = vadd.f32 0.0, %v2759
        %v2761 = vpop.f32.mrb[0].mxu0
        %2762 = vdwg.mxu0
        %v2764 = vsel %vm2362, %v2760, 0
        %2766 = vmatprep.subr.mxu0 0.0
        %2767 = vmatpush1.msra.mxu0 %v2116
        %2768 = vmatprep.subr.mxu0 0.0
        %2769 = vmatpush1.msra.mxu0 0.0
        %2770 = vmatprep.subr.mxu0 0.0
        %2771 = vmatpush1.msra.mxu0 0.0
        %2772 = vmatprep.subr.mxu0 0.0
        %2773 = vmatpush1.msra.mxu0 0.0
        %2774 = vmatprep.subr.mxu0 0.0
        %2775 = vmatpush1.msra.mxu0 0.0
        %2776 = vmatprep.subr.mxu0 0.0
        %2777 = vmatpush1.msra.mxu0 0.0
        %2778 = vmatprep.subr.mxu0 0.0
        %2779 = vmatpush1.msra.mxu0 0.0
        %2780 = vmatprep.subr.mxu0 0.0
        %2781 = vmatpush1.msra.mxu0 0.0
        %2782 = vmatprep.subr.mxu0 0.0
        %2783 = vmatpush1.msra.mxu0 0.0
        %2784 = vmatprep.subr.mxu0 0.0
        %2785 = vmatpush1.msra.mxu0 0.0
        %2786 = vmatprep.subr.mxu0 0.0
        %2787 = vmatpush1.msra.mxu0 0.0
        %2788 = vmatprep.subr.mxu0 0.0
        %2789 = vmatpush1.msra.mxu0 0.0
        %2790 = vmatprep.subr.mxu0 0.0
        %2791 = vmatpush1.msra.mxu0 0.0
        %2792 = vmatprep.subr.mxu0 0.0
        %2793 = vmatpush1.msra.mxu0 0.0
        %2794 = vmatprep.subr.mxu0 0.0
        %2795 = vmatpush1.msra.mxu0 0.0
        %2796 = vmatprep.subr.mxu0 0.0
        %2797 = vmatpush1.msra.mxu0 0.0
        %2798 = vmatprep.subr.mxu0 0.0
        %2799 = vmatpush1.msra.mxu0 0.0
        %2800 = vmatprep.subr.mxu0 0.0
        %2801 = vmatpush1.msra.mxu0 0.0
        %2802 = vmatprep.subr.mxu0 0.0
        %2803 = vmatpush1.msra.mxu0 0.0
        %2804 = vmatprep.subr.mxu0 0.0
        %2805 = vmatpush1.msra.mxu0 0.0
        %2806 = vmatprep.subr.mxu0 0.0
        %2807 = vmatpush1.msra.mxu0 0.0
        %2808 = vmatprep.subr.mxu0 0.0
        %2809 = vmatpush1.msra.mxu0 0.0
        %2810 = vmatprep.subr.mxu0 0.0
        %2811 = vmatpush1.msra.mxu0 0.0
        %2812 = vmatprep.subr.mxu0 0.0
        %2813 = vmatpush1.msra.mxu0 0.0
        %2814 = vmatprep.subr.mxu0 0.0
        %2815 = vmatpush1.msra.mxu0 0.0
        %2816 = vmatprep.subr.mxu0 0.0
        %2817 = vmatpush1.msra.mxu0 0.0
        %2818 = vmatprep.subr.mxu0 0.0
        %2819 = vmatpush1.msra.mxu0 0.0
        %2820 = vmatprep.subr.mxu0 0.0
        %2821 = vmatpush1.msra.mxu0 0.0
        %2822 = vmatprep.subr.mxu0 0.0
        %2823 = vmatpush1.msra.mxu0 0.0
        %2824 = vmatprep.subr.mxu0 0.0
        %2825 = vmatpush1.msra.mxu0 0.0
        %2826 = vmatprep.subr.mxu0 0.0
        %2827 = vmatpush1.msra.mxu0 0.0
        %2828 = vmatprep.subr.mxu0 0.0
        %2829 = vmatpush1.msra.mxu0 0.0
        %2830 = vmatprep.mubr.f32.mxu0 0.0
        %2831 = vmatmul.mubr.f32.gmra.mrb[0].mxu0 %v2764
        %v2832 = vpop.f32.mrb[0].mxu0
        %v2833 = vadd.f32 0.0, %v2832
        %v2834 = vpop.f32.mrb[0].mxu0
        %2835 = vdwg.mxu0
        %v2836 = vadd.f32 %v2596, %v2833
        %2837 = vrot.lane.b32.xlu0 %v2202, 112
        %v2838 = vpop.permute.xlu0 %2837
        %2839 = vrot.lane.b32.xlu0 %v2276, 112
        %v2840 = vpop.permute.xlu0 %2839
        %v2841 = vsel %vm2362, %v2838, 0
        %v2843 = vsel %vm2362, %v2840, 0
        %2845 = vmatprep.subr.mxu0 0.0
        %2846 = vmatpush1.xpose.msra.mxu0 %v2843
        %2847 = vmatprep.subr.mxu0 0.0
        %2848 = vmatpush1.xpose.msra.mxu0 0.0
        %2849 = vmatprep.subr.mxu0 0.0
        %2850 = vmatpush1.xpose.msra.mxu0 0.0
        %2851 = vmatprep.subr.mxu0 0.0
        %2852 = vmatpush1.xpose.msra.mxu0 0.0
        %2853 = vmatprep.subr.mxu0 0.0
        %2854 = vmatpush1.xpose.msra.mxu0 0.0
        %2855 = vmatprep.subr.mxu0 0.0
        %2856 = vmatpush1.xpose.msra.mxu0 0.0
        %2857 = vmatprep.subr.mxu0 0.0
        %2858 = vmatpush1.xpose.msra.mxu0 0.0
        %2859 = vmatprep.subr.mxu0 0.0
        %2860 = vmatpush1.xpose.msra.mxu0 0.0
        %2861 = vmatprep.subr.mxu0 0.0
        %2862 = vmatpush1.xpose.msra.mxu0 0.0
        %2863 = vmatprep.subr.mxu0 0.0
        %2864 = vmatpush1.xpose.msra.mxu0 0.0
        %2865 = vmatprep.subr.mxu0 0.0
        %2866 = vmatpush1.xpose.msra.mxu0 0.0
        %2867 = vmatprep.subr.mxu0 0.0
        %2868 = vmatpush1.xpose.msra.mxu0 0.0
        %2869 = vmatprep.subr.mxu0 0.0
        %2870 = vmatpush1.xpose.msra.mxu0 0.0
        %2871 = vmatprep.subr.mxu0 0.0
        %2872 = vmatpush1.xpose.msra.mxu0 0.0
        %2873 = vmatprep.subr.mxu0 0.0
        %2874 = vmatpush1.xpose.msra.mxu0 0.0
        %2875 = vmatprep.subr.mxu0 0.0
        %2876 = vmatpush1.xpose.msra.mxu0 0.0
        %2877 = vmatprep.subr.mxu0 0.0
        %2878 = vmatpush1.xpose.msra.mxu0 0.0
        %2879 = vmatprep.subr.mxu0 0.0
        %2880 = vmatpush1.xpose.msra.mxu0 0.0
        %2881 = vmatprep.subr.mxu0 0.0
        %2882 = vmatpush1.xpose.msra.mxu0 0.0
        %2883 = vmatprep.subr.mxu0 0.0
        %2884 = vmatpush1.xpose.msra.mxu0 0.0
        %2885 = vmatprep.subr.mxu0 0.0
        %2886 = vmatpush1.xpose.msra.mxu0 0.0
        %2887 = vmatprep.subr.mxu0 0.0
        %2888 = vmatpush1.xpose.msra.mxu0 0.0
        %2889 = vmatprep.subr.mxu0 0.0
        %2890 = vmatpush1.xpose.msra.mxu0 0.0
        %2891 = vmatprep.subr.mxu0 0.0
        %2892 = vmatpush1.xpose.msra.mxu0 0.0
        %2893 = vmatprep.subr.mxu0 0.0
        %2894 = vmatpush1.xpose.msra.mxu0 0.0
        %2895 = vmatprep.subr.mxu0 0.0
        %2896 = vmatpush1.xpose.msra.mxu0 0.0
        %2897 = vmatprep.subr.mxu0 0.0
        %2898 = vmatpush1.xpose.msra.mxu0 0.0
        %2899 = vmatprep.subr.mxu0 0.0
        %2900 = vmatpush1.xpose.msra.mxu0 0.0
        %2901 = vmatprep.subr.mxu0 0.0
        %2902 = vmatpush1.xpose.msra.mxu0 0.0
        %2903 = vmatprep.subr.mxu0 0.0
        %2904 = vmatpush1.xpose.msra.mxu0 0.0
        %2905 = vmatprep.subr.mxu0 0.0
        %2906 = vmatpush1.xpose.msra.mxu0 0.0
        %2907 = vmatprep.subr.mxu0 0.0
        %2908 = vmatpush1.xpose.msra.mxu0 0.0
        %2909 = vmatprep.mubr.f32.mxu0 0.0
        %2910 = vmatmul.mubr.f32.gmra.mrb[0].mxu0 %v2841
        %v2911 = vpop.f32.mrb[0].mxu0
        %v2912 = vadd.f32 0.0, %v2911
        %v2913 = vpop.f32.mrb[0].mxu0
        %2914 = vdwg.mxu0
        %v2915 = vsel %vm2362, %v2912, -inf
        %2916 = vmax.xlane.f32.xlu0 %v2915
        %v2917 = vpop.xlane.xlu0 %2916
        %v2918 = vsub.f32 %v2912, %v2917
        %v2919 = vmul.f32 %v2918, 1.442695
        %v2920 = vpow.pop %v2919
        %v2921 = vsel %vm2362, %v2920, 0.0
        %2922 = vadd.xlane.f32.xlu0 %v2921
        %v2923 = vpop.xlane.xlu0 %2922
        %v2924 = vrcp.pop %v2923
        %v2925 = vmul.f32 %v2920, %v2924
        %2926 = vrot.lane.b32.xlu0 %v2352, 112
        %v2927 = vpop.permute.xlu0 %2926
        %v2930 = vsel %vm2362, %v2925, 0
        %2932 = vmatprep.subr.mxu0 0.0
        %2933 = vmatpush1.msra.mxu0 %v2927
        %2934 = vmatprep.subr.mxu0 0.0
        %2935 = vmatpush1.msra.mxu0 0.0
        %2936 = vmatprep.subr.mxu0 0.0
        %2937 = vmatpush1.msra.mxu0 0.0
        %2938 = vmatprep.subr.mxu0 0.0
        %2939 = vmatpush1.msra.mxu0 0.0
        %2940 = vmatprep.subr.mxu0 0.0
        %2941 = vmatpush1.msra.mxu0 0.0
        %2942 = vmatprep.subr.mxu0 0.0
        %2943 = vmatpush1.msra.mxu0 0.0
        %2944 = vmatprep.subr.mxu0 0.0
        %2945 = vmatpush1.msra.mxu0 0.0
        %2946 = vmatprep.subr.mxu0 0.0
        %2947 = vmatpush1.msra.mxu0 0.0
        %2948 = vmatprep.subr.mxu0 0.0
        %2949 = vmatpush1.msra.mxu0 0.0
        %2950 = vmatprep.subr.mxu0 0.0
        %2951 = vmatpush1.msra.mxu0 0.0
        %2952 = vmatprep.subr.mxu0 0.0
        %2953 = vmatpush1.msra.mxu0 0.0
        %2954 = vmatprep.subr.mxu0 0.0
        %2955 = vmatpush1.msra.mxu0 0.0
        %2956 = vmatprep.subr.mxu0 0.0
        %2957 = vmatpush1.msra.mxu0 0.0
        %2958 = vmatprep.subr.mxu0 0.0
        %2959 = vmatpush1.msra.mxu0 0.0
        %2960 = vmatprep.subr.mxu0 0.0
        %2961 = vmatpush1.msra.mxu0 0.0
        %2962 = vmatprep.subr.mxu0 0.0
        %2963 = vmatpush1.msra.mxu0 0.0
        %2964 = vmatprep.subr.mxu0 0.0
        %2965 = vmatpush1.msra.mxu0 0.0
        %2966 = vmatprep.subr.mxu0 0.0
        %2967 = vmatpush1.msra.mxu0 0.0
        %2968 = vmatprep.subr.mxu0 0.0
        %2969 = vmatpush1.msra.mxu0 0.0
        %2970 = vmatprep.subr.mxu0 0.0
        %2971 = vmatpush1.msra.mxu0 0.0
        %2972 = vmatprep.subr.mxu0 0.0
        %2973 = vmatpush1.msra.mxu0 0.0
        %2974 = vmatprep.subr.mxu0 0.0
        %2975 = vmatpush1.msra.mxu0 0.0
        %2976 = vmatprep.subr.mxu0 0.0
        %2977 = vmatpush1.msra.mxu0 0.0
        %2978 = vmatprep.subr.mxu0 0.0
        %2979 = vmatpush1.msra.mxu0 0.0
        %2980 = vmatprep.subr.mxu0 0.0
        %2981 = vmatpush1.msra.mxu0 0.0
        %2982 = vmatprep.subr.mxu0 0.0
        %2983 = vmatpush1.msra.mxu0 0.0
        %2984 = vmatprep.subr.mxu0 0.0
        %2985 = vmatpush1.msra.mxu0 0.0
        %2986 = vmatprep.subr.mxu0 0.0
        %2987 = vmatpush1.msra.mxu0 0.0
        %2988 = vmatprep.subr.mxu0 0.0
        %2989 = vmatpush1.msra.mxu0 0.0
        %2990 = vmatprep.subr.mxu0 0.0
        %2991 = vmatpush1.msra.mxu0 0.0
        %2992 = vmatprep.subr.mxu0 0.0
        %2993 = vmatpush1.msra.mxu0 0.0
        %2994 = vmatprep.subr.mxu0 0.0
        %2995 = vmatpush1.msra.mxu0 0.0
        %2996 = vmatprep.mubr.f32.mxu0 0.0
        %2997 = vmatmul.mubr.f32.gmra.mrb[0].mxu0 %v2930
        %v2998 = vpop.f32.mrb[0].mxu0
        %v2999 = vadd.f32 0.0, %v2998
        %v3000 = vpop.f32.mrb[0].mxu0
        %3001 = vdwg.mxu0
        %v3003 = vsel %vm2362, %v2999, 0
        %3005 = vmatprep.subr.mxu0 0.0
        %3006 = vmatpush1.msra.mxu0 %v2117
        %3007 = vmatprep.subr.mxu0 0.0
        %3008 = vmatpush1.msra.mxu0 0.0
        %3009 = vmatprep.subr.mxu0 0.0
        %3010 = vmatpush1.msra.mxu0 0.0
        %3011 = vmatprep.subr.mxu0 0.0
        %3012 = vmatpush1.msra.mxu0 0.0
        %3013 = vmatprep.subr.mxu0 0.0
        %3014 = vmatpush1.msra.mxu0 0.0
        %3015 = vmatprep.subr.mxu0 0.0
        %3016 = vmatpush1.msra.mxu0 0.0
        %3017 = vmatprep.subr.mxu0 0.0
        %3018 = vmatpush1.msra.mxu0 0.0
        %3019 = vmatprep.subr.mxu0 0.0
        %3020 = vmatpush1.msra.mxu0 0.0
        %3021 = vmatprep.subr.mxu0 0.0
        %3022 = vmatpush1.msra.mxu0 0.0
        %3023 = vmatprep.subr.mxu0 0.0
        %3024 = vmatpush1.msra.mxu0 0.0
        %3025 = vmatprep.subr.mxu0 0.0
        %3026 = vmatpush1.msra.mxu0 0.0
        %3027 = vmatprep.subr.mxu0 0.0
        %3028 = vmatpush1.msra.mxu0 0.0
        %3029 = vmatprep.subr.mxu0 0.0
        %3030 = vmatpush1.msra.mxu0 0.0
        %3031 = vmatprep.subr.mxu0 0.0
        %3032 = vmatpush1.msra.mxu0 0.0
        %3033 = vmatprep.subr.mxu0 0.0
        %3034 = vmatpush1.msra.mxu0 0.0
        %3035 = vmatprep.subr.mxu0 0.0
        %3036 = vmatpush1.msra.mxu0 0.0
        %3037 = vmatprep.subr.mxu0 0.0
        %3038 = vmatpush1.msra.mxu0 0.0
        %3039 = vmatprep.subr.mxu0 0.0
        %3040 = vmatpush1.msra.mxu0 0.0
        %3041 = vmatprep.subr.mxu0 0.0
        %3042 = vmatpush1.msra.mxu0 0.0
        %3043 = vmatprep.subr.mxu0 0.0
        %3044 = vmatpush1.msra.mxu0 0.0
        %3045 = vmatprep.subr.mxu0 0.0
        %3046 = vmatpush1.msra.mxu0 0.0
        %3047 = vmatprep.subr.mxu0 0.0
        %3048 = vmatpush1.msra.mxu0 0.0
        %3049 = vmatprep.subr.mxu0 0.0
        %3050 = vmatpush1.msra.mxu0 0.0
        %3051 = vmatprep.subr.mxu0 0.0
        %3052 = vmatpush1.msra.mxu0 0.0
        %3053 = vmatprep.subr.mxu0 0.0
        %3054 = vmatpush1.msra.mxu0 0.0
        %3055 = vmatprep.subr.mxu0 0.0
        %3056 = vmatpush1.msra.mxu0 0.0
        %3057 = vmatprep.subr.mxu0 0.0
        %3058 = vmatpush1.msra.mxu0 0.0
        %3059 = vmatprep.subr.mxu0 0.0
        %3060 = vmatpush1.msra.mxu0 0.0
        %3061 = vmatprep.subr.mxu0 0.0
        %3062 = vmatpush1.msra.mxu0 0.0
        %3063 = vmatprep.subr.mxu0 0.0
        %3064 = vmatpush1.msra.mxu0 0.0
        %3065 = vmatprep.subr.mxu0 0.0
        %3066 = vmatpush1.msra.mxu0 0.0
        %3067 = vmatprep.subr.mxu0 0.0
        %3068 = vmatpush1.msra.mxu0 0.0
        %3069 = vmatprep.mubr.f32.mxu0 0.0
        %3070 = vmatmul.mubr.f32.gmra.mrb[0].mxu0 %v3003
        %v3071 = vpop.f32.mrb[0].mxu0
        %v3072 = vadd.f32 0.0, %v3071
        %v3073 = vpop.f32.mrb[0].mxu0
        %3074 = vdwg.mxu0
        %v3075 = vadd.f32 %v2836, %v3072
        %3076 = vrot.lane.b32.xlu0 %v2202, 104
        %v3077 = vpop.permute.xlu0 %3076
        %3078 = vrot.lane.b32.xlu0 %v2276, 104
        %v3079 = vpop.permute.xlu0 %3078
        %v3080 = vsel %vm2362, %v3077, 0
        %v3082 = vsel %vm2362, %v3079, 0
        %3084 = vmatprep.subr.mxu0 0.0
        %3085 = vmatpush1.xpose.msra.mxu0 %v3082
        %3086 = vmatprep.subr.mxu0 0.0
        %3087 = vmatpush1.xpose.msra.mxu0 0.0
        %3088 = vmatprep.subr.mxu0 0.0
        %3089 = vmatpush1.xpose.msra.mxu0 0.0
        %3090 = vmatprep.subr.mxu0 0.0
        %3091 = vmatpush1.xpose.msra.mxu0 0.0
        %3092 = vmatprep.subr.mxu0 0.0
        %3093 = vmatpush1.xpose.msra.mxu0 0.0
        %3094 = vmatprep.subr.mxu0 0.0
        %3095 = vmatpush1.xpose.msra.mxu0 0.0
        %3096 = vmatprep.subr.mxu0 0.0
        %3097 = vmatpush1.xpose.msra.mxu0 0.0
        %3098 = vmatprep.subr.mxu0 0.0
        %3099 = vmatpush1.xpose.msra.mxu0 0.0
        %3100 = vmatprep.subr.mxu0 0.0
        %3101 = vmatpush1.xpose.msra.mxu0 0.0
        %3102 = vmatprep.subr.mxu0 0.0
        %3103 = vmatpush1.xpose.msra.mxu0 0.0
        %3104 = vmatprep.subr.mxu0 0.0
        %3105 = vmatpush1.xpose.msra.mxu0 0.0
        %3106 = vmatprep.subr.mxu0 0.0
        %3107 = vmatpush1.xpose.msra.mxu0 0.0
        %3108 = vmatprep.subr.mxu0 0.0
        %3109 = vmatpush1.xpose.msra.mxu0 0.0
        %3110 = vmatprep.subr.mxu0 0.0
        %3111 = vmatpush1.xpose.msra.mxu0 0.0
        %3112 = vmatprep.subr.mxu0 0.0
        %3113 = vmatpush1.xpose.msra.mxu0 0.0
        %3114 = vmatprep.subr.mxu0 0.0
        %3115 = vmatpush1.xpose.msra.mxu0 0.0
        %3116 = vmatprep.subr.mxu0 0.0
        %3117 = vmatpush1.xpose.msra.mxu0 0.0
        %3118 = vmatprep.subr.mxu0 0.0
        %3119 = vmatpush1.xpose.msra.mxu0 0.0
        %3120 = vmatprep.subr.mxu0 0.0
        %3121 = vmatpush1.xpose.msra.mxu0 0.0
        %3122 = vmatprep.subr.mxu0 0.0
        %3123 = vmatpush1.xpose.msra.mxu0 0.0
        %3124 = vmatprep.subr.mxu0 0.0
        %3125 = vmatpush1.xpose.msra.mxu0 0.0
        %3126 = vmatprep.subr.mxu0 0.0
        %3127 = vmatpush1.xpose.msra.mxu0 0.0
        %3128 = vmatprep.subr.mxu0 0.0
        %3129 = vmatpush1.xpose.msra.mxu0 0.0
        %3130 = vmatprep.subr.mxu0 0.0
        %3131 = vmatpush1.xpose.msra.mxu0 0.0
        %3132 = vmatprep.subr.mxu0 0.0
        %3133 = vmatpush1.xpose.msra.mxu0 0.0
        %3134 = vmatprep.subr.mxu0 0.0
        %3135 = vmatpush1.xpose.msra.mxu0 0.0
        %3136 = vmatprep.subr.mxu0 0.0
        %3137 = vmatpush1.xpose.msra.mxu0 0.0
        %3138 = vmatprep.subr.mxu0 0.0
        %3139 = vmatpush1.xpose.msra.mxu0 0.0
        %3140 = vmatprep.subr.mxu0 0.0
        %3141 = vmatpush1.xpose.msra.mxu0 0.0
        %3142 = vmatprep.subr.mxu0 0.0
        %3143 = vmatpush1.xpose.msra.mxu0 0.0
        %3144 = vmatprep.subr.mxu0 0.0
        %3145 = vmatpush1.xpose.msra.mxu0 0.0
        %3146 = vmatprep.subr.mxu0 0.0
        %3147 = vmatpush1.xpose.msra.mxu0 0.0
        %3148 = vmatprep.mubr.f32.mxu0 0.0
        %3149 = vmatmul.mubr.f32.gmra.mrb[0].mxu0 %v3080
        %v3150 = vpop.f32.mrb[0].mxu0
        %v3151 = vadd.f32 0.0, %v3150
        %v3152 = vpop.f32.mrb[0].mxu0
        %3153 = vdwg.mxu0
        %v3154 = vsel %vm2362, %v3151, -inf
        %3155 = vmax.xlane.f32.xlu0 %v3154
        %v3156 = vpop.xlane.xlu0 %3155
        %v3157 = vsub.f32 %v3151, %v3156
        %v3158 = vmul.f32 %v3157, 1.442695
        %v3159 = vpow.pop %v3158
        %v3160 = vsel %vm2362, %v3159, 0.0
        %3161 = vadd.xlane.f32.xlu0 %v3160
        %v3162 = vpop.xlane.xlu0 %3161
        %v3163 = vrcp.pop %v3162
        %v3164 = vmul.f32 %v3159, %v3163
        %3165 = vrot.lane.b32.xlu0 %v2352, 104
        %v3166 = vpop.permute.xlu0 %3165
        %v3169 = vsel %vm2362, %v3164, 0
        %3171 = vmatprep.subr.mxu0 0.0
        %3172 = vmatpush1.msra.mxu0 %v3166
        %3173 = vmatprep.subr.mxu0 0.0
        %3174 = vmatpush1.msra.mxu0 0.0
        %3175 = vmatprep.subr.mxu0 0.0
        %3176 = vmatpush1.msra.mxu0 0.0
        %3177 = vmatprep.subr.mxu0 0.0
        %3178 = vmatpush1.msra.mxu0 0.0
        %3179 = vmatprep.subr.mxu0 0.0
        %3180 = vmatpush1.msra.mxu0 0.0
        %3181 = vmatprep.subr.mxu0 0.0
        %3182 = vmatpush1.msra.mxu0 0.0
        %3183 = vmatprep.subr.mxu0 0.0
        %3184 = vmatpush1.msra.mxu0 0.0
        %3185 = vmatprep.subr.mxu0 0.0
        %3186 = vmatpush1.msra.mxu0 0.0
        %3187 = vmatprep.subr.mxu0 0.0
        %3188 = vmatpush1.msra.mxu0 0.0
        %3189 = vmatprep.subr.mxu0 0.0
        %3190 = vmatpush1.msra.mxu0 0.0
        %3191 = vmatprep.subr.mxu0 0.0
        %3192 = vmatpush1.msra.mxu0 0.0
        %3193 = vmatprep.subr.mxu0 0.0
        %3194 = vmatpush1.msra.mxu0 0.0
        %3195 = vmatprep.subr.mxu0 0.0
        %3196 = vmatpush1.msra.mxu0 0.0
        %3197 = vmatprep.subr.mxu0 0.0
        %3198 = vmatpush1.msra.mxu0 0.0
        %3199 = vmatprep.subr.mxu0 0.0
        %3200 = vmatpush1.msra.mxu0 0.0
        %3201 = vmatprep.subr.mxu0 0.0
        %3202 = vmatpush1.msra.mxu0 0.0
        %3203 = vmatprep.subr.mxu0 0.0
        %3204 = vmatpush1.msra.mxu0 0.0
        %3205 = vmatprep.subr.mxu0 0.0
        %3206 = vmatpush1.msra.mxu0 0.0
        %3207 = vmatprep.subr.mxu0 0.0
        %3208 = vmatpush1.msra.mxu0 0.0
        %3209 = vmatprep.subr.mxu0 0.0
        %3210 = vmatpush1.msra.mxu0 0.0
        %3211 = vmatprep.subr.mxu0 0.0
        %3212 = vmatpush1.msra.mxu0 0.0
        %3213 = vmatprep.subr.mxu0 0.0
        %3214 = vmatpush1.msra.mxu0 0.0
        %3215 = vmatprep.subr.mxu0 0.0
        %3216 = vmatpush1.msra.mxu0 0.0
        %3217 = vmatprep.subr.mxu0 0.0
        %3218 = vmatpush1.msra.mxu0 0.0
        %3219 = vmatprep.subr.mxu0 0.0
        %3220 = vmatpush1.msra.mxu0 0.0
        %3221 = vmatprep.subr.mxu0 0.0
        %3222 = vmatpush1.msra.mxu0 0.0
        %3223 = vmatprep.subr.mxu0 0.0
        %3224 = vmatpush1.msra.mxu0 0.0
        %3225 = vmatprep.subr.mxu0 0.0
        %3226 = vmatpush1.msra.mxu0 0.0
        %3227 = vmatprep.subr.mxu0 0.0
        %3228 = vmatpush1.msra.mxu0 0.0
        %3229 = vmatprep.subr.mxu0 0.0
        %3230 = vmatpush1.msra.mxu0 0.0
        %3231 = vmatprep.subr.mxu0 0.0
        %3232 = vmatpush1.msra.mxu0 0.0
        %3233 = vmatprep.subr.mxu0 0.0
        %3234 = vmatpush1.msra.mxu0 0.0
        %3235 = vmatprep.mubr.f32.mxu0 0.0
        %3236 = vmatmul.mubr.f32.gmra.mrb[0].mxu0 %v3169
        %v3237 = vpop.f32.mrb[0].mxu0
        %v3238 = vadd.f32 0.0, %v3237
        %v3239 = vpop.f32.mrb[0].mxu0
        %3240 = vdwg.mxu0
        %v3242 = vsel %vm2362, %v3238, 0
        %3244 = vmatprep.subr.mxu0 0.0
        %3245 = vmatpush1.msra.mxu0 %v2118
        %3246 = vmatprep.subr.mxu0 0.0
        %3247 = vmatpush1.msra.mxu0 0.0
        %3248 = vmatprep.subr.mxu0 0.0
        %3249 = vmatpush1.msra.mxu0 0.0
        %3250 = vmatprep.subr.mxu0 0.0
        %3251 = vmatpush1.msra.mxu0 0.0
        %3252 = vmatprep.subr.mxu0 0.0
        %3253 = vmatpush1.msra.mxu0 0.0
        %3254 = vmatprep.subr.mxu0 0.0
        %3255 = vmatpush1.msra.mxu0 0.0
        %3256 = vmatprep.subr.mxu0 0.0
        %3257 = vmatpush1.msra.mxu0 0.0
        %3258 = vmatprep.subr.mxu0 0.0
        %3259 = vmatpush1.msra.mxu0 0.0
        %3260 = vmatprep.subr.mxu0 0.0
        %3261 = vmatpush1.msra.mxu0 0.0
        %3262 = vmatprep.subr.mxu0 0.0
        %3263 = vmatpush1.msra.mxu0 0.0
        %3264 = vmatprep.subr.mxu0 0.0
        %3265 = vmatpush1.msra.mxu0 0.0
        %3266 = vmatprep.subr.mxu0 0.0
        %3267 = vmatpush1.msra.mxu0 0.0
        %3268 = vmatprep.subr.mxu0 0.0
        %3269 = vmatpush1.msra.mxu0 0.0
        %3270 = vmatprep.subr.mxu0 0.0
        %3271 = vmatpush1.msra.mxu0 0.0
        %3272 = vmatprep.subr.mxu0 0.0
        %3273 = vmatpush1.msra.mxu0 0.0
        %3274 = vmatprep.subr.mxu0 0.0
        %3275 = vmatpush1.msra.mxu0 0.0
        %3276 = vmatprep.subr.mxu0 0.0
        %3277 = vmatpush1.msra.mxu0 0.0
        %3278 = vmatprep.subr.mxu0 0.0
        %3279 = vmatpush1.msra.mxu0 0.0
        %3280 = vmatprep.subr.mxu0 0.0
        %3281 = vmatpush1.msra.mxu0 0.0
        %3282 = vmatprep.subr.mxu0 0.0
        %3283 = vmatpush1.msra.mxu0 0.0
        %3284 = vmatprep.subr.mxu0 0.0
        %3285 = vmatpush1.msra.mxu0 0.0
        %3286 = vmatprep.subr.mxu0 0.0
        %3287 = vmatpush1.msra.mxu0 0.0
        %3288 = vmatprep.subr.mxu0 0.0
        %3289 = vmatpush1.msra.mxu0 0.0
        %3290 = vmatprep.subr.mxu0 0.0
        %3291 = vmatpush1.msra.mxu0 0.0
        %3292 = vmatprep.subr.mxu0 0.0
        %3293 = vmatpush1.msra.mxu0 0.0
        %3294 = vmatprep.subr.mxu0 0.0
        %3295 = vmatpush1.msra.mxu0 0.0
        %3296 = vmatprep.subr.mxu0 0.0
        %3297 = vmatpush1.msra.mxu0 0.0
        %3298 = vmatprep.subr.mxu0 0.0
        %3299 = vmatpush1.msra.mxu0 0.0
        %3300 = vmatprep.subr.mxu0 0.0
        %3301 = vmatpush1.msra.mxu0 0.0
        %3302 = vmatprep.subr.mxu0 0.0
        %3303 = vmatpush1.msra.mxu0 0.0
        %3304 = vmatprep.subr.mxu0 0.0
        %3305 = vmatpush1.msra.mxu0 0.0
        %3306 = vmatprep.subr.mxu0 0.0
        %3307 = vmatpush1.msra.mxu0 0.0
        %3308 = vmatprep.mubr.f32.mxu0 0.0
        %3309 = vmatmul.mubr.f32.gmra.mrb[0].mxu0 %v3242
        %v3310 = vpop.f32.mrb[0].mxu0
        %v3311 = vadd.f32 0.0, %v3310
        %v3312 = vpop.f32.mrb[0].mxu0
        %3313 = vdwg.mxu0
        %v3314 = vadd.f32 %v3075, %v3311
        %v3315 = vsel %vm2128, %v3314, 0.0
        %3316 = vadd.xlane.f32.xlu0 %v3315
        %v3317 = vpop.xlane.xlu0 %3316
        %v3318 = vrcp.pop 32.0
        %v3319 = vmul.f32 %v3317, %v3318
        %v3320 = vsub.f32 %v3314, %v3319
        %v3321 = vmul.f32 %v3320, %v3320
        %v3322 = vsel %vm2128, %v3321, 0.0
        %3323 = vadd.xlane.f32.xlu0 %v3322
        %v3324 = vpop.xlane.xlu0 %3323
        %v3325 = vmul.f32 %v3324, %v3318
        %v3326 = vadd.f32 %v3325, 1e-12
        %v3327 = vrsqrt.pop %v3326
        %v3328 = vmul.f32 %v3320, %v3327
        %v3330 = vlaneseq
        %v3331 = vshrl.u32 %v3330, 7
        %v3332 = vsub.s32 0, %v3331
        %v3333 = vrot.slane %v2120, %v3332
        %v3335 = vmul.f32 %v3328, %v3333
        %v3337 = vlaneseq
        %v3338 = vshrl.u32 %v3337, 7
        %v3339 = vsub.s32 0, %v3338
        %v3340 = vrot.slane %v2121, %v3339
        %v3342 = vadd.f32 %v3335, %v3340
        %v3343 = vld [vmem:[#allocation22] sm:$0xff]
        %v3344 = vld [vmem:[#allocation22 + $0x8] sm:$0xff]
        %v3345 = vld [vmem:[#allocation22 + $0x10] sm:$0xff]
        %v3346 = vld [vmem:[#allocation22 + $0x18] sm:$0xff]
        %v3347 = vld [vmem:[#allocation23] sm:$0x1]
        %v3348 = vld [vmem:[#allocation25] sm:$0xff]
        %v3349 = vld [vmem:[#allocation25 + $0x8] sm:$0xff]
        %v3350 = vld [vmem:[#allocation25 + $0x10] sm:$0xff]
        %v3351 = vld [vmem:[#allocation25 + $0x18] sm:$0xff]
        %v3352 = vld [vmem:[#allocation25 + $0x20] sm:$0xff]
        %v3353 = vld [vmem:[#allocation25 + $0x28] sm:$0xff]
        %v3354 = vld [vmem:[#allocation26] sm:$0x1]
        %v3355 = vld [vmem:[#allocation28] sm:$0xff]
        %v3356 = vld [vmem:[#allocation28 + $0x8] sm:$0xff]
        %v3357 = vld [vmem:[#allocation28 + $0x10] sm:$0xff]
        %v3358 = vld [vmem:[#allocation28 + $0x18] sm:$0xff]
        %v3359 = vld [vmem:[#allocation28 + $0x20] sm:$0xff]
        %v3360 = vld [vmem:[#allocation28 + $0x28] sm:$0xff]
        %v3361 = vld [vmem:[#allocation29] sm:$0x1]
        %v3362 = vld [vmem:[#allocation31] sm:$0xff]
        %v3363 = vld [vmem:[#allocation31 + $0x8] sm:$0xff]
        %v3364 = vld [vmem:[#allocation31 + $0x10] sm:$0xff]
        %v3365 = vld [vmem:[#allocation31 + $0x18] sm:$0xff]
        %v3366 = vld [vmem:[#allocation32] sm:$0x1]
        %v3367 = vld [vmem:[#allocation34] sm:$0x1]
        %v3368 = vld [vmem:[#allocation35] sm:$0x1]
        %v3370 = vlaneseq
        %v3371 = vshrl.u32 %v3370, 7
        %v3372 = vsub.s32 0, %v3371
        %v3373 = vrot.slane %v3347, %v3372
        %v3376 = vsel %vm2128, %v3342, 0
        %3378 = vmatprep.subr.mxu0 0.0
        %3379 = vmatpush1.msra.mxu0 %v3343
        %3380 = vmatprep.subr.mxu0 0.0
        %3381 = vmatpush1.msra.mxu0 %v3344
        %3382 = vmatprep.subr.mxu0 0.0
        %3383 = vmatpush1.msra.mxu0 %v3345
        %3384 = vmatprep.subr.mxu0 0.0
        %3385 = vmatpush1.msra.mxu0 %v3346
        %3386 = vmatprep.subr.mxu0 0.0
        %3387 = vmatpush1.msra.mxu0 0.0
        %3388 = vmatprep.subr.mxu0 0.0
        %3389 = vmatpush1.msra.mxu0 0.0
        %3390 = vmatprep.subr.mxu0 0.0
        %3391 = vmatpush1.msra.mxu0 0.0
        %3392 = vmatprep.subr.mxu0 0.0
        %3393 = vmatpush1.msra.mxu0 0.0
        %3394 = vmatprep.subr.mxu0 0.0
        %3395 = vmatpush1.msra.mxu0 0.0
        %3396 = vmatprep.subr.mxu0 0.0
        %3397 = vmatpush1.msra.mxu0 0.0
        %3398 = vmatprep.subr.mxu0 0.0
        %3399 = vmatpush1.msra.mxu0 0.0
        %3400 = vmatprep.subr.mxu0 0.0
        %3401 = vmatpush1.msra.mxu0 0.0
        %3402 = vmatprep.subr.mxu0 0.0
        %3403 = vmatpush1.msra.mxu0 0.0
        %3404 = vmatprep.subr.mxu0 0.0
        %3405 = vmatpush1.msra.mxu0 0.0
        %3406 = vmatprep.subr.mxu0 0.0
        %3407 = vmatpush1.msra.mxu0 0.0
        %3408 = vmatprep.subr.mxu0 0.0
        %3409 = vmatpush1.msra.mxu0 0.0
        %3410 = vmatprep.subr.mxu0 0.0
        %3411 = vmatpush1.msra.mxu0 0.0
        %3412 = vmatprep.subr.mxu0 0.0
        %3413 = vmatpush1.msra.mxu0 0.0
        %3414 = vmatprep.subr.mxu0 0.0
        %3415 = vmatpush1.msra.mxu0 0.0
        %3416 = vmatprep.subr.mxu0 0.0
        %3417 = vmatpush1.msra.mxu0 0.0
        %3418 = vmatprep.subr.mxu0 0.0
        %3419 = vmatpush1.msra.mxu0 0.0
        %3420 = vmatprep.subr.mxu0 0.0
        %3421 = vmatpush1.msra.mxu0 0.0
        %3422 = vmatprep.subr.mxu0 0.0
        %3423 = vmatpush1.msra.mxu0 0.0
        %3424 = vmatprep.subr.mxu0 0.0
        %3425 = vmatpush1.msra.mxu0 0.0
        %3426 = vmatprep.subr.mxu0 0.0
        %3427 = vmatpush1.msra.mxu0 0.0
        %3428 = vmatprep.subr.mxu0 0.0
        %3429 = vmatpush1.msra.mxu0 0.0
        %3430 = vmatprep.subr.mxu0 0.0
        %3431 = vmatpush1.msra.mxu0 0.0
        %3432 = vmatprep.subr.mxu0 0.0
        %3433 = vmatpush1.msra.mxu0 0.0
        %3434 = vmatprep.subr.mxu0 0.0
        %3435 = vmatpush1.msra.mxu0 0.0
        %3436 = vmatprep.subr.mxu0 0.0
        %3437 = vmatpush1.msra.mxu0 0.0
        %3438 = vmatprep.subr.mxu0 0.0
        %3439 = vmatpush1.msra.mxu0 0.0
        %3440 = vmatprep.subr.mxu0 0.0
        %3441 = vmatpush1.msra.mxu0 0.0
        %3442 = vmatprep.mubr.f32.mxu0 0.0
        %3443 = vmatmul.mubr.f32.gmra.mrb[0].mxu0 %v3376
        %v3444 = vpop.f32.mrb[0].mxu0
        %v3445 = vadd.f32 %v3373, %v3444
        %v3446 = vpop.f32.mrb[0].mxu0
        %3447 = vdwg.mxu0
        %v3448 = vmul.f32 %v3445, 0.35355338
        %v3450 = vlaneseq
        %v3451 = vshrl.u32 %v3450, 7
        %v3452 = vsub.s32 0, %v3451
        %v3453 = vrot.slane %v3354, %v3452
        %vm3455 = vcmask 392192
        %v3457 = vsel %vm3455, %v2098, 0
        %v3460 = vsel %vm3455, %v2099, 0
        %3462 = vmatprep.subr.mxu0 0.0
        %3463 = vmatpush1.msra.mxu0 %v3348
        %3464 = vmatprep.subr.mxu0 0.0
        %3465 = vmatpush1.msra.mxu0 %v3349
        %3466 = vmatprep.subr.mxu0 0.0
        %3467 = vmatpush1.msra.mxu0 %v3350
        %3468 = vmatprep.subr.mxu0 0.0
        %3469 = vmatpush1.msra.mxu0 %v3351
        %3470 = vmatprep.subr.mxu0 0.0
        %3471 = vmatpush1.msra.mxu0 %v3352
        %3472 = vmatprep.subr.mxu0 0.0
        %3473 = vmatpush1.msra.mxu0 %v3353
        %3474 = vmatprep.subr.mxu0 0.0
        %3475 = vmatpush1.msra.mxu0 0.0
        %3476 = vmatprep.subr.mxu0 0.0
        %3477 = vmatpush1.msra.mxu0 0.0
        %3478 = vmatprep.subr.mxu0 0.0
        %3479 = vmatpush1.msra.mxu0 0.0
        %3480 = vmatprep.subr.mxu0 0.0
        %3481 = vmatpush1.msra.mxu0 0.0
        %3482 = vmatprep.subr.mxu0 0.0
        %3483 = vmatpush1.msra.mxu0 0.0
        %3484 = vmatprep.subr.mxu0 0.0
        %3485 = vmatpush1.msra.mxu0 0.0
        %3486 = vmatprep.subr.mxu0 0.0
        %3487 = vmatpush1.msra.mxu0 0.0
        %3488 = vmatprep.subr.mxu0 0.0
        %3489 = vmatpush1.msra.mxu0 0.0
        %3490 = vmatprep.subr.mxu0 0.0
        %3491 = vmatpush1.msra.mxu0 0.0
        %3492 = vmatprep.subr.mxu0 0.0
        %3493 = vmatpush1.msra.mxu0 0.0
        %3494 = vmatprep.subr.mxu0 0.0
        %3495 = vmatpush1.msra.mxu0 0.0
        %3496 = vmatprep.subr.mxu0 0.0
        %3497 = vmatpush1.msra.mxu0 0.0
        %3498 = vmatprep.subr.mxu0 0.0
        %3499 = vmatpush1.msra.mxu0 0.0
        %3500 = vmatprep.subr.mxu0 0.0
        %3501 = vmatpush1.msra.mxu0 0.0
        %3502 = vmatprep.subr.mxu0 0.0
        %3503 = vmatpush1.msra.mxu0 0.0
        %3504 = vmatprep.subr.mxu0 0.0
        %3505 = vmatpush1.msra.mxu0 0.0
        %3506 = vmatprep.subr.mxu0 0.0
        %3507 = vmatpush1.msra.mxu0 0.0
        %3508 = vmatprep.subr.mxu0 0.0
        %3509 = vmatpush1.msra.mxu0 0.0
        %3510 = vmatprep.subr.mxu0 0.0
        %3511 = vmatpush1.msra.mxu0 0.0
        %3512 = vmatprep.subr.mxu0 0.0
        %3513 = vmatpush1.msra.mxu0 0.0
        %3514 = vmatprep.subr.mxu0 0.0
        %3515 = vmatpush1.msra.mxu0 0.0
        %3516 = vmatprep.subr.mxu0 0.0
        %3517 = vmatpush1.msra.mxu0 0.0
        %3518 = vmatprep.subr.mxu0 0.0
        %3519 = vmatpush1.msra.mxu0 0.0
        %3520 = vmatprep.subr.mxu0 0.0
        %3521 = vmatpush1.msra.mxu0 0.0
        %3522 = vmatprep.subr.mxu0 0.0
        %3523 = vmatpush1.msra.mxu0 0.0
        %3524 = vmatprep.subr.mxu0 0.0
        %3525 = vmatpush1.msra.mxu0 0.0
        %3526 = vmatprep.mubr.f32.mxu0 0.0
        %3527 = vmatmul.mubr.f32.gmra.mrb[0].mxu0 %v3457
        %v3528 = vpop.f32.mrb[0].mxu0
        %v3529 = vadd.f32 %v3453, %v3528
        %v3530 = vpop.f32.mrb[0].mxu0
        %3531 = vmatprep.mubr.f32.mxu0 0.0
        %3532 = vmatmul.mubr.f32.gmra.mrb[0].mxu0 %v3460
        %v3533 = vpop.f32.mrb[0].mxu0
        %v3534 = vadd.f32 %v3453, %v3533
        %v3535 = vpop.f32.mrb[0].mxu0
        %3536 = vdwg.mxu0
        %v3538 = vlaneseq
        %v3539 = vshrl.u32 %v3538, 7
        %v3540 = vsub.s32 0, %v3539
        %v3541 = vrot.slane %v3361, %v3540
        %3543 = vmatprep.subr.mxu0 0.0
        %3544 = vmatpush1.msra.mxu0 %v3355
        %3545 = vmatprep.subr.mxu0 0.0
        %3546 = vmatpush1.msra.mxu0 %v3356
        %3547 = vmatprep.subr.mxu0 0.0
        %3548 = vmatpush1.msra.mxu0 %v3357
        %3549 = vmatprep.subr.mxu0 0.0
        %3550 = vmatpush1.msra.mxu0 %v3358
        %3551 = vmatprep.subr.mxu0 0.0
        %3552 = vmatpush1.msra.mxu0 %v3359
        %3553 = vmatprep.subr.mxu0 0.0
        %3554 = vmatpush1.msra.mxu0 %v3360
        %3555 = vmatprep.subr.mxu0 0.0
        %3556 = vmatpush1.msra.mxu0 0.0
        %3557 = vmatprep.subr.mxu0 0.0
        %3558 = vmatpush1.msra.mxu0 0.0
        %3559 = vmatprep.subr.mxu0 0.0
        %3560 = vmatpush1.msra.mxu0 0.0
        %3561 = vmatprep.subr.mxu0 0.0
        %3562 = vmatpush1.msra.mxu0 0.0
        %3563 = vmatprep.subr.mxu0 0.0
        %3564 = vmatpush1.msra.mxu0 0.0
        %3565 = vmatprep.subr.mxu0 0.0
        %3566 = vmatpush1.msra.mxu0 0.0
        %3567 = vmatprep.subr.mxu0 0.0
        %3568 = vmatpush1.msra.mxu0 0.0
        %3569 = vmatprep.subr.mxu0 0.0
        %3570 = vmatpush1.msra.mxu0 0.0
        %3571 = vmatprep.subr.mxu0 0.0
        %3572 = vmatpush1.msra.mxu0 0.0
        %3573 = vmatprep.subr.mxu0 0.0
        %3574 = vmatpush1.msra.mxu0 0.0
        %3575 = vmatprep.subr.mxu0 0.0
        %3576 = vmatpush1.msra.mxu0 0.0
        %3577 = vmatprep.subr.mxu0 0.0
        %3578 = vmatpush1.msra.mxu0 0.0
        %3579 = vmatprep.subr.mxu0 0.0
        %3580 = vmatpush1.msra.mxu0 0.0
        %3581 = vmatprep.subr.mxu0 0.0
        %3582 = vmatpush1.msra.mxu0 0.0
        %3583 = vmatprep.subr.mxu0 0.0
        %3584 = vmatpush1.msra.mxu0 0.0
        %3585 = vmatprep.subr.mxu0 0.0
        %3586 = vmatpush1.msra.mxu0 0.0
        %3587 = vmatprep.subr.mxu0 0.0
        %3588 = vmatpush1.msra.mxu0 0.0
        %3589 = vmatprep.subr.mxu0 0.0
        %3590 = vmatpush1.msra.mxu0 0.0
        %3591 = vmatprep.subr.mxu0 0.0
        %3592 = vmatpush1.msra.mxu0 0.0
        %3593 = vmatprep.subr.mxu0 0.0
        %3594 = vmatpush1.msra.mxu0 0.0
        %3595 = vmatprep.subr.mxu0 0.0
        %3596 = vmatpush1.msra.mxu0 0.0
        %3597 = vmatprep.subr.mxu0 0.0
        %3598 = vmatpush1.msra.mxu0 0.0
        %3599 = vmatprep.subr.mxu0 0.0
        %3600 = vmatpush1.msra.mxu0 0.0
        %3601 = vmatprep.subr.mxu0 0.0
        %3602 = vmatpush1.msra.mxu0 0.0
        %3603 = vmatprep.subr.mxu0 0.0
        %3604 = vmatpush1.msra.mxu0 0.0
        %3605 = vmatprep.subr.mxu0 0.0
        %3606 = vmatpush1.msra.mxu0 0.0
        %3607 = vmatprep.mubr.f32.mxu0 0.0
        %3608 = vmatmul.mubr.f32.gmra.mrb[0].mxu0 %v3457
        %v3609 = vpop.f32.mrb[0].mxu0
        %v3610 = vadd.f32 %v3541, %v3609
        %v3611 = vpop.f32.mrb[0].mxu0
        %3612 = vmatprep.mubr.f32.mxu0 0.0
        %3613 = vmatmul.mubr.f32.gmra.mrb[0].mxu0 %v3460
        %v3614 = vpop.f32.mrb[0].mxu0
        %v3615 = vadd.f32 %v3541, %v3614
        %v3616 = vpop.f32.mrb[0].mxu0
        %3617 = vdwg.mxu0
        %v3619 = vlaneseq
        %v3620 = vshrl.u32 %v3619, 7
        %v3621 = vsub.s32 0, %v3620
        %v3622 = vrot.slane %v3366, %v3621
        %v3624 = vadd.f32 %v3342, %v3622
        %v3626 = vsel %vm2362, %v3448, 0
        %v3629 = vsel %vm2362, %v3529, 0
        %v3632 = vsel %vm2362, %v3534, 0
        %3634 = vmatprep.subr.mxu0 0.0
        %3635 = vmatpush1.xpose.msra.mxu0 %v3629
        %3636 = vmatprep.subr.mxu0 0.0
        %3637 = vmatpush1.xpose.msra.mxu0 %v3632
        %3638 = vmatprep.subr.mxu0 0.0
        %3639 = vmatpush1.xpose.msra.mxu0 0.0
        %3640 = vmatprep.subr.mxu0 0.0
        %3641 = vmatpush1.xpose.msra.mxu0 0.0
        %3642 = vmatprep.subr.mxu0 0.0
        %3643 = vmatpush1.xpose.msra.mxu0 0.0
        %3644 = vmatprep.subr.mxu0 0.0
        %3645 = vmatpush1.xpose.msra.mxu0 0.0
        %3646 = vmatprep.subr.mxu0 0.0
        %3647 = vmatpush1.xpose.msra.mxu0 0.0
        %3648 = vmatprep.subr.mxu0 0.0
        %3649 = vmatpush1.xpose.msra.mxu0 0.0
        %3650 = vmatprep.subr.mxu0 0.0
        %3651 = vmatpush1.xpose.msra.mxu0 0.0
        %3652 = vmatprep.subr.mxu0 0.0
        %3653 = vmatpush1.xpose.msra.mxu0 0.0
        %3654 = vmatprep.subr.mxu0 0.0
        %3655 = vmatpush1.xpose.msra.mxu0 0.0
        %3656 = vmatprep.subr.mxu0 0.0
        %3657 = vmatpush1.xpose.msra.mxu0 0.0
        %3658 = vmatprep.subr.mxu0 0.0
        %3659 = vmatpush1.xpose.msra.mxu0 0.0
        %3660 = vmatprep.subr.mxu0 0.0
        %3661 = vmatpush1.xpose.msra.mxu0 0.0
        %3662 = vmatprep.subr.mxu0 0.0
        %3663 = vmatpush1.xpose.msra.mxu0 0.0
        %3664 = vmatprep.subr.mxu0 0.0
        %3665 = vmatpush1.xpose.msra.mxu0 0.0
        %3666 = vmatprep.subr.mxu0 0.0
        %3667 = vmatpush1.xpose.msra.mxu0 0.0
        %3668 = vmatprep.subr.mxu0 0.0
        %3669 = vmatpush1.xpose.msra.mxu0 0.0
        %3670 = vmatprep.subr.mxu0 0.0
        %3671 = vmatpush1.xpose.msra.mxu0 0.0
        %3672 = vmatprep.subr.mxu0 0.0
        %3673 = vmatpush1.xpose.msra.mxu0 0.0
        %3674 = vmatprep.subr.mxu0 0.0
        %3675 = vmatpush1.xpose.msra.mxu0 0.0
        %3676 = vmatprep.subr.mxu0 0.0
        %3677 = vmatpush1.xpose.msra.mxu0 0.0
        %3678 = vmatprep.subr.mxu0 0.0
        %3679 = vmatpush1.xpose.msra.mxu0 0.0
        %3680 = vmatprep.subr.mxu0 0.0
        %3681 = vmatpush1.xpose.msra.mxu0 0.0
        %3682 = vmatprep.subr.mxu0 0.0
        %3683 = vmatpush1.xpose.msra.mxu0 0.0
        %3684 = vmatprep.subr.mxu0 0.0
        %3685 = vmatpush1.xpose.msra.mxu0 0.0
        %3686 = vmatprep.subr.mxu0 0.0
        %3687 = vmatpush1.xpose.msra.mxu0 0.0
        %3688 = vmatprep.subr.mxu0 0.0
        %3689 = vmatpush1.xpose.msra.mxu0 0.0
        %3690 = vmatprep.subr.mxu0 0.0
        %3691 = vmatpush1.xpose.msra.mxu0 0.0
        %3692 = vmatprep.subr.mxu0 0.0
        %3693 = vmatpush1.xpose.msra.mxu0 0.0
        %3694 = vmatprep.subr.mxu0 0.0
        %3695 = vmatpush1.xpose.msra.mxu0 0.0
        %3696 = vmatprep.subr.mxu0 0.0
        %3697 = vmatpush1.xpose.msra.mxu0 0.0
        %3698 = vmatprep.mubr.f32.mxu0 0.0
        %3699 = vmatmul.mubr.f32.gmra.mrb[0].mxu0 %v3626
        %v3700 = vpop.f32.mrb[0].mxu0
        %v3701 = vadd.f32 0.0, %v3700
        %v3702 = vpop.f32.mrb[0].mxu0
        %3703 = vdwg.mxu0
        %vm3704 = vcmask 130048
        %v3705 = vsel %vm3704, %v3701, -inf
        %3706 = vmax.xlane.f32.xlu0 %v3705
        %v3707 = vpop.xlane.xlu0 %3706
        %v3708 = vsub.f32 %v3701, %v3707
        %v3709 = vmul.f32 %v3708, 1.442695
        %v3710 = vpow.pop %v3709
        %v3711 = vsel %vm3704, %v3710, 0.0
        %3712 = vadd.xlane.f32.xlu0 %v3711
        %v3713 = vpop.xlane.xlu0 %3712
        %v3714 = vrcp.pop %v3713
        %v3715 = vmul.f32 %v3710, %v3714
        %v3717 = vsel %vm3704, %v3715, 0
        %3719 = vmatprep.subr.mxu0 0.0
        %3720 = vmatpush1.msra.mxu0 %v3610
        %3721 = vmatprep.subr.mxu0 0.0
        %3722 = vmatpush1.msra.mxu0 %v3615
        %3723 = vmatprep.subr.mxu0 0.0
        %3724 = vmatpush1.msra.mxu0 0.0
        %3725 = vmatprep.subr.mxu0 0.0
        %3726 = vmatpush1.msra.mxu0 0.0
        %3727 = vmatprep.subr.mxu0 0.0
        %3728 = vmatpush1.msra.mxu0 0.0
        %3729 = vmatprep.subr.mxu0 0.0
        %3730 = vmatpush1.msra.mxu0 0.0
        %3731 = vmatprep.subr.mxu0 0.0
        %3732 = vmatpush1.msra.mxu0 0.0
        %3733 = vmatprep.subr.mxu0 0.0
        %3734 = vmatpush1.msra.mxu0 0.0
        %3735 = vmatprep.subr.mxu0 0.0
        %3736 = vmatpush1.msra.mxu0 0.0
        %3737 = vmatprep.subr.mxu0 0.0
        %3738 = vmatpush1.msra.mxu0 0.0
        %3739 = vmatprep.subr.mxu0 0.0
        %3740 = vmatpush1.msra.mxu0 0.0
        %3741 = vmatprep.subr.mxu0 0.0
        %3742 = vmatpush1.msra.mxu0 0.0
        %3743 = vmatprep.subr.mxu0 0.0
        %3744 = vmatpush1.msra.mxu0 0.0
        %3745 = vmatprep.subr.mxu0 0.0
        %3746 = vmatpush1.msra.mxu0 0.0
        %3747 = vmatprep.subr.mxu0 0.0
        %3748 = vmatpush1.msra.mxu0 0.0
        %3749 = vmatprep.subr.mxu0 0.0
        %3750 = vmatpush1.msra.mxu0 0.0
        %3751 = vmatprep.subr.mxu0 0.0
        %3752 = vmatpush1.msra.mxu0 0.0
        %3753 = vmatprep.subr.mxu0 0.0
        %3754 = vmatpush1.msra.mxu0 0.0
        %3755 = vmatprep.subr.mxu0 0.0
        %3756 = vmatpush1.msra.mxu0 0.0
        %3757 = vmatprep.subr.mxu0 0.0
        %3758 = vmatpush1.msra.mxu0 0.0
        %3759 = vmatprep.subr.mxu0 0.0
        %3760 = vmatpush1.msra.mxu0 0.0
        %3761 = vmatprep.subr.mxu0 0.0
        %3762 = vmatpush1.msra.mxu0 0.0
        %3763 = vmatprep.subr.mxu0 0.0
        %3764 = vmatpush1.msra.mxu0 0.0
        %3765 = vmatprep.subr.mxu0 0.0
        %3766 = vmatpush1.msra.mxu0 0.0
        %3767 = vmatprep.subr.mxu0 0.0
        %3768 = vmatpush1.msra.mxu0 0.0
        %3769 = vmatprep.subr.mxu0 0.0
        %3770 = vmatpush1.msra.mxu0 0.0
        %3771 = vmatprep.subr.mxu0 0.0
        %3772 = vmatpush1.msra.mxu0 0.0
        %3773 = vmatprep.subr.mxu0 0.0
        %3774 = vmatpush1.msra.mxu0 0.0
        %3775 = vmatprep.subr.mxu0 0.0
        %3776 = vmatpush1.msra.mxu0 0.0
        %3777 = vmatprep.subr.mxu0 0.0
        %3778 = vmatpush1.msra.mxu0 0.0
        %3779 = vmatprep.subr.mxu0 0.0
        %3780 = vmatpush1.msra.mxu0 0.0
        %3781 = vmatprep.subr.mxu0 0.0
        %3782 = vmatpush1.msra.mxu0 0.0
        %3783 = vmatprep.mubr.f32.mxu0 0.0
        %3784 = vmatmul.mubr.f32.gmra.mrb[0].mxu0 %v3717
        %v3785 = vpop.f32.mrb[0].mxu0
        %v3786 = vadd.f32 0.0, %v3785
        %v3787 = vpop.f32.mrb[0].mxu0
        %3788 = vdwg.mxu0
        %v3790 = vsel %vm2362, %v3786, 0
        %3792 = vmatprep.subr.mxu0 0.0
        %3793 = vmatpush1.msra.mxu0 %v3362
        %3794 = vmatprep.subr.mxu0 0.0
        %3795 = vmatpush1.msra.mxu0 0.0
        %3796 = vmatprep.subr.mxu0 0.0
        %3797 = vmatpush1.msra.mxu0 0.0
        %3798 = vmatprep.subr.mxu0 0.0
        %3799 = vmatpush1.msra.mxu0 0.0
        %3800 = vmatprep.subr.mxu0 0.0
        %3801 = vmatpush1.msra.mxu0 0.0
        %3802 = vmatprep.subr.mxu0 0.0
        %3803 = vmatpush1.msra.mxu0 0.0
        %3804 = vmatprep.subr.mxu0 0.0
        %3805 = vmatpush1.msra.mxu0 0.0
        %3806 = vmatprep.subr.mxu0 0.0
        %3807 = vmatpush1.msra.mxu0 0.0
        %3808 = vmatprep.subr.mxu0 0.0
        %3809 = vmatpush1.msra.mxu0 0.0
        %3810 = vmatprep.subr.mxu0 0.0
        %3811 = vmatpush1.msra.mxu0 0.0
        %3812 = vmatprep.subr.mxu0 0.0
        %3813 = vmatpush1.msra.mxu0 0.0
        %3814 = vmatprep.subr.mxu0 0.0
        %3815 = vmatpush1.msra.mxu0 0.0
        %3816 = vmatprep.subr.mxu0 0.0
        %3817 = vmatpush1.msra.mxu0 0.0
        %3818 = vmatprep.subr.mxu0 0.0
        %3819 = vmatpush1.msra.mxu0 0.0
        %3820 = vmatprep.subr.mxu0 0.0
        %3821 = vmatpush1.msra.mxu0 0.0
        %3822 = vmatprep.subr.mxu0 0.0
        %3823 = vmatpush1.msra.mxu0 0.0
        %3824 = vmatprep.subr.mxu0 0.0
        %3825 = vmatpush1.msra.mxu0 0.0
        %3826 = vmatprep.subr.mxu0 0.0
        %3827 = vmatpush1.msra.mxu0 0.0
        %3828 = vmatprep.subr.mxu0 0.0
        %3829 = vmatpush1.msra.mxu0 0.0
        %3830 = vmatprep.subr.mxu0 0.0
        %3831 = vmatpush1.msra.mxu0 0.0
        %3832 = vmatprep.subr.mxu0 0.0
        %3833 = vmatpush1.msra.mxu0 0.0
        %3834 = vmatprep.subr.mxu0 0.0
        %3835 = vmatpush1.msra.mxu0 0.0
        %3836 = vmatprep.subr.mxu0 0.0
        %3837 = vmatpush1.msra.mxu0 0.0
        %3838 = vmatprep.subr.mxu0 0.0
        %3839 = vmatpush1.msra.mxu0 0.0
        %3840 = vmatprep.subr.mxu0 0.0
        %3841 = vmatpush1.msra.mxu0 0.0
        %3842 = vmatprep.subr.mxu0 0.0
        %3843 = vmatpush1.msra.mxu0 0.0
        %3844 = vmatprep.subr.mxu0 0.0
        %3845 = vmatpush1.msra.mxu0 0.0
        %3846 = vmatprep.subr.mxu0 0.0
        %3847 = vmatpush1.msra.mxu0 0.0
        %3848 = vmatprep.subr.mxu0 0.0
        %3849 = vmatpush1.msra.mxu0 0.0
        %3850 = vmatprep.subr.mxu0 0.0
        %3851 = vmatpush1.msra.mxu0 0.0
        %3852 = vmatprep.subr.mxu0 0.0
        %3853 = vmatpush1.msra.mxu0 0.0
        %3854 = vmatprep.subr.mxu0 0.0
        %3855 = vmatpush1.msra.mxu0 0.0
        %3856 = vmatprep.mubr.f32.mxu0 0.0
        %3857 = vmatmul.mubr.f32.gmra.mrb[0].mxu0 %v3790
        %v3858 = vpop.f32.mrb[0].mxu0
        %v3859 = vadd.f32 0.0, %v3858
        %v3860 = vpop.f32.mrb[0].mxu0
        %3861 = vdwg.mxu0
        %v3862 = vadd.f32 %v3624, %v3859
        %3863 = vrot.lane.b32.xlu0 %v3448, 120
        %v3864 = vpop.permute.xlu0 %3863
        %3865 = vrot.lane.b32.xlu0 %v3529, 120
        %v3866 = vpop.permute.xlu0 %3865
        %3867 = vrot.lane.b32.xlu0 %v3534, 120
        %v3868 = vpop.permute.xlu0 %3867
        %v3869 = vsel %vm2362, %v3864, 0
        %v3871 = vsel %vm2362, %v3866, 0
        %v3873 = vsel %vm2362, %v3868, 0
        %3875 = vmatprep.subr.mxu0 0.0
        %3876 = vmatpush1.xpose.msra.mxu0 %v3871
        %3877 = vmatprep.subr.mxu0 0.0
        %3878 = vmatpush1.xpose.msra.mxu0 %v3873
        %3879 = vmatprep.subr.mxu0 0.0
        %3880 = vmatpush1.xpose.msra.mxu0 0.0
        %3881 = vmatprep.subr.mxu0 0.0
        %3882 = vmatpush1.xpose.msra.mxu0 0.0
        %3883 = vmatprep.subr.mxu0 0.0
        %3884 = vmatpush1.xpose.msra.mxu0 0.0
        %3885 = vmatprep.subr.mxu0 0.0
        %3886 = vmatpush1.xpose.msra.mxu0 0.0
        %3887 = vmatprep.subr.mxu0 0.0
        %3888 = vmatpush1.xpose.msra.mxu0 0.0
        %3889 = vmatprep.subr.mxu0 0.0
        %3890 = vmatpush1.xpose.msra.mxu0 0.0
        %3891 = vmatprep.subr.mxu0 0.0
        %3892 = vmatpush1.xpose.msra.mxu0 0.0
        %3893 = vmatprep.subr.mxu0 0.0
        %3894 = vmatpush1.xpose.msra.mxu0 0.0
        %3895 = vmatprep.subr.mxu0 0.0
        %3896 = vmatpush1.xpose.msra.mxu0 0.0
        %3897 = vmatprep.subr.mxu0 0.0
        %3898 = vmatpush1.xpose.msra.mxu0 0.0
        %3899 = vmatprep.subr.mxu0 0.0
        %3900 = vmatpush1.xpose.msra.mxu0 0.0
        %3901 = vmatprep.subr.mxu0 0.0
        %3902 = vmatpush1.xpose.msra.mxu0 0.0
        %3903 = vmatprep.subr.mxu0 0.0
        %3904 = vmatpush1.xpose.msra.mxu0 0.0
        %3905 = vmatprep.subr.mxu0 0.0
        %3906 = vmatpush1.xpose.msra.mxu0 0.0
        %3907 = vmatprep.subr.mxu0 0.0
        %3908 = vmatpush1.xpose.msra.mxu0 0.0
        %3909 = vmatprep.subr.mxu0 0.0
        %3910 = vmatpush1.xpose.msra.mxu0 0.0
        %3911 = vmatprep.subr.mxu0 0.0
        %3912 = vmatpush1.xpose.msra.mxu0 0.0
        %3913 = vmatprep.subr.mxu0 0.0
        %3914 = vmatpush1.xpose.msra.mxu0 0.0
        %3915 = vmatprep.subr.mxu0 0.0
        %3916 = vmatpush1.xpose.msra.mxu0 0.0
        %3917 = vmatprep.subr.mxu0 0.0
        %3918 = vmatpush1.xpose.msra.mxu0 0.0
        %3919 = vmatprep.subr.mxu0 0.0
        %3920 = vmatpush1.xpose.msra.mxu0 0.0
        %3921 = vmatprep.subr.mxu0 0.0
        %3922 = vmatpush1.xpose.msra.mxu0 0.0
        %3923 = vmatprep.subr.mxu0 0.0
        %3924 = vmatpush1.xpose.msra.mxu0 0.0
        %3925 = vmatprep.subr.mxu0 0.0
        %3926 = vmatpush1.xpose.msra.mxu0 0.0
        %3927 = vmatprep.subr.mxu0 0.0
        %3928 = vmatpush1.xpose.msra.mxu0 0.0
        %3929 = vmatprep.subr.mxu0 0.0
        %3930 = vmatpush1.xpose.msra.mxu0 0.0
        %3931 = vmatprep.subr.mxu0 0.0
        %3932 = vmatpush1.xpose.msra.mxu0 0.0
        %3933 = vmatprep.subr.mxu0 0.0
        %3934 = vmatpush1.xpose.msra.mxu0 0.0
        %3935 = vmatprep.subr.mxu0 0.0
        %3936 = vmatpush1.xpose.msra.mxu0 0.0
        %3937 = vmatprep.subr.mxu0 0.0
        %3938 = vmatpush1.xpose.msra.mxu0 0.0
        %3939 = vmatprep.mubr.f32.mxu0 0.0
        %3940 = vmatmul.mubr.f32.gmra.mrb[0].mxu0 %v3869
        %v3941 = vpop.f32.mrb[0].mxu0
        %v3942 = vadd.f32 0.0, %v3941
        %v3943 = vpop.f32.mrb[0].mxu0
        %3944 = vdwg.mxu0
        %v3945 = vsel %vm3704, %v3942, -inf
        %3946 = vmax.xlane.f32.xlu0 %v3945
        %v3947 = vpop.xlane.xlu0 %3946
        %v3948 = vsub.f32 %v3942, %v3947
        %v3949 = vmul.f32 %v3948, 1.442695
        %v3950 = vpow.pop %v3949
        %v3951 = vsel %vm3704, %v3950, 0.0
        %3952 = vadd.xlane.f32.xlu0 %v3951
        %v3953 = vpop.xlane.xlu0 %3952
        %v3954 = vrcp.pop %v3953
        %v3955 = vmul.f32 %v3950, %v3954
        %3958 = vrot.lane.b32.xlu0 %v3610, 120
        %v3959 = vpop.permute.xlu0 %3958
        %3960 = vrot.lane.b32.xlu0 %v3615, 120
        %v3961 = vpop.permute.xlu0 %3960
        %v3965 = vsel %vm3704, %v3955, 0
        %3967 = vmatprep.subr.mxu0 0.0
        %3968 = vmatpush1.msra.mxu0 %v3959
        %3969 = vmatprep.subr.mxu0 0.0
        %3970 = vmatpush1.msra.mxu0 %v3961
        %3971 = vmatprep.subr.mxu0 0.0
        %3972 = vmatpush1.msra.mxu0 0.0
        %3973 = vmatprep.subr.mxu0 0.0
        %3974 = vmatpush1.msra.mxu0 0.0
        %3975 = vmatprep.subr.mxu0 0.0
        %3976 = vmatpush1.msra.mxu0 0.0
        %3977 = vmatprep.subr.mxu0 0.0
        %3978 = vmatpush1.msra.mxu0 0.0
        %3979 = vmatprep.subr.mxu0 0.0
        %3980 = vmatpush1.msra.mxu0 0.0
        %3981 = vmatprep.subr.mxu0 0.0
        %3982 = vmatpush1.msra.mxu0 0.0
        %3983 = vmatprep.subr.mxu0 0.0
        %3984 = vmatpush1.msra.mxu0 0.0
        %3985 = vmatprep.subr.mxu0 0.0
        %3986 = vmatpush1.msra.mxu0 0.0
        %3987 = vmatprep.subr.mxu0 0.0
        %3988 = vmatpush1.msra.mxu0 0.0
        %3989 = vmatprep.subr.mxu0 0.0
        %3990 = vmatpush1.msra.mxu0 0.0
        %3991 = vmatprep.subr.mxu0 0.0
        %3992 = vmatpush1.msra.mxu0 0.0
        %3993 = vmatprep.subr.mxu0 0.0
        %3994 = vmatpush1.msra.mxu0 0.0
        %3995 = vmatprep.subr.mxu0 0.0
        %3996 = vmatpush1.msra.mxu0 0.0
        %3997 = vmatprep.subr.mxu0 0.0
        %3998 = vmatpush1.msra.mxu0 0.0
        %3999 = vmatprep.subr.mxu0 0.0
        %4000 = vmatpush1.msra.mxu0 0.0
        %4001 = vmatprep.subr.mxu0 0.0
        %4002 = vmatpush1.msra.mxu0 0.0
        %4003 = vmatprep.subr.mxu0 0.0
        %4004 = vmatpush1.msra.mxu0 0.0
        %4005 = vmatprep.subr.mxu0 0.0
        %4006 = vmatpush1.msra.mxu0 0.0
        %4007 = vmatprep.subr.mxu0 0.0
        %4008 = vmatpush1.msra.mxu0 0.0
        %4009 = vmatprep.subr.mxu0 0.0
        %4010 = vmatpush1.msra.mxu0 0.0
        %4011 = vmatprep.subr.mxu0 0.0
        %4012 = vmatpush1.msra.mxu0 0.0
        %4013 = vmatprep.subr.mxu0 0.0
        %4014 = vmatpush1.msra.mxu0 0.0
        %4015 = vmatprep.subr.mxu0 0.0
        %4016 = vmatpush1.msra.mxu0 0.0
        %4017 = vmatprep.subr.mxu0 0.0
        %4018 = vmatpush1.msra.mxu0 0.0
        %4019 = vmatprep.subr.mxu0 0.0
        %4020 = vmatpush1.msra.mxu0 0.0
        %4021 = vmatprep.subr.mxu0 0.0
        %4022 = vmatpush1.msra.mxu0 0.0
        %4023 = vmatprep.subr.mxu0 0.0
        %4024 = vmatpush1.msra.mxu0 0.0
        %4025 = vmatprep.subr.mxu0 0.0
        %4026 = vmatpush1.msra.mxu0 0.0
        %4027 = vmatprep.subr.mxu0 0.0
        %4028 = vmatpush1.msra.mxu0 0.0
        %4029 = vmatprep.subr.mxu0 0.0
        %4030 = vmatpush1.msra.mxu0 0.0
        %4031 = vmatprep.mubr.f32.mxu0 0.0
        %4032 = vmatmul.mubr.f32.gmra.mrb[0].mxu0 %v3965
        %v4033 = vpop.f32.mrb[0].mxu0
        %v4034 = vadd.f32 0.0, %v4033
        %v4035 = vpop.f32.mrb[0].mxu0
        %4036 = vdwg.mxu0
        %v4038 = vsel %vm2362, %v4034, 0
        %4040 = vmatprep.subr.mxu0 0.0
        %4041 = vmatpush1.msra.mxu0 %v3363
        %4042 = vmatprep.subr.mxu0 0.0
        %4043 = vmatpush1.msra.mxu0 0.0
        %4044 = vmatprep.subr.mxu0 0.0
        %4045 = vmatpush1.msra.mxu0 0.0
        %4046 = vmatprep.subr.mxu0 0.0
        %4047 = vmatpush1.msra.mxu0 0.0
        %4048 = vmatprep.subr.mxu0 0.0
        %4049 = vmatpush1.msra.mxu0 0.0
        %4050 = vmatprep.subr.mxu0 0.0
        %4051 = vmatpush1.msra.mxu0 0.0
        %4052 = vmatprep.subr.mxu0 0.0
        %4053 = vmatpush1.msra.mxu0 0.0
        %4054 = vmatprep.subr.mxu0 0.0
        %4055 = vmatpush1.msra.mxu0 0.0
        %4056 = vmatprep.subr.mxu0 0.0
        %4057 = vmatpush1.msra.mxu0 0.0
        %4058 = vmatprep.subr.mxu0 0.0
        %4059 = vmatpush1.msra.mxu0 0.0
        %4060 = vmatprep.subr.mxu0 0.0
        %4061 = vmatpush1.msra.mxu0 0.0
        %4062 = vmatprep.subr.mxu0 0.0
        %4063 = vmatpush1.msra.mxu0 0.0
        %4064 = vmatprep.subr.mxu0 0.0
        %4065 = vmatpush1.msra.mxu0 0.0
        %4066 = vmatprep.subr.mxu0 0.0
        %4067 = vmatpush1.msra.mxu0 0.0
        %4068 = vmatprep.subr.mxu0 0.0
        %4069 = vmatpush1.msra.mxu0 0.0
        %4070 = vmatprep.subr.mxu0 0.0
        %4071 = vmatpush1.msra.mxu0 0.0
        %4072 = vmatprep.subr.mxu0 0.0
        %4073 = vmatpush1.msra.mxu0 0.0
        %4074 = vmatprep.subr.mxu0 0.0
        %4075 = vmatpush1.msra.mxu0 0.0
        %4076 = vmatprep.subr.mxu0 0.0
        %4077 = vmatpush1.msra.mxu0 0.0
        %4078 = vmatprep.subr.mxu0 0.0
        %4079 = vmatpush1.msra.mxu0 0.0
        %4080 = vmatprep.subr.mxu0 0.0
        %4081 = vmatpush1.msra.mxu0 0.0
        %4082 = vmatprep.subr.mxu0 0.0
        %4083 = vmatpush1.msra.mxu0 0.0
        %4084 = vmatprep.subr.mxu0 0.0
        %4085 = vmatpush1.msra.mxu0 0.0
        %4086 = vmatprep.subr.mxu0 0.0
        %4087 = vmatpush1.msra.mxu0 0.0
        %4088 = vmatprep.subr.mxu0 0.0
        %4089 = vmatpush1.msra.mxu0 0.0
        %4090 = vmatprep.subr.mxu0 0.0
        %4091 = vmatpush1.msra.mxu0 0.0
        %4092 = vmatprep.subr.mxu0 0.0
        %4093 = vmatpush1.msra.mxu0 0.0
        %4094 = vmatprep.subr.mxu0 0.0
        %4095 = vmatpush1.msra.mxu0 0.0
        %4096 = vmatprep.subr.mxu0 0.0
        %4097 = vmatpush1.msra.mxu0 0.0
        %4098 = vmatprep.subr.mxu0 0.0
        %4099 = vmatpush1.msra.mxu0 0.0
        %4100 = vmatprep.subr.mxu0 0.0
        %4101 = vmatpush1.msra.mxu0 0.0
        %4102 = vmatprep.subr.mxu0 0.0
        %4103 = vmatpush1.msra.mxu0 0.0
        %4104 = vmatprep.mubr.f32.mxu0 0.0
        %4105 = vmatmul.mubr.f32.gmra.mrb[0].mxu0 %v4038
        %v4106 = vpop.f32.mrb[0].mxu0
        %v4107 = vadd.f32 0.0, %v4106
        %v4108 = vpop.f32.mrb[0].mxu0
        %4109 = vdwg.mxu0
        %v4110 = vadd.f32 %v3862, %v4107
        %4111 = vrot.lane.b32.xlu0 %v3448, 112
        %v4112 = vpop.permute.xlu0 %4111
        %4113 = vrot.lane.b32.xlu0 %v3529, 112
        %v4114 = vpop.permute.xlu0 %4113
        %4115 = vrot.lane.b32.xlu0 %v3534, 112
        %v4116 = vpop.permute.xlu0 %4115
        %v4117 = vsel %vm2362, %v4112, 0
        %v4119 = vsel %vm2362, %v4114, 0
        %v4121 = vsel %vm2362, %v4116, 0
        %4123 = vmatprep.subr.mxu0 0.0
        %4124 = vmatpush1.xpose.msra.mxu0 %v4119
        %4125 = vmatprep.subr.mxu0 0.0
        %4126 = vmatpush1.xpose.msra.mxu0 %v4121
        %4127 = vmatprep.subr.mxu0 0.0
        %4128 = vmatpush1.xpose.msra.mxu0 0.0
        %4129 = vmatprep.subr.mxu0 0.0
        %4130 = vmatpush1.xpose.msra.mxu0 0.0
        %4131 = vmatprep.subr.mxu0 0.0
        %4132 = vmatpush1.xpose.msra.mxu0 0.0
        %4133 = vmatprep.subr.mxu0 0.0
        %4134 = vmatpush1.xpose.msra.mxu0 0.0
        %4135 = vmatprep.subr.mxu0 0.0
        %4136 = vmatpush1.xpose.msra.mxu0 0.0
        %4137 = vmatprep.subr.mxu0 0.0
        %4138 = vmatpush1.xpose.msra.mxu0 0.0
        %4139 = vmatprep.subr.mxu0 0.0
        %4140 = vmatpush1.xpose.msra.mxu0 0.0
        %4141 = vmatprep.subr.mxu0 0.0
        %4142 = vmatpush1.xpose.msra.mxu0 0.0
        %4143 = vmatprep.subr.mxu0 0.0
        %4144 = vmatpush1.xpose.msra.mxu0 0.0
        %4145 = vmatprep.subr.mxu0 0.0
        %4146 = vmatpush1.xpose.msra.mxu0 0.0
        %4147 = vmatprep.subr.mxu0 0.0
        %4148 = vmatpush1.xpose.msra.mxu0 0.0
        %4149 = vmatprep.subr.mxu0 0.0
        %4150 = vmatpush1.xpose.msra.mxu0 0.0
        %4151 = vmatprep.subr.mxu0 0.0
        %4152 = vmatpush1.xpose.msra.mxu0 0.0
        %4153 = vmatprep.subr.mxu0 0.0
        %4154 = vmatpush1.xpose.msra.mxu0 0.0
        %4155 = vmatprep.subr.mxu0 0.0
        %4156 = vmatpush1.xpose.msra.mxu0 0.0
        %4157 = vmatprep.subr.mxu0 0.0
        %4158 = vmatpush1.xpose.msra.mxu0 0.0
        %4159 = vmatprep.subr.mxu0 0.0
        %4160 = vmatpush1.xpose.msra.mxu0 0.0
        %4161 = vmatprep.subr.mxu0 0.0
        %4162 = vmatpush1.xpose.msra.mxu0 0.0
        %4163 = vmatprep.subr.mxu0 0.0
        %4164 = vmatpush1.xpose.msra.mxu0 0.0
        %4165 = vmatprep.subr.mxu0 0.0
        %4166 = vmatpush1.xpose.msra.mxu0 0.0
        %4167 = vmatprep.subr.mxu0 0.0
        %4168 = vmatpush1.xpose.msra.mxu0 0.0
        %4169 = vmatprep.subr.mxu0 0.0
        %4170 = vmatpush1.xpose.msra.mxu0 0.0
        %4171 = vmatprep.subr.mxu0 0.0
        %4172 = vmatpush1.xpose.msra.mxu0 0.0
        %4173 = vmatprep.subr.mxu0 0.0
        %4174 = vmatpush1.xpose.msra.mxu0 0.0
        %4175 = vmatprep.subr.mxu0 0.0
        %4176 = vmatpush1.xpose.msra.mxu0 0.0
        %4177 = vmatprep.subr.mxu0 0.0
        %4178 = vmatpush1.xpose.msra.mxu0 0.0
        %4179 = vmatprep.subr.mxu0 0.0
        %4180 = vmatpush1.xpose.msra.mxu0 0.0
        %4181 = vmatprep.subr.mxu0 0.0
        %4182 = vmatpush1.xpose.msra.mxu0 0.0
        %4183 = vmatprep.subr.mxu0 0.0
        %4184 = vmatpush1.xpose.msra.mxu0 0.0
        %4185 = vmatprep.subr.mxu0 0.0
        %4186 = vmatpush1.xpose.msra.mxu0 0.0
        %4187 = vmatprep.mubr.f32.mxu0 0.0
        %4188 = vmatmul.mubr.f32.gmra.mrb[0].mxu0 %v4117
        %v4189 = vpop.f32.mrb[0].mxu0
        %v4190 = vadd.f32 0.0, %v4189
        %v4191 = vpop.f32.mrb[0].mxu0
        %4192 = vdwg.mxu0
        %v4193 = vsel %vm3704, %v4190, -inf
        %4194 = vmax.xlane.f32.xlu0 %v4193
        %v4195 = vpop.xlane.xlu0 %4194
        %v4196 = vsub.f32 %v4190, %v4195
        %v4197 = vmul.f32 %v4196, 1.442695
        %v4198 = vpow.pop %v4197
        %v4199 = vsel %vm3704, %v4198, 0.0
        %4200 = vadd.xlane.f32.xlu0 %v4199
        %v4201 = vpop.xlane.xlu0 %4200
        %v4202 = vrcp.pop %v4201
        %v4203 = vmul.f32 %v4198, %v4202
        %4204 = vrot.lane.b32.xlu0 %v3610, 112
        %v4205 = vpop.permute.xlu0 %4204
        %4206 = vrot.lane.b32.xlu0 %v3615, 112
        %v4207 = vpop.permute.xlu0 %4206
        %v4211 = vsel %vm3704, %v4203, 0
        %4213 = vmatprep.subr.mxu0 0.0
        %4214 = vmatpush1.msra.mxu0 %v4205
        %4215 = vmatprep.subr.mxu0 0.0
        %4216 = vmatpush1.msra.mxu0 %v4207
        %4217 = vmatprep.subr.mxu0 0.0
        %4218 = vmatpush1.msra.mxu0 0.0
        %4219 = vmatprep.subr.mxu0 0.0
        %4220 = vmatpush1.msra.mxu0 0.0
        %4221 = vmatprep.subr.mxu0 0.0
        %4222 = vmatpush1.msra.mxu0 0.0
        %4223 = vmatprep.subr.mxu0 0.0
        %4224 = vmatpush1.msra.mxu0 0.0
        %4225 = vmatprep.subr.mxu0 0.0
        %4226 = vmatpush1.msra.mxu0 0.0
        %4227 = vmatprep.subr.mxu0 0.0
        %4228 = vmatpush1.msra.mxu0 0.0
        %4229 = vmatprep.subr.mxu0 0.0
        %4230 = vmatpush1.msra.mxu0 0.0
        %4231 = vmatprep.subr.mxu0 0.0
        %4232 = vmatpush1.msra.mxu0 0.0
        %4233 = vmatprep.subr.mxu0 0.0
        %4234 = vmatpush1.msra.mxu0 0.0
        %4235 = vmatprep.subr.mxu0 0.0
        %4236 = vmatpush1.msra.mxu0 0.0
        %4237 = vmatprep.subr.mxu0 0.0
        %4238 = vmatpush1.msra.mxu0 0.0
        %4239 = vmatprep.subr.mxu0 0.0
        %4240 = vmatpush1.msra.mxu0 0.0
        %4241 = vmatprep.subr.mxu0 0.0
        %4242 = vmatpush1.msra.mxu0 0.0
        %4243 = vmatprep.subr.mxu0 0.0
        %4244 = vmatpush1.msra.mxu0 0.0
        %4245 = vmatprep.subr.mxu0 0.0
        %4246 = vmatpush1.msra.mxu0 0.0
        %4247 = vmatprep.subr.mxu0 0.0
        %4248 = vmatpush1.msra.mxu0 0.0
        %4249 = vmatprep.subr.mxu0 0.0
        %4250 = vmatpush1.msra.mxu0 0.0
        %4251 = vmatprep.subr.mxu0 0.0
        %4252 = vmatpush1.msra.mxu0 0.0
        %4253 = vmatprep.subr.mxu0 0.0
        %4254 = vmatpush1.msra.mxu0 0.0
        %4255 = vmatprep.subr.mxu0 0.0
        %4256 = vmatpush1.msra.mxu0 0.0
        %4257 = vmatprep.subr.mxu0 0.0
        %4258 = vmatpush1.msra.mxu0 0.0
        %4259 = vmatprep.subr.mxu0 0.0
        %4260 = vmatpush1.msra.mxu0 0.0
        %4261 = vmatprep.subr.mxu0 0.0
        %4262 = vmatpush1.msra.mxu0 0.0
        %4263 = vmatprep.subr.mxu0 0.0
        %4264 = vmatpush1.msra.mxu0 0.0
        %4265 = vmatprep.subr.mxu0 0.0
        %4266 = vmatpush1.msra.mxu0 0.0
        %4267 = vmatprep.subr.mxu0 0.0
        %4268 = vmatpush1.msra.mxu0 0.0
        %4269 = vmatprep.subr.mxu0 0.0
        %4270 = vmatpush1.msra.mxu0 0.0
        %4271 = vmatprep.subr.mxu0 0.0
        %4272 = vmatpush1.msra.mxu0 0.0
        %4273 = vmatprep.subr.mxu0 0.0
        %4274 = vmatpush1.msra.mxu0 0.0
        %4275 = vmatprep.subr.mxu0 0.0
        %4276 = vmatpush1.msra.mxu0 0.0
        %4277 = vmatprep.mubr.f32.mxu0 0.0
        %4278 = vmatmul.mubr.f32.gmra.mrb[0].mxu0 %v4211
        %v4279 = vpop.f32.mrb[0].mxu0
        %v4280 = vadd.f32 0.0, %v4279
        %v4281 = vpop.f32.mrb[0].mxu0
        %4282 = vdwg.mxu0
        %v4284 = vsel %vm2362, %v4280, 0
        %4286 = vmatprep.subr.mxu0 0.0
        %4287 = vmatpush1.msra.mxu0 %v3364
        %4288 = vmatprep.subr.mxu0 0.0
        %4289 = vmatpush1.msra.mxu0 0.0
        %4290 = vmatprep.subr.mxu0 0.0
        %4291 = vmatpush1.msra.mxu0 0.0
        %4292 = vmatprep.subr.mxu0 0.0
        %4293 = vmatpush1.msra.mxu0 0.0
        %4294 = vmatprep.subr.mxu0 0.0
        %4295 = vmatpush1.msra.mxu0 0.0
        %4296 = vmatprep.subr.mxu0 0.0
        %4297 = vmatpush1.msra.mxu0 0.0
        %4298 = vmatprep.subr.mxu0 0.0
        %4299 = vmatpush1.msra.mxu0 0.0
        %4300 = vmatprep.subr.mxu0 0.0
        %4301 = vmatpush1.msra.mxu0 0.0
        %4302 = vmatprep.subr.mxu0 0.0
        %4303 = vmatpush1.msra.mxu0 0.0
        %4304 = vmatprep.subr.mxu0 0.0
        %4305 = vmatpush1.msra.mxu0 0.0
        %4306 = vmatprep.subr.mxu0 0.0
        %4307 = vmatpush1.msra.mxu0 0.0
        %4308 = vmatprep.subr.mxu0 0.0
        %4309 = vmatpush1.msra.mxu0 0.0
        %4310 = vmatprep.subr.mxu0 0.0
        %4311 = vmatpush1.msra.mxu0 0.0
        %4312 = vmatprep.subr.mxu0 0.0
        %4313 = vmatpush1.msra.mxu0 0.0
        %4314 = vmatprep.subr.mxu0 0.0
        %4315 = vmatpush1.msra.mxu0 0.0
        %4316 = vmatprep.subr.mxu0 0.0
        %4317 = vmatpush1.msra.mxu0 0.0
        %4318 = vmatprep.subr.mxu0 0.0
        %4319 = vmatpush1.msra.mxu0 0.0
        %4320 = vmatprep.subr.mxu0 0.0
        %4321 = vmatpush1.msra.mxu0 0.0
        %4322 = vmatprep.subr.mxu0 0.0
        %4323 = vmatpush1.msra.mxu0 0.0
        %4324 = vmatprep.subr.mxu0 0.0
        %4325 = vmatpush1.msra.mxu0 0.0
        %4326 = vmatprep.subr.mxu0 0.0
        %4327 = vmatpush1.msra.mxu0 0.0
        %4328 = vmatprep.subr.mxu0 0.0
        %4329 = vmatpush1.msra.mxu0 0.0
        %4330 = vmatprep.subr.mxu0 0.0
        %4331 = vmatpush1.msra.mxu0 0.0
        %4332 = vmatprep.subr.mxu0 0.0
        %4333 = vmatpush1.msra.mxu0 0.0
        %4334 = vmatprep.subr.mxu0 0.0
        %4335 = vmatpush1.msra.mxu0 0.0
        %4336 = vmatprep.subr.mxu0 0.0
        %4337 = vmatpush1.msra.mxu0 0.0
        %4338 = vmatprep.subr.mxu0 0.0
        %4339 = vmatpush1.msra.mxu0 0.0
        %4340 = vmatprep.subr.mxu0 0.0
        %4341 = vmatpush1.msra.mxu0 0.0
        %4342 = vmatprep.subr.mxu0 0.0
        %4343 = vmatpush1.msra.mxu0 0.0
        %4344 = vmatprep.subr.mxu0 0.0
        %4345 = vmatpush1.msra.mxu0 0.0
        %4346 = vmatprep.subr.mxu0 0.0
        %4347 = vmatpush1.msra.mxu0 0.0
        %4348 = vmatprep.subr.mxu0 0.0
        %4349 = vmatpush1.msra.mxu0 0.0
        %4350 = vmatprep.mubr.f32.mxu0 0.0
        %4351 = vmatmul.mubr.f32.gmra.mrb[0].mxu0 %v4284
        %v4352 = vpop.f32.mrb[0].mxu0
        %v4353 = vadd.f32 0.0, %v4352
        %v4354 = vpop.f32.mrb[0].mxu0
        %4355 = vdwg.mxu0
        %v4356 = vadd.f32 %v4110, %v4353
        %4357 = vrot.lane.b32.xlu0 %v3448, 104
        %v4358 = vpop.permute.xlu0 %4357
        %4359 = vrot.lane.b32.xlu0 %v3529, 104
        %v4360 = vpop.permute.xlu0 %4359
        %4361 = vrot.lane.b32.xlu0 %v3534, 104
        %v4362 = vpop.permute.xlu0 %4361
        %v4363 = vsel %vm2362, %v4358, 0
        %v4365 = vsel %vm2362, %v4360, 0
        %v4367 = vsel %vm2362, %v4362, 0
        %4369 = vmatprep.subr.mxu0 0.0
        %4370 = vmatpush1.xpose.msra.mxu0 %v4365
        %4371 = vmatprep.subr.mxu0 0.0
        %4372 = vmatpush1.xpose.msra.mxu0 %v4367
        %4373 = vmatprep.subr.mxu0 0.0
        %4374 = vmatpush1.xpose.msra.mxu0 0.0
        %4375 = vmatprep.subr.mxu0 0.0
        %4376 = vmatpush1.xpose.msra.mxu0 0.0
        %4377 = vmatprep.subr.mxu0 0.0
        %4378 = vmatpush1.xpose.msra.mxu0 0.0
        %4379 = vmatprep.subr.mxu0 0.0
        %4380 = vmatpush1.xpose.msra.mxu0 0.0
        %4381 = vmatprep.subr.mxu0 0.0
        %4382 = vmatpush1.xpose.msra.mxu0 0.0
        %4383 = vmatprep.subr.mxu0 0.0
        %4384 = vmatpush1.xpose.msra.mxu0 0.0
        %4385 = vmatprep.subr.mxu0 0.0
        %4386 = vmatpush1.xpose.msra.mxu0 0.0
        %4387 = vmatprep.subr.mxu0 0.0
        %4388 = vmatpush1.xpose.msra.mxu0 0.0
        %4389 = vmatprep.subr.mxu0 0.0
        %4390 = vmatpush1.xpose.msra.mxu0 0.0
        %4391 = vmatprep.subr.mxu0 0.0
        %4392 = vmatpush1.xpose.msra.mxu0 0.0
        %4393 = vmatprep.subr.mxu0 0.0
        %4394 = vmatpush1.xpose.msra.mxu0 0.0
        %4395 = vmatprep.subr.mxu0 0.0
        %4396 = vmatpush1.xpose.msra.mxu0 0.0
        %4397 = vmatprep.subr.mxu0 0.0
        %4398 = vmatpush1.xpose.msra.mxu0 0.0
        %4399 = vmatprep.subr.mxu0 0.0
        %4400 = vmatpush1.xpose.msra.mxu0 0.0
        %4401 = vmatprep.subr.mxu0 0.0
        %4402 = vmatpush1.xpose.msra.mxu0 0.0
        %4403 = vmatprep.subr.mxu0 0.0
        %4404 = vmatpush1.xpose.msra.mxu0 0.0
        %4405 = vmatprep.subr.mxu0 0.0
        %4406 = vmatpush1.xpose.msra.mxu0 0.0
        %4407 = vmatprep.subr.mxu0 0.0
        %4408 = vmatpush1.xpose.msra.mxu0 0.0
        %4409 = vmatprep.subr.mxu0 0.0
        %4410 = vmatpush1.xpose.msra.mxu0 0.0
        %4411 = vmatprep.subr.mxu0 0.0
        %4412 = vmatpush1.xpose.msra.mxu0 0.0
        %4413 = vmatprep.subr.mxu0 0.0
        %4414 = vmatpush1.xpose.msra.mxu0 0.0
        %4415 = vmatprep.subr.mxu0 0.0
        %4416 = vmatpush1.xpose.msra.mxu0 0.0
        %4417 = vmatprep.subr.mxu0 0.0
        %4418 = vmatpush1.xpose.msra.mxu0 0.0
        %4419 = vmatprep.subr.mxu0 0.0
        %4420 = vmatpush1.xpose.msra.mxu0 0.0
        %4421 = vmatprep.subr.mxu0 0.0
        %4422 = vmatpush1.xpose.msra.mxu0 0.0
        %4423 = vmatprep.subr.mxu0 0.0
        %4424 = vmatpush1.xpose.msra.mxu0 0.0
        %4425 = vmatprep.subr.mxu0 0.0
        %4426 = vmatpush1.xpose.msra.mxu0 0.0
        %4427 = vmatprep.subr.mxu0 0.0
        %4428 = vmatpush1.xpose.msra.mxu0 0.0
        %4429 = vmatprep.subr.mxu0 0.0
        %4430 = vmatpush1.xpose.msra.mxu0 0.0
        %4431 = vmatprep.subr.mxu0 0.0
        %4432 = vmatpush1.xpose.msra.mxu0 0.0
        %4433 = vmatprep.mubr.f32.mxu0 0.0
        %4434 = vmatmul.mubr.f32.gmra.mrb[0].mxu0 %v4363
        %v4435 = vpop.f32.mrb[0].mxu0
        %v4436 = vadd.f32 0.0, %v4435
        %v4437 = vpop.f32.mrb[0].mxu0
        %4438 = vdwg.mxu0
        %v4439 = vsel %vm3704, %v4436, -inf
        %4440 = vmax.xlane.f32.xlu0 %v4439
        %v4441 = vpop.xlane.xlu0 %4440
        %v4442 = vsub.f32 %v4436, %v4441
        %v4443 = vmul.f32 %v4442, 1.442695
        %v4444 = vpow.pop %v4443
        %v4445 = vsel %vm3704, %v4444, 0.0
        %4446 = vadd.xlane.f32.xlu0 %v4445
        %v4447 = vpop.xlane.xlu0 %4446
        %v4448 = vrcp.pop %v4447
        %v4449 = vmul.f32 %v4444, %v4448
        %4450 = vrot.lane.b32.xlu0 %v3610, 104
        %v4451 = vpop.permute.xlu0 %4450
        %4452 = vrot.lane.b32.xlu0 %v3615, 104
        %v4453 = vpop.permute.xlu0 %4452
        %v4457 = vsel %vm3704, %v4449, 0
        %4459 = vmatprep.subr.mxu0 0.0
        %4460 = vmatpush1.msra.mxu0 %v4451
        %4461 = vmatprep.subr.mxu0 0.0
        %4462 = vmatpush1.msra.mxu0 %v4453
        %4463 = vmatprep.subr.mxu0 0.0
        %4464 = vmatpush1.msra.mxu0 0.0
        %4465 = vmatprep.subr.mxu0 0.0
        %4466 = vmatpush1.msra.mxu0 0.0
        %4467 = vmatprep.subr.mxu0 0.0
        %4468 = vmatpush1.msra.mxu0 0.0
        %4469 = vmatprep.subr.mxu0 0.0
        %4470 = vmatpush1.msra.mxu0 0.0
        %4471 = vmatprep.subr.mxu0 0.0
        %4472 = vmatpush1.msra.mxu0 0.0
        %4473 = vmatprep.subr.mxu0 0.0
        %4474 = vmatpush1.msra.mxu0 0.0
        %4475 = vmatprep.subr.mxu0 0.0
        %4476 = vmatpush1.msra.mxu0 0.0
        %4477 = vmatprep.subr.mxu0 0.0
        %4478 = vmatpush1.msra.mxu0 0.0
        %4479 = vmatprep.subr.mxu0 0.0
        %4480 = vmatpush1.msra.mxu0 0.0
        %4481 = vmatprep.subr.mxu0 0.0
        %4482 = vmatpush1.msra.mxu0 0.0
        %4483 = vmatprep.subr.mxu0 0.0
        %4484 = vmatpush1.msra.mxu0 0.0
        %4485 = vmatprep.subr.mxu0 0.0
        %4486 = vmatpush1.msra.mxu0 0.0
        %4487 = vmatprep.subr.mxu0 0.0
        %4488 = vmatpush1.msra.mxu0 0.0
        %4489 = vmatprep.subr.mxu0 0.0
        %4490 = vmatpush1.msra.mxu0 0.0
        %4491 = vmatprep.subr.mxu0 0.0
        %4492 = vmatpush1.msra.mxu0 0.0
        %4493 = vmatprep.subr.mxu0 0.0
        %4494 = vmatpush1.msra.mxu0 0.0
        %4495 = vmatprep.subr.mxu0 0.0
        %4496 = vmatpush1.msra.mxu0 0.0
        %4497 = vmatprep.subr.mxu0 0.0
        %4498 = vmatpush1.msra.mxu0 0.0
        %4499 = vmatprep.subr.mxu0 0.0
        %4500 = vmatpush1.msra.mxu0 0.0
        %4501 = vmatprep.subr.mxu0 0.0
        %4502 = vmatpush1.msra.mxu0 0.0
        %4503 = vmatprep.subr.mxu0 0.0
        %4504 = vmatpush1.msra.mxu0 0.0
        %4505 = vmatprep.subr.mxu0 0.0
        %4506 = vmatpush1.msra.mxu0 0.0
        %4507 = vmatprep.subr.mxu0 0.0
        %4508 = vmatpush1.msra.mxu0 0.0
        %4509 = vmatprep.subr.mxu0 0.0
        %4510 = vmatpush1.msra.mxu0 0.0
        %4511 = vmatprep.subr.mxu0 0.0
        %4512 = vmatpush1.msra.mxu0 0.0
        %4513 = vmatprep.subr.mxu0 0.0
        %4514 = vmatpush1.msra.mxu0 0.0
        %4515 = vmatprep.subr.mxu0 0.0
        %4516 = vmatpush1.msra.mxu0 0.0
        %4517 = vmatprep.subr.mxu0 0.0
        %4518 = vmatpush1.msra.mxu0 0.0
        %4519 = vmatprep.subr.mxu0 0.0
        %4520 = vmatpush1.msra.mxu0 0.0
        %4521 = vmatprep.subr.mxu0 0.0
        %4522 = vmatpush1.msra.mxu0 0.0
        %4523 = vmatprep.mubr.f32.mxu0 0.0
        %4524 = vmatmul.mubr.f32.gmra.mrb[0].mxu0 %v4457
        %v4525 = vpop.f32.mrb[0].mxu0
        %v4526 = vadd.f32 0.0, %v4525
        %v4527 = vpop.f32.mrb[0].mxu0
        %4528 = vdwg.mxu0
        %v4530 = vsel %vm2362, %v4526, 0
        %4532 = vmatprep.subr.mxu0 0.0
        %4533 = vmatpush1.msra.mxu0 %v3365
        %4534 = vmatprep.subr.mxu0 0.0
        %4535 = vmatpush1.msra.mxu0 0.0
        %4536 = vmatprep.subr.mxu0 0.0
        %4537 = vmatpush1.msra.mxu0 0.0
        %4538 = vmatprep.subr.mxu0 0.0
        %4539 = vmatpush1.msra.mxu0 0.0
        %4540 = vmatprep.subr.mxu0 0.0
        %4541 = vmatpush1.msra.mxu0 0.0
        %4542 = vmatprep.subr.mxu0 0.0
        %4543 = vmatpush1.msra.mxu0 0.0
        %4544 = vmatprep.subr.mxu0 0.0
        %4545 = vmatpush1.msra.mxu0 0.0
        %4546 = vmatprep.subr.mxu0 0.0
        %4547 = vmatpush1.msra.mxu0 0.0
        %4548 = vmatprep.subr.mxu0 0.0
        %4549 = vmatpush1.msra.mxu0 0.0
        %4550 = vmatprep.subr.mxu0 0.0
        %4551 = vmatpush1.msra.mxu0 0.0
        %4552 = vmatprep.subr.mxu0 0.0
        %4553 = vmatpush1.msra.mxu0 0.0
        %4554 = vmatprep.subr.mxu0 0.0
        %4555 = vmatpush1.msra.mxu0 0.0
        %4556 = vmatprep.subr.mxu0 0.0
        %4557 = vmatpush1.msra.mxu0 0.0
        %4558 = vmatprep.subr.mxu0 0.0
        %4559 = vmatpush1.msra.mxu0 0.0
        %4560 = vmatprep.subr.mxu0 0.0
        %4561 = vmatpush1.msra.mxu0 0.0
        %4562 = vmatprep.subr.mxu0 0.0
        %4563 = vmatpush1.msra.mxu0 0.0
        %4564 = vmatprep.subr.mxu0 0.0
        %4565 = vmatpush1.msra.mxu0 0.0
        %4566 = vmatprep.subr.mxu0 0.0
        %4567 = vmatpush1.msra.mxu0 0.0
        %4568 = vmatprep.subr.mxu0 0.0
        %4569 = vmatpush1.msra.mxu0 0.0
        %4570 = vmatprep.subr.mxu0 0.0
        %4571 = vmatpush1.msra.mxu0 0.0
        %4572 = vmatprep.subr.mxu0 0.0
        %4573 = vmatpush1.msra.mxu0 0.0
        %4574 = vmatprep.subr.mxu0 0.0
        %4575 = vmatpush1.msra.mxu0 0.0
        %4576 = vmatprep.subr.mxu0 0.0
        %4577 = vmatpush1.msra.mxu0 0.0
        %4578 = vmatprep.subr.mxu0 0.0
        %4579 = vmatpush1.msra.mxu0 0.0
        %4580 = vmatprep.subr.mxu0 0.0
        %4581 = vmatpush1.msra.mxu0 0.0
        %4582 = vmatprep.subr.mxu0 0.0
        %4583 = vmatpush1.msra.mxu0 0.0
        %4584 = vmatprep.subr.mxu0 0.0
        %4585 = vmatpush1.msra.mxu0 0.0
        %4586 = vmatprep.subr.mxu0 0.0
        %4587 = vmatpush1.msra.mxu0 0.0
        %4588 = vmatprep.subr.mxu0 0.0
        %4589 = vmatpush1.msra.mxu0 0.0
        %4590 = vmatprep.subr.mxu0 0.0
        %4591 = vmatpush1.msra.mxu0 0.0
        %4592 = vmatprep.subr.mxu0 0.0
        %4593 = vmatpush1.msra.mxu0 0.0
        %4594 = vmatprep.subr.mxu0 0.0
        %4595 = vmatpush1.msra.mxu0 0.0
        %4596 = vmatprep.mubr.f32.mxu0 0.0
        %4597 = vmatmul.mubr.f32.gmra.mrb[0].mxu0 %v4530
        %v4598 = vpop.f32.mrb[0].mxu0
        %v4599 = vadd.f32 0.0, %v4598
        %v4600 = vpop.f32.mrb[0].mxu0
        %4601 = vdwg.mxu0
        %v4602 = vadd.f32 %v4356, %v4599
        %v4603 = vsel %vm2128, %v4602, 0.0
        %4604 = vadd.xlane.f32.xlu0 %v4603
        %v4605 = vpop.xlane.xlu0 %4604
        %v4606 = vmul.f32 %v4605, %v3318
        %v4607 = vsub.f32 %v4602, %v4606
        %v4608 = vmul.f32 %v4607, %v4607
        %v4609 = vsel %vm2128, %v4608, 0.0
        %4610 = vadd.xlane.f32.xlu0 %v4609
        %v4611 = vpop.xlane.xlu0 %4610
        %v4612 = vmul.f32 %v4611, %v3318
        %v4613 = vadd.f32 %v4612, 1e-12
        %v4614 = vrsqrt.pop %v4613
        %v4615 = vmul.f32 %v4607, %v4614
        %v4617 = vlaneseq
        %v4618 = vshrl.u32 %v4617, 7
        %v4619 = vsub.s32 0, %v4618
        %v4620 = vrot.slane %v3367, %v4619
        %v4622 = vmul.f32 %v4615, %v4620
        %v4624 = vlaneseq
        %v4625 = vshrl.u32 %v4624, 7
        %v4626 = vsub.s32 0, %v4625
        %v4627 = vrot.slane %v3368, %v4626
        %v4629 = vadd.f32 %v4622, %v4627
        %v4630 = vld [vmem:[#allocation37] sm:$0xff]
        %v4631 = vld [vmem:[#allocation37 + $0x8] sm:$0xff]
        %v4632 = vld [vmem:[#allocation37 + $0x10] sm:$0xff]
        %v4633 = vld [vmem:[#allocation37 + $0x18] sm:$0xff]
        %v4634 = vld [vmem:[#allocation38] sm:$0x1]
        %v4635 = vld [vmem:[#allocation40] sm:$0x1]
        %v4636 = vld [vmem:[#allocation41] sm:$0x1]
        %v4637 = vld [vmem:[#allocation43] sm:$0xff]
        %v4638 = vld [vmem:[#allocation43 + $0x8] sm:$0xff]
        %v4639 = vld [vmem:[#allocation43 + $0x10] sm:$0xff]
        %v4640 = vld [vmem:[#allocation43 + $0x18] sm:$0xff]
        %v4641 = vld [vmem:[#allocation44] sm:$0x1]
        %v4642 = vld [vmem:[#allocation46] sm:$0x1]
        %v4643 = vld [vmem:[#allocation47] sm:$0x1]
        %v4645 = vlaneseq
        %v4646 = vshrl.u32 %v4645, 7
        %v4647 = vsub.s32 0, %v4646
        %v4648 = vrot.slane %v4634, %v4647
        %v4651 = vsel %vm2128, %v4629, 0
        %4653 = vmatprep.subr.mxu0 0.0
        %4654 = vmatpush1.msra.mxu0 %v4630
        %4655 = vmatprep.subr.mxu0 0.0
        %4656 = vmatpush1.msra.mxu0 %v4631
        %4657 = vmatprep.subr.mxu0 0.0
        %4658 = vmatpush1.msra.mxu0 %v4632
        %4659 = vmatprep.subr.mxu0 0.0
        %4660 = vmatpush1.msra.mxu0 %v4633
        %4661 = vmatprep.subr.mxu0 0.0
        %4662 = vmatpush1.msra.mxu0 0.0
        %4663 = vmatprep.subr.mxu0 0.0
        %4664 = vmatpush1.msra.mxu0 0.0
        %4665 = vmatprep.subr.mxu0 0.0
        %4666 = vmatpush1.msra.mxu0 0.0
        %4667 = vmatprep.subr.mxu0 0.0
        %4668 = vmatpush1.msra.mxu0 0.0
        %4669 = vmatprep.subr.mxu0 0.0
        %4670 = vmatpush1.msra.mxu0 0.0
        %4671 = vmatprep.subr.mxu0 0.0
        %4672 = vmatpush1.msra.mxu0 0.0
        %4673 = vmatprep.subr.mxu0 0.0
        %4674 = vmatpush1.msra.mxu0 0.0
        %4675 = vmatprep.subr.mxu0 0.0
        %4676 = vmatpush1.msra.mxu0 0.0
        %4677 = vmatprep.subr.mxu0 0.0
        %4678 = vmatpush1.msra.mxu0 0.0
        %4679 = vmatprep.subr.mxu0 0.0
        %4680 = vmatpush1.msra.mxu0 0.0
        %4681 = vmatprep.subr.mxu0 0.0
        %4682 = vmatpush1.msra.mxu0 0.0
        %4683 = vmatprep.subr.mxu0 0.0
        %4684 = vmatpush1.msra.mxu0 0.0
        %4685 = vmatprep.subr.mxu0 0.0
        %4686 = vmatpush1.msra.mxu0 0.0
        %4687 = vmatprep.subr.mxu0 0.0
        %4688 = vmatpush1.msra.mxu0 0.0
        %4689 = vmatprep.subr.mxu0 0.0
        %4690 = vmatpush1.msra.mxu0 0.0
        %4691 = vmatprep.subr.mxu0 0.0
        %4692 = vmatpush1.msra.mxu0 0.0
        %4693 = vmatprep.subr.mxu0 0.0
        %4694 = vmatpush1.msra.mxu0 0.0
        %4695 = vmatprep.subr.mxu0 0.0
        %4696 = vmatpush1.msra.mxu0 0.0
        %4697 = vmatprep.subr.mxu0 0.0
        %4698 = vmatpush1.msra.mxu0 0.0
        %4699 = vmatprep.subr.mxu0 0.0
        %4700 = vmatpush1.msra.mxu0 0.0
        %4701 = vmatprep.subr.mxu0 0.0
        %4702 = vmatpush1.msra.mxu0 0.0
        %4703 = vmatprep.subr.mxu0 0.0
        %4704 = vmatpush1.msra.mxu0 0.0
        %4705 = vmatprep.subr.mxu0 0.0
        %4706 = vmatpush1.msra.mxu0 0.0
        %4707 = vmatprep.subr.mxu0 0.0
        %4708 = vmatpush1.msra.mxu0 0.0
        %4709 = vmatprep.subr.mxu0 0.0
        %4710 = vmatpush1.msra.mxu0 0.0
        %4711 = vmatprep.subr.mxu0 0.0
        %4712 = vmatpush1.msra.mxu0 0.0
        %4713 = vmatprep.subr.mxu0 0.0
        %4714 = vmatpush1.msra.mxu0 0.0
        %4715 = vmatprep.subr.mxu0 0.0
        %4716 = vmatpush1.msra.mxu0 0.0
        %4717 = vmatprep.mubr.f32.mxu0 0.0
        %4718 = vmatmul.mubr.f32.gmra.mrb[0].mxu0 %v4651
        %v4719 = vpop.f32.mrb[0].mxu0
        %v4720 = vadd.f32 %v4648, %v4719
        %v4721 = vpop.f32.mrb[0].mxu0
        %4722 = vdwg.mxu0
        %v4723 = vadd.f32 %v4720, %v4629
        %v4724 = vsel %vm2128, %v4723, 0.0
        %4725 = vadd.xlane.f32.xlu0 %v4724
        %v4726 = vpop.xlane.xlu0 %4725
        %v4727 = vmul.f32 %v4726, %v3318
        %v4728 = vsub.f32 %v4723, %v4727
        %v4729 = vmul.f32 %v4728, %v4728
        %v4730 = vsel %vm2128, %v4729, 0.0
        %4731 = vadd.xlane.f32.xlu0 %v4730
        %v4732 = vpop.xlane.xlu0 %4731
        %v4733 = vmul.f32 %v4732, %v3318
        %v4734 = vadd.f32 %v4733, 1e-12
        %v4735 = vrsqrt.pop %v4734
        %v4736 = vmul.f32 %v4728, %v4735
        %v4738 = vlaneseq
        %v4739 = vshrl.u32 %v4738, 7
        %v4740 = vsub.s32 0, %v4739
        %v4741 = vrot.slane %v4635, %v4740
        %v4743 = vmul.f32 %v4736, %v4741
        %v4745 = vlaneseq
        %v4746 = vshrl.u32 %v4745, 7
        %v4747 = vsub.s32 0, %v4746
        %v4748 = vrot.slane %v4636, %v4747
        %v4750 = vadd.f32 %v4743, %v4748
        %v4752 = vlaneseq
        %v4753 = vshrl.u32 %v4752, 7
        %v4754 = vsub.s32 0, %v4753
        %v4755 = vrot.slane %v4641, %v4754
        %v4758 = vsel %vm2128, %v4750, 0
        %4760 = vmatprep.subr.mxu0 0.0
        %4761 = vmatpush1.msra.mxu0 %v4637
        %4762 = vmatprep.subr.mxu0 0.0
        %4763 = vmatpush1.msra.mxu0 %v4638
        %4764 = vmatprep.subr.mxu0 0.0
        %4765 = vmatpush1.msra.mxu0 %v4639
        %4766 = vmatprep.subr.mxu0 0.0
        %4767 = vmatpush1.msra.mxu0 %v4640
        %4768 = vmatprep.subr.mxu0 0.0
        %4769 = vmatpush1.msra.mxu0 0.0
        %4770 = vmatprep.subr.mxu0 0.0
        %4771 = vmatpush1.msra.mxu0 0.0
        %4772 = vmatprep.subr.mxu0 0.0
        %4773 = vmatpush1.msra.mxu0 0.0
        %4774 = vmatprep.subr.mxu0 0.0
        %4775 = vmatpush1.msra.mxu0 0.0
        %4776 = vmatprep.subr.mxu0 0.0
        %4777 = vmatpush1.msra.mxu0 0.0
        %4778 = vmatprep.subr.mxu0 0.0
        %4779 = vmatpush1.msra.mxu0 0.0
        %4780 = vmatprep.subr.mxu0 0.0
        %4781 = vmatpush1.msra.mxu0 0.0
        %4782 = vmatprep.subr.mxu0 0.0
        %4783 = vmatpush1.msra.mxu0 0.0
        %4784 = vmatprep.subr.mxu0 0.0
        %4785 = vmatpush1.msra.mxu0 0.0
        %4786 = vmatprep.subr.mxu0 0.0
        %4787 = vmatpush1.msra.mxu0 0.0
        %4788 = vmatprep.subr.mxu0 0.0
        %4789 = vmatpush1.msra.mxu0 0.0
        %4790 = vmatprep.subr.mxu0 0.0
        %4791 = vmatpush1.msra.mxu0 0.0
        %4792 = vmatprep.subr.mxu0 0.0
        %4793 = vmatpush1.msra.mxu0 0.0
        %4794 = vmatprep.subr.mxu0 0.0
        %4795 = vmatpush1.msra.mxu0 0.0
        %4796 = vmatprep.subr.mxu0 0.0
        %4797 = vmatpush1.msra.mxu0 0.0
        %4798 = vmatprep.subr.mxu0 0.0
        %4799 = vmatpush1.msra.mxu0 0.0
        %4800 = vmatprep.subr.mxu0 0.0
        %4801 = vmatpush1.msra.mxu0 0.0
        %4802 = vmatprep.subr.mxu0 0.0
        %4803 = vmatpush1.msra.mxu0 0.0
        %4804 = vmatprep.subr.mxu0 0.0
        %4805 = vmatpush1.msra.mxu0 0.0
        %4806 = vmatprep.subr.mxu0 0.0
        %4807 = vmatpush1.msra.mxu0 0.0
        %4808 = vmatprep.subr.mxu0 0.0
        %4809 = vmatpush1.msra.mxu0 0.0
        %4810 = vmatprep.subr.mxu0 0.0
        %4811 = vmatpush1.msra.mxu0 0.0
        %4812 = vmatprep.subr.mxu0 0.0
        %4813 = vmatpush1.msra.mxu0 0.0
        %4814 = vmatprep.subr.mxu0 0.0
        %4815 = vmatpush1.msra.mxu0 0.0
        %4816 = vmatprep.subr.mxu0 0.0
        %4817 = vmatpush1.msra.mxu0 0.0
        %4818 = vmatprep.subr.mxu0 0.0
        %4819 = vmatpush1.msra.mxu0 0.0
        %4820 = vmatprep.subr.mxu0 0.0
        %4821 = vmatpush1.msra.mxu0 0.0
        %4822 = vmatprep.subr.mxu0 0.0
        %4823 = vmatpush1.msra.mxu0 0.0
        %4824 = vmatprep.mubr.f32.mxu0 0.0
        %4825 = vmatmul.mubr.f32.gmra.mrb[0].mxu0 %v4758
        %v4826 = vpop.f32.mrb[0].mxu0
        %v4827 = vadd.f32 %v4755, %v4826
        %v4828 = vpop.f32.mrb[0].mxu0
        %4829 = vdwg.mxu0
        %v4830 = vadd.f32 %v4827, %v4629
        %v4831 = vsel %vm2128, %v4830, 0.0
        %4832 = vadd.xlane.f32.xlu0 %v4831
        %v4833 = vpop.xlane.xlu0 %4832
        %v4834 = vmul.f32 %v4833, %v3318
        %v4835 = vsub.f32 %v4830, %v4834
        %v4836 = vmul.f32 %v4835, %v4835
        %v4837 = vsel %vm2128, %v4836, 0.0
        %4838 = vadd.xlane.f32.xlu0 %v4837
        %v4839 = vpop.xlane.xlu0 %4838
        %v4840 = vmul.f32 %v4839, %v3318
        %v4841 = vadd.f32 %v4840, 1e-12
        %v4842 = vrsqrt.pop %v4841
        %v4843 = vmul.f32 %v4835, %v4842
        %v4845 = vlaneseq
        %v4846 = vshrl.u32 %v4845, 7
        %v4847 = vsub.s32 0, %v4846
        %v4848 = vrot.slane %v4642, %v4847
        %v4850 = vmul.f32 %v4843, %v4848
        %v4852 = vlaneseq
        %v4853 = vshrl.u32 %v4852, 7
        %v4854 = vsub.s32 0, %v4853
        %v4855 = vrot.slane %v4643, %v4854
        %v4857 = vadd.f32 %v4850, %v4855
        %v4858 = vld [vmem:[#allocation49] sm:$0xff]
        %v4859 = vld [vmem:[#allocation49 + $0x8] sm:$0xff]
        %v4860 = vld [vmem:[#allocation49 + $0x10] sm:$0xff]
        %v4861 = vld [vmem:[#allocation49 + $0x18] sm:$0xff]
        %v4862 = vld [vmem:[#allocation50] sm:$0x1]
        %v4863 = vld [vmem:[#allocation52] sm:$0xff]
        %v4864 = vld [vmem:[#allocation52 + $0x8] sm:$0xff]
        %v4865 = vld [vmem:[#allocation52 + $0x10] sm:$0xff]
        %v4866 = vld [vmem:[#allocation52 + $0x18] sm:$0xff]
        %v4867 = vld [vmem:[#allocation53] sm:$0x1]
        %v4868 = vld [vmem:[#allocation55] sm:$0xff]
        %v4869 = vld [vmem:[#allocation55 + $0x8] sm:$0xff]
        %v4870 = vld [vmem:[#allocation55 + $0x10] sm:$0xff]
        %v4871 = vld [vmem:[#allocation55 + $0x18] sm:$0xff]
        %v4872 = vld [vmem:[#allocation56] sm:$0x1]
        %v4873 = vld [vmem:[#allocation58] sm:$0xff]
        %v4874 = vld [vmem:[#allocation58 + $0x8] sm:$0xff]
        %v4875 = vld [vmem:[#allocation58 + $0x10] sm:$0xff]
        %v4876 = vld [vmem:[#allocation58 + $0x18] sm:$0xff]
        %v4877 = vld [vmem:[#allocation59] sm:$0x1]
        %v4878 = vld [vmem:[#allocation61] sm:$0x1]
        %v4879 = vld [vmem:[#allocation62] sm:$0x1]
        %v4881 = vlaneseq
        %v4882 = vshrl.u32 %v4881, 7
        %v4883 = vsub.s32 0, %v4882
        %v4884 = vrot.slane %v4862, %v4883
        %v4887 = vsel %vm2128, %v4857, 0
        %4889 = vmatprep.subr.mxu0 0.0
        %4890 = vmatpush1.msra.mxu0 %v4858
        %4891 = vmatprep.subr.mxu0 0.0
        %4892 = vmatpush1.msra.mxu0 %v4859
        %4893 = vmatprep.subr.mxu0 0.0
        %4894 = vmatpush1.msra.mxu0 %v4860
        %4895 = vmatprep.subr.mxu0 0.0
        %4896 = vmatpush1.msra.mxu0 %v4861
        %4897 = vmatprep.subr.mxu0 0.0
        %4898 = vmatpush1.msra.mxu0 0.0
        %4899 = vmatprep.subr.mxu0 0.0
        %4900 = vmatpush1.msra.mxu0 0.0
        %4901 = vmatprep.subr.mxu0 0.0
        %4902 = vmatpush1.msra.mxu0 0.0
        %4903 = vmatprep.subr.mxu0 0.0
        %4904 = vmatpush1.msra.mxu0 0.0
        %4905 = vmatprep.subr.mxu0 0.0
        %4906 = vmatpush1.msra.mxu0 0.0
        %4907 = vmatprep.subr.mxu0 0.0
        %4908 = vmatpush1.msra.mxu0 0.0
        %4909 = vmatprep.subr.mxu0 0.0
        %4910 = vmatpush1.msra.mxu0 0.0
        %4911 = vmatprep.subr.mxu0 0.0
        %4912 = vmatpush1.msra.mxu0 0.0
        %4913 = vmatprep.subr.mxu0 0.0
        %4914 = vmatpush1.msra.mxu0 0.0
        %4915 = vmatprep.subr.mxu0 0.0
        %4916 = vmatpush1.msra.mxu0 0.0
        %4917 = vmatprep.subr.mxu0 0.0
        %4918 = vmatpush1.msra.mxu0 0.0
        %4919 = vmatprep.subr.mxu0 0.0
        %4920 = vmatpush1.msra.mxu0 0.0
        %4921 = vmatprep.subr.mxu0 0.0
        %4922 = vmatpush1.msra.mxu0 0.0
        %4923 = vmatprep.subr.mxu0 0.0
        %4924 = vmatpush1.msra.mxu0 0.0
        %4925 = vmatprep.subr.mxu0 0.0
        %4926 = vmatpush1.msra.mxu0 0.0
        %4927 = vmatprep.subr.mxu0 0.0
        %4928 = vmatpush1.msra.mxu0 0.0
        %4929 = vmatprep.subr.mxu0 0.0
        %4930 = vmatpush1.msra.mxu0 0.0
        %4931 = vmatprep.subr.mxu0 0.0
        %4932 = vmatpush1.msra.mxu0 0.0
        %4933 = vmatprep.subr.mxu0 0.0
        %4934 = vmatpush1.msra.mxu0 0.0
        %4935 = vmatprep.subr.mxu0 0.0
        %4936 = vmatpush1.msra.mxu0 0.0
        %4937 = vmatprep.subr.mxu0 0.0
        %4938 = vmatpush1.msra.mxu0 0.0
        %4939 = vmatprep.subr.mxu0 0.0
        %4940 = vmatpush1.msra.mxu0 0.0
        %4941 = vmatprep.subr.mxu0 0.0
        %4942 = vmatpush1.msra.mxu0 0.0
        %4943 = vmatprep.subr.mxu0 0.0
        %4944 = vmatpush1.msra.mxu0 0.0
        %4945 = vmatprep.subr.mxu0 0.0
        %4946 = vmatpush1.msra.mxu0 0.0
        %4947 = vmatprep.subr.mxu0 0.0
        %4948 = vmatpush1.msra.mxu0 0.0
        %4949 = vmatprep.subr.mxu0 0.0
        %4950 = vmatpush1.msra.mxu0 0.0
        %4951 = vmatprep.subr.mxu0 0.0
        %4952 = vmatpush1.msra.mxu0 0.0
        %4953 = vmatprep.mubr.f32.mxu0 0.0
        %4954 = vmatmul.mubr.f32.gmra.mrb[0].mxu0 %v4887
        %v4955 = vpop.f32.mrb[0].mxu0
        %v4956 = vadd.f32 %v4884, %v4955
        %v4957 = vpop.f32.mrb[0].mxu0
        %4958 = vdwg.mxu0
        %v4959 = vmul.f32 %v4956, 0.35355338
        %v4961 = vlaneseq
        %v4962 = vshrl.u32 %v4961, 7
        %v4963 = vsub.s32 0, %v4962
        %v4964 = vrot.slane %v4867, %v4963
        %4966 = vmatprep.subr.mxu0 0.0
        %4967 = vmatpush1.msra.mxu0 %v4863
        %4968 = vmatprep.subr.mxu0 0.0
        %4969 = vmatpush1.msra.mxu0 %v4864
        %4970 = vmatprep.subr.mxu0 0.0
        %4971 = vmatpush1.msra.mxu0 %v4865
        %4972 = vmatprep.subr.mxu0 0.0
        %4973 = vmatpush1.msra.mxu0 %v4866
        %4974 = vmatprep.subr.mxu0 0.0
        %4975 = vmatpush1.msra.mxu0 0.0
        %4976 = vmatprep.subr.mxu0 0.0
        %4977 = vmatpush1.msra.mxu0 0.0
        %4978 = vmatprep.subr.mxu0 0.0
        %4979 = vmatpush1.msra.mxu0 0.0
        %4980 = vmatprep.subr.mxu0 0.0
        %4981 = vmatpush1.msra.mxu0 0.0
        %4982 = vmatprep.subr.mxu0 0.0
        %4983 = vmatpush1.msra.mxu0 0.0
        %4984 = vmatprep.subr.mxu0 0.0
        %4985 = vmatpush1.msra.mxu0 0.0
        %4986 = vmatprep.subr.mxu0 0.0
        %4987 = vmatpush1.msra.mxu0 0.0
        %4988 = vmatprep.subr.mxu0 0.0
        %4989 = vmatpush1.msra.mxu0 0.0
        %4990 = vmatprep.subr.mxu0 0.0
        %4991 = vmatpush1.msra.mxu0 0.0
        %4992 = vmatprep.subr.mxu0 0.0
        %4993 = vmatpush1.msra.mxu0 0.0
        %4994 = vmatprep.subr.mxu0 0.0
        %4995 = vmatpush1.msra.mxu0 0.0
        %4996 = vmatprep.subr.mxu0 0.0
        %4997 = vmatpush1.msra.mxu0 0.0
        %4998 = vmatprep.subr.mxu0 0.0
        %4999 = vmatpush1.msra.mxu0 0.0
        %5000 = vmatprep.subr.mxu0 0.0
        %5001 = vmatpush1.msra.mxu0 0.0
        %5002 = vmatprep.subr.mxu0 0.0
        %5003 = vmatpush1.msra.mxu0 0.0
        %5004 = vmatprep.subr.mxu0 0.0
        %5005 = vmatpush1.msra.mxu0 0.0
        %5006 = vmatprep.subr.mxu0 0.0
        %5007 = vmatpush1.msra.mxu0 0.0
        %5008 = vmatprep.subr.mxu0 0.0
        %5009 = vmatpush1.msra.mxu0 0.0
        %5010 = vmatprep.subr.mxu0 0.0
        %5011 = vmatpush1.msra.mxu0 0.0
        %5012 = vmatprep.subr.mxu0 0.0
        %5013 = vmatpush1.msra.mxu0 0.0
        %5014 = vmatprep.subr.mxu0 0.0
        %5015 = vmatpush1.msra.mxu0 0.0
        %5016 = vmatprep.subr.mxu0 0.0
        %5017 = vmatpush1.msra.mxu0 0.0
        %5018 = vmatprep.subr.mxu0 0.0
        %5019 = vmatpush1.msra.mxu0 0.0
        %5020 = vmatprep.subr.mxu0 0.0
        %5021 = vmatpush1.msra.mxu0 0.0
        %5022 = vmatprep.subr.mxu0 0.0
        %5023 = vmatpush1.msra.mxu0 0.0
        %5024 = vmatprep.subr.mxu0 0.0
        %5025 = vmatpush1.msra.mxu0 0.0
        %5026 = vmatprep.subr.mxu0 0.0
        %5027 = vmatpush1.msra.mxu0 0.0
        %5028 = vmatprep.subr.mxu0 0.0
        %5029 = vmatpush1.msra.mxu0 0.0
        %5030 = vmatprep.mubr.f32.mxu0 0.0
        %5031 = vmatmul.mubr.f32.gmra.mrb[0].mxu0 %v4887
        %v5032 = vpop.f32.mrb[0].mxu0
        %v5033 = vadd.f32 %v4964, %v5032
        %v5034 = vpop.f32.mrb[0].mxu0
        %5035 = vdwg.mxu0
        %v5037 = vlaneseq
        %v5038 = vshrl.u32 %v5037, 7
        %v5039 = vsub.s32 0, %v5038
        %v5040 = vrot.slane %v4872, %v5039
        %5042 = vmatprep.subr.mxu0 0.0
        %5043 = vmatpush1.msra.mxu0 %v4868
        %5044 = vmatprep.subr.mxu0 0.0
        %5045 = vmatpush1.msra.mxu0 %v4869
        %5046 = vmatprep.subr.mxu0 0.0
        %5047 = vmatpush1.msra.mxu0 %v4870
        %5048 = vmatprep.subr.mxu0 0.0
        %5049 = vmatpush1.msra.mxu0 %v4871
        %5050 = vmatprep.subr.mxu0 0.0
        %5051 = vmatpush1.msra.mxu0 0.0
        %5052 = vmatprep.subr.mxu0 0.0
        %5053 = vmatpush1.msra.mxu0 0.0
        %5054 = vmatprep.subr.mxu0 0.0
        %5055 = vmatpush1.msra.mxu0 0.0
        %5056 = vmatprep.subr.mxu0 0.0
        %5057 = vmatpush1.msra.mxu0 0.0
        %5058 = vmatprep.subr.mxu0 0.0
        %5059 = vmatpush1.msra.mxu0 0.0
        %5060 = vmatprep.subr.mxu0 0.0
        %5061 = vmatpush1.msra.mxu0 0.0
        %5062 = vmatprep.subr.mxu0 0.0
        %5063 = vmatpush1.msra.mxu0 0.0
        %5064 = vmatprep.subr.mxu0 0.0
        %5065 = vmatpush1.msra.mxu0 0.0
        %5066 = vmatprep.subr.mxu0 0.0
        %5067 = vmatpush1.msra.mxu0 0.0
        %5068 = vmatprep.subr.mxu0 0.0
        %5069 = vmatpush1.msra.mxu0 0.0
        %5070 = vmatprep.subr.mxu0 0.0
        %5071 = vmatpush1.msra.mxu0 0.0
        %5072 = vmatprep.subr.mxu0 0.0
        %5073 = vmatpush1.msra.mxu0 0.0
        %5074 = vmatprep.subr.mxu0 0.0
        %5075 = vmatpush1.msra.mxu0 0.0
        %5076 = vmatprep.subr.mxu0 0.0
        %5077 = vmatpush1.msra.mxu0 0.0
        %5078 = vmatprep.subr.mxu0 0.0
        %5079 = vmatpush1.msra.mxu0 0.0
        %5080 = vmatprep.subr.mxu0 0.0
        %5081 = vmatpush1.msra.mxu0 0.0
        %5082 = vmatprep.subr.mxu0 0.0
        %5083 = vmatpush1.msra.mxu0 0.0
        %5084 = vmatprep.subr.mxu0 0.0
        %5085 = vmatpush1.msra.mxu0 0.0
        %5086 = vmatprep.subr.mxu0 0.0
        %5087 = vmatpush1.msra.mxu0 0.0
        %5088 = vmatprep.subr.mxu0 0.0
        %5089 = vmatpush1.msra.mxu0 0.0
        %5090 = vmatprep.subr.mxu0 0.0
        %5091 = vmatpush1.msra.mxu0 0.0
        %5092 = vmatprep.subr.mxu0 0.0
        %5093 = vmatpush1.msra.mxu0 0.0
        %5094 = vmatprep.subr.mxu0 0.0
        %5095 = vmatpush1.msra.mxu0 0.0
        %5096 = vmatprep.subr.mxu0 0.0
        %5097 = vmatpush1.msra.mxu0 0.0
        %5098 = vmatprep.subr.mxu0 0.0
        %5099 = vmatpush1.msra.mxu0 0.0
        %5100 = vmatprep.subr.mxu0 0.0
        %5101 = vmatpush1.msra.mxu0 0.0
        %5102 = vmatprep.subr.mxu0 0.0
        %5103 = vmatpush1.msra.mxu0 0.0
        %5104 = vmatprep.subr.mxu0 0.0
        %5105 = vmatpush1.msra.mxu0 0.0
        %5106 = vmatprep.mubr.f32.mxu0 0.0
        %5107 = vmatmul.mubr.f32.gmra.mrb[0].mxu0 %v4887
        %v5108 = vpop.f32.mrb[0].mxu0
        %v5109 = vadd.f32 %v5040, %v5108
        %v5110 = vpop.f32.mrb[0].mxu0
        %5111 = vdwg.mxu0
        %v5113 = vlaneseq
        %v5114 = vshrl.u32 %v5113, 7
        %v5115 = vsub.s32 0, %v5114
        %v5116 = vrot.slane %v4877, %v5115
        %v5118 = vadd.f32 %v4857, %v5116
        %v5120 = vsel %vm2362, %v4959, 0
        %v5123 = vsel %vm2362, %v5033, 0
        %5125 = vmatprep.subr.mxu0 0.0
        %5126 = vmatpush1.xpose.msra.mxu0 %v5123
        %5127 = vmatprep.subr.mxu0 0.0
        %5128 = vmatpush1.xpose.msra.mxu0 0.0
        %5129 = vmatprep.subr.mxu0 0.0
        %5130 = vmatpush1.xpose.msra.mxu0 0.0
        %5131 = vmatprep.subr.mxu0 0.0
        %5132 = vmatpush1.xpose.msra.mxu0 0.0
        %5133 = vmatprep.subr.mxu0 0.0
        %5134 = vmatpush1.xpose.msra.mxu0 0.0
        %5135 = vmatprep.subr.mxu0 0.0
        %5136 = vmatpush1.xpose.msra.mxu0 0.0
        %5137 = vmatprep.subr.mxu0 0.0
        %5138 = vmatpush1.xpose.msra.mxu0 0.0
        %5139 = vmatprep.subr.mxu0 0.0
        %5140 = vmatpush1.xpose.msra.mxu0 0.0
        %5141 = vmatprep.subr.mxu0 0.0
        %5142 = vmatpush1.xpose.msra.mxu0 0.0
        %5143 = vmatprep.subr.mxu0 0.0
        %5144 = vmatpush1.xpose.msra.mxu0 0.0
        %5145 = vmatprep.subr.mxu0 0.0
        %5146 = vmatpush1.xpose.msra.mxu0 0.0
        %5147 = vmatprep.subr.mxu0 0.0
        %5148 = vmatpush1.xpose.msra.mxu0 0.0
        %5149 = vmatprep.subr.mxu0 0.0
        %5150 = vmatpush1.xpose.msra.mxu0 0.0
        %5151 = vmatprep.subr.mxu0 0.0
        %5152 = vmatpush1.xpose.msra.mxu0 0.0
        %5153 = vmatprep.subr.mxu0 0.0
        %5154 = vmatpush1.xpose.msra.mxu0 0.0
        %5155 = vmatprep.subr.mxu0 0.0
        %5156 = vmatpush1.xpose.msra.mxu0 0.0
        %5157 = vmatprep.subr.mxu0 0.0
        %5158 = vmatpush1.xpose.msra.mxu0 0.0
        %5159 = vmatprep.subr.mxu0 0.0
        %5160 = vmatpush1.xpose.msra.mxu0 0.0
        %5161 = vmatprep.subr.mxu0 0.0
        %5162 = vmatpush1.xpose.msra.mxu0 0.0
        %5163 = vmatprep.subr.mxu0 0.0
        %5164 = vmatpush1.xpose.msra.mxu0 0.0
        %5165 = vmatprep.subr.mxu0 0.0
        %5166 = vmatpush1.xpose.msra.mxu0 0.0
        %5167 = vmatprep.subr.mxu0 0.0
        %5168 = vmatpush1.xpose.msra.mxu0 0.0
        %5169 = vmatprep.subr.mxu0 0.0
        %5170 = vmatpush1.xpose.msra.mxu0 0.0
        %5171 = vmatprep.subr.mxu0 0.0
        %5172 = vmatpush1.xpose.msra.mxu0 0.0
        %5173 = vmatprep.subr.mxu0 0.0
        %5174 = vmatpush1.xpose.msra.mxu0 0.0
        %5175 = vmatprep.subr.mxu0 0.0
        %5176 = vmatpush1.xpose.msra.mxu0 0.0
        %5177 = vmatprep.subr.mxu0 0.0
        %5178 = vmatpush1.xpose.msra.mxu0 0.0
        %5179 = vmatprep.subr.mxu0 0.0
        %5180 = vmatpush1.xpose.msra.mxu0 0.0
        %5181 = vmatprep.subr.mxu0 0.0
        %5182 = vmatpush1.xpose.msra.mxu0 0.0
        %5183 = vmatprep.subr.mxu0 0.0
        %5184 = vmatpush1.xpose.msra.mxu0 0.0
        %5185 = vmatprep.subr.mxu0 0.0
        %5186 = vmatpush1.xpose.msra.mxu0 0.0
        %5187 = vmatprep.subr.mxu0 0.0
        %5188 = vmatpush1.xpose.msra.mxu0 0.0
        %5189 = vmatprep.mubr.f32.mxu0 0.0
        %5190 = vmatmul.mubr.f32.gmra.mrb[0].mxu0 %v5120
        %v5191 = vpop.f32.mrb[0].mxu0
        %v5192 = vadd.f32 0.0, %v5191
        %v5193 = vpop.f32.mrb[0].mxu0
        %5194 = vdwg.mxu0
        %v5195 = vsel %vm2362, %v5192, -inf
        %5196 = vmax.xlane.f32.xlu0 %v5195
        %v5197 = vpop.xlane.xlu0 %5196
        %v5198 = vsub.f32 %v5192, %v5197
        %v5199 = vmul.f32 %v5198, 1.442695
        %v5200 = vpow.pop %v5199
        %v5201 = vsel %vm2362, %v5200, 0.0
        %5202 = vadd.xlane.f32.xlu0 %v5201
        %v5203 = vpop.xlane.xlu0 %5202
        %v5204 = vrcp.pop %v5203
        %v5205 = vmul.f32 %v5200, %v5204
        %v5207 = vsel %vm2362, %v5205, 0
        %5209 = vmatprep.subr.mxu0 0.0
        %5210 = vmatpush1.msra.mxu0 %v5109
        %5211 = vmatprep.subr.mxu0 0.0
        %5212 = vmatpush1.msra.mxu0 0.0
        %5213 = vmatprep.subr.mxu0 0.0
        %5214 = vmatpush1.msra.mxu0 0.0
        %5215 = vmatprep.subr.mxu0 0.0
        %5216 = vmatpush1.msra.mxu0 0.0
        %5217 = vmatprep.subr.mxu0 0.0
        %5218 = vmatpush1.msra.mxu0 0.0
        %5219 = vmatprep.subr.mxu0 0.0
        %5220 = vmatpush1.msra.mxu0 0.0
        %5221 = vmatprep.subr.mxu0 0.0
        %5222 = vmatpush1.msra.mxu0 0.0
        %5223 = vmatprep.subr.mxu0 0.0
        %5224 = vmatpush1.msra.mxu0 0.0
        %5225 = vmatprep.subr.mxu0 0.0
        %5226 = vmatpush1.msra.mxu0 0.0
        %5227 = vmatprep.subr.mxu0 0.0
        %5228 = vmatpush1.msra.mxu0 0.0
        %5229 = vmatprep.subr.mxu0 0.0
        %5230 = vmatpush1.msra.mxu0 0.0
        %5231 = vmatprep.subr.mxu0 0.0
        %5232 = vmatpush1.msra.mxu0 0.0
        %5233 = vmatprep.subr.mxu0 0.0
        %5234 = vmatpush1.msra.mxu0 0.0
        %5235 = vmatprep.subr.mxu0 0.0
        %5236 = vmatpush1.msra.mxu0 0.0
        %5237 = vmatprep.subr.mxu0 0.0
        %5238 = vmatpush1.msra.mxu0 0.0
        %5239 = vmatprep.subr.mxu0 0.0
        %5240 = vmatpush1.msra.mxu0 0.0
        %5241 = vmatprep.subr.mxu0 0.0
        %5242 = vmatpush1.msra.mxu0 0.0
        %5243 = vmatprep.subr.mxu0 0.0
        %5244 = vmatpush1.msra.mxu0 0.0
        %5245 = vmatprep.subr.mxu0 0.0
        %5246 = vmatpush1.msra.mxu0 0.0
        %5247 = vmatprep.subr.mxu0 0.0
        %5248 = vmatpush1.msra.mxu0 0.0
        %5249 = vmatprep.subr.mxu0 0.0
        %5250 = vmatpush1.msra.mxu0 0.0
        %5251 = vmatprep.subr.mxu0 0.0
        %5252 = vmatpush1.msra.mxu0 0.0
        %5253 = vmatprep.subr.mxu0 0.0
        %5254 = vmatpush1.msra.mxu0 0.0
        %5255 = vmatprep.subr.mxu0 0.0
        %5256 = vmatpush1.msra.mxu0 0.0
        %5257 = vmatprep.subr.mxu0 0.0
        %5258 = vmatpush1.msra.mxu0 0.0
        %5259 = vmatprep.subr.mxu0 0.0
        %5260 = vmatpush1.msra.mxu0 0.0
        %5261 = vmatprep.subr.mxu0 0.0
        %5262 = vmatpush1.msra.mxu0 0.0
        %5263 = vmatprep.subr.mxu0 0.0
        %5264 = vmatpush1.msra.mxu0 0.0
        %5265 = vmatprep.subr.mxu0 0.0
        %5266 = vmatpush1.msra.mxu0 0.0
        %5267 = vmatprep.subr.mxu0 0.0
        %5268 = vmatpush1.msra.mxu0 0.0
        %5269 = vmatprep.subr.mxu0 0.0
        %5270 = vmatpush1.msra.mxu0 0.0
        %5271 = vmatprep.subr.mxu0 0.0
        %5272 = vmatpush1.msra.mxu0 0.0
        %5273 = vmatprep.mubr.f32.mxu0 0.0
        %5274 = vmatmul.mubr.f32.gmra.mrb[0].mxu0 %v5207
        %v5275 = vpop.f32.mrb[0].mxu0
        %v5276 = vadd.f32 0.0, %v5275
        %v5277 = vpop.f32.mrb[0].mxu0
        %5278 = vdwg.mxu0
        %v5280 = vsel %vm2362, %v5276, 0
        %5282 = vmatprep.subr.mxu0 0.0
        %5283 = vmatpush1.msra.mxu0 %v4873
        %5284 = vmatprep.subr.mxu0 0.0
        %5285 = vmatpush1.msra.mxu0 0.0
        %5286 = vmatprep.subr.mxu0 0.0
        %5287 = vmatpush1.msra.mxu0 0.0
        %5288 = vmatprep.subr.mxu0 0.0
        %5289 = vmatpush1.msra.mxu0 0.0
        %5290 = vmatprep.subr.mxu0 0.0
        %5291 = vmatpush1.msra.mxu0 0.0
        %5292 = vmatprep.subr.mxu0 0.0
        %5293 = vmatpush1.msra.mxu0 0.0
        %5294 = vmatprep.subr.mxu0 0.0
        %5295 = vmatpush1.msra.mxu0 0.0
        %5296 = vmatprep.subr.mxu0 0.0
        %5297 = vmatpush1.msra.mxu0 0.0
        %5298 = vmatprep.subr.mxu0 0.0
        %5299 = vmatpush1.msra.mxu0 0.0
        %5300 = vmatprep.subr.mxu0 0.0
        %5301 = vmatpush1.msra.mxu0 0.0
        %5302 = vmatprep.subr.mxu0 0.0
        %5303 = vmatpush1.msra.mxu0 0.0
        %5304 = vmatprep.subr.mxu0 0.0
        %5305 = vmatpush1.msra.mxu0 0.0
        %5306 = vmatprep.subr.mxu0 0.0
        %5307 = vmatpush1.msra.mxu0 0.0
        %5308 = vmatprep.subr.mxu0 0.0
        %5309 = vmatpush1.msra.mxu0 0.0
        %5310 = vmatprep.subr.mxu0 0.0
        %5311 = vmatpush1.msra.mxu0 0.0
        %5312 = vmatprep.subr.mxu0 0.0
        %5313 = vmatpush1.msra.mxu0 0.0
        %5314 = vmatprep.subr.mxu0 0.0
        %5315 = vmatpush1.msra.mxu0 0.0
        %5316 = vmatprep.subr.mxu0 0.0
        %5317 = vmatpush1.msra.mxu0 0.0
        %5318 = vmatprep.subr.mxu0 0.0
        %5319 = vmatpush1.msra.mxu0 0.0
        %5320 = vmatprep.subr.mxu0 0.0
        %5321 = vmatpush1.msra.mxu0 0.0
        %5322 = vmatprep.subr.mxu0 0.0
        %5323 = vmatpush1.msra.mxu0 0.0
        %5324 = vmatprep.subr.mxu0 0.0
        %5325 = vmatpush1.msra.mxu0 0.0
        %5326 = vmatprep.subr.mxu0 0.0
        %5327 = vmatpush1.msra.mxu0 0.0
        %5328 = vmatprep.subr.mxu0 0.0
        %5329 = vmatpush1.msra.mxu0 0.0
        %5330 = vmatprep.subr.mxu0 0.0
        %5331 = vmatpush1.msra.mxu0 0.0
        %5332 = vmatprep.subr.mxu0 0.0
        %5333 = vmatpush1.msra.mxu0 0.0
        %5334 = vmatprep.subr.mxu0 0.0
        %5335 = vmatpush1.msra.mxu0 0.0
        %5336 = vmatprep.subr.mxu0 0.0
        %5337 = vmatpush1.msra.mxu0 0.0
        %5338 = vmatprep.subr.mxu0 0.0
        %5339 = vmatpush1.msra.mxu0 0.0
        %5340 = vmatprep.subr.mxu0 0.0
        %5341 = vmatpush1.msra.mxu0 0.0
        %5342 = vmatprep.subr.mxu0 0.0
        %5343 = vmatpush1.msra.mxu0 0.0
        %5344 = vmatprep.subr.mxu0 0.0
        %5345 = vmatpush1.msra.mxu0 0.0
        %5346 = vmatprep.mubr.f32.mxu0 0.0
        %5347 = vmatmul.mubr.f32.gmra.mrb[0].mxu0 %v5280
        %v5348 = vpop.f32.mrb[0].mxu0
        %v5349 = vadd.f32 0.0, %v5348
        %v5350 = vpop.f32.mrb[0].mxu0
        %5351 = vdwg.mxu0
        %v5352 = vadd.f32 %v5118, %v5349
        %5353 = vrot.lane.b32.xlu0 %v4959, 120
        %v5354 = vpop.permute.xlu0 %5353
        %5355 = vrot.lane.b32.xlu0 %v5033, 120
        %v5356 = vpop.permute.xlu0 %5355
        %v5357 = vsel %vm2362, %v5354, 0
        %v5359 = vsel %vm2362, %v5356, 0
        %5361 = vmatprep.subr.mxu0 0.0
        %5362 = vmatpush1.xpose.msra.mxu0 %v5359
        %5363 = vmatprep.subr.mxu0 0.0
        %5364 = vmatpush1.xpose.msra.mxu0 0.0
        %5365 = vmatprep.subr.mxu0 0.0
        %5366 = vmatpush1.xpose.msra.mxu0 0.0
        %5367 = vmatprep.subr.mxu0 0.0
        %5368 = vmatpush1.xpose.msra.mxu0 0.0
        %5369 = vmatprep.subr.mxu0 0.0
        %5370 = vmatpush1.xpose.msra.mxu0 0.0
        %5371 = vmatprep.subr.mxu0 0.0
        %5372 = vmatpush1.xpose.msra.mxu0 0.0
        %5373 = vmatprep.subr.mxu0 0.0
        %5374 = vmatpush1.xpose.msra.mxu0 0.0
        %5375 = vmatprep.subr.mxu0 0.0
        %5376 = vmatpush1.xpose.msra.mxu0 0.0
        %5377 = vmatprep.subr.mxu0 0.0
        %5378 = vmatpush1.xpose.msra.mxu0 0.0
        %5379 = vmatprep.subr.mxu0 0.0
        %5380 = vmatpush1.xpose.msra.mxu0 0.0
        %5381 = vmatprep.subr.mxu0 0.0
        %5382 = vmatpush1.xpose.msra.mxu0 0.0
        %5383 = vmatprep.subr.mxu0 0.0
        %5384 = vmatpush1.xpose.msra.mxu0 0.0
        %5385 = vmatprep.subr.mxu0 0.0
        %5386 = vmatpush1.xpose.msra.mxu0 0.0
        %5387 = vmatprep.subr.mxu0 0.0
        %5388 = vmatpush1.xpose.msra.mxu0 0.0
        %5389 = vmatprep.subr.mxu0 0.0
        %5390 = vmatpush1.xpose.msra.mxu0 0.0
        %5391 = vmatprep.subr.mxu0 0.0
        %5392 = vmatpush1.xpose.msra.mxu0 0.0
        %5393 = vmatprep.subr.mxu0 0.0
        %5394 = vmatpush1.xpose.msra.mxu0 0.0
        %5395 = vmatprep.subr.mxu0 0.0
        %5396 = vmatpush1.xpose.msra.mxu0 0.0
        %5397 = vmatprep.subr.mxu0 0.0
        %5398 = vmatpush1.xpose.msra.mxu0 0.0
        %5399 = vmatprep.subr.mxu0 0.0
        %5400 = vmatpush1.xpose.msra.mxu0 0.0
        %5401 = vmatprep.subr.mxu0 0.0
        %5402 = vmatpush1.xpose.msra.mxu0 0.0
        %5403 = vmatprep.subr.mxu0 0.0
        %5404 = vmatpush1.xpose.msra.mxu0 0.0
        %5405 = vmatprep.subr.mxu0 0.0
        %5406 = vmatpush1.xpose.msra.mxu0 0.0
        %5407 = vmatprep.subr.mxu0 0.0
        %5408 = vmatpush1.xpose.msra.mxu0 0.0
        %5409 = vmatprep.subr.mxu0 0.0
        %5410 = vmatpush1.xpose.msra.mxu0 0.0
        %5411 = vmatprep.subr.mxu0 0.0
        %5412 = vmatpush1.xpose.msra.mxu0 0.0
        %5413 = vmatprep.subr.mxu0 0.0
        %5414 = vmatpush1.xpose.msra.mxu0 0.0
        %5415 = vmatprep.subr.mxu0 0.0
        %5416 = vmatpush1.xpose.msra.mxu0 0.0
        %5417 = vmatprep.subr.mxu0 0.0
        %5418 = vmatpush1.xpose.msra.mxu0 0.0
        %5419 = vmatprep.subr.mxu0 0.0
        %5420 = vmatpush1.xpose.msra.mxu0 0.0
        %5421 = vmatprep.subr.mxu0 0.0
        %5422 = vmatpush1.xpose.msra.mxu0 0.0
        %5423 = vmatprep.subr.mxu0 0.0
        %5424 = vmatpush1.xpose.msra.mxu0 0.0
        %5425 = vmatprep.mubr.f32.mxu0 0.0
        %5426 = vmatmul.mubr.f32.gmra.mrb[0].mxu0 %v5357
        %v5427 = vpop.f32.mrb[0].mxu0
        %v5428 = vadd.f32 0.0, %v5427
        %v5429 = vpop.f32.mrb[0].mxu0
        %5430 = vdwg.mxu0
        %v5431 = vsel %vm2362, %v5428, -inf
        %5432 = vmax.xlane.f32.xlu0 %v5431
        %v5433 = vpop.xlane.xlu0 %5432
        %v5434 = vsub.f32 %v5428, %v5433
        %v5435 = vmul.f32 %v5434, 1.442695
        %v5436 = vpow.pop %v5435
        %v5437 = vsel %vm2362, %v5436, 0.0
        %5438 = vadd.xlane.f32.xlu0 %v5437
        %v5439 = vpop.xlane.xlu0 %5438
        %v5440 = vrcp.pop %v5439
        %v5441 = vmul.f32 %v5436, %v5440
        %5443 = vrot.lane.b32.xlu0 %v5109, 120
        %v5444 = vpop.permute.xlu0 %5443
        %v5447 = vsel %vm2362, %v5441, 0
        %5449 = vmatprep.subr.mxu0 0.0
        %5450 = vmatpush1.msra.mxu0 %v5444
        %5451 = vmatprep.subr.mxu0 0.0
        %5452 = vmatpush1.msra.mxu0 0.0
        %5453 = vmatprep.subr.mxu0 0.0
        %5454 = vmatpush1.msra.mxu0 0.0
        %5455 = vmatprep.subr.mxu0 0.0
        %5456 = vmatpush1.msra.mxu0 0.0
        %5457 = vmatprep.subr.mxu0 0.0
        %5458 = vmatpush1.msra.mxu0 0.0
        %5459 = vmatprep.subr.mxu0 0.0
        %5460 = vmatpush1.msra.mxu0 0.0
        %5461 = vmatprep.subr.mxu0 0.0
        %5462 = vmatpush1.msra.mxu0 0.0
        %5463 = vmatprep.subr.mxu0 0.0
        %5464 = vmatpush1.msra.mxu0 0.0
        %5465 = vmatprep.subr.mxu0 0.0
        %5466 = vmatpush1.msra.mxu0 0.0
        %5467 = vmatprep.subr.mxu0 0.0
        %5468 = vmatpush1.msra.mxu0 0.0
        %5469 = vmatprep.subr.mxu0 0.0
        %5470 = vmatpush1.msra.mxu0 0.0
        %5471 = vmatprep.subr.mxu0 0.0
        %5472 = vmatpush1.msra.mxu0 0.0
        %5473 = vmatprep.subr.mxu0 0.0
        %5474 = vmatpush1.msra.mxu0 0.0
        %5475 = vmatprep.subr.mxu0 0.0
        %5476 = vmatpush1.msra.mxu0 0.0
        %5477 = vmatprep.subr.mxu0 0.0
        %5478 = vmatpush1.msra.mxu0 0.0
        %5479 = vmatprep.subr.mxu0 0.0
        %5480 = vmatpush1.msra.mxu0 0.0
        %5481 = vmatprep.subr.mxu0 0.0
        %5482 = vmatpush1.msra.mxu0 0.0
        %5483 = vmatprep.subr.mxu0 0.0
        %5484 = vmatpush1.msra.mxu0 0.0
        %5485 = vmatprep.subr.mxu0 0.0
        %5486 = vmatpush1.msra.mxu0 0.0
        %5487 = vmatprep.subr.mxu0 0.0
        %5488 = vmatpush1.msra.mxu0 0.0
        %5489 = vmatprep.subr.mxu0 0.0
        %5490 = vmatpush1.msra.mxu0 0.0
        %5491 = vmatprep.subr.mxu0 0.0
        %5492 = vmatpush1.msra.mxu0 0.0
        %5493 = vmatprep.subr.mxu0 0.0
        %5494 = vmatpush1.msra.mxu0 0.0
        %5495 = vmatprep.subr.mxu0 0.0
        %5496 = vmatpush1.msra.mxu0 0.0
        %5497 = vmatprep.subr.mxu0 0.0
        %5498 = vmatpush1.msra.mxu0 0.0
        %5499 = vmatprep.subr.mxu0 0.0
        %5500 = vmatpush1.msra.mxu0 0.0
        %5501 = vmatprep.subr.mxu0 0.0
        %5502 = vmatpush1.msra.mxu0 0.0
        %5503 = vmatprep.subr.mxu0 0.0
        %5504 = vmatpush1.msra.mxu0 0.0
        %5505 = vmatprep.subr.mxu0 0.0
        %5506 = vmatpush1.msra.mxu0 0.0
        %5507 = vmatprep.subr.mxu0 0.0
        %5508 = vmatpush1.msra.mxu0 0.0
        %5509 = vmatprep.subr.mxu0 0.0
        %5510 = vmatpush1.msra.mxu0 0.0
        %5511 = vmatprep.subr.mxu0 0.0
        %5512 = vmatpush1.msra.mxu0 0.0
        %5513 = vmatprep.mubr.f32.mxu0 0.0
        %5514 = vmatmul.mubr.f32.gmra.mrb[0].mxu0 %v5447
        %v5515 = vpop.f32.mrb[0].mxu0
        %v5516 = vadd.f32 0.0, %v5515
        %v5517 = vpop.f32.mrb[0].mxu0
        %5518 = vdwg.mxu0
        %v5520 = vsel %vm2362, %v5516, 0
        %5522 = vmatprep.subr.mxu0 0.0
        %5523 = vmatpush1.msra.mxu0 %v4874
        %5524 = vmatprep.subr.mxu0 0.0
        %5525 = vmatpush1.msra.mxu0 0.0
        %5526 = vmatprep.subr.mxu0 0.0
        %5527 = vmatpush1.msra.mxu0 0.0
        %5528 = vmatprep.subr.mxu0 0.0
        %5529 = vmatpush1.msra.mxu0 0.0
        %5530 = vmatprep.subr.mxu0 0.0
        %5531 = vmatpush1.msra.mxu0 0.0
        %5532 = vmatprep.subr.mxu0 0.0
        %5533 = vmatpush1.msra.mxu0 0.0
        %5534 = vmatprep.subr.mxu0 0.0
        %5535 = vmatpush1.msra.mxu0 0.0
        %5536 = vmatprep.subr.mxu0 0.0
        %5537 = vmatpush1.msra.mxu0 0.0
        %5538 = vmatprep.subr.mxu0 0.0
        %5539 = vmatpush1.msra.mxu0 0.0
        %5540 = vmatprep.subr.mxu0 0.0
        %5541 = vmatpush1.msra.mxu0 0.0
        %5542 = vmatprep.subr.mxu0 0.0
        %5543 = vmatpush1.msra.mxu0 0.0
        %5544 = vmatprep.subr.mxu0 0.0
        %5545 = vmatpush1.msra.mxu0 0.0
        %5546 = vmatprep.subr.mxu0 0.0
        %5547 = vmatpush1.msra.mxu0 0.0
        %5548 = vmatprep.subr.mxu0 0.0
        %5549 = vmatpush1.msra.mxu0 0.0
        %5550 = vmatprep.subr.mxu0 0.0
        %5551 = vmatpush1.msra.mxu0 0.0
        %5552 = vmatprep.subr.mxu0 0.0
        %5553 = vmatpush1.msra.mxu0 0.0
        %5554 = vmatprep.subr.mxu0 0.0
        %5555 = vmatpush1.msra.mxu0 0.0
        %5556 = vmatprep.subr.mxu0 0.0
        %5557 = vmatpush1.msra.mxu0 0.0
        %5558 = vmatprep.subr.mxu0 0.0
        %5559 = vmatpush1.msra.mxu0 0.0
        %5560 = vmatprep.subr.mxu0 0.0
        %5561 = vmatpush1.msra.mxu0 0.0
        %5562 = vmatprep.subr.mxu0 0.0
        %5563 = vmatpush1.msra.mxu0 0.0
        %5564 = vmatprep.subr.mxu0 0.0
        %5565 = vmatpush1.msra.mxu0 0.0
        %5566 = vmatprep.subr.mxu0 0.0
        %5567 = vmatpush1.msra.mxu0 0.0
        %5568 = vmatprep.subr.mxu0 0.0
        %5569 = vmatpush1.msra.mxu0 0.0
        %5570 = vmatprep.subr.mxu0 0.0
        %5571 = vmatpush1.msra.mxu0 0.0
        %5572 = vmatprep.subr.mxu0 0.0
        %5573 = vmatpush1.msra.mxu0 0.0
        %5574 = vmatprep.subr.mxu0 0.0
        %5575 = vmatpush1.msra.mxu0 0.0
        %5576 = vmatprep.subr.mxu0 0.0
        %5577 = vmatpush1.msra.mxu0 0.0
        %5578 = vmatprep.subr.mxu0 0.0
        %5579 = vmatpush1.msra.mxu0 0.0
        %5580 = vmatprep.subr.mxu0 0.0
        %5581 = vmatpush1.msra.mxu0 0.0
        %5582 = vmatprep.subr.mxu0 0.0
        %5583 = vmatpush1.msra.mxu0 0.0
        %5584 = vmatprep.subr.mxu0 0.0
        %5585 = vmatpush1.msra.mxu0 0.0
        %5586 = vmatprep.mubr.f32.mxu0 0.0
        %5587 = vmatmul.mubr.f32.gmra.mrb[0].mxu0 %v5520
        %v5588 = vpop.f32.mrb[0].mxu0
        %v5589 = vadd.f32 0.0, %v5588
        %v5590 = vpop.f32.mrb[0].mxu0
        %5591 = vdwg.mxu0
        %v5592 = vadd.f32 %v5352, %v5589
        %5593 = vrot.lane.b32.xlu0 %v4959, 112
        %v5594 = vpop.permute.xlu0 %5593
        %5595 = vrot.lane.b32.xlu0 %v5033, 112
        %v5596 = vpop.permute.xlu0 %5595
        %v5597 = vsel %vm2362, %v5594, 0
        %v5599 = vsel %vm2362, %v5596, 0
        %5601 = vmatprep.subr.mxu0 0.0
        %5602 = vmatpush1.xpose.msra.mxu0 %v5599
        %5603 = vmatprep.subr.mxu0 0.0
        %5604 = vmatpush1.xpose.msra.mxu0 0.0
        %5605 = vmatprep.subr.mxu0 0.0
        %5606 = vmatpush1.xpose.msra.mxu0 0.0
        %5607 = vmatprep.subr.mxu0 0.0
        %5608 = vmatpush1.xpose.msra.mxu0 0.0
        %5609 = vmatprep.subr.mxu0 0.0
        %5610 = vmatpush1.xpose.msra.mxu0 0.0
        %5611 = vmatprep.subr.mxu0 0.0
        %5612 = vmatpush1.xpose.msra.mxu0 0.0
        %5613 = vmatprep.subr.mxu0 0.0
        %5614 = vmatpush1.xpose.msra.mxu0 0.0
        %5615 = vmatprep.subr.mxu0 0.0
        %5616 = vmatpush1.xpose.msra.mxu0 0.0
        %5617 = vmatprep.subr.mxu0 0.0
        %5618 = vmatpush1.xpose.msra.mxu0 0.0
        %5619 = vmatprep.subr.mxu0 0.0
        %5620 = vmatpush1.xpose.msra.mxu0 0.0
        %5621 = vmatprep.subr.mxu0 0.0
        %5622 = vmatpush1.xpose.msra.mxu0 0.0
        %5623 = vmatprep.subr.mxu0 0.0
        %5624 = vmatpush1.xpose.msra.mxu0 0.0
        %5625 = vmatprep.subr.mxu0 0.0
        %5626 = vmatpush1.xpose.msra.mxu0 0.0
        %5627 = vmatprep.subr.mxu0 0.0
        %5628 = vmatpush1.xpose.msra.mxu0 0.0
        %5629 = vmatprep.subr.mxu0 0.0
        %5630 = vmatpush1.xpose.msra.mxu0 0.0
        %5631 = vmatprep.subr.mxu0 0.0
        %5632 = vmatpush1.xpose.msra.mxu0 0.0
        %5633 = vmatprep.subr.mxu0 0.0
        %5634 = vmatpush1.xpose.msra.mxu0 0.0
        %5635 = vmatprep.subr.mxu0 0.0
        %5636 = vmatpush1.xpose.msra.mxu0 0.0
        %5637 = vmatprep.subr.mxu0 0.0
        %5638 = vmatpush1.xpose.msra.mxu0 0.0
        %5639 = vmatprep.subr.mxu0 0.0
        %5640 = vmatpush1.xpose.msra.mxu0 0.0
        %5641 = vmatprep.subr.mxu0 0.0
        %5642 = vmatpush1.xpose.msra.mxu0 0.0
        %5643 = vmatprep.subr.mxu0 0.0
        %5644 = vmatpush1.xpose.msra.mxu0 0.0
        %5645 = vmatprep.subr.mxu0 0.0
        %5646 = vmatpush1.xpose.msra.mxu0 0.0
        %5647 = vmatprep.subr.mxu0 0.0
        %5648 = vmatpush1.xpose.msra.mxu0 0.0
        %5649 = vmatprep.subr.mxu0 0.0
        %5650 = vmatpush1.xpose.msra.mxu0 0.0
        %5651 = vmatprep.subr.mxu0 0.0
        %5652 = vmatpush1.xpose.msra.mxu0 0.0
        %5653 = vmatprep.subr.mxu0 0.0
        %5654 = vmatpush1.xpose.msra.mxu0 0.0
        %5655 = vmatprep.subr.mxu0 0.0
        %5656 = vmatpush1.xpose.msra.mxu0 0.0
        %5657 = vmatprep.subr.mxu0 0.0
        %5658 = vmatpush1.xpose.msra.mxu0 0.0
        %5659 = vmatprep.subr.mxu0 0.0
        %5660 = vmatpush1.xpose.msra.mxu0 0.0
        %5661 = vmatprep.subr.mxu0 0.0
        %5662 = vmatpush1.xpose.msra.mxu0 0.0
        %5663 = vmatprep.subr.mxu0 0.0
        %5664 = vmatpush1.xpose.msra.mxu0 0.0
        %5665 = vmatprep.mubr.f32.mxu0 0.0
        %5666 = vmatmul.mubr.f32.gmra.mrb[0].mxu0 %v5597
        %v5667 = vpop.f32.mrb[0].mxu0
        %v5668 = vadd.f32 0.0, %v5667
        %v5669 = vpop.f32.mrb[0].mxu0
        %5670 = vdwg.mxu0
        %v5671 = vsel %vm2362, %v5668, -inf
        %5672 = vmax.xlane.f32.xlu0 %v5671
        %v5673 = vpop.xlane.xlu0 %5672
        %v5674 = vsub.f32 %v5668, %v5673
        %v5675 = vmul.f32 %v5674, 1.442695
        %v5676 = vpow.pop %v5675
        %v5677 = vsel %vm2362, %v5676, 0.0
        %5678 = vadd.xlane.f32.xlu0 %v5677
        %v5679 = vpop.xlane.xlu0 %5678
        %v5680 = vrcp.pop %v5679
        %v5681 = vmul.f32 %v5676, %v5680
        %5682 = vrot.lane.b32.xlu0 %v5109, 112
        %v5683 = vpop.permute.xlu0 %5682
        %v5686 = vsel %vm2362, %v5681, 0
        %5688 = vmatprep.subr.mxu0 0.0
        %5689 = vmatpush1.msra.mxu0 %v5683
        %5690 = vmatprep.subr.mxu0 0.0
        %5691 = vmatpush1.msra.mxu0 0.0
        %5692 = vmatprep.subr.mxu0 0.0
        %5693 = vmatpush1.msra.mxu0 0.0
        %5694 = vmatprep.subr.mxu0 0.0
        %5695 = vmatpush1.msra.mxu0 0.0
        %5696 = vmatprep.subr.mxu0 0.0
        %5697 = vmatpush1.msra.mxu0 0.0
        %5698 = vmatprep.subr.mxu0 0.0
        %5699 = vmatpush1.msra.mxu0 0.0
        %5700 = vmatprep.subr.mxu0 0.0
        %5701 = vmatpush1.msra.mxu0 0.0
        %5702 = vmatprep.subr.mxu0 0.0
        %5703 = vmatpush1.msra.mxu0 0.0
        %5704 = vmatprep.subr.mxu0 0.0
        %5705 = vmatpush1.msra.mxu0 0.0
        %5706 = vmatprep.subr.mxu0 0.0
        %5707 = vmatpush1.msra.mxu0 0.0
        %5708 = vmatprep.subr.mxu0 0.0
        %5709 = vmatpush1.msra.mxu0 0.0
        %5710 = vmatprep.subr.mxu0 0.0
        %5711 = vmatpush1.msra.mxu0 0.0
        %5712 = vmatprep.subr.mxu0 0.0
        %5713 = vmatpush1.msra.mxu0 0.0
        %5714 = vmatprep.subr.mxu0 0.0
        %5715 = vmatpush1.msra.mxu0 0.0
        %5716 = vmatprep.subr.mxu0 0.0
        %5717 = vmatpush1.msra.mxu0 0.0
        %5718 = vmatprep.subr.mxu0 0.0
        %5719 = vmatpush1.msra.mxu0 0.0
        %5720 = vmatprep.subr.mxu0 0.0
        %5721 = vmatpush1.msra.mxu0 0.0
        %5722 = vmatprep.subr.mxu0 0.0
        %5723 = vmatpush1.msra.mxu0 0.0
        %5724 = vmatprep.subr.mxu0 0.0
        %5725 = vmatpush1.msra.mxu0 0.0
        %5726 = vmatprep.subr.mxu0 0.0
        %5727 = vmatpush1.msra.mxu0 0.0
        %5728 = vmatprep.subr.mxu0 0.0
        %5729 = vmatpush1.msra.mxu0 0.0
        %5730 = vmatprep.subr.mxu0 0.0
        %5731 = vmatpush1.msra.mxu0 0.0
        %5732 = vmatprep.subr.mxu0 0.0
        %5733 = vmatpush1.msra.mxu0 0.0
        %5734 = vmatprep.subr.mxu0 0.0
        %5735 = vmatpush1.msra.mxu0 0.0
        %5736 = vmatprep.subr.mxu0 0.0
        %5737 = vmatpush1.msra.mxu0 0.0
        %5738 = vmatprep.subr.mxu0 0.0
        %5739 = vmatpush1.msra.mxu0 0.0
        %5740 = vmatprep.subr.mxu0 0.0
        %5741 = vmatpush1.msra.mxu0 0.0
        %5742 = vmatprep.subr.mxu0 0.0
        %5743 = vmatpush1.msra.mxu0 0.0
        %5744 = vmatprep.subr.mxu0 0.0
        %5745 = vmatpush1.msra.mxu0 0.0
        %5746 = vmatprep.subr.mxu0 0.0
        %5747 = vmatpush1.msra.mxu0 0.0
        %5748 = vmatprep.subr.mxu0 0.0
        %5749 = vmatpush1.msra.mxu0 0.0
        %5750 = vmatprep.subr.mxu0 0.0
        %5751 = vmatpush1.msra.mxu0 0.0
        %5752 = vmatprep.mubr.f32.mxu0 0.0
        %5753 = vmatmul.mubr.f32.gmra.mrb[0].mxu0 %v5686
        %v5754 = vpop.f32.mrb[0].mxu0
        %v5755 = vadd.f32 0.0, %v5754
        %v5756 = vpop.f32.mrb[0].mxu0
        %5757 = vdwg.mxu0
        %v5759 = vsel %vm2362, %v5755, 0
        %5761 = vmatprep.subr.mxu0 0.0
        %5762 = vmatpush1.msra.mxu0 %v4875
        %5763 = vmatprep.subr.mxu0 0.0
        %5764 = vmatpush1.msra.mxu0 0.0
        %5765 = vmatprep.subr.mxu0 0.0
        %5766 = vmatpush1.msra.mxu0 0.0
        %5767 = vmatprep.subr.mxu0 0.0
        %5768 = vmatpush1.msra.mxu0 0.0
        %5769 = vmatprep.subr.mxu0 0.0
        %5770 = vmatpush1.msra.mxu0 0.0
        %5771 = vmatprep.subr.mxu0 0.0
        %5772 = vmatpush1.msra.mxu0 0.0
        %5773 = vmatprep.subr.mxu0 0.0
        %5774 = vmatpush1.msra.mxu0 0.0
        %5775 = vmatprep.subr.mxu0 0.0
        %5776 = vmatpush1.msra.mxu0 0.0
        %5777 = vmatprep.subr.mxu0 0.0
        %5778 = vmatpush1.msra.mxu0 0.0
        %5779 = vmatprep.subr.mxu0 0.0
        %5780 = vmatpush1.msra.mxu0 0.0
        %5781 = vmatprep.subr.mxu0 0.0
        %5782 = vmatpush1.msra.mxu0 0.0
        %5783 = vmatprep.subr.mxu0 0.0
        %5784 = vmatpush1.msra.mxu0 0.0
        %5785 = vmatprep.subr.mxu0 0.0
        %5786 = vmatpush1.msra.mxu0 0.0
        %5787 = vmatprep.subr.mxu0 0.0
        %5788 = vmatpush1.msra.mxu0 0.0
        %5789 = vmatprep.subr.mxu0 0.0
        %5790 = vmatpush1.msra.mxu0 0.0
        %5791 = vmatprep.subr.mxu0 0.0
        %5792 = vmatpush1.msra.mxu0 0.0
        %5793 = vmatprep.subr.mxu0 0.0
        %5794 = vmatpush1.msra.mxu0 0.0
        %5795 = vmatprep.subr.mxu0 0.0
        %5796 = vmatpush1.msra.mxu0 0.0
        %5797 = vmatprep.subr.mxu0 0.0
        %5798 = vmatpush1.msra.mxu0 0.0
        %5799 = vmatprep.subr.mxu0 0.0
        %5800 = vmatpush1.msra.mxu0 0.0
        %5801 = vmatprep.subr.mxu0 0.0
        %5802 = vmatpush1.msra.mxu0 0.0
        %5803 = vmatprep.subr.mxu0 0.0
        %5804 = vmatpush1.msra.mxu0 0.0
        %5805 = vmatprep.subr.mxu0 0.0
        %5806 = vmatpush1.msra.mxu0 0.0
        %5807 = vmatprep.subr.mxu0 0.0
        %5808 = vmatpush1.msra.mxu0 0.0
        %5809 = vmatprep.subr.mxu0 0.0
        %5810 = vmatpush1.msra.mxu0 0.0
        %5811 = vmatprep.subr.mxu0 0.0
        %5812 = vmatpush1.msra.mxu0 0.0
        %5813 = vmatprep.subr.mxu0 0.0
        %5814 = vmatpush1.msra.mxu0 0.0
        %5815 = vmatprep.subr.mxu0 0.0
        %5816 = vmatpush1.msra.mxu0 0.0
        %5817 = vmatprep.subr.mxu0 0.0
        %5818 = vmatpush1.msra.mxu0 0.0
        %5819 = vmatprep.subr.mxu0 0.0
        %5820 = vmatpush1.msra.mxu0 0.0
        %5821 = vmatprep.subr.mxu0 0.0
        %5822 = vmatpush1.msra.mxu0 0.0
        %5823 = vmatprep.subr.mxu0 0.0
        %5824 = vmatpush1.msra.mxu0 0.0
        %5825 = vmatprep.mubr.f32.mxu0 0.0
        %5826 = vmatmul.mubr.f32.gmra.mrb[0].mxu0 %v5759
        %v5827 = vpop.f32.mrb[0].mxu0
        %v5828 = vadd.f32 0.0, %v5827
        %v5829 = vpop.f32.mrb[0].mxu0
        %5830 = vdwg.mxu0
        %v5831 = vadd.f32 %v5592, %v5828
        %5832 = vrot.lane.b32.xlu0 %v4959, 104
        %v5833 = vpop.permute.xlu0 %5832
        %5834 = vrot.lane.b32.xlu0 %v5033, 104
        %v5835 = vpop.permute.xlu0 %5834
        %v5836 = vsel %vm2362, %v5833, 0
        %v5838 = vsel %vm2362, %v5835, 0
        %5840 = vmatprep.subr.mxu0 0.0
        %5841 = vmatpush1.xpose.msra.mxu0 %v5838
        %5842 = vmatprep.subr.mxu0 0.0
        %5843 = vmatpush1.xpose.msra.mxu0 0.0
        %5844 = vmatprep.subr.mxu0 0.0
        %5845 = vmatpush1.xpose.msra.mxu0 0.0
        %5846 = vmatprep.subr.mxu0 0.0
        %5847 = vmatpush1.xpose.msra.mxu0 0.0
        %5848 = vmatprep.subr.mxu0 0.0
        %5849 = vmatpush1.xpose.msra.mxu0 0.0
        %5850 = vmatprep.subr.mxu0 0.0
        %5851 = vmatpush1.xpose.msra.mxu0 0.0
        %5852 = vmatprep.subr.mxu0 0.0
        %5853 = vmatpush1.xpose.msra.mxu0 0.0
        %5854 = vmatprep.subr.mxu0 0.0
        %5855 = vmatpush1.xpose.msra.mxu0 0.0
        %5856 = vmatprep.subr.mxu0 0.0
        %5857 = vmatpush1.xpose.msra.mxu0 0.0
        %5858 = vmatprep.subr.mxu0 0.0
        %5859 = vmatpush1.xpose.msra.mxu0 0.0
        %5860 = vmatprep.subr.mxu0 0.0
        %5861 = vmatpush1.xpose.msra.mxu0 0.0
        %5862 = vmatprep.subr.mxu0 0.0
        %5863 = vmatpush1.xpose.msra.mxu0 0.0
        %5864 = vmatprep.subr.mxu0 0.0
        %5865 = vmatpush1.xpose.msra.mxu0 0.0
        %5866 = vmatprep.subr.mxu0 0.0
        %5867 = vmatpush1.xpose.msra.mxu0 0.0
        %5868 = vmatprep.subr.mxu0 0.0
        %5869 = vmatpush1.xpose.msra.mxu0 0.0
        %5870 = vmatprep.subr.mxu0 0.0
        %5871 = vmatpush1.xpose.msra.mxu0 0.0
        %5872 = vmatprep.subr.mxu0 0.0
        %5873 = vmatpush1.xpose.msra.mxu0 0.0
        %5874 = vmatprep.subr.mxu0 0.0
        %5875 = vmatpush1.xpose.msra.mxu0 0.0
        %5876 = vmatprep.subr.mxu0 0.0
        %5877 = vmatpush1.xpose.msra.mxu0 0.0
        %5878 = vmatprep.subr.mxu0 0.0
        %5879 = vmatpush1.xpose.msra.mxu0 0.0
        %5880 = vmatprep.subr.mxu0 0.0
        %5881 = vmatpush1.xpose.msra.mxu0 0.0
        %5882 = vmatprep.subr.mxu0 0.0
        %5883 = vmatpush1.xpose.msra.mxu0 0.0
        %5884 = vmatprep.subr.mxu0 0.0
        %5885 = vmatpush1.xpose.msra.mxu0 0.0
        %5886 = vmatprep.subr.mxu0 0.0
        %5887 = vmatpush1.xpose.msra.mxu0 0.0
        %5888 = vmatprep.subr.mxu0 0.0
        %5889 = vmatpush1.xpose.msra.mxu0 0.0
        %5890 = vmatprep.subr.mxu0 0.0
        %5891 = vmatpush1.xpose.msra.mxu0 0.0
        %5892 = vmatprep.subr.mxu0 0.0
        %5893 = vmatpush1.xpose.msra.mxu0 0.0
        %5894 = vmatprep.subr.mxu0 0.0
        %5895 = vmatpush1.xpose.msra.mxu0 0.0
        %5896 = vmatprep.subr.mxu0 0.0
        %5897 = vmatpush1.xpose.msra.mxu0 0.0
        %5898 = vmatprep.subr.mxu0 0.0
        %5899 = vmatpush1.xpose.msra.mxu0 0.0
        %5900 = vmatprep.subr.mxu0 0.0
        %5901 = vmatpush1.xpose.msra.mxu0 0.0
        %5902 = vmatprep.subr.mxu0 0.0
        %5903 = vmatpush1.xpose.msra.mxu0 0.0
        %5904 = vmatprep.mubr.f32.mxu0 0.0
        %5905 = vmatmul.mubr.f32.gmra.mrb[0].mxu0 %v5836
        %v5906 = vpop.f32.mrb[0].mxu0
        %v5907 = vadd.f32 0.0, %v5906
        %v5908 = vpop.f32.mrb[0].mxu0
        %5909 = vdwg.mxu0
        %v5910 = vsel %vm2362, %v5907, -inf
        %5911 = vmax.xlane.f32.xlu0 %v5910
        %v5912 = vpop.xlane.xlu0 %5911
        %v5913 = vsub.f32 %v5907, %v5912
        %v5914 = vmul.f32 %v5913, 1.442695
        %v5915 = vpow.pop %v5914
        %v5916 = vsel %vm2362, %v5915, 0.0
        %5917 = vadd.xlane.f32.xlu0 %v5916
        %v5918 = vpop.xlane.xlu0 %5917
        %v5919 = vrcp.pop %v5918
        %v5920 = vmul.f32 %v5915, %v5919
        %5921 = vrot.lane.b32.xlu0 %v5109, 104
        %v5922 = vpop.permute.xlu0 %5921
        %v5925 = vsel %vm2362, %v5920, 0
        %5927 = vmatprep.subr.mxu0 0.0
        %5928 = vmatpush1.msra.mxu0 %v5922
        %5929 = vmatprep.subr.mxu0 0.0
        %5930 = vmatpush1.msra.mxu0 0.0
        %5931 = vmatprep.subr.mxu0 0.0
        %5932 = vmatpush1.msra.mxu0 0.0
        %5933 = vmatprep.subr.mxu0 0.0
        %5934 = vmatpush1.msra.mxu0 0.0
        %5935 = vmatprep.subr.mxu0 0.0
        %5936 = vmatpush1.msra.mxu0 0.0
        %5937 = vmatprep.subr.mxu0 0.0
        %5938 = vmatpush1.msra.mxu0 0.0
        %5939 = vmatprep.subr.mxu0 0.0
        %5940 = vmatpush1.msra.mxu0 0.0
        %5941 = vmatprep.subr.mxu0 0.0
        %5942 = vmatpush1.msra.mxu0 0.0
        %5943 = vmatprep.subr.mxu0 0.0
        %5944 = vmatpush1.msra.mxu0 0.0
        %5945 = vmatprep.subr.mxu0 0.0
        %5946 = vmatpush1.msra.mxu0 0.0
        %5947 = vmatprep.subr.mxu0 0.0
        %5948 = vmatpush1.msra.mxu0 0.0
        %5949 = vmatprep.subr.mxu0 0.0
        %5950 = vmatpush1.msra.mxu0 0.0
        %5951 = vmatprep.subr.mxu0 0.0
        %5952 = vmatpush1.msra.mxu0 0.0
        %5953 = vmatprep.subr.mxu0 0.0
        %5954 = vmatpush1.msra.mxu0 0.0
        %5955 = vmatprep.subr.mxu0 0.0
        %5956 = vmatpush1.msra.mxu0 0.0
        %5957 = vmatprep.subr.mxu0 0.0
        %5958 = vmatpush1.msra.mxu0 0.0
        %5959 = vmatprep.subr.mxu0 0.0
        %5960 = vmatpush1.msra.mxu0 0.0
        %5961 = vmatprep.subr.mxu0 0.0
        %5962 = vmatpush1.msra.mxu0 0.0
        %5963 = vmatprep.subr.mxu0 0.0
        %5964 = vmatpush1.msra.mxu0 0.0
        %5965 = vmatprep.subr.mxu0 0.0
        %5966 = vmatpush1.msra.mxu0 0.0
        %5967 = vmatprep.subr.mxu0 0.0
        %5968 = vmatpush1.msra.mxu0 0.0
        %5969 = vmatprep.subr.mxu0 0.0
        %5970 = vmatpush1.msra.mxu0 0.0
        %5971 = vmatprep.subr.mxu0 0.0
        %5972 = vmatpush1.msra.mxu0 0.0
        %5973 = vmatprep.subr.mxu0 0.0
        %5974 = vmatpush1.msra.mxu0 0.0
        %5975 = vmatprep.subr.mxu0 0.0
        %5976 = vmatpush1.msra.mxu0 0.0
        %5977 = vmatprep.subr.mxu0 0.0
        %5978 = vmatpush1.msra.mxu0 0.0
        %5979 = vmatprep.subr.mxu0 0.0
        %5980 = vmatpush1.msra.mxu0 0.0
        %5981 = vmatprep.subr.mxu0 0.0
        %5982 = vmatpush1.msra.mxu0 0.0
        %5983 = vmatprep.subr.mxu0 0.0
        %5984 = vmatpush1.msra.mxu0 0.0
        %5985 = vmatprep.subr.mxu0 0.0
        %5986 = vmatpush1.msra.mxu0 0.0
        %5987 = vmatprep.subr.mxu0 0.0
        %5988 = vmatpush1.msra.mxu0 0.0
        %5989 = vmatprep.subr.mxu0 0.0
        %5990 = vmatpush1.msra.mxu0 0.0
        %5991 = vmatprep.mubr.f32.mxu0 0.0
        %5992 = vmatmul.mubr.f32.gmra.mrb[0].mxu0 %v5925
        %v5993 = vpop.f32.mrb[0].mxu0
        %v5994 = vadd.f32 0.0, %v5993
        %v5995 = vpop.f32.mrb[0].mxu0
        %5996 = vdwg.mxu0
        %v5998 = vsel %vm2362, %v5994, 0
        %6000 = vmatprep.subr.mxu0 0.0
        %6001 = vmatpush1.msra.mxu0 %v4876
        %6002 = vmatprep.subr.mxu0 0.0
        %6003 = vmatpush1.msra.mxu0 0.0
        %6004 = vmatprep.subr.mxu0 0.0
        %6005 = vmatpush1.msra.mxu0 0.0
        %6006 = vmatprep.subr.mxu0 0.0
        %6007 = vmatpush1.msra.mxu0 0.0
        %6008 = vmatprep.subr.mxu0 0.0
        %6009 = vmatpush1.msra.mxu0 0.0
        %6010 = vmatprep.subr.mxu0 0.0
        %6011 = vmatpush1.msra.mxu0 0.0
        %6012 = vmatprep.subr.mxu0 0.0
        %6013 = vmatpush1.msra.mxu0 0.0
        %6014 = vmatprep.subr.mxu0 0.0
        %6015 = vmatpush1.msra.mxu0 0.0
        %6016 = vmatprep.subr.mxu0 0.0
        %6017 = vmatpush1.msra.mxu0 0.0
        %6018 = vmatprep.subr.mxu0 0.0
        %6019 = vmatpush1.msra.mxu0 0.0
        %6020 = vmatprep.subr.mxu0 0.0
        %6021 = vmatpush1.msra.mxu0 0.0
        %6022 = vmatprep.subr.mxu0 0.0
        %6023 = vmatpush1.msra.mxu0 0.0
        %6024 = vmatprep.subr.mxu0 0.0
        %6025 = vmatpush1.msra.mxu0 0.0
        %6026 = vmatprep.subr.mxu0 0.0
        %6027 = vmatpush1.msra.mxu0 0.0
        %6028 = vmatprep.subr.mxu0 0.0
        %6029 = vmatpush1.msra.mxu0 0.0
        %6030 = vmatprep.subr.mxu0 0.0
        %6031 = vmatpush1.msra.mxu0 0.0
        %6032 = vmatprep.subr.mxu0 0.0
        %6033 = vmatpush1.msra.mxu0 0.0
        %6034 = vmatprep.subr.mxu0 0.0
        %6035 = vmatpush1.msra.mxu0 0.0
        %6036 = vmatprep.subr.mxu0 0.0
        %6037 = vmatpush1.msra.mxu0 0.0
        %6038 = vmatprep.subr.mxu0 0.0
        %6039 = vmatpush1.msra.mxu0 0.0
        %6040 = vmatprep.subr.mxu0 0.0
        %6041 = vmatpush1.msra.mxu0 0.0
        %6042 = vmatprep.subr.mxu0 0.0
        %6043 = vmatpush1.msra.mxu0 0.0
        %6044 = vmatprep.subr.mxu0 0.0
        %6045 = vmatpush1.msra.mxu0 0.0
        %6046 = vmatprep.subr.mxu0 0.0
        %6047 = vmatpush1.msra.mxu0 0.0
        %6048 = vmatprep.subr.mxu0 0.0
        %6049 = vmatpush1.msra.mxu0 0.0
        %6050 = vmatprep.subr.mxu0 0.0
        %6051 = vmatpush1.msra.mxu0 0.0
        %6052 = vmatprep.subr.mxu0 0.0
        %6053 = vmatpush1.msra.mxu0 0.0
        %6054 = vmatprep.subr.mxu0 0.0
        %6055 = vmatpush1.msra.mxu0 0.0
        %6056 = vmatprep.subr.mxu0 0.0
        %6057 = vmatpush1.msra.mxu0 0.0
        %6058 = vmatprep.subr.mxu0 0.0
        %6059 = vmatpush1.msra.mxu0 0.0
        %6060 = vmatprep.subr.mxu0 0.0
        %6061 = vmatpush1.msra.mxu0 0.0
        %6062 = vmatprep.subr.mxu0 0.0
        %6063 = vmatpush1.msra.mxu0 0.0
        %6064 = vmatprep.mubr.f32.mxu0 0.0
        %6065 = vmatmul.mubr.f32.gmra.mrb[0].mxu0 %v5998
        %v6066 = vpop.f32.mrb[0].mxu0
        %v6067 = vadd.f32 0.0, %v6066
        %v6068 = vpop.f32.mrb[0].mxu0
        %6069 = vdwg.mxu0
        %v6070 = vadd.f32 %v5831, %v6067
        %v6071 = vsel %vm2128, %v6070, 0.0
        %6072 = vadd.xlane.f32.xlu0 %v6071
        %v6073 = vpop.xlane.xlu0 %6072
        %v6074 = vmul.f32 %v6073, %v3318
        %v6075 = vsub.f32 %v6070, %v6074
        %v6076 = vmul.f32 %v6075, %v6075
        %v6077 = vsel %vm2128, %v6076, 0.0
        %6078 = vadd.xlane.f32.xlu0 %v6077
        %v6079 = vpop.xlane.xlu0 %6078
        %v6080 = vmul.f32 %v6079, %v3318
        %v6081 = vadd.f32 %v6080, 1e-12
        %v6082 = vrsqrt.pop %v6081
        %v6083 = vmul.f32 %v6075, %v6082
        %v6085 = vlaneseq
        %v6086 = vshrl.u32 %v6085, 7
        %v6087 = vsub.s32 0, %v6086
        %v6088 = vrot.slane %v4878, %v6087
        %v6090 = vmul.f32 %v6083, %v6088
        %v6092 = vlaneseq
        %v6093 = vshrl.u32 %v6092, 7
        %v6094 = vsub.s32 0, %v6093
        %v6095 = vrot.slane %v4879, %v6094
        %v6097 = vadd.f32 %v6090, %v6095
        %v6098 = vld [vmem:[#allocation64] sm:$0xff]
        %v6099 = vld [vmem:[#allocation64 + $0x8] sm:$0xff]
        %v6100 = vld [vmem:[#allocation64 + $0x10] sm:$0xff]
        %v6101 = vld [vmem:[#allocation64 + $0x18] sm:$0xff]
        %v6102 = vld [vmem:[#allocation65] sm:$0x1]
        %v6103 = vld [vmem:[#allocation67] sm:$0x1]
        %v6104 = vld [vmem:[#allocation68] sm:$0x1]
        %v6105 = vld [vmem:[#allocation70] sm:$0xff]
        %v6106 = vld [vmem:[#allocation70 + $0x8] sm:$0xff]
        %v6107 = vld [vmem:[#allocation70 + $0x10] sm:$0xff]
        %v6108 = vld [vmem:[#allocation70 + $0x18] sm:$0xff]
        %v6109 = vld [vmem:[#allocation71] sm:$0x1]
        %v6110 = vld [vmem:[#allocation73] sm:$0x1]
        %v6111 = vld [vmem:[#allocation74] sm:$0x1]
        %v6113 = vlaneseq
        %v6114 = vshrl.u32 %v6113, 7
        %v6115 = vsub.s32 0, %v6114
        %v6116 = vrot.slane %v6102, %v6115
        %v6119 = vsel %vm2128, %v6097, 0
        %6121 = vmatprep.subr.mxu0 0.0
        %6122 = vmatpush1.msra.mxu0 %v6098
        %6123 = vmatprep.subr.mxu0 0.0
        %6124 = vmatpush1.msra.mxu0 %v6099
        %6125 = vmatprep.subr.mxu0 0.0
        %6126 = vmatpush1.msra.mxu0 %v6100
        %6127 = vmatprep.subr.mxu0 0.0
        %6128 = vmatpush1.msra.mxu0 %v6101
        %6129 = vmatprep.subr.mxu0 0.0
        %6130 = vmatpush1.msra.mxu0 0.0
        %6131 = vmatprep.subr.mxu0 0.0
        %6132 = vmatpush1.msra.mxu0 0.0
        %6133 = vmatprep.subr.mxu0 0.0
        %6134 = vmatpush1.msra.mxu0 0.0
        %6135 = vmatprep.subr.mxu0 0.0
        %6136 = vmatpush1.msra.mxu0 0.0
        %6137 = vmatprep.subr.mxu0 0.0
        %6138 = vmatpush1.msra.mxu0 0.0
        %6139 = vmatprep.subr.mxu0 0.0
        %6140 = vmatpush1.msra.mxu0 0.0
        %6141 = vmatprep.subr.mxu0 0.0
        %6142 = vmatpush1.msra.mxu0 0.0
        %6143 = vmatprep.subr.mxu0 0.0
        %6144 = vmatpush1.msra.mxu0 0.0
        %6145 = vmatprep.subr.mxu0 0.0
        %6146 = vmatpush1.msra.mxu0 0.0
        %6147 = vmatprep.subr.mxu0 0.0
        %6148 = vmatpush1.msra.mxu0 0.0
        %6149 = vmatprep.subr.mxu0 0.0
        %6150 = vmatpush1.msra.mxu0 0.0
        %6151 = vmatprep.subr.mxu0 0.0
        %6152 = vmatpush1.msra.mxu0 0.0
        %6153 = vmatprep.subr.mxu0 0.0
        %6154 = vmatpush1.msra.mxu0 0.0
        %6155 = vmatprep.subr.mxu0 0.0
        %6156 = vmatpush1.msra.mxu0 0.0
        %6157 = vmatprep.subr.mxu0 0.0
        %6158 = vmatpush1.msra.mxu0 0.0
        %6159 = vmatprep.subr.mxu0 0.0
        %6160 = vmatpush1.msra.mxu0 0.0
        %6161 = vmatprep.subr.mxu0 0.0
        %6162 = vmatpush1.msra.mxu0 0.0
        %6163 = vmatprep.subr.mxu0 0.0
        %6164 = vmatpush1.msra.mxu0 0.0
        %6165 = vmatprep.subr.mxu0 0.0
        %6166 = vmatpush1.msra.mxu0 0.0
        %6167 = vmatprep.subr.mxu0 0.0
        %6168 = vmatpush1.msra.mxu0 0.0
        %6169 = vmatprep.subr.mxu0 0.0
        %6170 = vmatpush1.msra.mxu0 0.0
        %6171 = vmatprep.subr.mxu0 0.0
        %6172 = vmatpush1.msra.mxu0 0.0
        %6173 = vmatprep.subr.mxu0 0.0
        %6174 = vmatpush1.msra.mxu0 0.0
        %6175 = vmatprep.subr.mxu0 0.0
        %6176 = vmatpush1.msra.mxu0 0.0
        %6177 = vmatprep.subr.mxu0 0.0
        %6178 = vmatpush1.msra.mxu0 0.0
        %6179 = vmatprep.subr.mxu0 0.0
        %6180 = vmatpush1.msra.mxu0 0.0
        %6181 = vmatprep.subr.mxu0 0.0
        %6182 = vmatpush1.msra.mxu0 0.0
        %6183 = vmatprep.subr.mxu0 0.0
        %6184 = vmatpush1.msra.mxu0 0.0
        %6185 = vmatprep.mubr.f32.mxu0 0.0
        %6186 = vmatmul.mubr.f32.gmra.mrb[0].mxu0 %v6119
        %v6187 = vpop.f32.mrb[0].mxu0
        %v6188 = vadd.f32 %v6116, %v6187
        %v6189 = vpop.f32.mrb[0].mxu0
        %6190 = vdwg.mxu0
        %v6191 = vadd.f32 %v6188, %v6097
        %v6192 = vsel %vm2128, %v6191, 0.0
        %6193 = vadd.xlane.f32.xlu0 %v6192
        %v6194 = vpop.xlane.xlu0 %6193
        %v6195 = vmul.f32 %v6194, %v3318
        %v6196 = vsub.f32 %v6191, %v6195
        %v6197 = vmul.f32 %v6196, %v6196
        %v6198 = vsel %vm2128, %v6197, 0.0
        %6199 = vadd.xlane.f32.xlu0 %v6198
        %v6200 = vpop.xlane.xlu0 %6199
        %v6201 = vmul.f32 %v6200, %v3318
        %v6202 = vadd.f32 %v6201, 1e-12
        %v6203 = vrsqrt.pop %v6202
        %v6204 = vmul.f32 %v6196, %v6203
        %v6206 = vlaneseq
        %v6207 = vshrl.u32 %v6206, 7
        %v6208 = vsub.s32 0, %v6207
        %v6209 = vrot.slane %v6103, %v6208
        %v6211 = vmul.f32 %v6204, %v6209
        %v6213 = vlaneseq
        %v6214 = vshrl.u32 %v6213, 7
        %v6215 = vsub.s32 0, %v6214
        %v6216 = vrot.slane %v6104, %v6215
        %v6218 = vadd.f32 %v6211, %v6216
        %v6220 = vlaneseq
        %v6221 = vshrl.u32 %v6220, 7
        %v6222 = vsub.s32 0, %v6221
        %v6223 = vrot.slane %v6109, %v6222
        %v6226 = vsel %vm2128, %v6218, 0
        %6228 = vmatprep.subr.mxu0 0.0
        %6229 = vmatpush1.msra.mxu0 %v6105
        %6230 = vmatprep.subr.mxu0 0.0
        %6231 = vmatpush1.msra.mxu0 %v6106
        %6232 = vmatprep.subr.mxu0 0.0
        %6233 = vmatpush1.msra.mxu0 %v6107
        %6234 = vmatprep.subr.mxu0 0.0
        %6235 = vmatpush1.msra.mxu0 %v6108
        %6236 = vmatprep.subr.mxu0 0.0
        %6237 = vmatpush1.msra.mxu0 0.0
        %6238 = vmatprep.subr.mxu0 0.0
        %6239 = vmatpush1.msra.mxu0 0.0
        %6240 = vmatprep.subr.mxu0 0.0
        %6241 = vmatpush1.msra.mxu0 0.0
        %6242 = vmatprep.subr.mxu0 0.0
        %6243 = vmatpush1.msra.mxu0 0.0
        %6244 = vmatprep.subr.mxu0 0.0
        %6245 = vmatpush1.msra.mxu0 0.0
        %6246 = vmatprep.subr.mxu0 0.0
        %6247 = vmatpush1.msra.mxu0 0.0
        %6248 = vmatprep.subr.mxu0 0.0
        %6249 = vmatpush1.msra.mxu0 0.0
        %6250 = vmatprep.subr.mxu0 0.0
        %6251 = vmatpush1.msra.mxu0 0.0
        %6252 = vmatprep.subr.mxu0 0.0
        %6253 = vmatpush1.msra.mxu0 0.0
        %6254 = vmatprep.subr.mxu0 0.0
        %6255 = vmatpush1.msra.mxu0 0.0
        %6256 = vmatprep.subr.mxu0 0.0
        %6257 = vmatpush1.msra.mxu0 0.0
        %6258 = vmatprep.subr.mxu0 0.0
        %6259 = vmatpush1.msra.mxu0 0.0
        %6260 = vmatprep.subr.mxu0 0.0
        %6261 = vmatpush1.msra.mxu0 0.0
        %6262 = vmatprep.subr.mxu0 0.0
        %6263 = vmatpush1.msra.mxu0 0.0
        %6264 = vmatprep.subr.mxu0 0.0
        %6265 = vmatpush1.msra.mxu0 0.0
        %6266 = vmatprep.subr.mxu0 0.0
        %6267 = vmatpush1.msra.mxu0 0.0
        %6268 = vmatprep.subr.mxu0 0.0
        %6269 = vmatpush1.msra.mxu0 0.0
        %6270 = vmatprep.subr.mxu0 0.0
        %6271 = vmatpush1.msra.mxu0 0.0
        %6272 = vmatprep.subr.mxu0 0.0
        %6273 = vmatpush1.msra.mxu0 0.0
        %6274 = vmatprep.subr.mxu0 0.0
        %6275 = vmatpush1.msra.mxu0 0.0
        %6276 = vmatprep.subr.mxu0 0.0
        %6277 = vmatpush1.msra.mxu0 0.0
        %6278 = vmatprep.subr.mxu0 0.0
        %6279 = vmatpush1.msra.mxu0 0.0
        %6280 = vmatprep.subr.mxu0 0.0
        %6281 = vmatpush1.msra.mxu0 0.0
        %6282 = vmatprep.subr.mxu0 0.0
        %6283 = vmatpush1.msra.mxu0 0.0
        %6284 = vmatprep.subr.mxu0 0.0
        %6285 = vmatpush1.msra.mxu0 0.0
        %6286 = vmatprep.subr.mxu0 0.0
        %6287 = vmatpush1.msra.mxu0 0.0
        %6288 = vmatprep.subr.mxu0 0.0
        %6289 = vmatpush1.msra.mxu0 0.0
        %6290 = vmatprep.subr.mxu0 0.0
        %6291 = vmatpush1.msra.mxu0 0.0
        %6292 = vmatprep.mubr.f32.mxu0 0.0
        %6293 = vmatmul.mubr.f32.gmra.mrb[0].mxu0 %v6226
        %v6294 = vpop.f32.mrb[0].mxu0
        %v6295 = vadd.f32 %v6223, %v6294
        %v6296 = vpop.f32.mrb[0].mxu0
        %6297 = vdwg.mxu0
        %v6298 = vadd.f32 %v6295, %v6097
        %v6299 = vsel %vm2128, %v6298, 0.0
        %6300 = vadd.xlane.f32.xlu0 %v6299
        %v6301 = vpop.xlane.xlu0 %6300
        %v6302 = vmul.f32 %v6301, %v3318
        %v6303 = vsub.f32 %v6298, %v6302
        %v6304 = vmul.f32 %v6303, %v6303
        %v6305 = vsel %vm2128, %v6304, 0.0
        %6306 = vadd.xlane.f32.xlu0 %v6305
        %v6307 = vpop.xlane.xlu0 %6306
        %v6308 = vmul.f32 %v6307, %v3318
        %v6309 = vadd.f32 %v6308, 1e-12
        %v6310 = vrsqrt.pop %v6309
        %v6311 = vmul.f32 %v6303, %v6310
        %v6313 = vlaneseq
        %v6314 = vshrl.u32 %v6313, 7
        %v6315 = vsub.s32 0, %v6314
        %v6316 = vrot.slane %v6110, %v6315
        %v6318 = vmul.f32 %v6311, %v6316
        %v6320 = vlaneseq
        %v6321 = vshrl.u32 %v6320, 7
        %v6322 = vsub.s32 0, %v6321
        %v6323 = vrot.slane %v6111, %v6322
        %v6325 = vadd.f32 %v6318, %v6323
        %6326 = vst.msk [vmem:[%s2096] sm:$0xff] %vm2128, %v6325
        %s6327 = sand.u32 %s1166, 1
        %s6328 = scalar_lea.sflag [#allocation4], %s6327
        %s6329 = sand.u32 %s1166, 1
        %s6330 = smul.addr %s6329, 8
        %s6331 = scalar_lea.vmem [#allocation76], %s6330
        // Predicated region
        $region405: #{tpu_custom_call.1} parent=211 // pred_check
          %p6332 = pneg %p1176
        $region406: #{tpu_custom_call.1} parent=211 // pred_check_branch
          %6334 = sbr.rel (%p6332) target = $region408
        $region407: #{tpu_custom_call.1} parent=211 // pred_region
          %s6336 = ssub.s32 128, 128
          %6337 = vsyncadd %s6328, %s6336
          %s6338 = smul.addr %s140, 128
          %s6339 = scalar_lea.hbm %s97, %s6338
          %s6341 = sshll.u32 %s6331, 4
          %s6342 = int_to_ptr.vmem [resolvable:$true] %s6341
          %6344 = dma.vmem_to_hbm [thread:$0]  %s6342, 128, %s6339, %s6328
        $region408: #{tpu_custom_call.1} parent=211 // pred_fallthru
          _
      $region212: #{tpu_custom_call.1} parent=5 // pred_fallthru
        _
      %p6345 = scmp.le.s32.totalorder 2, %s135
      // Predicated region
      $region409: #{tpu_custom_call.1} parent=5 // pred_check
        %p6346 = pneg %p6345
      $region410: #{tpu_custom_call.1} parent=5 // pred_check_branch
        %6348 = sbr.rel (%p6346) target = $region412
      $region411: #{tpu_custom_call.1} parent=5 // pred_region
        %s6349 = ssub.s32 %s135, 2
        // Predicated region
        $region413: #{tpu_custom_call.1} parent=411 // pred_check
          %p6350 = pneg %p1182
        $region414: #{tpu_custom_call.1} parent=411 // pred_check_branch
          %6352 = sbr.rel (%p6350) target = $region416
        $region415: #{tpu_custom_call.1} parent=411 // pred_region
          %s6353 = sand.u32 %s1167, 1
          %s6354 = scalar_lea.sflag [#allocation4], %s6353
          %s6355 = sand.u32 %s1167, 1
          %s6356 = smul.addr %s6355, 8
          %s6357 = scalar_lea.vmem [#allocation76], %s6356
          %6358 = dma.done %s6354, 128
        $region416: #{tpu_custom_call.1} parent=411 // pred_fallthru
          _
      $region412: #{tpu_custom_call.1} parent=5 // pred_fallthru
        _
    $region6: #{tpu_custom_call.1} parent=1 // loop_footer
      %s139 = sadd.s32 1, %s135
    $region7: #{tpu_custom_call.1} parent=1 // loop_footer_branch
      %134 = sbr.rel target = $region3
    $region8: #{tpu_custom_call.1} parent=1 // loop_exit
      _
    %6359 = vsyncpa [#allocation3], 1
    %s6360 = scalar_lea.sflag [#allocation3], 1
    %6361 = vsyncpa %s6360, 1
    %6362 = vsyncpa [#allocation6], 1
    %s6363 = scalar_lea.sflag [#allocation6], 1
    %6364 = vsyncpa %s6363, 1
    %6365 = vsyncpa [#allocation9], 1
    %6366 = vsyncpa [#allocation12], 1
    %6367 = vsyncpa [#allocation15], 1
    %6368 = vsyncpa [#allocation18], 1
    %6369 = vsyncpa [#allocation21], 1
    %6370 = vsyncpa [#allocation24], 1
    %6371 = vsyncpa [#allocation27], 1
    %6372 = vsyncpa [#allocation30], 1
    %6373 = vsyncpa [#allocation33], 1
    %6374 = vsyncpa [#allocation36], 1
    %6375 = vsyncpa [#allocation39], 1
    %6376 = vsyncpa [#allocation42], 1
    %6377 = vsyncpa [#allocation45], 1
    %6378 = vsyncpa [#allocation48], 1
    %6379 = vsyncpa [#allocation51], 1
    %6380 = vsyncpa [#allocation54], 1
    %6381 = vsyncpa [#allocation57], 1
    %6382 = vsyncpa [#allocation60], 1
    %6383 = vsyncpa [#allocation63], 1
    %6384 = vsyncpa [#allocation66], 1
    %6385 = vsyncpa [#allocation69], 1
    %6386 = vsyncpa [#allocation72], 1
    %6387 = vsyncpa [#allocation75], 1
    %6388 = vsyncpa [#allocation4], 1
    %s6389 = scalar_lea.sflag [#allocation4], 1
    %6390 = vsyncpa %s6389, 1

</llo_original>
